<compile_context>
chip_gen: v5e
topology: v5e:2x2
jax: 0.10.0
libtpu: 0.0.40
codegen_flags: <defaults>
</compile_context>

<pallas_src>
import jax
import jax.numpy as jnp
from jax.experimental import pallas as pl
from jax.experimental.pallas import tpu as pltpu


def _shift_h(v, d):
    """out[:, h, ...] = v[:, h + d, ...] (zero padded). H is a major axis."""
    if d == 0:
        return v
    z = jnp.zeros_like(v[:, :1])
    if d > 0:
        return jnp.concatenate([v[:, d:], z], axis=1)
    return jnp.concatenate([z, v[:, :d]], axis=1)


def _shift_w(v, d):
    """out[:, :, w, ...] = v[:, :, w + d, ...] (zero padded)."""
    if d == 0:
        return v
    z = jnp.zeros_like(v[:, :, :1])
    if d > 0:
        return jnp.concatenate([v[:, :, d:], z], axis=2)
    return jnp.concatenate([z, v[:, :, :d]], axis=2)


def basic_block_kernel(x_ref, w1_ref, b1_ref, w2_ref, b2_ref,
                       caw1_ref, caw2_ref, saw_ref, sab_ref, out_ref):
    N, H, W, C = x_ref.shape
    M = N * H * W

    x = x_ref[...]                                   # (N, H, W, C) f32

    def conv3x3(v_bf16, w_ref_, b_ref_):
        # im2col: one (M, 9C) x (9C, C) bf16 matmul with f32 accumulation.
        taps = []
        for dy in (-1, 0, 1):
            vh = _shift_h(v_bf16, dy)
            for dx in (-1, 0, 1):
                taps.append(_shift_w(vh, dx))
        patches = jnp.concatenate(taps, axis=-1)     # (N, H, W, 9C) bf16
        y = jnp.dot(patches.reshape(M, 9 * C), w_ref_[...],
                    preferred_element_type=jnp.float32)   # (M, C) f32
        return y + b_ref_[...]

    # conv1 + folded bn1 + relu
    h1 = jnp.maximum(conv3x3(x.astype(jnp.bfloat16), w1_ref, b1_ref), 0.0)
    # conv2 + folded bn2 (no relu before attention, matching the reference)
    o2 = conv3x3(h1.reshape(N, H, W, C).astype(jnp.bfloat16), w2_ref, b2_ref)

    # ---------------- channel attention (per image) ----------------
    o2i = o2.reshape(N, H * W, C)
    avg = jnp.mean(o2i, axis=1)                                # (N, C)
    mx = jnp.max(o2i, axis=1)                                  # (N, C)

    # avg & max rows share the MLP weights -> one stacked matmul pair.
    ca_in = jnp.concatenate([avg, mx], axis=0).astype(jnp.bfloat16)  # (2N, C)
    hid = jnp.maximum(jnp.dot(ca_in, caw1_ref[...],
                              preferred_element_type=jnp.float32), 0.0)
    ca_out = jnp.dot(hid.astype(jnp.bfloat16), caw2_ref[...],
                     preferred_element_type=jnp.float32)       # (2N, C)
    ca = jax.nn.sigmoid(ca_out[:N] + ca_out[N:])               # (N, C)
    o4 = (o2i * ca[:, None, :]).reshape(N, H, W, C)

    # ---------------- spatial attention (pure VPU, no MXU) ----------------
    # Computed in (N, H, W) layout: lane axis = W instead of a size-1 channel
    # axis -> ~16x fewer padded vregs through the 18 multiply-adds below.
    savg = jnp.mean(o4, axis=-1)                               # (N, H, W)
    smax = jnp.max(o4, axis=-1)                                # (N, H, W)
    sacc = jnp.zeros((N, H, W), jnp.float32)
    k = 0
    for dy in (-1, 0, 1):
        a_h = _shift_h(savg, dy)
        m_h = _shift_h(smax, dy)
        for dx in (-1, 0, 1):
            sacc = (sacc
                    + _shift_w(a_h, dx) * saw_ref[2 * k]
                    + _shift_w(m_h, dx) * saw_ref[2 * k + 1])
            k += 1
    sa = jax.nn.sigmoid(sacc + sab_ref[0])                     # (N, H, W)

    # ---------------- attention apply + residual + relu ----------------
    out = o4 * sa[..., None] + x      # downsample is None, inplanes == planes
    out_ref[...] = jnp.maximum(out, 0.0)


def basic_block_forward(x_nhwc, p):
    N, H, W, C = x_nhwc.shape

    # ---- host-side folding: conv bias + inference BatchNorm -> conv w/b ----
    s1 = p["bn1_scale"].reshape(1, 1, 1, C)
    w1 = (p["w1"] * s1).reshape(9 * C, C).astype(jnp.bfloat16)
    b1 = (p["b1"] * p["bn1_scale"] + p["bn1_bias"]).reshape(1, C).astype(jnp.float32)
    s2 = p["bn2_scale"].reshape(1, 1, 1, C)
    w2 = (p["w2"] * s2).reshape(9 * C, C).astype(jnp.bfloat16)
    b2 = (p["b2"] * p["bn2_scale"] + p["bn2_bias"]).reshape(1, C).astype(jnp.float32)

    ca_w1 = p["ca_w1"].astype(jnp.bfloat16)            # (C, C//16)
    ca_w2 = p["ca_w2"].astype(jnp.bfloat16)            # (C//16, C)
    sa_w = p["sa_w"].reshape(-1).astype(jnp.float32)   # (18,)  SMEM scalars
    sa_b = p["sa_b"].reshape(-1).astype(jnp.float32)   # (1,)   SMEM scalar

    vmem = pl.BlockSpec(memory_space=pltpu.MemorySpace.VMEM)
    smem = pl.BlockSpec(memory_space=pltpu.MemorySpace.SMEM)

    fn = pl.pallas_call(
        basic_block_kernel,
        out_shape=jax.ShapeDtypeStruct((N, H, W, C), jnp.float32),
        in_specs=[vmem, vmem, vmem, vmem, vmem, vmem, vmem, smem, smem],
        out_specs=vmem,
    )
    return fn(x_nhwc, w1, b1, w2, b2, ca_w1, ca_w2, sa_w, sa_b)


def make_params(key, C):
    Cr = C // 16
    ks = jax.random.split(key, 16)
    eps = 1e-5

    def nrm(k, shape, scale=0.1):
        return (scale * jax.random.normal(k, shape)).astype(jnp.float32)

    # conv1 / conv2 (SphereConv2D approximated as 3x3 conv, with bias)
    w1 = nrm(ks[0], (3, 3, C, C))
    b1 = nrm(ks[1], (1, C), 0.05)
    w2 = nrm(ks[2], (3, 3, C, C))
    b2 = nrm(ks[3], (1, C), 0.05)

    # BatchNorm (inference): fold gamma/beta/mean/var into scale/bias
    def bn(kg, kb, km, kv):
        gamma = 1.0 + nrm(kg, (1, C), 0.05)
        beta = nrm(kb, (1, C), 0.05)
        mean = nrm(km, (1, C), 0.05)
        var = 1.0 + 0.1 * jax.nn.sigmoid(jax.random.normal(kv, (1, C)))
        scale = gamma / jnp.sqrt(var + eps)
        bias = beta - mean * scale
        return scale.astype(jnp.float32), bias.astype(jnp.float32)

    bn1_scale, bn1_bias = bn(ks[4], ks[5], ks[6], ks[7])
    bn2_scale, bn2_bias = bn(ks[8], ks[9], ks[10], ks[11])

    # channel attention 1x1 convs (no bias), stored as matmul matrices
    ca_w1 = nrm(ks[12], (C, Cr), 0.2)
    ca_w2 = nrm(ks[13], (Cr, C), 0.2)

    # spatial attention conv (2 -> 1 channels, 3x3), with bias
    sa_w = nrm(ks[14], (3, 3, 2, 1), 0.2)
    sa_b = nrm(ks[15], (1, 1), 0.05)

    return dict(
        w1=w1, b1=b1, bn1_scale=bn1_scale, bn1_bias=bn1_bias,
        w2=w2, b2=b2, bn2_scale=bn2_scale, bn2_bias=bn2_bias,
        ca_w1=ca_w1, ca_w2=ca_w2, sa_w=sa_w, sa_b=sa_b,
    )


if __name__ == "__main__":
    # BasicBlock(inplanes=32, planes=32, stride=1, downsample=None)
    # C must be >= 16 so that ChannelAttention's hidden dim C//16 >= 1.
    N, C, H, W = 2, 32, 16, 16

    key = jax.random.PRNGKey(0)
    kx, kp = jax.random.split(key)

    x_nchw = jax.random.normal(kx, (N, C, H, W), dtype=jnp.float32)  # torch layout
    params = make_params(kp, C)

    x_nhwc = jnp.transpose(x_nchw, (0, 2, 3, 1))       # NCHW -> NHWC for the kernel
    out_nhwc = basic_block_forward(x_nhwc, params)
    out_nchw = jnp.transpose(out_nhwc, (0, 3, 1, 2))   # back to NCHW

    out_nchw = jax.block_until_ready(out_nchw)
    assert out_nchw.shape == (N, C, H, W)
    assert bool(jnp.all(jnp.isfinite(out_nchw)))
    print("KERNEL_OK")
</pallas_src>

<mosaic_0001>
module attributes {stable_mosaic.version = 11 : i64} {
  func.func @basic_block_kernel(%arg0: memref<2x16x16x32xf32, #tpu.memory_space<vmem>>, %arg1: memref<288x32xbf16, #tpu.memory_space<vmem>>, %arg2: memref<1x32xf32, #tpu.memory_space<vmem>>, %arg3: memref<288x32xbf16, #tpu.memory_space<vmem>>, %arg4: memref<1x32xf32, #tpu.memory_space<vmem>>, %arg5: memref<32x2xbf16, #tpu.memory_space<vmem>>, %arg6: memref<2x32xbf16, #tpu.memory_space<vmem>>, %arg7: memref<18xf32, #tpu.memory_space<smem>>, %arg8: memref<1xf32, #tpu.memory_space<smem>>, %arg9: memref<2x16x16x32xf32, #tpu.memory_space<vmem>>) attributes {dimension_semantics = [], scalar_prefetch = 0 : i64, scratch_operands = 0 : i64, tpu.core_type = #tpu.core_type<tc>} {
    %c0 = arith.constant 0 : index
    %c0_0 = arith.constant 0 : index
    %c0_1 = arith.constant 0 : index
    %c0_2 = arith.constant 0 : index
    %0 = vector.load %arg0[%c0, %c0_0, %c0_1, %c0_2] : memref<2x16x16x32xf32, #tpu.memory_space<vmem>>, vector<2x16x16x32xf32>
    %1 = arith.truncf %0 : vector<2x16x16x32xf32> to vector<2x16x16x32xbf16>
    %cst = arith.constant 0.000000e+00 : bf16
    %2 = vector.broadcast %cst : bf16 to vector<2x1x16x32xbf16>
    %3 = vector.extract_strided_slice %1 {offsets = [0, 0, 0, 0], sizes = [2, 15, 16, 32], strides = [1, 1, 1, 1]} : vector<2x16x16x32xbf16> to vector<2x15x16x32xbf16>
    %4 = tpu.concatenate %2, %3 in 1 : vector<2x1x16x32xbf16>, vector<2x15x16x32xbf16> -> vector<2x16x16x32xbf16>
    %cst_3 = arith.constant 0.000000e+00 : bf16
    %5 = vector.broadcast %cst_3 : bf16 to vector<2x16x1x32xbf16>
    %6 = vector.extract_strided_slice %4 {offsets = [0, 0, 0, 0], sizes = [2, 16, 15, 32], strides = [1, 1, 1, 1]} : vector<2x16x16x32xbf16> to vector<2x16x15x32xbf16>
    %7 = tpu.concatenate %5, %6 in 2 : vector<2x16x1x32xbf16>, vector<2x16x15x32xbf16> -> vector<2x16x16x32xbf16>
    %cst_4 = arith.constant 0.000000e+00 : bf16
    %8 = vector.broadcast %cst_4 : bf16 to vector<2x16x1x32xbf16>
    %9 = vector.extract_strided_slice %4 {offsets = [0, 0, 1, 0], sizes = [2, 16, 15, 32], strides = [1, 1, 1, 1]} : vector<2x16x16x32xbf16> to vector<2x16x15x32xbf16>
    %10 = tpu.concatenate %9, %8 in 2 : vector<2x16x15x32xbf16>, vector<2x16x1x32xbf16> -> vector<2x16x16x32xbf16>
    %cst_5 = arith.constant 0.000000e+00 : bf16
    %11 = vector.broadcast %cst_5 : bf16 to vector<2x16x1x32xbf16>
    %12 = vector.extract_strided_slice %1 {offsets = [0, 0, 0, 0], sizes = [2, 16, 15, 32], strides = [1, 1, 1, 1]} : vector<2x16x16x32xbf16> to vector<2x16x15x32xbf16>
    %13 = tpu.concatenate %11, %12 in 2 : vector<2x16x1x32xbf16>, vector<2x16x15x32xbf16> -> vector<2x16x16x32xbf16>
    %cst_6 = arith.constant 0.000000e+00 : bf16
    %14 = vector.broadcast %cst_6 : bf16 to vector<2x16x1x32xbf16>
    %15 = vector.extract_strided_slice %1 {offsets = [0, 0, 1, 0], sizes = [2, 16, 15, 32], strides = [1, 1, 1, 1]} : vector<2x16x16x32xbf16> to vector<2x16x15x32xbf16>
    %16 = tpu.concatenate %15, %14 in 2 : vector<2x16x15x32xbf16>, vector<2x16x1x32xbf16> -> vector<2x16x16x32xbf16>
    %cst_7 = arith.constant 0.000000e+00 : bf16
    %17 = vector.broadcast %cst_7 : bf16 to vector<2x1x16x32xbf16>
    %18 = vector.extract_strided_slice %1 {offsets = [0, 1, 0, 0], sizes = [2, 15, 16, 32], strides = [1, 1, 1, 1]} : vector<2x16x16x32xbf16> to vector<2x15x16x32xbf16>
    %19 = tpu.concatenate %18, %17 in 1 : vector<2x15x16x32xbf16>, vector<2x1x16x32xbf16> -> vector<2x16x16x32xbf16>
    %cst_8 = arith.constant 0.000000e+00 : bf16
    %20 = vector.broadcast %cst_8 : bf16 to vector<2x16x1x32xbf16>
    %21 = vector.extract_strided_slice %19 {offsets = [0, 0, 0, 0], sizes = [2, 16, 15, 32], strides = [1, 1, 1, 1]} : vector<2x16x16x32xbf16> to vector<2x16x15x32xbf16>
    %22 = tpu.concatenate %20, %21 in 2 : vector<2x16x1x32xbf16>, vector<2x16x15x32xbf16> -> vector<2x16x16x32xbf16>
    %cst_9 = arith.constant 0.000000e+00 : bf16
    %23 = vector.broadcast %cst_9 : bf16 to vector<2x16x1x32xbf16>
    %24 = vector.extract_strided_slice %19 {offsets = [0, 0, 1, 0], sizes = [2, 16, 15, 32], strides = [1, 1, 1, 1]} : vector<2x16x16x32xbf16> to vector<2x16x15x32xbf16>
    %25 = tpu.concatenate %24, %23 in 2 : vector<2x16x15x32xbf16>, vector<2x16x1x32xbf16> -> vector<2x16x16x32xbf16>
    %26 = tpu.concatenate %7, %4, %10, %13, %1, %16, %22, %19, %25 in 3 : vector<2x16x16x32xbf16>, vector<2x16x16x32xbf16>, vector<2x16x16x32xbf16>, vector<2x16x16x32xbf16>, vector<2x16x16x32xbf16>, vector<2x16x16x32xbf16>, vector<2x16x16x32xbf16>, vector<2x16x16x32xbf16>, vector<2x16x16x32xbf16> -> vector<2x16x16x288xbf16>
    %27 = vector.shape_cast %26 : vector<2x16x16x288xbf16> to vector<512x288xbf16>
    %c0_10 = arith.constant 0 : index
    %c0_11 = arith.constant 0 : index
    %28 = vector.load %arg1[%c0_10, %c0_11] : memref<288x32xbf16, #tpu.memory_space<vmem>>, vector<288x32xbf16>
    %cst_12 = arith.constant dense<0.000000e+00> : vector<512x32xf32>
    %29 = tpu.matmul %27, %28, %cst_12 {dimension_numbers = #tpu.dot_dimension_numbers<[1], [0], [0], [1], [0, 0, 1, 1], [], []>} : vector<512x288xbf16>, vector<288x32xbf16>, vector<512x32xf32> -> vector<512x32xf32>
    %c0_13 = arith.constant 0 : index
    %c0_14 = arith.constant 0 : index
    %30 = vector.load %arg2[%c0_13, %c0_14] : memref<1x32xf32, #tpu.memory_space<vmem>>, vector<1x32xf32>
    %31 = vector.broadcast %30 : vector<1x32xf32> to vector<512x32xf32>
    %32 = arith.addf %29, %31 : vector<512x32xf32>
    %cst_15 = arith.constant 0.000000e+00 : f32
    %33 = vector.broadcast %cst_15 : f32 to vector<512x32xf32>
    %34 = arith.maximumf %32, %33 : vector<512x32xf32>
    %35 = vector.shape_cast %34 : vector<512x32xf32> to vector<2x16x16x32xf32>
    %36 = arith.truncf %35 : vector<2x16x16x32xf32> to vector<2x16x16x32xbf16>
    %cst_16 = arith.constant 0.000000e+00 : bf16
    %37 = vector.broadcast %cst_16 : bf16 to vector<2x1x16x32xbf16>
    %38 = vector.extract_strided_slice %36 {offsets = [0, 0, 0, 0], sizes = [2, 15, 16, 32], strides = [1, 1, 1, 1]} : vector<2x16x16x32xbf16> to vector<2x15x16x32xbf16>
    %39 = tpu.concatenate %37, %38 in 1 : vector<2x1x16x32xbf16>, vector<2x15x16x32xbf16> -> vector<2x16x16x32xbf16>
    %cst_17 = arith.constant 0.000000e+00 : bf16
    %40 = vector.broadcast %cst_17 : bf16 to vector<2x16x1x32xbf16>
    %41 = vector.extract_strided_slice %39 {offsets = [0, 0, 0, 0], sizes = [2, 16, 15, 32], strides = [1, 1, 1, 1]} : vector<2x16x16x32xbf16> to vector<2x16x15x32xbf16>
    %42 = tpu.concatenate %40, %41 in 2 : vector<2x16x1x32xbf16>, vector<2x16x15x32xbf16> -> vector<2x16x16x32xbf16>
    %cst_18 = arith.constant 0.000000e+00 : bf16
    %43 = vector.broadcast %cst_18 : bf16 to vector<2x16x1x32xbf16>
    %44 = vector.extract_strided_slice %39 {offsets = [0, 0, 1, 0], sizes = [2, 16, 15, 32], strides = [1, 1, 1, 1]} : vector<2x16x16x32xbf16> to vector<2x16x15x32xbf16>
    %45 = tpu.concatenate %44, %43 in 2 : vector<2x16x15x32xbf16>, vector<2x16x1x32xbf16> -> vector<2x16x16x32xbf16>
    %cst_19 = arith.constant 0.000000e+00 : bf16
    %46 = vector.broadcast %cst_19 : bf16 to vector<2x16x1x32xbf16>
    %47 = vector.extract_strided_slice %36 {offsets = [0, 0, 0, 0], sizes = [2, 16, 15, 32], strides = [1, 1, 1, 1]} : vector<2x16x16x32xbf16> to vector<2x16x15x32xbf16>
    %48 = tpu.concatenate %46, %47 in 2 : vector<2x16x1x32xbf16>, vector<2x16x15x32xbf16> -> vector<2x16x16x32xbf16>
    %cst_20 = arith.constant 0.000000e+00 : bf16
    %49 = vector.broadcast %cst_20 : bf16 to vector<2x16x1x32xbf16>
    %50 = vector.extract_strided_slice %36 {offsets = [0, 0, 1, 0], sizes = [2, 16, 15, 32], strides = [1, 1, 1, 1]} : vector<2x16x16x32xbf16> to vector<2x16x15x32xbf16>
    %51 = tpu.concatenate %50, %49 in 2 : vector<2x16x15x32xbf16>, vector<2x16x1x32xbf16> -> vector<2x16x16x32xbf16>
    %cst_21 = arith.constant 0.000000e+00 : bf16
    %52 = vector.broadcast %cst_21 : bf16 to vector<2x1x16x32xbf16>
    %53 = vector.extract_strided_slice %36 {offsets = [0, 1, 0, 0], sizes = [2, 15, 16, 32], strides = [1, 1, 1, 1]} : vector<2x16x16x32xbf16> to vector<2x15x16x32xbf16>
    %54 = tpu.concatenate %53, %52 in 1 : vector<2x15x16x32xbf16>, vector<2x1x16x32xbf16> -> vector<2x16x16x32xbf16>
    %cst_22 = arith.constant 0.000000e+00 : bf16
    %55 = vector.broadcast %cst_22 : bf16 to vector<2x16x1x32xbf16>
    %56 = vector.extract_strided_slice %54 {offsets = [0, 0, 0, 0], sizes = [2, 16, 15, 32], strides = [1, 1, 1, 1]} : vector<2x16x16x32xbf16> to vector<2x16x15x32xbf16>
    %57 = tpu.concatenate %55, %56 in 2 : vector<2x16x1x32xbf16>, vector<2x16x15x32xbf16> -> vector<2x16x16x32xbf16>
    %cst_23 = arith.constant 0.000000e+00 : bf16
    %58 = vector.broadcast %cst_23 : bf16 to vector<2x16x1x32xbf16>
    %59 = vector.extract_strided_slice %54 {offsets = [0, 0, 1, 0], sizes = [2, 16, 15, 32], strides = [1, 1, 1, 1]} : vector<2x16x16x32xbf16> to vector<2x16x15x32xbf16>
    %60 = tpu.concatenate %59, %58 in 2 : vector<2x16x15x32xbf16>, vector<2x16x1x32xbf16> -> vector<2x16x16x32xbf16>
    %61 = tpu.concatenate %42, %39, %45, %48, %36, %51, %57, %54, %60 in 3 : vector<2x16x16x32xbf16>, vector<2x16x16x32xbf16>, vector<2x16x16x32xbf16>, vector<2x16x16x32xbf16>, vector<2x16x16x32xbf16>, vector<2x16x16x32xbf16>, vector<2x16x16x32xbf16>, vector<2x16x16x32xbf16>, vector<2x16x16x32xbf16> -> vector<2x16x16x288xbf16>
    %62 = vector.shape_cast %61 : vector<2x16x16x288xbf16> to vector<512x288xbf16>
    %c0_24 = arith.constant 0 : index
    %c0_25 = arith.constant 0 : index
    %63 = vector.load %arg3[%c0_24, %c0_25] : memref<288x32xbf16, #tpu.memory_space<vmem>>, vector<288x32xbf16>
    %cst_26 = arith.constant dense<0.000000e+00> : vector<512x32xf32>
    %64 = tpu.matmul %62, %63, %cst_26 {dimension_numbers = #tpu.dot_dimension_numbers<[1], [0], [0], [1], [0, 0, 1, 1], [], []>} : vector<512x288xbf16>, vector<288x32xbf16>, vector<512x32xf32> -> vector<512x32xf32>
    %c0_27 = arith.constant 0 : index
    %c0_28 = arith.constant 0 : index
    %65 = vector.load %arg4[%c0_27, %c0_28] : memref<1x32xf32, #tpu.memory_space<vmem>>, vector<1x32xf32>
    %66 = vector.broadcast %65 : vector<1x32xf32> to vector<512x32xf32>
    %67 = arith.addf %64, %66 : vector<512x32xf32>
    %68 = vector.shape_cast %67 : vector<512x32xf32> to vector<2x256x32xf32>
    %cst_29 = arith.constant dense<0.000000e+00> : vector<2x32xf32>
    %69 = vector.multi_reduction <add>, %68, %cst_29 [1] : vector<2x256x32xf32> to vector<2x32xf32>
    %cst_30 = arith.constant 2.560000e+02 : f32
    %70 = vector.broadcast %cst_30 : f32 to vector<2x32xf32>
    %71 = arith.divf %69, %70 : vector<2x32xf32>
    %cst_31 = arith.constant dense<0xFF800000> : vector<2x32xf32>
    %72 = vector.multi_reduction <maximumf>, %68, %cst_31 [1] : vector<2x256x32xf32> to vector<2x32xf32>
    %73 = tpu.concatenate %71, %72 in 0 : vector<2x32xf32>, vector<2x32xf32> -> vector<4x32xf32>
    %74 = arith.truncf %73 : vector<4x32xf32> to vector<4x32xbf16>
    %c0_32 = arith.constant 0 : index
    %c0_33 = arith.constant 0 : index
    %75 = vector.load %arg5[%c0_32, %c0_33] : memref<32x2xbf16, #tpu.memory_space<vmem>>, vector<32x2xbf16>
    %cst_34 = arith.constant dense<0.000000e+00> : vector<4x2xf32>
    %76 = tpu.matmul %74, %75, %cst_34 {dimension_numbers = #tpu.dot_dimension_numbers<[1], [0], [0], [1], [0, 0, 1, 1], [], []>} : vector<4x32xbf16>, vector<32x2xbf16>, vector<4x2xf32> -> vector<4x2xf32>
    %cst_35 = arith.constant 0.000000e+00 : f32
    %77 = vector.broadcast %cst_35 : f32 to vector<4x2xf32>
    %78 = arith.maximumf %76, %77 : vector<4x2xf32>
    %79 = arith.truncf %78 : vector<4x2xf32> to vector<4x2xbf16>
    %c0_36 = arith.constant 0 : index
    %c0_37 = arith.constant 0 : index
    %80 = vector.load %arg6[%c0_36, %c0_37] : memref<2x32xbf16, #tpu.memory_space<vmem>>, vector<2x32xbf16>
    %cst_38 = arith.constant dense<0.000000e+00> : vector<4x32xf32>
    %81 = tpu.matmul %79, %80, %cst_38 {dimension_numbers = #tpu.dot_dimension_numbers<[1], [0], [0], [1], [0, 0, 1, 1], [], []>} : vector<4x2xbf16>, vector<2x32xbf16>, vector<4x32xf32> -> vector<4x32xf32>
    %82 = vector.extract_strided_slice %81 {offsets = [0, 0], sizes = [2, 32], strides = [1, 1]} : vector<4x32xf32> to vector<2x32xf32>
    %83 = vector.extract_strided_slice %81 {offsets = [2, 0], sizes = [2, 32], strides = [1, 1]} : vector<4x32xf32> to vector<2x32xf32>
    %84 = arith.addf %82, %83 : vector<2x32xf32>
    %85 = arith.negf %84 : vector<2x32xf32>
    %86 = math.exp %85 : vector<2x32xf32>
    %cst_39 = arith.constant 1.000000e+00 : f32
    %87 = vector.broadcast %cst_39 : f32 to vector<2x32xf32>
    %88 = arith.addf %87, %86 : vector<2x32xf32>
    %89 = arith.divf %87, %88 : vector<2x32xf32>
    %90 = vector.shape_cast %89 : vector<2x32xf32> to vector<2x1x32xf32>
    %91 = vector.broadcast %90 : vector<2x1x32xf32> to vector<2x256x32xf32>
    %92 = arith.mulf %68, %91 : vector<2x256x32xf32>
    %93 = vector.shape_cast %92 : vector<2x256x32xf32> to vector<2x16x16x32xf32>
    %cst_40 = arith.constant dense<0.000000e+00> : vector<2x16x16xf32>
    %94 = vector.multi_reduction <add>, %93, %cst_40 [3] : vector<2x16x16x32xf32> to vector<2x16x16xf32>
    %cst_41 = arith.constant 3.200000e+01 : f32
    %95 = vector.broadcast %cst_41 : f32 to vector<2x16x16xf32>
    %96 = arith.divf %94, %95 : vector<2x16x16xf32>
    %cst_42 = arith.constant dense<0xFF800000> : vector<2x16x16xf32>
    %97 = vector.multi_reduction <maximumf>, %93, %cst_42 [3] : vector<2x16x16x32xf32> to vector<2x16x16xf32>
    %cst_43 = arith.constant 0.000000e+00 : f32
    %98 = vector.broadcast %cst_43 : f32 to vector<2x16x16xf32>
    %cst_44 = arith.constant 0.000000e+00 : f32
    %99 = vector.broadcast %cst_44 : f32 to vector<2x1x16xf32>
    %100 = vector.extract_strided_slice %96 {offsets = [0, 0, 0], sizes = [2, 15, 16], strides = [1, 1, 1]} : vector<2x16x16xf32> to vector<2x15x16xf32>
    %101 = tpu.concatenate %99, %100 in 1 : vector<2x1x16xf32>, vector<2x15x16xf32> -> vector<2x16x16xf32>
    %cst_45 = arith.constant 0.000000e+00 : f32
    %102 = vector.broadcast %cst_45 : f32 to vector<2x1x16xf32>
    %103 = vector.extract_strided_slice %97 {offsets = [0, 0, 0], sizes = [2, 15, 16], strides = [1, 1, 1]} : vector<2x16x16xf32> to vector<2x15x16xf32>
    %104 = tpu.concatenate %102, %103 in 1 : vector<2x1x16xf32>, vector<2x15x16xf32> -> vector<2x16x16xf32>
    %cst_46 = arith.constant 0.000000e+00 : f32
    %105 = vector.broadcast %cst_46 : f32 to vector<2x16x1xf32>
    %106 = vector.extract_strided_slice %101 {offsets = [0, 0, 0], sizes = [2, 16, 15], strides = [1, 1, 1]} : vector<2x16x16xf32> to vector<2x16x15xf32>
    %107 = tpu.concatenate %105, %106 in 2 : vector<2x16x1xf32>, vector<2x16x15xf32> -> vector<2x16x16xf32>
    %c0_47 = arith.constant 0 : index
    %108 = memref.load %arg7[%c0_47] : memref<18xf32, #tpu.memory_space<smem>>
    %109 = vector.broadcast %108 : f32 to vector<2x16x16xf32>
    %110 = arith.mulf %107, %109 : vector<2x16x16xf32>
    %111 = arith.addf %98, %110 : vector<2x16x16xf32>
    %cst_48 = arith.constant 0.000000e+00 : f32
    %112 = vector.broadcast %cst_48 : f32 to vector<2x16x1xf32>
    %113 = vector.extract_strided_slice %104 {offsets = [0, 0, 0], sizes = [2, 16, 15], strides = [1, 1, 1]} : vector<2x16x16xf32> to vector<2x16x15xf32>
    %114 = tpu.concatenate %112, %113 in 2 : vector<2x16x1xf32>, vector<2x16x15xf32> -> vector<2x16x16xf32>
    %c1 = arith.constant 1 : index
    %115 = memref.load %arg7[%c1] : memref<18xf32, #tpu.memory_space<smem>>
    %116 = vector.broadcast %115 : f32 to vector<2x16x16xf32>
    %117 = arith.mulf %114, %116 : vector<2x16x16xf32>
    %118 = arith.addf %111, %117 : vector<2x16x16xf32>
    %c2 = arith.constant 2 : index
    %119 = memref.load %arg7[%c2] : memref<18xf32, #tpu.memory_space<smem>>
    %120 = vector.broadcast %119 : f32 to vector<2x16x16xf32>
    %121 = arith.mulf %101, %120 : vector<2x16x16xf32>
    %122 = arith.addf %118, %121 : vector<2x16x16xf32>
    %c3 = arith.constant 3 : index
    %123 = memref.load %arg7[%c3] : memref<18xf32, #tpu.memory_space<smem>>
    %124 = vector.broadcast %123 : f32 to vector<2x16x16xf32>
    %125 = arith.mulf %104, %124 : vector<2x16x16xf32>
    %126 = arith.addf %122, %125 : vector<2x16x16xf32>
    %cst_49 = arith.constant 0.000000e+00 : f32
    %127 = vector.broadcast %cst_49 : f32 to vector<2x16x1xf32>
    %128 = vector.extract_strided_slice %101 {offsets = [0, 0, 1], sizes = [2, 16, 15], strides = [1, 1, 1]} : vector<2x16x16xf32> to vector<2x16x15xf32>
    %129 = tpu.concatenate %128, %127 in 2 : vector<2x16x15xf32>, vector<2x16x1xf32> -> vector<2x16x16xf32>
    %c4 = arith.constant 4 : index
    %130 = memref.load %arg7[%c4] : memref<18xf32, #tpu.memory_space<smem>>
    %131 = vector.broadcast %130 : f32 to vector<2x16x16xf32>
    %132 = arith.mulf %129, %131 : vector<2x16x16xf32>
    %133 = arith.addf %126, %132 : vector<2x16x16xf32>
    %cst_50 = arith.constant 0.000000e+00 : f32
    %134 = vector.broadcast %cst_50 : f32 to vector<2x16x1xf32>
    %135 = vector.extract_strided_slice %104 {offsets = [0, 0, 1], sizes = [2, 16, 15], strides = [1, 1, 1]} : vector<2x16x16xf32> to vector<2x16x15xf32>
    %136 = tpu.concatenate %135, %134 in 2 : vector<2x16x15xf32>, vector<2x16x1xf32> -> vector<2x16x16xf32>
    %c5 = arith.constant 5 : index
    %137 = memref.load %arg7[%c5] : memref<18xf32, #tpu.memory_space<smem>>
    %138 = vector.broadcast %137 : f32 to vector<2x16x16xf32>
    %139 = arith.mulf %136, %138 : vector<2x16x16xf32>
    %140 = arith.addf %133, %139 : vector<2x16x16xf32>
    %cst_51 = arith.constant 0.000000e+00 : f32
    %141 = vector.broadcast %cst_51 : f32 to vector<2x16x1xf32>
    %142 = vector.extract_strided_slice %96 {offsets = [0, 0, 0], sizes = [2, 16, 15], strides = [1, 1, 1]} : vector<2x16x16xf32> to vector<2x16x15xf32>
    %143 = tpu.concatenate %141, %142 in 2 : vector<2x16x1xf32>, vector<2x16x15xf32> -> vector<2x16x16xf32>
    %c6 = arith.constant 6 : index
    %144 = memref.load %arg7[%c6] : memref<18xf32, #tpu.memory_space<smem>>
    %145 = vector.broadcast %144 : f32 to vector<2x16x16xf32>
    %146 = arith.mulf %143, %145 : vector<2x16x16xf32>
    %147 = arith.addf %140, %146 : vector<2x16x16xf32>
    %cst_52 = arith.constant 0.000000e+00 : f32
    %148 = vector.broadcast %cst_52 : f32 to vector<2x16x1xf32>
    %149 = vector.extract_strided_slice %97 {offsets = [0, 0, 0], sizes = [2, 16, 15], strides = [1, 1, 1]} : vector<2x16x16xf32> to vector<2x16x15xf32>
    %150 = tpu.concatenate %148, %149 in 2 : vector<2x16x1xf32>, vector<2x16x15xf32> -> vector<2x16x16xf32>
    %c7 = arith.constant 7 : index
    %151 = memref.load %arg7[%c7] : memref<18xf32, #tpu.memory_space<smem>>
    %152 = vector.broadcast %151 : f32 to vector<2x16x16xf32>
    %153 = arith.mulf %150, %152 : vector<2x16x16xf32>
    %154 = arith.addf %147, %153 : vector<2x16x16xf32>
    %c8 = arith.constant 8 : index
    %155 = memref.load %arg7[%c8] : memref<18xf32, #tpu.memory_space<smem>>
    %156 = vector.broadcast %155 : f32 to vector<2x16x16xf32>
    %157 = arith.mulf %96, %156 : vector<2x16x16xf32>
    %158 = arith.addf %154, %157 : vector<2x16x16xf32>
    %c9 = arith.constant 9 : index
    %159 = memref.load %arg7[%c9] : memref<18xf32, #tpu.memory_space<smem>>
    %160 = vector.broadcast %159 : f32 to vector<2x16x16xf32>
    %161 = arith.mulf %97, %160 : vector<2x16x16xf32>
    %162 = arith.addf %158, %161 : vector<2x16x16xf32>
    %cst_53 = arith.constant 0.000000e+00 : f32
    %163 = vector.broadcast %cst_53 : f32 to vector<2x16x1xf32>
    %164 = vector.extract_strided_slice %96 {offsets = [0, 0, 1], sizes = [2, 16, 15], strides = [1, 1, 1]} : vector<2x16x16xf32> to vector<2x16x15xf32>
    %165 = tpu.concatenate %164, %163 in 2 : vector<2x16x15xf32>, vector<2x16x1xf32> -> vector<2x16x16xf32>
    %c10 = arith.constant 10 : index
    %166 = memref.load %arg7[%c10] : memref<18xf32, #tpu.memory_space<smem>>
    %167 = vector.broadcast %166 : f32 to vector<2x16x16xf32>
    %168 = arith.mulf %165, %167 : vector<2x16x16xf32>
    %169 = arith.addf %162, %168 : vector<2x16x16xf32>
    %cst_54 = arith.constant 0.000000e+00 : f32
    %170 = vector.broadcast %cst_54 : f32 to vector<2x16x1xf32>
    %171 = vector.extract_strided_slice %97 {offsets = [0, 0, 1], sizes = [2, 16, 15], strides = [1, 1, 1]} : vector<2x16x16xf32> to vector<2x16x15xf32>
    %172 = tpu.concatenate %171, %170 in 2 : vector<2x16x15xf32>, vector<2x16x1xf32> -> vector<2x16x16xf32>
    %c11 = arith.constant 11 : index
    %173 = memref.load %arg7[%c11] : memref<18xf32, #tpu.memory_space<smem>>
    %174 = vector.broadcast %173 : f32 to vector<2x16x16xf32>
    %175 = arith.mulf %172, %174 : vector<2x16x16xf32>
    %176 = arith.addf %169, %175 : vector<2x16x16xf32>
    %cst_55 = arith.constant 0.000000e+00 : f32
    %177 = vector.broadcast %cst_55 : f32 to vector<2x1x16xf32>
    %178 = vector.extract_strided_slice %96 {offsets = [0, 1, 0], sizes = [2, 15, 16], strides = [1, 1, 1]} : vector<2x16x16xf32> to vector<2x15x16xf32>
    %179 = tpu.concatenate %178, %177 in 1 : vector<2x15x16xf32>, vector<2x1x16xf32> -> vector<2x16x16xf32>
    %cst_56 = arith.constant 0.000000e+00 : f32
    %180 = vector.broadcast %cst_56 : f32 to vector<2x1x16xf32>
    %181 = vector.extract_strided_slice %97 {offsets = [0, 1, 0], sizes = [2, 15, 16], strides = [1, 1, 1]} : vector<2x16x16xf32> to vector<2x15x16xf32>
    %182 = tpu.concatenate %181, %180 in 1 : vector<2x15x16xf32>, vector<2x1x16xf32> -> vector<2x16x16xf32>
    %cst_57 = arith.constant 0.000000e+00 : f32
    %183 = vector.broadcast %cst_57 : f32 to vector<2x16x1xf32>
    %184 = vector.extract_strided_slice %179 {offsets = [0, 0, 0], sizes = [2, 16, 15], strides = [1, 1, 1]} : vector<2x16x16xf32> to vector<2x16x15xf32>
    %185 = tpu.concatenate %183, %184 in 2 : vector<2x16x1xf32>, vector<2x16x15xf32> -> vector<2x16x16xf32>
    %c12 = arith.constant 12 : index
    %186 = memref.load %arg7[%c12] : memref<18xf32, #tpu.memory_space<smem>>
    %187 = vector.broadcast %186 : f32 to vector<2x16x16xf32>
    %188 = arith.mulf %185, %187 : vector<2x16x16xf32>
    %189 = arith.addf %176, %188 : vector<2x16x16xf32>
    %cst_58 = arith.constant 0.000000e+00 : f32
    %190 = vector.broadcast %cst_58 : f32 to vector<2x16x1xf32>
    %191 = vector.extract_strided_slice %182 {offsets = [0, 0, 0], sizes = [2, 16, 15], strides = [1, 1, 1]} : vector<2x16x16xf32> to vector<2x16x15xf32>
    %192 = tpu.concatenate %190, %191 in 2 : vector<2x16x1xf32>, vector<2x16x15xf32> -> vector<2x16x16xf32>
    %c13 = arith.constant 13 : index
    %193 = memref.load %arg7[%c13] : memref<18xf32, #tpu.memory_space<smem>>
    %194 = vector.broadcast %193 : f32 to vector<2x16x16xf32>
    %195 = arith.mulf %192, %194 : vector<2x16x16xf32>
    %196 = arith.addf %189, %195 : vector<2x16x16xf32>
    %c14 = arith.constant 14 : index
    %197 = memref.load %arg7[%c14] : memref<18xf32, #tpu.memory_space<smem>>
    %198 = vector.broadcast %197 : f32 to vector<2x16x16xf32>
    %199 = arith.mulf %179, %198 : vector<2x16x16xf32>
    %200 = arith.addf %196, %199 : vector<2x16x16xf32>
    %c15 = arith.constant 15 : index
    %201 = memref.load %arg7[%c15] : memref<18xf32, #tpu.memory_space<smem>>
    %202 = vector.broadcast %201 : f32 to vector<2x16x16xf32>
    %203 = arith.mulf %182, %202 : vector<2x16x16xf32>
    %204 = arith.addf %200, %203 : vector<2x16x16xf32>
    %cst_59 = arith.constant 0.000000e+00 : f32
    %205 = vector.broadcast %cst_59 : f32 to vector<2x16x1xf32>
    %206 = vector.extract_strided_slice %179 {offsets = [0, 0, 1], sizes = [2, 16, 15], strides = [1, 1, 1]} : vector<2x16x16xf32> to vector<2x16x15xf32>
    %207 = tpu.concatenate %206, %205 in 2 : vector<2x16x15xf32>, vector<2x16x1xf32> -> vector<2x16x16xf32>
    %c16 = arith.constant 16 : index
    %208 = memref.load %arg7[%c16] : memref<18xf32, #tpu.memory_space<smem>>
    %209 = vector.broadcast %208 : f32 to vector<2x16x16xf32>
    %210 = arith.mulf %207, %209 : vector<2x16x16xf32>
    %211 = arith.addf %204, %210 : vector<2x16x16xf32>
    %cst_60 = arith.constant 0.000000e+00 : f32
    %212 = vector.broadcast %cst_60 : f32 to vector<2x16x1xf32>
    %213 = vector.extract_strided_slice %182 {offsets = [0, 0, 1], sizes = [2, 16, 15], strides = [1, 1, 1]} : vector<2x16x16xf32> to vector<2x16x15xf32>
    %214 = tpu.concatenate %213, %212 in 2 : vector<2x16x15xf32>, vector<2x16x1xf32> -> vector<2x16x16xf32>
    %c17 = arith.constant 17 : index
    %215 = memref.load %arg7[%c17] : memref<18xf32, #tpu.memory_space<smem>>
    %216 = vector.broadcast %215 : f32 to vector<2x16x16xf32>
    %217 = arith.mulf %214, %216 : vector<2x16x16xf32>
    %218 = arith.addf %211, %217 : vector<2x16x16xf32>
    %c0_61 = arith.constant 0 : index
    %219 = memref.load %arg8[%c0_61] : memref<1xf32, #tpu.memory_space<smem>>
    %220 = vector.broadcast %219 : f32 to vector<2x16x16xf32>
    %221 = arith.addf %218, %220 : vector<2x16x16xf32>
    %222 = arith.negf %221 : vector<2x16x16xf32>
    %223 = math.exp %222 : vector<2x16x16xf32>
    %cst_62 = arith.constant 1.000000e+00 : f32
    %224 = vector.broadcast %cst_62 : f32 to vector<2x16x16xf32>
    %225 = arith.addf %224, %223 : vector<2x16x16xf32>
    %226 = arith.divf %224, %225 : vector<2x16x16xf32>
    %227 = vector.shape_cast %226 : vector<2x16x16xf32> to vector<2x16x16x1xf32>
    %228 = vector.broadcast %227 : vector<2x16x16x1xf32> to vector<2x16x16x32xf32>
    %229 = arith.mulf %93, %228 : vector<2x16x16x32xf32>
    %230 = arith.addf %229, %0 : vector<2x16x16x32xf32>
    %cst_63 = arith.constant 0.000000e+00 : f32
    %231 = vector.broadcast %cst_63 : f32 to vector<2x16x16x32xf32>
    %232 = arith.maximumf %230, %231 : vector<2x16x16x32xf32>
    %c0_64 = arith.constant 0 : index
    %c0_65 = arith.constant 0 : index
    %c0_66 = arith.constant 0 : index
    %c0_67 = arith.constant 0 : index
    %233 = vector.load %arg9[%c0_64, %c0_65, %c0_66, %c0_67] : memref<2x16x16x32xf32, #tpu.memory_space<vmem>>, vector<2x16x16x32xf32>
    tpu.vector_store %arg9[%c0_64, %c0_65, %c0_66, %c0_67], %232 {strides = array<i32>} : memref<2x16x16x32xf32, #tpu.memory_space<vmem>>, vector<2x16x16x32xf32>,
    return
  }
}

</mosaic_0001>

<llo_original>
// kernel: tpu_custom_call.1
$region0: #{tpu_custom_call.1}
  #allocation0 [shape = 'u32[]', space=smem, size = 0x4, offset = 0x4, fixed_abs, tag = 'smem constant byte address 0x4 - core index']
  #allocation1 [shape = 'u32[72,128]{1,0:T(1,128)}', space=vmem, size = 0x9000, scoped, tag = 'internal scratch']
  #allocation2 [shape = 'f32[1]{0:T(128)S(6)}', space=smem, size = 0x200, scoped, tag = 'scoped memory for tpu_custom_call.1']
  %s0 = inlined_call_operand.hbm [shape: f32[2,16,16,32], index: 0, kind: input, shape index: {}]
  %s1 = inlined_call_operand.vmem [shape: bf16[288,32], index: 1, kind: input, shape index: {}]
  %s2 = inlined_call_operand.vmem [shape: f32[1,32], index: 2, kind: input, shape index: {}]
  %s3 = inlined_call_operand.vmem [shape: bf16[288,32], index: 3, kind: input, shape index: {}]
  %s4 = inlined_call_operand.vmem [shape: f32[1,32], index: 4, kind: input, shape index: {}]
  %s5 = inlined_call_operand.vmem [shape: bf16[32,2], index: 5, kind: input, shape index: {}]
  %s6 = inlined_call_operand.vmem [shape: bf16[2,32], index: 6, kind: input, shape index: {}]
  %s7 = inlined_call_operand.vmem [shape: f32[18], index: 7, kind: input, shape index: {}]
  %s8 = inlined_call_operand.<no memory space> [shape: f32[1], index: 8, kind: input, shape index: {}]
  %s9 = inlined_call_operand.hbm [shape: f32[2,16,16,32], index: 9, kind: output, shape index: {}]
  %s10 = sld [smem:[#allocation0]]
  $region54: #{tpu_custom_call.1} parent=0
    _
  %s12 = ssub.s32 1, %s10
  %s13 = scalar_select 0, %s12, %s10
  %14 = sst [smem:[#allocation2]] %s8
  $region1: #{tpu_custom_call.1} parent=0
    #allocation3 [shape = 'u8[262144]{0}', space=vmem, size = 0x40000, scoped, tag = 'input window, operand 0, single buffered']
    #allocation4 [shape = 's32[1]{0}', space=sflag, size = 0x4, scoped, tag = 'scoped memory for tpu_custom_call.1']
    #allocation5 [shape = 's32[1]{0}', space=sflag, size = 0x4, scoped, tag = 'scoped memory for tpu_custom_call.1']
    #allocation6 [shape = 's32[1]{0}', space=sflag, size = 0x4, scoped, tag = 'scoped memory for tpu_custom_call.1']
    #allocation7 [shape = 'u8[512]{0}', space=smem, size = 0x200, scoped, tag = 'input window, operand 7, single buffered']
    #allocation8 [shape = 'u8[262144]{0}', space=vmem, size = 0x40000, scoped, tag = 'output window, operand 0, single buffered']
    %15 = vsyncpa [#allocation4], 0
    %16 = vsyncpa [#allocation6], 0
    %17 = vsyncpa [#allocation5], 0
    // Predicated region
    $region2: #{tpu_custom_call.1} parent=1 // pred_check
      _
    $region3: #{tpu_custom_call.1} parent=1 // pred_check_branch
      %19 = sbr.rel (0) target = $region5
    $region4: #{tpu_custom_call.1} parent=1 // pred_region
      %21 = vsyncadd [#allocation4], 0
      %s22 = sshll.u32 %s0, 4
      %s23 = int_to_ptr.hbm [resolvable:$true] %s22
      %s24 = sshll.u32 [#allocation3], 4
      %s25 = int_to_ptr.vmem [resolvable:$true] %s24
      %30 = dma.hbm_to_vmem [thread:$0]  %s23, 8192, %s25, [#allocation4], 128, 128, 8
    $region5: #{tpu_custom_call.1} parent=1 // pred_fallthru
      _
    // Predicated region
    $region6: #{tpu_custom_call.1} parent=1 // pred_check
      _
    $region7: #{tpu_custom_call.1} parent=1 // pred_check_branch
      %32 = sbr.rel (0) target = $region9
    $region8: #{tpu_custom_call.1} parent=1 // pred_region
      _
    $region9: #{tpu_custom_call.1} parent=1 // pred_fallthru
      _
    // Predicated region
    $region10: #{tpu_custom_call.1} parent=1 // pred_check
      _
    $region11: #{tpu_custom_call.1} parent=1 // pred_check_branch
      %34 = sbr.rel (0) target = $region13
    $region12: #{tpu_custom_call.1} parent=1 // pred_region
      _
    $region13: #{tpu_custom_call.1} parent=1 // pred_fallthru
      _
    // Predicated region
    $region14: #{tpu_custom_call.1} parent=1 // pred_check
      _
    $region15: #{tpu_custom_call.1} parent=1 // pred_check_branch
      %36 = sbr.rel (0) target = $region17
    $region16: #{tpu_custom_call.1} parent=1 // pred_region
      _
    $region17: #{tpu_custom_call.1} parent=1 // pred_fallthru
      _
    // Predicated region
    $region18: #{tpu_custom_call.1} parent=1 // pred_check
      _
    $region19: #{tpu_custom_call.1} parent=1 // pred_check_branch
      %38 = sbr.rel (0) target = $region21
    $region20: #{tpu_custom_call.1} parent=1 // pred_region
      _
    $region21: #{tpu_custom_call.1} parent=1 // pred_fallthru
      _
    // Predicated region
    $region22: #{tpu_custom_call.1} parent=1 // pred_check
      _
    $region23: #{tpu_custom_call.1} parent=1 // pred_check_branch
      %40 = sbr.rel (0) target = $region25
    $region24: #{tpu_custom_call.1} parent=1 // pred_region
      _
    $region25: #{tpu_custom_call.1} parent=1 // pred_fallthru
      _
    // Predicated region
    $region26: #{tpu_custom_call.1} parent=1 // pred_check
      _
    $region27: #{tpu_custom_call.1} parent=1 // pred_check_branch
      %42 = sbr.rel (0) target = $region29
    $region28: #{tpu_custom_call.1} parent=1 // pred_region
      _
    $region29: #{tpu_custom_call.1} parent=1 // pred_fallthru
      _
    // Predicated region
    $region30: #{tpu_custom_call.1} parent=1 // pred_check
      _
    $region31: #{tpu_custom_call.1} parent=1 // pred_check_branch
      %44 = sbr.rel (0) target = $region33
    $region32: #{tpu_custom_call.1} parent=1 // pred_region
      %46 = vsyncadd [#allocation6], 0
      %s48 = sshll.u32 %s7, 4
      %s49 = int_to_ptr.vmem [resolvable:$true] %s48
      %51 = dma.vmem_to_smem %s49, 16, [#allocation7], [#allocation6]
    $region33: #{tpu_custom_call.1} parent=1 // pred_fallthru
      _
    // Predicated region
    $region34: #{tpu_custom_call.1} parent=1 // pred_check
      _
    $region35: #{tpu_custom_call.1} parent=1 // pred_check_branch
      %53 = sbr.rel (0) target = $region37
    $region36: #{tpu_custom_call.1} parent=1 // pred_region
      _
    $region37: #{tpu_custom_call.1} parent=1 // pred_fallthru
      _
    // Predicated region
    $region38: #{tpu_custom_call.1} parent=1 // pred_check
      _
    $region39: #{tpu_custom_call.1} parent=1 // pred_check_branch
      %55 = sbr.rel (0) target = $region41
    $region40: #{tpu_custom_call.1} parent=1 // pred_region
      %57 = dma.done [#allocation4], 8192
    $region41: #{tpu_custom_call.1} parent=1 // pred_fallthru
      _
    // Predicated region
    $region42: #{tpu_custom_call.1} parent=1 // pred_check
      _
    $region43: #{tpu_custom_call.1} parent=1 // pred_check_branch
      %59 = sbr.rel (0) target = $region45
    $region44: #{tpu_custom_call.1} parent=1 // pred_region
      %61 = dma.done [#allocation6], 16
    $region45: #{tpu_custom_call.1} parent=1 // pred_fallthru
      _
    %62 = sfence
    %v64 = vld [vmem:[#allocation3] sm:$0xff]
    %v65 = vld [vmem:[#allocation3 + $0x8] sm:$0xff]
    %v66 = vld [vmem:[#allocation3 + $0x10] sm:$0xff]
    %v67 = vld [vmem:[#allocation3 + $0x18] sm:$0xff]
    %v68 = vld [vmem:[#allocation3 + $0x20] sm:$0xff]
    %v69 = vld [vmem:[#allocation3 + $0x28] sm:$0xff]
    %v70 = vld [vmem:[#allocation3 + $0x30] sm:$0xff]
    %v71 = vld [vmem:[#allocation3 + $0x38] sm:$0xff]
    %v72 = vld [vmem:[#allocation3 + $0x40] sm:$0xff]
    %v73 = vld [vmem:[#allocation3 + $0x48] sm:$0xff]
    %v74 = vld [vmem:[#allocation3 + $0x50] sm:$0xff]
    %v75 = vld [vmem:[#allocation3 + $0x58] sm:$0xff]
    %v76 = vld [vmem:[#allocation3 + $0x60] sm:$0xff]
    %v77 = vld [vmem:[#allocation3 + $0x68] sm:$0xff]
    %v78 = vld [vmem:[#allocation3 + $0x70] sm:$0xff]
    %v79 = vld [vmem:[#allocation3 + $0x78] sm:$0xff]
    %v80 = vld [vmem:[#allocation3 + $0x80] sm:$0xff]
    %v81 = vld [vmem:[#allocation3 + $0x88] sm:$0xff]
    %v82 = vld [vmem:[#allocation3 + $0x90] sm:$0xff]
    %v83 = vld [vmem:[#allocation3 + $0x98] sm:$0xff]
    %v84 = vld [vmem:[#allocation3 + $0xa0] sm:$0xff]
    %v85 = vld [vmem:[#allocation3 + $0xa8] sm:$0xff]
    %v86 = vld [vmem:[#allocation3 + $0xb0] sm:$0xff]
    %v87 = vld [vmem:[#allocation3 + $0xb8] sm:$0xff]
    %v88 = vld [vmem:[#allocation3 + $0xc0] sm:$0xff]
    %v89 = vld [vmem:[#allocation3 + $0xc8] sm:$0xff]
    %v90 = vld [vmem:[#allocation3 + $0xd0] sm:$0xff]
    %v91 = vld [vmem:[#allocation3 + $0xd8] sm:$0xff]
    %v92 = vld [vmem:[#allocation3 + $0xe0] sm:$0xff]
    %v93 = vld [vmem:[#allocation3 + $0xe8] sm:$0xff]
    %v94 = vld [vmem:[#allocation3 + $0xf0] sm:$0xff]
    %v95 = vld [vmem:[#allocation3 + $0xf8] sm:$0xff]
    %v96 = vld [vmem:[#allocation3 + $0x100] sm:$0xff]
    %v97 = vld [vmem:[#allocation3 + $0x108] sm:$0xff]
    %v98 = vld [vmem:[#allocation3 + $0x110] sm:$0xff]
    %v99 = vld [vmem:[#allocation3 + $0x118] sm:$0xff]
    %v100 = vld [vmem:[#allocation3 + $0x120] sm:$0xff]
    %v101 = vld [vmem:[#allocation3 + $0x128] sm:$0xff]
    %v102 = vld [vmem:[#allocation3 + $0x130] sm:$0xff]
    %v103 = vld [vmem:[#allocation3 + $0x138] sm:$0xff]
    %v104 = vld [vmem:[#allocation3 + $0x140] sm:$0xff]
    %v105 = vld [vmem:[#allocation3 + $0x148] sm:$0xff]
    %v106 = vld [vmem:[#allocation3 + $0x150] sm:$0xff]
    %v107 = vld [vmem:[#allocation3 + $0x158] sm:$0xff]
    %v108 = vld [vmem:[#allocation3 + $0x160] sm:$0xff]
    %v109 = vld [vmem:[#allocation3 + $0x168] sm:$0xff]
    %v110 = vld [vmem:[#allocation3 + $0x170] sm:$0xff]
    %v111 = vld [vmem:[#allocation3 + $0x178] sm:$0xff]
    %v112 = vld [vmem:[#allocation3 + $0x180] sm:$0xff]
    %v113 = vld [vmem:[#allocation3 + $0x188] sm:$0xff]
    %v114 = vld [vmem:[#allocation3 + $0x190] sm:$0xff]
    %v115 = vld [vmem:[#allocation3 + $0x198] sm:$0xff]
    %v116 = vld [vmem:[#allocation3 + $0x1a0] sm:$0xff]
    %v117 = vld [vmem:[#allocation3 + $0x1a8] sm:$0xff]
    %v118 = vld [vmem:[#allocation3 + $0x1b0] sm:$0xff]
    %v119 = vld [vmem:[#allocation3 + $0x1b8] sm:$0xff]
    %v120 = vld [vmem:[#allocation3 + $0x1c0] sm:$0xff]
    %v121 = vld [vmem:[#allocation3 + $0x1c8] sm:$0xff]
    %v122 = vld [vmem:[#allocation3 + $0x1d0] sm:$0xff]
    %v123 = vld [vmem:[#allocation3 + $0x1d8] sm:$0xff]
    %v124 = vld [vmem:[#allocation3 + $0x1e0] sm:$0xff]
    %v125 = vld [vmem:[#allocation3 + $0x1e8] sm:$0xff]
    %v126 = vld [vmem:[#allocation3 + $0x1f0] sm:$0xff]
    %v127 = vld [vmem:[#allocation3 + $0x1f8] sm:$0xff]
    %v128 = vpack.c.bf16 %v64, %v64
    %v129 = vpack.c.bf16 %v65, %v65
    %v130 = vpack.c.bf16 %v66, %v66
    %v131 = vpack.c.bf16 %v67, %v67
    %v132 = vpack.c.bf16 %v68, %v68
    %v133 = vpack.c.bf16 %v69, %v69
    %v134 = vpack.c.bf16 %v70, %v70
    %v135 = vpack.c.bf16 %v71, %v71
    %v136 = vpack.c.bf16 %v72, %v72
    %v137 = vpack.c.bf16 %v73, %v73
    %v138 = vpack.c.bf16 %v74, %v74
    %v139 = vpack.c.bf16 %v75, %v75
    %v140 = vpack.c.bf16 %v76, %v76
    %v141 = vpack.c.bf16 %v77, %v77
    %v142 = vpack.c.bf16 %v78, %v78
    %v143 = vpack.c.bf16 %v79, %v79
    %v144 = vpack.c.bf16 %v80, %v80
    %v145 = vpack.c.bf16 %v81, %v81
    %v146 = vpack.c.bf16 %v82, %v82
    %v147 = vpack.c.bf16 %v83, %v83
    %v148 = vpack.c.bf16 %v84, %v84
    %v149 = vpack.c.bf16 %v85, %v85
    %v150 = vpack.c.bf16 %v86, %v86
    %v151 = vpack.c.bf16 %v87, %v87
    %v152 = vpack.c.bf16 %v88, %v88
    %v153 = vpack.c.bf16 %v89, %v89
    %v154 = vpack.c.bf16 %v90, %v90
    %v155 = vpack.c.bf16 %v91, %v91
    %v156 = vpack.c.bf16 %v92, %v92
    %v157 = vpack.c.bf16 %v93, %v93
    %v158 = vpack.c.bf16 %v94, %v94
    %v159 = vpack.c.bf16 %v95, %v95
    %v160 = vpack.c.bf16 %v96, %v96
    %v161 = vpack.c.bf16 %v97, %v97
    %v162 = vpack.c.bf16 %v98, %v98
    %v163 = vpack.c.bf16 %v99, %v99
    %v164 = vpack.c.bf16 %v100, %v100
    %v165 = vpack.c.bf16 %v101, %v101
    %v166 = vpack.c.bf16 %v102, %v102
    %v167 = vpack.c.bf16 %v103, %v103
    %v168 = vpack.c.bf16 %v104, %v104
    %v169 = vpack.c.bf16 %v105, %v105
    %v170 = vpack.c.bf16 %v106, %v106
    %v171 = vpack.c.bf16 %v107, %v107
    %v172 = vpack.c.bf16 %v108, %v108
    %v173 = vpack.c.bf16 %v109, %v109
    %v174 = vpack.c.bf16 %v110, %v110
    %v175 = vpack.c.bf16 %v111, %v111
    %v176 = vpack.c.bf16 %v112, %v112
    %v177 = vpack.c.bf16 %v113, %v113
    %v178 = vpack.c.bf16 %v114, %v114
    %v179 = vpack.c.bf16 %v115, %v115
    %v180 = vpack.c.bf16 %v116, %v116
    %v181 = vpack.c.bf16 %v117, %v117
    %v182 = vpack.c.bf16 %v118, %v118
    %v183 = vpack.c.bf16 %v119, %v119
    %v184 = vpack.c.bf16 %v120, %v120
    %v185 = vpack.c.bf16 %v121, %v121
    %v186 = vpack.c.bf16 %v122, %v122
    %v187 = vpack.c.bf16 %v123, %v123
    %v188 = vpack.c.bf16 %v124, %v124
    %v189 = vpack.c.bf16 %v125, %v125
    %v190 = vpack.c.bf16 %v126, %v126
    %v191 = vpack.c.bf16 %v127, %v127
    %v252 = vunpack.c.l.b16 %v128
    %v253 = vunpack.c.l.b16 %v129
    %v254 = vunpack.c.l.b16 %v130
    %v255 = vunpack.c.l.b16 %v131
    %v256 = vunpack.c.l.b16 %v132
    %v257 = vunpack.c.l.b16 %v133
    %v258 = vunpack.c.l.b16 %v134
    %v259 = vunpack.c.l.b16 %v135
    %v260 = vunpack.c.l.b16 %v136
    %v261 = vunpack.c.l.b16 %v137
    %v262 = vunpack.c.l.b16 %v138
    %v263 = vunpack.c.l.b16 %v139
    %v264 = vunpack.c.l.b16 %v140
    %v265 = vunpack.c.l.b16 %v141
    %v266 = vunpack.c.l.b16 %v142
    %v267 = vunpack.c.l.b16 %v143
    %v268 = vunpack.c.l.b16 %v144
    %v269 = vunpack.c.l.b16 %v145
    %v270 = vunpack.c.l.b16 %v146
    %v271 = vunpack.c.l.b16 %v147
    %v272 = vunpack.c.l.b16 %v148
    %v273 = vunpack.c.l.b16 %v149
    %v274 = vunpack.c.l.b16 %v150
    %v275 = vunpack.c.l.b16 %v151
    %v276 = vunpack.c.l.b16 %v152
    %v277 = vunpack.c.l.b16 %v153
    %v278 = vunpack.c.l.b16 %v154
    %v279 = vunpack.c.l.b16 %v155
    %v280 = vunpack.c.l.b16 %v156
    %v281 = vunpack.c.l.b16 %v157
    %v282 = vunpack.c.l.b16 %v160
    %v283 = vunpack.c.l.b16 %v161
    %v284 = vunpack.c.l.b16 %v162
    %v285 = vunpack.c.l.b16 %v163
    %v286 = vunpack.c.l.b16 %v164
    %v287 = vunpack.c.l.b16 %v165
    %v288 = vunpack.c.l.b16 %v166
    %v289 = vunpack.c.l.b16 %v167
    %v290 = vunpack.c.l.b16 %v168
    %v291 = vunpack.c.l.b16 %v169
    %v292 = vunpack.c.l.b16 %v170
    %v293 = vunpack.c.l.b16 %v171
    %v294 = vunpack.c.l.b16 %v172
    %v295 = vunpack.c.l.b16 %v173
    %v296 = vunpack.c.l.b16 %v174
    %v297 = vunpack.c.l.b16 %v175
    %v298 = vunpack.c.l.b16 %v176
    %v299 = vunpack.c.l.b16 %v177
    %v300 = vunpack.c.l.b16 %v178
    %v301 = vunpack.c.l.b16 %v179
    %v302 = vunpack.c.l.b16 %v180
    %v303 = vunpack.c.l.b16 %v181
    %v304 = vunpack.c.l.b16 %v182
    %v305 = vunpack.c.l.b16 %v183
    %v306 = vunpack.c.l.b16 %v184
    %v307 = vunpack.c.l.b16 %v185
    %v308 = vunpack.c.l.b16 %v186
    %v309 = vunpack.c.l.b16 %v187
    %v310 = vunpack.c.l.b16 %v188
    %v311 = vunpack.c.l.b16 %v189
    %v312 = vpack.c.b16 %v253, %v252
    %v313 = vpack.c.b16 %v255, %v254
    %v314 = vpack.c.b16 %v257, %v256
    %v315 = vpack.c.b16 %v259, %v258
    %v316 = vpack.c.b16 %v261, %v260
    %v317 = vpack.c.b16 %v263, %v262
    %v318 = vpack.c.b16 %v265, %v264
    %v319 = vpack.c.b16 %v267, %v266
    %v320 = vpack.c.b16 %v269, %v268
    %v321 = vpack.c.b16 %v271, %v270
    %v322 = vpack.c.b16 %v273, %v272
    %v323 = vpack.c.b16 %v275, %v274
    %v324 = vpack.c.b16 %v277, %v276
    %v325 = vpack.c.b16 %v279, %v278
    %v326 = vpack.c.b16 %v281, %v280
    %v327 = vpack.c.b16 %v283, %v282
    %v328 = vpack.c.b16 %v285, %v284
    %v329 = vpack.c.b16 %v287, %v286
    %v330 = vpack.c.b16 %v289, %v288
    %v331 = vpack.c.b16 %v291, %v290
    %v332 = vpack.c.b16 %v293, %v292
    %v333 = vpack.c.b16 %v295, %v294
    %v334 = vpack.c.b16 %v297, %v296
    %v335 = vpack.c.b16 %v299, %v298
    %v336 = vpack.c.b16 %v301, %v300
    %v337 = vpack.c.b16 %v303, %v302
    %v338 = vpack.c.b16 %v305, %v304
    %v339 = vpack.c.b16 %v307, %v306
    %v340 = vpack.c.b16 %v309, %v308
    %v341 = vpack.c.b16 %v311, %v310
    %v343 = vshrl.u32 0, 16
    %v345 = vrot.slane %v343, 7
    %v346 = vshll.u32 0, 16
    %v348 = vor.u32 %v345, %v346
    %v350 = vshrl.u32 %v312, 16
    %v352 = vrot.slane %v350, 7
    %v353 = vshll.u32 %v312, 16
    %v355 = vor.u32 %v352, %v353
    %v357 = vshrl.u32 %v313, 16
    %v359 = vrot.slane %v357, 7
    %v360 = vshll.u32 %v313, 16
    %v362 = vor.u32 %v359, %v360
    %v364 = vshrl.u32 %v314, 16
    %v366 = vrot.slane %v364, 7
    %v367 = vshll.u32 %v314, 16
    %v369 = vor.u32 %v366, %v367
    %v371 = vshrl.u32 %v315, 16
    %v373 = vrot.slane %v371, 7
    %v374 = vshll.u32 %v315, 16
    %v376 = vor.u32 %v373, %v374
    %v378 = vshrl.u32 %v316, 16
    %v380 = vrot.slane %v378, 7
    %v381 = vshll.u32 %v316, 16
    %v383 = vor.u32 %v380, %v381
    %v385 = vshrl.u32 %v317, 16
    %v387 = vrot.slane %v385, 7
    %v388 = vshll.u32 %v317, 16
    %v390 = vor.u32 %v387, %v388
    %v392 = vshrl.u32 %v318, 16
    %v394 = vrot.slane %v392, 7
    %v395 = vshll.u32 %v318, 16
    %v397 = vor.u32 %v394, %v395
    %v399 = vshrl.u32 %v319, 16
    %v401 = vrot.slane %v399, 7
    %v402 = vshll.u32 %v319, 16
    %v404 = vor.u32 %v401, %v402
    %v406 = vshrl.u32 %v320, 16
    %v408 = vrot.slane %v406, 7
    %v409 = vshll.u32 %v320, 16
    %v411 = vor.u32 %v408, %v409
    %v413 = vshrl.u32 %v321, 16
    %v415 = vrot.slane %v413, 7
    %v416 = vshll.u32 %v321, 16
    %v418 = vor.u32 %v415, %v416
    %v420 = vshrl.u32 %v322, 16
    %v422 = vrot.slane %v420, 7
    %v423 = vshll.u32 %v322, 16
    %v425 = vor.u32 %v422, %v423
    %v427 = vshrl.u32 %v323, 16
    %v429 = vrot.slane %v427, 7
    %v430 = vshll.u32 %v323, 16
    %v432 = vor.u32 %v429, %v430
    %v434 = vshrl.u32 %v324, 16
    %v436 = vrot.slane %v434, 7
    %v437 = vshll.u32 %v324, 16
    %v439 = vor.u32 %v436, %v437
    %v441 = vshrl.u32 %v325, 16
    %v443 = vrot.slane %v441, 7
    %v444 = vshll.u32 %v325, 16
    %v446 = vor.u32 %v443, %v444
    %v448 = vshrl.u32 %v326, 16
    %v450 = vrot.slane %v448, 7
    %v451 = vshll.u32 %v326, 16
    %v453 = vor.u32 %v450, %v451
    %v455 = vshrl.u32 %v327, 16
    %v457 = vrot.slane %v455, 7
    %v458 = vshll.u32 %v327, 16
    %v460 = vor.u32 %v457, %v458
    %v462 = vshrl.u32 %v328, 16
    %v464 = vrot.slane %v462, 7
    %v465 = vshll.u32 %v328, 16
    %v467 = vor.u32 %v464, %v465
    %v469 = vshrl.u32 %v329, 16
    %v471 = vrot.slane %v469, 7
    %v472 = vshll.u32 %v329, 16
    %v474 = vor.u32 %v471, %v472
    %v476 = vshrl.u32 %v330, 16
    %v478 = vrot.slane %v476, 7
    %v479 = vshll.u32 %v330, 16
    %v481 = vor.u32 %v478, %v479
    %v483 = vshrl.u32 %v331, 16
    %v485 = vrot.slane %v483, 7
    %v486 = vshll.u32 %v331, 16
    %v488 = vor.u32 %v485, %v486
    %v490 = vshrl.u32 %v332, 16
    %v492 = vrot.slane %v490, 7
    %v493 = vshll.u32 %v332, 16
    %v495 = vor.u32 %v492, %v493
    %v497 = vshrl.u32 %v333, 16
    %v499 = vrot.slane %v497, 7
    %v500 = vshll.u32 %v333, 16
    %v502 = vor.u32 %v499, %v500
    %v504 = vshrl.u32 %v334, 16
    %v506 = vrot.slane %v504, 7
    %v507 = vshll.u32 %v334, 16
    %v509 = vor.u32 %v506, %v507
    %v511 = vshrl.u32 %v335, 16
    %v513 = vrot.slane %v511, 7
    %v514 = vshll.u32 %v335, 16
    %v516 = vor.u32 %v513, %v514
    %v518 = vshrl.u32 %v336, 16
    %v520 = vrot.slane %v518, 7
    %v521 = vshll.u32 %v336, 16
    %v523 = vor.u32 %v520, %v521
    %v525 = vshrl.u32 %v337, 16
    %v527 = vrot.slane %v525, 7
    %v528 = vshll.u32 %v337, 16
    %v530 = vor.u32 %v527, %v528
    %v532 = vshrl.u32 %v338, 16
    %v534 = vrot.slane %v532, 7
    %v535 = vshll.u32 %v338, 16
    %v537 = vor.u32 %v534, %v535
    %v539 = vshrl.u32 %v339, 16
    %v541 = vrot.slane %v539, 7
    %v542 = vshll.u32 %v339, 16
    %v544 = vor.u32 %v541, %v542
    %v546 = vshrl.u32 %v340, 16
    %v548 = vrot.slane %v546, 7
    %v549 = vshll.u32 %v340, 16
    %v551 = vor.u32 %v548, %v549
    %v553 = vshrl.u32 %v341, 16
    %v555 = vrot.slane %v553, 7
    %v556 = vshll.u32 %v341, 16
    %v558 = vor.u32 %v555, %v556
    %vm590 = vcmask 1040384
    %vm591 = vsmask.f32 256
    %vm592 = vmand %vm590, %vm591
    %v593 = vsel %vm592, 0, %v348
    %v594 = vsel %vm592, 0, %v355
    %v595 = vsel %vm592, 0, %v362
    %v596 = vsel %vm592, 0, %v369
    %v597 = vsel %vm592, 0, %v376
    %v598 = vsel %vm592, 0, %v383
    %v599 = vsel %vm592, 0, %v390
    %v600 = vsel %vm592, 0, %v397
    %v601 = vsel %vm592, 0, %v404
    %v602 = vsel %vm592, 0, %v411
    %v603 = vsel %vm592, 0, %v418
    %v604 = vsel %vm592, 0, %v425
    %v605 = vsel %vm592, 0, %v432
    %v606 = vsel %vm592, 0, %v439
    %v607 = vsel %vm592, 0, %v446
    %v608 = vsel %vm592, 0, %v453
    %v609 = vsel %vm592, 0, %v460
    %v610 = vsel %vm592, 0, %v467
    %v611 = vsel %vm592, 0, %v474
    %v612 = vsel %vm592, 0, %v481
    %v613 = vsel %vm592, 0, %v488
    %v614 = vsel %vm592, 0, %v495
    %v615 = vsel %vm592, 0, %v502
    %v616 = vsel %vm592, 0, %v509
    %v617 = vsel %vm592, 0, %v516
    %v618 = vsel %vm592, 0, %v523
    %v619 = vsel %vm592, 0, %v530
    %v620 = vsel %vm592, 0, %v537
    %v621 = vsel %vm592, 0, %v544
    %v622 = vsel %vm592, 0, %v551
    %v623 = vsel %vm592, 0, %v558
    %v624 = vrot.slane %v346, 1
    %v625 = vor.u32 %v343, %v624
    %v626 = vrot.slane %v353, 1
    %v627 = vor.u32 %v350, %v626
    %v628 = vrot.slane %v360, 1
    %v629 = vor.u32 %v357, %v628
    %v630 = vrot.slane %v367, 1
    %v631 = vor.u32 %v364, %v630
    %v632 = vrot.slane %v374, 1
    %v633 = vor.u32 %v371, %v632
    %v634 = vrot.slane %v381, 1
    %v635 = vor.u32 %v378, %v634
    %v636 = vrot.slane %v388, 1
    %v637 = vor.u32 %v385, %v636
    %v638 = vrot.slane %v395, 1
    %v639 = vor.u32 %v392, %v638
    %v640 = vrot.slane %v402, 1
    %v641 = vor.u32 %v399, %v640
    %v642 = vrot.slane %v409, 1
    %v643 = vor.u32 %v406, %v642
    %v644 = vrot.slane %v416, 1
    %v645 = vor.u32 %v413, %v644
    %v646 = vrot.slane %v423, 1
    %v647 = vor.u32 %v420, %v646
    %v648 = vrot.slane %v430, 1
    %v649 = vor.u32 %v427, %v648
    %v650 = vrot.slane %v437, 1
    %v651 = vor.u32 %v434, %v650
    %v652 = vrot.slane %v444, 1
    %v653 = vor.u32 %v441, %v652
    %v654 = vrot.slane %v451, 1
    %v655 = vor.u32 %v448, %v654
    %v656 = vrot.slane %v458, 1
    %v657 = vor.u32 %v455, %v656
    %v658 = vrot.slane %v465, 1
    %v659 = vor.u32 %v462, %v658
    %v660 = vrot.slane %v472, 1
    %v661 = vor.u32 %v469, %v660
    %v662 = vrot.slane %v479, 1
    %v663 = vor.u32 %v476, %v662
    %v664 = vrot.slane %v486, 1
    %v665 = vor.u32 %v483, %v664
    %v666 = vrot.slane %v493, 1
    %v667 = vor.u32 %v490, %v666
    %v668 = vrot.slane %v500, 1
    %v669 = vor.u32 %v497, %v668
    %v670 = vrot.slane %v507, 1
    %v671 = vor.u32 %v504, %v670
    %v672 = vrot.slane %v514, 1
    %v673 = vor.u32 %v511, %v672
    %v674 = vrot.slane %v521, 1
    %v675 = vor.u32 %v518, %v674
    %v676 = vrot.slane %v528, 1
    %v677 = vor.u32 %v525, %v676
    %v678 = vrot.slane %v535, 1
    %v679 = vor.u32 %v532, %v678
    %v680 = vrot.slane %v542, 1
    %v681 = vor.u32 %v539, %v680
    %v682 = vrot.slane %v549, 1
    %v683 = vor.u32 %v546, %v682
    %v684 = vrot.slane %v556, 1
    %v685 = vor.u32 %v553, %v684
    %vm717 = vcmask 1047552
    %vm718 = vsmask.f32 7424
    %vm719 = vmand %vm717, %vm718
    %v720 = vsel %vm719, %v625, 0
    %v721 = vsel %vm719, %v627, 0
    %v722 = vsel %vm719, %v629, 0
    %v723 = vsel %vm719, %v631, 0
    %v724 = vsel %vm719, %v633, 0
    %v725 = vsel %vm719, %v635, 0
    %v726 = vsel %vm719, %v637, 0
    %v727 = vsel %vm719, %v639, 0
    %v728 = vsel %vm719, %v641, 0
    %v729 = vsel %vm719, %v643, 0
    %v730 = vsel %vm719, %v645, 0
    %v731 = vsel %vm719, %v647, 0
    %v732 = vsel %vm719, %v649, 0
    %v733 = vsel %vm719, %v651, 0
    %v734 = vsel %vm719, %v653, 0
    %v735 = vsel %vm719, %v655, 0
    %v736 = vsel %vm719, %v657, 0
    %v737 = vsel %vm719, %v659, 0
    %v738 = vsel %vm719, %v661, 0
    %v739 = vsel %vm719, %v663, 0
    %v740 = vsel %vm719, %v665, 0
    %v741 = vsel %vm719, %v667, 0
    %v742 = vsel %vm719, %v669, 0
    %v743 = vsel %vm719, %v671, 0
    %v744 = vsel %vm719, %v673, 0
    %v745 = vsel %vm719, %v675, 0
    %v746 = vsel %vm719, %v677, 0
    %v747 = vsel %vm719, %v679, 0
    %v748 = vsel %vm719, %v681, 0
    %v749 = vsel %vm719, %v683, 0
    %v750 = vsel %vm719, %v685, 0
    %v755 = vunpack.c.l.b16 %v158
    %v756 = vunpack.c.l.b16 %v159
    %v757 = vunpack.c.l.b16 %v190
    %v758 = vunpack.c.l.b16 %v191
    %v759 = vpack.c.b16 %v756, %v755
    %v760 = vpack.c.b16 %v758, %v757
    %v762 = vshrl.u32 %v759, 16
    %v764 = vrot.slane %v762, 7
    %v765 = vshll.u32 %v759, 16
    %v767 = vor.u32 %v764, %v765
    %v769 = vshrl.u32 %v760, 16
    %v771 = vrot.slane %v769, 7
    %v772 = vshll.u32 %v760, 16
    %v774 = vor.u32 %v771, %v772
    %v777 = vsel %vm592, 0, %v767
    %v778 = vsel %vm592, 0, %v774
    %v779 = vrot.slane %v765, 1
    %v780 = vor.u32 %v762, %v779
    %v781 = vrot.slane %v772, 1
    %v782 = vor.u32 %v769, %v781
    %v785 = vsel %vm719, %v780, 0
    %v786 = vsel %vm719, %v782, 0
    %v788 = vunpack.c.l.b16 0
    %v789 = vpack.c.b16 %v788, %v788
    %v791 = vshrl.u32 %v789, 16
    %v793 = vrot.slane %v791, 7
    %v794 = vshll.u32 %v789, 16
    %v796 = vor.u32 %v793, %v794
    %v798 = vsel %vm592, 0, %v796
    %v799 = vrot.slane %v794, 1
    %v800 = vor.u32 %v791, %v799
    %v802 = vsel %vm719, %v800, 0
    %803 = vrot.lane.b32.xlu0 0, 32
    %v804 = vpop.permute.xlu0 %803
    %805 = vrot.lane.b32.xlu0 %v312, 32
    %v806 = vpop.permute.xlu0 %805
    %807 = vrot.lane.b32.xlu0 %v313, 32
    %v808 = vpop.permute.xlu0 %807
    %809 = vrot.lane.b32.xlu0 %v314, 32
    %v810 = vpop.permute.xlu0 %809
    %811 = vrot.lane.b32.xlu0 %v315, 32
    %v812 = vpop.permute.xlu0 %811
    %813 = vrot.lane.b32.xlu0 %v316, 32
    %v814 = vpop.permute.xlu0 %813
    %815 = vrot.lane.b32.xlu0 %v317, 32
    %v816 = vpop.permute.xlu0 %815
    %817 = vrot.lane.b32.xlu0 %v318, 32
    %v818 = vpop.permute.xlu0 %817
    %819 = vrot.lane.b32.xlu0 %v319, 32
    %v820 = vpop.permute.xlu0 %819
    %821 = vrot.lane.b32.xlu0 %v320, 32
    %v822 = vpop.permute.xlu0 %821
    %823 = vrot.lane.b32.xlu0 %v321, 32
    %v824 = vpop.permute.xlu0 %823
    %825 = vrot.lane.b32.xlu0 %v322, 32
    %v826 = vpop.permute.xlu0 %825
    %827 = vrot.lane.b32.xlu0 %v323, 32
    %v828 = vpop.permute.xlu0 %827
    %829 = vrot.lane.b32.xlu0 %v324, 32
    %v830 = vpop.permute.xlu0 %829
    %831 = vrot.lane.b32.xlu0 %v325, 32
    %v832 = vpop.permute.xlu0 %831
    %833 = vrot.lane.b32.xlu0 %v326, 32
    %v834 = vpop.permute.xlu0 %833
    %835 = vrot.lane.b32.xlu0 %v327, 32
    %v836 = vpop.permute.xlu0 %835
    %837 = vrot.lane.b32.xlu0 %v328, 32
    %v838 = vpop.permute.xlu0 %837
    %839 = vrot.lane.b32.xlu0 %v329, 32
    %v840 = vpop.permute.xlu0 %839
    %841 = vrot.lane.b32.xlu0 %v330, 32
    %v842 = vpop.permute.xlu0 %841
    %843 = vrot.lane.b32.xlu0 %v331, 32
    %v844 = vpop.permute.xlu0 %843
    %845 = vrot.lane.b32.xlu0 %v332, 32
    %v846 = vpop.permute.xlu0 %845
    %847 = vrot.lane.b32.xlu0 %v333, 32
    %v848 = vpop.permute.xlu0 %847
    %849 = vrot.lane.b32.xlu0 %v334, 32
    %v850 = vpop.permute.xlu0 %849
    %851 = vrot.lane.b32.xlu0 %v335, 32
    %v852 = vpop.permute.xlu0 %851
    %853 = vrot.lane.b32.xlu0 %v336, 32
    %v854 = vpop.permute.xlu0 %853
    %855 = vrot.lane.b32.xlu0 %v337, 32
    %v856 = vpop.permute.xlu0 %855
    %857 = vrot.lane.b32.xlu0 %v338, 32
    %v858 = vpop.permute.xlu0 %857
    %859 = vrot.lane.b32.xlu0 %v339, 32
    %v860 = vpop.permute.xlu0 %859
    %861 = vrot.lane.b32.xlu0 %v340, 32
    %v862 = vpop.permute.xlu0 %861
    %863 = vrot.lane.b32.xlu0 %v341, 32
    %v864 = vpop.permute.xlu0 %863
    %896 = vrot.lane.b32.xlu0 %v720, 64
    %v897 = vpop.permute.xlu0 %896
    %898 = vrot.lane.b32.xlu0 %v721, 64
    %v899 = vpop.permute.xlu0 %898
    %900 = vrot.lane.b32.xlu0 %v722, 64
    %v901 = vpop.permute.xlu0 %900
    %902 = vrot.lane.b32.xlu0 %v723, 64
    %v903 = vpop.permute.xlu0 %902
    %904 = vrot.lane.b32.xlu0 %v724, 64
    %v905 = vpop.permute.xlu0 %904
    %906 = vrot.lane.b32.xlu0 %v725, 64
    %v907 = vpop.permute.xlu0 %906
    %908 = vrot.lane.b32.xlu0 %v726, 64
    %v909 = vpop.permute.xlu0 %908
    %910 = vrot.lane.b32.xlu0 %v727, 64
    %v911 = vpop.permute.xlu0 %910
    %912 = vrot.lane.b32.xlu0 %v728, 64
    %v913 = vpop.permute.xlu0 %912
    %914 = vrot.lane.b32.xlu0 %v729, 64
    %v915 = vpop.permute.xlu0 %914
    %916 = vrot.lane.b32.xlu0 %v730, 64
    %v917 = vpop.permute.xlu0 %916
    %918 = vrot.lane.b32.xlu0 %v731, 64
    %v919 = vpop.permute.xlu0 %918
    %920 = vrot.lane.b32.xlu0 %v732, 64
    %v921 = vpop.permute.xlu0 %920
    %922 = vrot.lane.b32.xlu0 %v733, 64
    %v923 = vpop.permute.xlu0 %922
    %924 = vrot.lane.b32.xlu0 %v734, 64
    %v925 = vpop.permute.xlu0 %924
    %926 = vrot.lane.b32.xlu0 %v735, 64
    %v927 = vpop.permute.xlu0 %926
    %928 = vrot.lane.b32.xlu0 %v736, 64
    %v929 = vpop.permute.xlu0 %928
    %930 = vrot.lane.b32.xlu0 %v737, 64
    %v931 = vpop.permute.xlu0 %930
    %932 = vrot.lane.b32.xlu0 %v738, 64
    %v933 = vpop.permute.xlu0 %932
    %934 = vrot.lane.b32.xlu0 %v739, 64
    %v935 = vpop.permute.xlu0 %934
    %936 = vrot.lane.b32.xlu0 %v740, 64
    %v937 = vpop.permute.xlu0 %936
    %938 = vrot.lane.b32.xlu0 %v741, 64
    %v939 = vpop.permute.xlu0 %938
    %940 = vrot.lane.b32.xlu0 %v742, 64
    %v941 = vpop.permute.xlu0 %940
    %942 = vrot.lane.b32.xlu0 %v743, 64
    %v943 = vpop.permute.xlu0 %942
    %944 = vrot.lane.b32.xlu0 %v744, 64
    %v945 = vpop.permute.xlu0 %944
    %946 = vrot.lane.b32.xlu0 %v745, 64
    %v947 = vpop.permute.xlu0 %946
    %948 = vrot.lane.b32.xlu0 %v746, 64
    %v949 = vpop.permute.xlu0 %948
    %950 = vrot.lane.b32.xlu0 %v747, 64
    %v951 = vpop.permute.xlu0 %950
    %952 = vrot.lane.b32.xlu0 %v748, 64
    %v953 = vpop.permute.xlu0 %952
    %954 = vrot.lane.b32.xlu0 %v749, 64
    %v955 = vpop.permute.xlu0 %954
    %956 = vrot.lane.b32.xlu0 %v750, 64
    %v957 = vpop.permute.xlu0 %956
    %990 = vrot.lane.b32.xlu0 %v594, 96
    %v991 = vpop.permute.xlu0 %990
    %992 = vrot.lane.b32.xlu0 %v595, 96
    %v993 = vpop.permute.xlu0 %992
    %994 = vrot.lane.b32.xlu0 %v596, 96
    %v995 = vpop.permute.xlu0 %994
    %996 = vrot.lane.b32.xlu0 %v597, 96
    %v997 = vpop.permute.xlu0 %996
    %998 = vrot.lane.b32.xlu0 %v598, 96
    %v999 = vpop.permute.xlu0 %998
    %1000 = vrot.lane.b32.xlu0 %v599, 96
    %v1001 = vpop.permute.xlu0 %1000
    %1002 = vrot.lane.b32.xlu0 %v600, 96
    %v1003 = vpop.permute.xlu0 %1002
    %1004 = vrot.lane.b32.xlu0 %v601, 96
    %v1005 = vpop.permute.xlu0 %1004
    %1006 = vrot.lane.b32.xlu0 %v602, 96
    %v1007 = vpop.permute.xlu0 %1006
    %1008 = vrot.lane.b32.xlu0 %v603, 96
    %v1009 = vpop.permute.xlu0 %1008
    %1010 = vrot.lane.b32.xlu0 %v604, 96
    %v1011 = vpop.permute.xlu0 %1010
    %1012 = vrot.lane.b32.xlu0 %v605, 96
    %v1013 = vpop.permute.xlu0 %1012
    %1014 = vrot.lane.b32.xlu0 %v606, 96
    %v1015 = vpop.permute.xlu0 %1014
    %1016 = vrot.lane.b32.xlu0 %v607, 96
    %v1017 = vpop.permute.xlu0 %1016
    %1018 = vrot.lane.b32.xlu0 %v608, 96
    %v1019 = vpop.permute.xlu0 %1018
    %1020 = vrot.lane.b32.xlu0 %v777, 96
    %v1021 = vpop.permute.xlu0 %1020
    %1022 = vrot.lane.b32.xlu0 %v609, 96
    %v1023 = vpop.permute.xlu0 %1022
    %1024 = vrot.lane.b32.xlu0 %v610, 96
    %v1025 = vpop.permute.xlu0 %1024
    %1026 = vrot.lane.b32.xlu0 %v611, 96
    %v1027 = vpop.permute.xlu0 %1026
    %1028 = vrot.lane.b32.xlu0 %v612, 96
    %v1029 = vpop.permute.xlu0 %1028
    %1030 = vrot.lane.b32.xlu0 %v613, 96
    %v1031 = vpop.permute.xlu0 %1030
    %1032 = vrot.lane.b32.xlu0 %v614, 96
    %v1033 = vpop.permute.xlu0 %1032
    %1034 = vrot.lane.b32.xlu0 %v615, 96
    %v1035 = vpop.permute.xlu0 %1034
    %1036 = vrot.lane.b32.xlu0 %v616, 96
    %v1037 = vpop.permute.xlu0 %1036
    %1038 = vrot.lane.b32.xlu0 %v617, 96
    %v1039 = vpop.permute.xlu0 %1038
    %1040 = vrot.lane.b32.xlu0 %v618, 96
    %v1041 = vpop.permute.xlu0 %1040
    %1042 = vrot.lane.b32.xlu0 %v619, 96
    %v1043 = vpop.permute.xlu0 %1042
    %1044 = vrot.lane.b32.xlu0 %v620, 96
    %v1045 = vpop.permute.xlu0 %1044
    %1046 = vrot.lane.b32.xlu0 %v621, 96
    %v1047 = vpop.permute.xlu0 %1046
    %1048 = vrot.lane.b32.xlu0 %v622, 96
    %v1049 = vpop.permute.xlu0 %1048
    %1050 = vrot.lane.b32.xlu0 %v623, 96
    %v1051 = vpop.permute.xlu0 %1050
    %1052 = vrot.lane.b32.xlu0 %v778, 96
    %v1053 = vpop.permute.xlu0 %1052
    %1056 = vrot.lane.b32.xlu0 %v721, 32
    %v1057 = vpop.permute.xlu0 %1056
    %1058 = vrot.lane.b32.xlu0 %v722, 32
    %v1059 = vpop.permute.xlu0 %1058
    %1060 = vrot.lane.b32.xlu0 %v723, 32
    %v1061 = vpop.permute.xlu0 %1060
    %1062 = vrot.lane.b32.xlu0 %v724, 32
    %v1063 = vpop.permute.xlu0 %1062
    %1064 = vrot.lane.b32.xlu0 %v725, 32
    %v1065 = vpop.permute.xlu0 %1064
    %1066 = vrot.lane.b32.xlu0 %v726, 32
    %v1067 = vpop.permute.xlu0 %1066
    %1068 = vrot.lane.b32.xlu0 %v727, 32
    %v1069 = vpop.permute.xlu0 %1068
    %1070 = vrot.lane.b32.xlu0 %v728, 32
    %v1071 = vpop.permute.xlu0 %1070
    %1072 = vrot.lane.b32.xlu0 %v729, 32
    %v1073 = vpop.permute.xlu0 %1072
    %1074 = vrot.lane.b32.xlu0 %v730, 32
    %v1075 = vpop.permute.xlu0 %1074
    %1076 = vrot.lane.b32.xlu0 %v731, 32
    %v1077 = vpop.permute.xlu0 %1076
    %1078 = vrot.lane.b32.xlu0 %v732, 32
    %v1079 = vpop.permute.xlu0 %1078
    %1080 = vrot.lane.b32.xlu0 %v733, 32
    %v1081 = vpop.permute.xlu0 %1080
    %1082 = vrot.lane.b32.xlu0 %v734, 32
    %v1083 = vpop.permute.xlu0 %1082
    %1084 = vrot.lane.b32.xlu0 %v735, 32
    %v1085 = vpop.permute.xlu0 %1084
    %1086 = vrot.lane.b32.xlu0 %v785, 32
    %v1087 = vpop.permute.xlu0 %1086
    %1088 = vrot.lane.b32.xlu0 %v736, 32
    %v1089 = vpop.permute.xlu0 %1088
    %1090 = vrot.lane.b32.xlu0 %v737, 32
    %v1091 = vpop.permute.xlu0 %1090
    %1092 = vrot.lane.b32.xlu0 %v738, 32
    %v1093 = vpop.permute.xlu0 %1092
    %1094 = vrot.lane.b32.xlu0 %v739, 32
    %v1095 = vpop.permute.xlu0 %1094
    %1096 = vrot.lane.b32.xlu0 %v740, 32
    %v1097 = vpop.permute.xlu0 %1096
    %1098 = vrot.lane.b32.xlu0 %v741, 32
    %v1099 = vpop.permute.xlu0 %1098
    %1100 = vrot.lane.b32.xlu0 %v742, 32
    %v1101 = vpop.permute.xlu0 %1100
    %1102 = vrot.lane.b32.xlu0 %v743, 32
    %v1103 = vpop.permute.xlu0 %1102
    %1104 = vrot.lane.b32.xlu0 %v744, 32
    %v1105 = vpop.permute.xlu0 %1104
    %1106 = vrot.lane.b32.xlu0 %v745, 32
    %v1107 = vpop.permute.xlu0 %1106
    %1108 = vrot.lane.b32.xlu0 %v746, 32
    %v1109 = vpop.permute.xlu0 %1108
    %1110 = vrot.lane.b32.xlu0 %v747, 32
    %v1111 = vpop.permute.xlu0 %1110
    %1112 = vrot.lane.b32.xlu0 %v748, 32
    %v1113 = vpop.permute.xlu0 %1112
    %1114 = vrot.lane.b32.xlu0 %v749, 32
    %v1115 = vpop.permute.xlu0 %1114
    %1116 = vrot.lane.b32.xlu0 %v750, 32
    %v1117 = vpop.permute.xlu0 %1116
    %1118 = vrot.lane.b32.xlu0 %v786, 32
    %v1119 = vpop.permute.xlu0 %1118
    %1121 = vrot.lane.b32.xlu0 %v595, 64
    %v1122 = vpop.permute.xlu0 %1121
    %1123 = vrot.lane.b32.xlu0 %v596, 64
    %v1124 = vpop.permute.xlu0 %1123
    %1125 = vrot.lane.b32.xlu0 %v597, 64
    %v1126 = vpop.permute.xlu0 %1125
    %1127 = vrot.lane.b32.xlu0 %v598, 64
    %v1128 = vpop.permute.xlu0 %1127
    %1129 = vrot.lane.b32.xlu0 %v599, 64
    %v1130 = vpop.permute.xlu0 %1129
    %1131 = vrot.lane.b32.xlu0 %v600, 64
    %v1132 = vpop.permute.xlu0 %1131
    %1133 = vrot.lane.b32.xlu0 %v601, 64
    %v1134 = vpop.permute.xlu0 %1133
    %1135 = vrot.lane.b32.xlu0 %v602, 64
    %v1136 = vpop.permute.xlu0 %1135
    %1137 = vrot.lane.b32.xlu0 %v603, 64
    %v1138 = vpop.permute.xlu0 %1137
    %1139 = vrot.lane.b32.xlu0 %v604, 64
    %v1140 = vpop.permute.xlu0 %1139
    %1141 = vrot.lane.b32.xlu0 %v605, 64
    %v1142 = vpop.permute.xlu0 %1141
    %1143 = vrot.lane.b32.xlu0 %v606, 64
    %v1144 = vpop.permute.xlu0 %1143
    %1145 = vrot.lane.b32.xlu0 %v607, 64
    %v1146 = vpop.permute.xlu0 %1145
    %1147 = vrot.lane.b32.xlu0 %v608, 64
    %v1148 = vpop.permute.xlu0 %1147
    %1149 = vrot.lane.b32.xlu0 %v777, 64
    %v1150 = vpop.permute.xlu0 %1149
    %1151 = vrot.lane.b32.xlu0 %v798, 64
    %v1152 = vpop.permute.xlu0 %1151
    %1153 = vrot.lane.b32.xlu0 %v610, 64
    %v1154 = vpop.permute.xlu0 %1153
    %1155 = vrot.lane.b32.xlu0 %v611, 64
    %v1156 = vpop.permute.xlu0 %1155
    %1157 = vrot.lane.b32.xlu0 %v612, 64
    %v1158 = vpop.permute.xlu0 %1157
    %1159 = vrot.lane.b32.xlu0 %v613, 64
    %v1160 = vpop.permute.xlu0 %1159
    %1161 = vrot.lane.b32.xlu0 %v614, 64
    %v1162 = vpop.permute.xlu0 %1161
    %1163 = vrot.lane.b32.xlu0 %v615, 64
    %v1164 = vpop.permute.xlu0 %1163
    %1165 = vrot.lane.b32.xlu0 %v616, 64
    %v1166 = vpop.permute.xlu0 %1165
    %1167 = vrot.lane.b32.xlu0 %v617, 64
    %v1168 = vpop.permute.xlu0 %1167
    %1169 = vrot.lane.b32.xlu0 %v618, 64
    %v1170 = vpop.permute.xlu0 %1169
    %1171 = vrot.lane.b32.xlu0 %v619, 64
    %v1172 = vpop.permute.xlu0 %1171
    %1173 = vrot.lane.b32.xlu0 %v620, 64
    %v1174 = vpop.permute.xlu0 %1173
    %1175 = vrot.lane.b32.xlu0 %v621, 64
    %v1176 = vpop.permute.xlu0 %1175
    %1177 = vrot.lane.b32.xlu0 %v622, 64
    %v1178 = vpop.permute.xlu0 %1177
    %1179 = vrot.lane.b32.xlu0 %v623, 64
    %v1180 = vpop.permute.xlu0 %1179
    %1181 = vrot.lane.b32.xlu0 %v778, 64
    %v1182 = vpop.permute.xlu0 %1181
    %1183 = vrot.lane.b32.xlu0 %v313, 96
    %v1184 = vpop.permute.xlu0 %1183
    %1185 = vrot.lane.b32.xlu0 %v314, 96
    %v1186 = vpop.permute.xlu0 %1185
    %1187 = vrot.lane.b32.xlu0 %v315, 96
    %v1188 = vpop.permute.xlu0 %1187
    %1189 = vrot.lane.b32.xlu0 %v316, 96
    %v1190 = vpop.permute.xlu0 %1189
    %1191 = vrot.lane.b32.xlu0 %v317, 96
    %v1192 = vpop.permute.xlu0 %1191
    %1193 = vrot.lane.b32.xlu0 %v318, 96
    %v1194 = vpop.permute.xlu0 %1193
    %1195 = vrot.lane.b32.xlu0 %v319, 96
    %v1196 = vpop.permute.xlu0 %1195
    %1197 = vrot.lane.b32.xlu0 %v320, 96
    %v1198 = vpop.permute.xlu0 %1197
    %1199 = vrot.lane.b32.xlu0 %v321, 96
    %v1200 = vpop.permute.xlu0 %1199
    %1201 = vrot.lane.b32.xlu0 %v322, 96
    %v1202 = vpop.permute.xlu0 %1201
    %1203 = vrot.lane.b32.xlu0 %v323, 96
    %v1204 = vpop.permute.xlu0 %1203
    %1205 = vrot.lane.b32.xlu0 %v324, 96
    %v1206 = vpop.permute.xlu0 %1205
    %1207 = vrot.lane.b32.xlu0 %v325, 96
    %v1208 = vpop.permute.xlu0 %1207
    %1209 = vrot.lane.b32.xlu0 %v326, 96
    %v1210 = vpop.permute.xlu0 %1209
    %1211 = vrot.lane.b32.xlu0 %v759, 96
    %v1212 = vpop.permute.xlu0 %1211
    %1213 = vrot.lane.b32.xlu0 %v789, 96
    %v1214 = vpop.permute.xlu0 %1213
    %1215 = vrot.lane.b32.xlu0 %v328, 96
    %v1216 = vpop.permute.xlu0 %1215
    %1217 = vrot.lane.b32.xlu0 %v329, 96
    %v1218 = vpop.permute.xlu0 %1217
    %1219 = vrot.lane.b32.xlu0 %v330, 96
    %v1220 = vpop.permute.xlu0 %1219
    %1221 = vrot.lane.b32.xlu0 %v331, 96
    %v1222 = vpop.permute.xlu0 %1221
    %1223 = vrot.lane.b32.xlu0 %v332, 96
    %v1224 = vpop.permute.xlu0 %1223
    %1225 = vrot.lane.b32.xlu0 %v333, 96
    %v1226 = vpop.permute.xlu0 %1225
    %1227 = vrot.lane.b32.xlu0 %v334, 96
    %v1228 = vpop.permute.xlu0 %1227
    %1229 = vrot.lane.b32.xlu0 %v335, 96
    %v1230 = vpop.permute.xlu0 %1229
    %1231 = vrot.lane.b32.xlu0 %v336, 96
    %v1232 = vpop.permute.xlu0 %1231
    %1233 = vrot.lane.b32.xlu0 %v337, 96
    %v1234 = vpop.permute.xlu0 %1233
    %1235 = vrot.lane.b32.xlu0 %v338, 96
    %v1236 = vpop.permute.xlu0 %1235
    %1237 = vrot.lane.b32.xlu0 %v339, 96
    %v1238 = vpop.permute.xlu0 %1237
    %1239 = vrot.lane.b32.xlu0 %v340, 96
    %v1240 = vpop.permute.xlu0 %1239
    %1241 = vrot.lane.b32.xlu0 %v341, 96
    %v1242 = vpop.permute.xlu0 %1241
    %1243 = vrot.lane.b32.xlu0 %v760, 96
    %v1244 = vpop.permute.xlu0 %1243
    %vm1245 = vcmask 261120
    %v1248 = vsel %vm1245, %v593, %v804
    %v1251 = vsel %vm1245, %v594, %v806
    %v1254 = vsel %vm1245, %v595, %v808
    %v1257 = vsel %vm1245, %v596, %v810
    %v1260 = vsel %vm1245, %v597, %v812
    %v1263 = vsel %vm1245, %v598, %v814
    %v1266 = vsel %vm1245, %v599, %v816
    %v1269 = vsel %vm1245, %v600, %v818
    %v1272 = vsel %vm1245, %v601, %v820
    %v1275 = vsel %vm1245, %v602, %v822
    %v1278 = vsel %vm1245, %v603, %v824
    %v1281 = vsel %vm1245, %v604, %v826
    %v1284 = vsel %vm1245, %v605, %v828
    %v1287 = vsel %vm1245, %v606, %v830
    %v1290 = vsel %vm1245, %v607, %v832
    %v1293 = vsel %vm1245, %v608, %v834
    %v1296 = vsel %vm1245, %v609, %v836
    %v1299 = vsel %vm1245, %v610, %v838
    %v1302 = vsel %vm1245, %v611, %v840
    %v1305 = vsel %vm1245, %v612, %v842
    %v1308 = vsel %vm1245, %v613, %v844
    %v1311 = vsel %vm1245, %v614, %v846
    %v1314 = vsel %vm1245, %v615, %v848
    %v1317 = vsel %vm1245, %v616, %v850
    %v1320 = vsel %vm1245, %v617, %v852
    %v1323 = vsel %vm1245, %v618, %v854
    %v1326 = vsel %vm1245, %v619, %v856
    %v1329 = vsel %vm1245, %v620, %v858
    %v1332 = vsel %vm1245, %v621, %v860
    %v1335 = vsel %vm1245, %v622, %v862
    %v1338 = vsel %vm1245, %v623, %v864
    %vm1339 = vcmask 523264
    %v1341 = vsel %vm1339, %v1248, %v897
    %v1343 = vsel %vm1339, %v1251, %v899
    %v1345 = vsel %vm1339, %v1254, %v901
    %v1347 = vsel %vm1339, %v1257, %v903
    %v1349 = vsel %vm1339, %v1260, %v905
    %v1351 = vsel %vm1339, %v1263, %v907
    %v1353 = vsel %vm1339, %v1266, %v909
    %v1355 = vsel %vm1339, %v1269, %v911
    %v1357 = vsel %vm1339, %v1272, %v913
    %v1359 = vsel %vm1339, %v1275, %v915
    %v1361 = vsel %vm1339, %v1278, %v917
    %v1363 = vsel %vm1339, %v1281, %v919
    %v1365 = vsel %vm1339, %v1284, %v921
    %v1367 = vsel %vm1339, %v1287, %v923
    %v1369 = vsel %vm1339, %v1290, %v925
    %v1371 = vsel %vm1339, %v1293, %v927
    %v1373 = vsel %vm1339, %v1296, %v929
    %v1375 = vsel %vm1339, %v1299, %v931
    %v1377 = vsel %vm1339, %v1302, %v933
    %v1379 = vsel %vm1339, %v1305, %v935
    %v1381 = vsel %vm1339, %v1308, %v937
    %v1383 = vsel %vm1339, %v1311, %v939
    %v1385 = vsel %vm1339, %v1314, %v941
    %v1387 = vsel %vm1339, %v1317, %v943
    %v1389 = vsel %vm1339, %v1320, %v945
    %v1391 = vsel %vm1339, %v1323, %v947
    %v1393 = vsel %vm1339, %v1326, %v949
    %v1395 = vsel %vm1339, %v1329, %v951
    %v1397 = vsel %vm1339, %v1332, %v953
    %v1399 = vsel %vm1339, %v1335, %v955
    %v1401 = vsel %vm1339, %v1338, %v957
    %vm1402 = vcmask 785408
    %v1404 = vsel %vm1402, %v1341, %v991
    %v1407 = vsel %vm1402, %v1343, %v993
    %v1410 = vsel %vm1402, %v1345, %v995
    %v1413 = vsel %vm1402, %v1347, %v997
    %v1416 = vsel %vm1402, %v1349, %v999
    %v1419 = vsel %vm1402, %v1351, %v1001
    %v1422 = vsel %vm1402, %v1353, %v1003
    %v1425 = vsel %vm1402, %v1355, %v1005
    %v1428 = vsel %vm1402, %v1357, %v1007
    %v1431 = vsel %vm1402, %v1359, %v1009
    %v1434 = vsel %vm1402, %v1361, %v1011
    %v1437 = vsel %vm1402, %v1363, %v1013
    %v1440 = vsel %vm1402, %v1365, %v1015
    %v1443 = vsel %vm1402, %v1367, %v1017
    %v1446 = vsel %vm1402, %v1369, %v1019
    %v1449 = vsel %vm1402, %v1371, %v1021
    %v1452 = vsel %vm1402, %v1341, %v1023
    %v1455 = vsel %vm1402, %v1373, %v1025
    %v1458 = vsel %vm1402, %v1375, %v1027
    %v1461 = vsel %vm1402, %v1377, %v1029
    %v1464 = vsel %vm1402, %v1379, %v1031
    %v1467 = vsel %vm1402, %v1381, %v1033
    %v1470 = vsel %vm1402, %v1383, %v1035
    %v1473 = vsel %vm1402, %v1385, %v1037
    %v1476 = vsel %vm1402, %v1387, %v1039
    %v1479 = vsel %vm1402, %v1389, %v1041
    %v1482 = vsel %vm1402, %v1391, %v1043
    %v1485 = vsel %vm1402, %v1393, %v1045
    %v1488 = vsel %vm1402, %v1395, %v1047
    %v1491 = vsel %vm1402, %v1397, %v1049
    %v1494 = vsel %vm1402, %v1399, %v1051
    %v1497 = vsel %vm1402, %v1401, %v1053
    %v1500 = vsel %vm1245, %v312, %v1057
    %v1502 = vsel %vm1245, %v313, %v1059
    %v1504 = vsel %vm1245, %v314, %v1061
    %v1506 = vsel %vm1245, %v315, %v1063
    %v1508 = vsel %vm1245, %v316, %v1065
    %v1510 = vsel %vm1245, %v317, %v1067
    %v1512 = vsel %vm1245, %v318, %v1069
    %v1514 = vsel %vm1245, %v319, %v1071
    %v1516 = vsel %vm1245, %v320, %v1073
    %v1518 = vsel %vm1245, %v321, %v1075
    %v1520 = vsel %vm1245, %v322, %v1077
    %v1522 = vsel %vm1245, %v323, %v1079
    %v1524 = vsel %vm1245, %v324, %v1081
    %v1526 = vsel %vm1245, %v325, %v1083
    %v1528 = vsel %vm1245, %v326, %v1085
    %v1530 = vsel %vm1245, %v759, %v1087
    %v1532 = vsel %vm1245, %v327, %v1089
    %v1534 = vsel %vm1245, %v328, %v1091
    %v1536 = vsel %vm1245, %v329, %v1093
    %v1538 = vsel %vm1245, %v330, %v1095
    %v1540 = vsel %vm1245, %v331, %v1097
    %v1542 = vsel %vm1245, %v332, %v1099
    %v1544 = vsel %vm1245, %v333, %v1101
    %v1546 = vsel %vm1245, %v334, %v1103
    %v1548 = vsel %vm1245, %v335, %v1105
    %v1550 = vsel %vm1245, %v336, %v1107
    %v1552 = vsel %vm1245, %v337, %v1109
    %v1554 = vsel %vm1245, %v338, %v1111
    %v1556 = vsel %vm1245, %v339, %v1113
    %v1558 = vsel %vm1245, %v340, %v1115
    %v1560 = vsel %vm1245, %v341, %v1117
    %v1562 = vsel %vm1245, %v760, %v1119
    %v1564 = vsel %vm1339, %v1500, %v1122
    %v1566 = vsel %vm1339, %v1502, %v1124
    %v1568 = vsel %vm1339, %v1504, %v1126
    %v1570 = vsel %vm1339, %v1506, %v1128
    %v1572 = vsel %vm1339, %v1508, %v1130
    %v1574 = vsel %vm1339, %v1510, %v1132
    %v1576 = vsel %vm1339, %v1512, %v1134
    %v1578 = vsel %vm1339, %v1514, %v1136
    %v1580 = vsel %vm1339, %v1516, %v1138
    %v1582 = vsel %vm1339, %v1518, %v1140
    %v1584 = vsel %vm1339, %v1520, %v1142
    %v1586 = vsel %vm1339, %v1522, %v1144
    %v1588 = vsel %vm1339, %v1524, %v1146
    %v1590 = vsel %vm1339, %v1526, %v1148
    %v1592 = vsel %vm1339, %v1528, %v1150
    %v1594 = vsel %vm1339, %v1530, %v1152
    %v1596 = vsel %vm1339, %v1532, %v1154
    %v1598 = vsel %vm1339, %v1534, %v1156
    %v1600 = vsel %vm1339, %v1536, %v1158
    %v1602 = vsel %vm1339, %v1538, %v1160
    %v1604 = vsel %vm1339, %v1540, %v1162
    %v1606 = vsel %vm1339, %v1542, %v1164
    %v1608 = vsel %vm1339, %v1544, %v1166
    %v1610 = vsel %vm1339, %v1546, %v1168
    %v1612 = vsel %vm1339, %v1548, %v1170
    %v1614 = vsel %vm1339, %v1550, %v1172
    %v1616 = vsel %vm1339, %v1552, %v1174
    %v1618 = vsel %vm1339, %v1554, %v1176
    %v1620 = vsel %vm1339, %v1556, %v1178
    %v1622 = vsel %vm1339, %v1558, %v1180
    %v1624 = vsel %vm1339, %v1560, %v1182
    %v1625 = vsel %vm1339, %v1562, %v1152
    %v1627 = vsel %vm1402, %v1564, %v1184
    %v1630 = vsel %vm1402, %v1566, %v1186
    %v1633 = vsel %vm1402, %v1568, %v1188
    %v1636 = vsel %vm1402, %v1570, %v1190
    %v1639 = vsel %vm1402, %v1572, %v1192
    %v1642 = vsel %vm1402, %v1574, %v1194
    %v1645 = vsel %vm1402, %v1576, %v1196
    %v1648 = vsel %vm1402, %v1578, %v1198
    %v1651 = vsel %vm1402, %v1580, %v1200
    %v1654 = vsel %vm1402, %v1582, %v1202
    %v1657 = vsel %vm1402, %v1584, %v1204
    %v1660 = vsel %vm1402, %v1586, %v1206
    %v1663 = vsel %vm1402, %v1588, %v1208
    %v1666 = vsel %vm1402, %v1590, %v1210
    %v1669 = vsel %vm1402, %v1592, %v1212
    %v1672 = vsel %vm1402, %v1594, %v1214
    %v1675 = vsel %vm1402, %v1596, %v1216
    %v1678 = vsel %vm1402, %v1598, %v1218
    %v1681 = vsel %vm1402, %v1600, %v1220
    %v1684 = vsel %vm1402, %v1602, %v1222
    %v1687 = vsel %vm1402, %v1604, %v1224
    %v1690 = vsel %vm1402, %v1606, %v1226
    %v1693 = vsel %vm1402, %v1608, %v1228
    %v1696 = vsel %vm1402, %v1610, %v1230
    %v1699 = vsel %vm1402, %v1612, %v1232
    %v1702 = vsel %vm1402, %v1614, %v1234
    %v1705 = vsel %vm1402, %v1616, %v1236
    %v1708 = vsel %vm1402, %v1618, %v1238
    %v1711 = vsel %vm1402, %v1620, %v1240
    %v1714 = vsel %vm1402, %v1622, %v1242
    %v1717 = vsel %vm1402, %v1624, %v1244
    %v1719 = vsel %vm1402, %v1625, %v1214
    %v1721 = vld [vmem:[%s1] sm:$0xf]
    %v1722 = vld [vmem:[%s1 + $0x4] sm:$0xf]
    %v1723 = vld [vmem:[%s1 + $0x8] sm:$0xf]
    %v1724 = vld [vmem:[%s1 + $0xc] sm:$0xf]
    %v1725 = vld [vmem:[%s1 + $0x10] sm:$0xf]
    %v1726 = vld [vmem:[%s1 + $0x14] sm:$0xf]
    %v1727 = vld [vmem:[%s1 + $0x18] sm:$0xf]
    %v1728 = vld [vmem:[%s1 + $0x1c] sm:$0xf]
    %v1729 = vld [vmem:[%s1 + $0x20] sm:$0xf]
    %v1730 = vld [vmem:[%s1 + $0x24] sm:$0xf]
    %v1731 = vld [vmem:[%s1 + $0x28] sm:$0xf]
    %v1732 = vld [vmem:[%s1 + $0x2c] sm:$0xf]
    %v1733 = vld [vmem:[%s1 + $0x30] sm:$0xf]
    %v1734 = vld [vmem:[%s1 + $0x34] sm:$0xf]
    %v1735 = vld [vmem:[%s1 + $0x38] sm:$0xf]
    %v1736 = vld [vmem:[%s1 + $0x3c] sm:$0xf]
    %v1737 = vld [vmem:[%s1 + $0x40] sm:$0xf]
    %v1738 = vld [vmem:[%s1 + $0x44] sm:$0xf]
    %v1739 = vld [vmem:[%s1 + $0x48] sm:$0xf]
    %v1740 = vld [vmem:[%s1 + $0x4c] sm:$0xf]
    %v1741 = vld [vmem:[%s1 + $0x50] sm:$0xf]
    %v1742 = vld [vmem:[%s1 + $0x54] sm:$0xf]
    %v1743 = vld [vmem:[%s1 + $0x58] sm:$0xf]
    %v1744 = vld [vmem:[%s1 + $0x5c] sm:$0xf]
    %v1745 = vld [vmem:[%s1 + $0x60] sm:$0xf]
    %v1746 = vld [vmem:[%s1 + $0x64] sm:$0xf]
    %v1747 = vld [vmem:[%s1 + $0x68] sm:$0xf]
    %v1748 = vld [vmem:[%s1 + $0x6c] sm:$0xf]
    %v1749 = vld [vmem:[%s1 + $0x70] sm:$0xf]
    %v1750 = vld [vmem:[%s1 + $0x74] sm:$0xf]
    %v1751 = vld [vmem:[%s1 + $0x78] sm:$0xf]
    %v1752 = vld [vmem:[%s1 + $0x7c] sm:$0xf]
    %v1753 = vld [vmem:[%s1 + $0x80] sm:$0xf]
    %v1754 = vld [vmem:[%s1 + $0x84] sm:$0xf]
    %v1755 = vld [vmem:[%s1 + $0x88] sm:$0xf]
    %v1756 = vld [vmem:[%s1 + $0x8c] sm:$0xf]
    %v1757 = vld [vmem:[%s2] sm:$0x1]
    %v1759 = vperm.slane %v1757, 0
    %v1797 = vunpack.c.l.b16 %v1721
    %v1798 = vunpack.c.l.b16 %v1722
    %v1799 = vunpack.c.l.b16 %v1723
    %v1800 = vunpack.c.l.b16 %v1724
    %v1801 = vunpack.c.l.b16 %v1725
    %v1802 = vunpack.c.l.b16 %v1726
    %v1803 = vunpack.c.l.b16 %v1727
    %v1804 = vunpack.c.l.b16 %v1728
    %v1805 = vunpack.c.l.b16 %v1729
    %v1806 = vunpack.c.l.b16 %v1730
    %v1807 = vunpack.c.l.b16 %v1731
    %v1808 = vunpack.c.l.b16 %v1732
    %v1809 = vunpack.c.l.b16 %v1733
    %v1810 = vunpack.c.l.b16 %v1734
    %v1811 = vunpack.c.l.b16 %v1735
    %v1812 = vunpack.c.l.b16 %v1736
    %v1813 = vunpack.c.l.b16 %v1737
    %v1814 = vunpack.c.l.b16 %v1738
    %v1815 = vunpack.c.l.b16 %v1739
    %v1816 = vunpack.c.l.b16 %v1740
    %v1817 = vunpack.c.l.b16 %v1741
    %v1818 = vunpack.c.l.b16 %v1742
    %v1819 = vunpack.c.l.b16 %v1743
    %v1820 = vunpack.c.l.b16 %v1744
    %v1821 = vunpack.c.l.b16 %v1745
    %v1822 = vunpack.c.l.b16 %v1746
    %v1823 = vunpack.c.l.b16 %v1747
    %v1824 = vunpack.c.l.b16 %v1748
    %v1825 = vunpack.c.l.b16 %v1749
    %v1826 = vunpack.c.l.b16 %v1750
    %v1827 = vunpack.c.l.b16 %v1751
    %v1828 = vunpack.c.l.b16 %v1752
    %v1829 = vunpack.c.l.b16 %v1753
    %v1830 = vunpack.c.l.b16 %v1754
    %v1831 = vunpack.c.l.b16 %v1755
    %v1832 = vunpack.c.l.b16 %v1756
    %v1833 = vpack.c.b16 %v1798, %v1797
    %v1834 = vpack.c.b16 %v1800, %v1799
    %v1835 = vpack.c.b16 %v1802, %v1801
    %v1836 = vpack.c.b16 %v1804, %v1803
    %v1837 = vpack.c.b16 %v1806, %v1805
    %v1838 = vpack.c.b16 %v1808, %v1807
    %v1839 = vpack.c.b16 %v1810, %v1809
    %v1840 = vpack.c.b16 %v1812, %v1811
    %v1841 = vpack.c.b16 %v1814, %v1813
    %v1842 = vpack.c.b16 %v1816, %v1815
    %v1843 = vpack.c.b16 %v1818, %v1817
    %v1844 = vpack.c.b16 %v1820, %v1819
    %v1845 = vpack.c.b16 %v1822, %v1821
    %v1846 = vpack.c.b16 %v1824, %v1823
    %v1847 = vpack.c.b16 %v1826, %v1825
    %v1848 = vpack.c.b16 %v1828, %v1827
    %v1849 = vpack.c.b16 %v1830, %v1829
    %v1850 = vpack.c.b16 %v1832, %v1831
    %v1870 = vsel %vm1245, %v722, 0
    %v1873 = vsel %vm1245, %v723, 0
    %v1876 = vsel %vm1245, %v724, 0
    %v1879 = vsel %vm1245, %v725, 0
    %v1882 = vsel %vm1245, %v726, 0
    %v1885 = vsel %vm1245, %v727, 0
    %v1888 = vsel %vm1245, %v728, 0
    %v1891 = vsel %vm1245, %v729, 0
    %v1894 = vsel %vm1245, %v730, 0
    %v1897 = vsel %vm1245, %v731, 0
    %v1900 = vsel %vm1245, %v732, 0
    %v1903 = vsel %vm1245, %v733, 0
    %v1906 = vsel %vm1245, %v734, 0
    %v1909 = vsel %vm1245, %v735, 0
    %v1912 = vsel %vm1245, %v785, 0
    %v1915 = vsel %vm1245, %v802, 0
    %v1918 = vsel %vm1245, %v737, 0
    %v1921 = vsel %vm1245, %v738, 0
    %v1924 = vsel %vm1245, %v739, 0
    %v1927 = vsel %vm1245, %v740, 0
    %v1930 = vsel %vm1245, %v741, 0
    %v1933 = vsel %vm1245, %v742, 0
    %v1936 = vsel %vm1245, %v743, 0
    %v1939 = vsel %vm1245, %v744, 0
    %v1942 = vsel %vm1245, %v745, 0
    %v1945 = vsel %vm1245, %v746, 0
    %v1948 = vsel %vm1245, %v747, 0
    %v1951 = vsel %vm1245, %v748, 0
    %v1954 = vsel %vm1245, %v749, 0
    %v1957 = vsel %vm1245, %v750, 0
    %v1960 = vsel %vm1245, %v786, 0
    %1962 = vmatpush.bf16.msra.mxu0 %v1840
    %1963 = vmatpush.bf16.msra.mxu0 %v1839
    %1964 = vmatpush.bf16.msra.mxu0 %v1838
    %1965 = vmatpush.bf16.msra.mxu0 %v1837
    %1966 = vmatpush.bf16.msra.mxu0 %v1836
    %1967 = vmatpush.bf16.msra.mxu0 %v1835
    %1968 = vmatpush.bf16.msra.mxu0 %v1834
    %1969 = vmatpush.bf16.msra.mxu0 %v1833
    %1970 = vmatmul.bf16.gmra.mxu0 %v1404
    %v1971 = vpop.f32.mrf.mxu0
    %v1972 = vadd.f32 %v1759, %v1971
    %v1973 = vpop.f32.mrf.mxu0
    %v1974 = vadd.f32 %v1759, %v1973
    %1975 = vmatmul.bf16.gmra.mxu0 %v1407
    %v1976 = vpop.f32.mrf.mxu0
    %v1977 = vadd.f32 %v1759, %v1976
    %v1978 = vpop.f32.mrf.mxu0
    %v1979 = vadd.f32 %v1759, %v1978
    %1980 = vmatmul.bf16.gmra.mxu0 %v1410
    %v1981 = vpop.f32.mrf.mxu0
    %v1982 = vadd.f32 %v1759, %v1981
    %v1983 = vpop.f32.mrf.mxu0
    %v1984 = vadd.f32 %v1759, %v1983
    %1985 = vmatmul.bf16.gmra.mxu0 %v1413
    %v1986 = vpop.f32.mrf.mxu0
    %v1987 = vadd.f32 %v1759, %v1986
    %v1988 = vpop.f32.mrf.mxu0
    %v1989 = vadd.f32 %v1759, %v1988
    %1990 = vmatmul.bf16.gmra.mxu0 %v1416
    %v1991 = vpop.f32.mrf.mxu0
    %v1992 = vadd.f32 %v1759, %v1991
    %v1993 = vpop.f32.mrf.mxu0
    %v1994 = vadd.f32 %v1759, %v1993
    %1995 = vmatmul.bf16.gmra.mxu0 %v1419
    %v1996 = vpop.f32.mrf.mxu0
    %v1997 = vadd.f32 %v1759, %v1996
    %v1998 = vpop.f32.mrf.mxu0
    %v1999 = vadd.f32 %v1759, %v1998
    %2000 = vmatmul.bf16.gmra.mxu0 %v1422
    %v2001 = vpop.f32.mrf.mxu0
    %v2002 = vadd.f32 %v1759, %v2001
    %v2003 = vpop.f32.mrf.mxu0
    %v2004 = vadd.f32 %v1759, %v2003
    %2005 = vmatmul.bf16.gmra.mxu0 %v1425
    %v2006 = vpop.f32.mrf.mxu0
    %v2007 = vadd.f32 %v1759, %v2006
    %v2008 = vpop.f32.mrf.mxu0
    %v2009 = vadd.f32 %v1759, %v2008
    %2010 = vmatmul.bf16.gmra.mxu0 %v1428
    %v2011 = vpop.f32.mrf.mxu0
    %v2012 = vadd.f32 %v1759, %v2011
    %v2013 = vpop.f32.mrf.mxu0
    %v2014 = vadd.f32 %v1759, %v2013
    %2015 = vmatmul.bf16.gmra.mxu0 %v1431
    %v2016 = vpop.f32.mrf.mxu0
    %v2017 = vadd.f32 %v1759, %v2016
    %v2018 = vpop.f32.mrf.mxu0
    %v2019 = vadd.f32 %v1759, %v2018
    %2020 = vmatmul.bf16.gmra.mxu0 %v1434
    %v2021 = vpop.f32.mrf.mxu0
    %v2022 = vadd.f32 %v1759, %v2021
    %v2023 = vpop.f32.mrf.mxu0
    %v2024 = vadd.f32 %v1759, %v2023
    %2025 = vmatmul.bf16.gmra.mxu0 %v1437
    %v2026 = vpop.f32.mrf.mxu0
    %v2027 = vadd.f32 %v1759, %v2026
    %v2028 = vpop.f32.mrf.mxu0
    %v2029 = vadd.f32 %v1759, %v2028
    %2030 = vmatmul.bf16.gmra.mxu0 %v1440
    %v2031 = vpop.f32.mrf.mxu0
    %v2032 = vadd.f32 %v1759, %v2031
    %v2033 = vpop.f32.mrf.mxu0
    %v2034 = vadd.f32 %v1759, %v2033
    %2035 = vmatmul.bf16.gmra.mxu0 %v1443
    %v2036 = vpop.f32.mrf.mxu0
    %v2037 = vadd.f32 %v1759, %v2036
    %v2038 = vpop.f32.mrf.mxu0
    %v2039 = vadd.f32 %v1759, %v2038
    %2040 = vmatmul.bf16.gmra.mxu0 %v1446
    %v2041 = vpop.f32.mrf.mxu0
    %v2042 = vadd.f32 %v1759, %v2041
    %v2043 = vpop.f32.mrf.mxu0
    %v2044 = vadd.f32 %v1759, %v2043
    %2045 = vmatmul.bf16.gmra.mxu0 %v1449
    %v2046 = vpop.f32.mrf.mxu0
    %v2047 = vadd.f32 %v1759, %v2046
    %v2048 = vpop.f32.mrf.mxu0
    %v2049 = vadd.f32 %v1759, %v2048
    %2050 = vmatmul.bf16.gmra.mxu0 %v1452
    %v2051 = vpop.f32.mrf.mxu0
    %v2052 = vadd.f32 %v1759, %v2051
    %v2053 = vpop.f32.mrf.mxu0
    %v2054 = vadd.f32 %v1759, %v2053
    %2055 = vmatmul.bf16.gmra.mxu0 %v1455
    %v2056 = vpop.f32.mrf.mxu0
    %v2057 = vadd.f32 %v1759, %v2056
    %v2058 = vpop.f32.mrf.mxu0
    %v2059 = vadd.f32 %v1759, %v2058
    %2060 = vmatmul.bf16.gmra.mxu0 %v1458
    %v2061 = vpop.f32.mrf.mxu0
    %v2062 = vadd.f32 %v1759, %v2061
    %v2063 = vpop.f32.mrf.mxu0
    %v2064 = vadd.f32 %v1759, %v2063
    %2065 = vmatmul.bf16.gmra.mxu0 %v1461
    %v2066 = vpop.f32.mrf.mxu0
    %v2067 = vadd.f32 %v1759, %v2066
    %v2068 = vpop.f32.mrf.mxu0
    %v2069 = vadd.f32 %v1759, %v2068
    %2070 = vmatmul.bf16.gmra.mxu0 %v1464
    %v2071 = vpop.f32.mrf.mxu0
    %v2072 = vadd.f32 %v1759, %v2071
    %v2073 = vpop.f32.mrf.mxu0
    %v2074 = vadd.f32 %v1759, %v2073
    %2075 = vmatmul.bf16.gmra.mxu0 %v1467
    %v2076 = vpop.f32.mrf.mxu0
    %v2077 = vadd.f32 %v1759, %v2076
    %v2078 = vpop.f32.mrf.mxu0
    %v2079 = vadd.f32 %v1759, %v2078
    %2080 = vmatmul.bf16.gmra.mxu0 %v1470
    %v2081 = vpop.f32.mrf.mxu0
    %v2082 = vadd.f32 %v1759, %v2081
    %v2083 = vpop.f32.mrf.mxu0
    %v2084 = vadd.f32 %v1759, %v2083
    %2085 = vmatmul.bf16.gmra.mxu0 %v1473
    %v2086 = vpop.f32.mrf.mxu0
    %v2087 = vadd.f32 %v1759, %v2086
    %v2088 = vpop.f32.mrf.mxu0
    %v2089 = vadd.f32 %v1759, %v2088
    %2090 = vmatmul.bf16.gmra.mxu0 %v1476
    %v2091 = vpop.f32.mrf.mxu0
    %v2092 = vadd.f32 %v1759, %v2091
    %v2093 = vpop.f32.mrf.mxu0
    %v2094 = vadd.f32 %v1759, %v2093
    %2095 = vmatmul.bf16.gmra.mxu0 %v1479
    %v2096 = vpop.f32.mrf.mxu0
    %v2097 = vadd.f32 %v1759, %v2096
    %v2098 = vpop.f32.mrf.mxu0
    %v2099 = vadd.f32 %v1759, %v2098
    %2100 = vmatmul.bf16.gmra.mxu0 %v1482
    %v2101 = vpop.f32.mrf.mxu0
    %v2102 = vadd.f32 %v1759, %v2101
    %v2103 = vpop.f32.mrf.mxu0
    %v2104 = vadd.f32 %v1759, %v2103
    %2105 = vmatmul.bf16.gmra.mxu0 %v1485
    %v2106 = vpop.f32.mrf.mxu0
    %v2107 = vadd.f32 %v1759, %v2106
    %v2108 = vpop.f32.mrf.mxu0
    %v2109 = vadd.f32 %v1759, %v2108
    %2110 = vmatmul.bf16.gmra.mxu0 %v1488
    %v2111 = vpop.f32.mrf.mxu0
    %v2112 = vadd.f32 %v1759, %v2111
    %v2113 = vpop.f32.mrf.mxu0
    %v2114 = vadd.f32 %v1759, %v2113
    %2115 = vmatmul.bf16.gmra.mxu0 %v1491
    %v2116 = vpop.f32.mrf.mxu0
    %v2117 = vadd.f32 %v1759, %v2116
    %v2118 = vpop.f32.mrf.mxu0
    %v2119 = vadd.f32 %v1759, %v2118
    %2120 = vmatmul.bf16.gmra.mxu0 %v1494
    %v2121 = vpop.f32.mrf.mxu0
    %v2122 = vadd.f32 %v1759, %v2121
    %v2123 = vpop.f32.mrf.mxu0
    %v2124 = vadd.f32 %v1759, %v2123
    %2125 = vmatmul.bf16.gmra.mxu0 %v1497
    %v2126 = vpop.f32.mrf.mxu0
    %v2127 = vadd.f32 %v1759, %v2126
    %v2128 = vpop.f32.mrf.mxu0
    %v2129 = vadd.f32 %v1759, %v2128
    %2130 = vdwg.mxu0
    %2131 = vmatpush.bf16.msra.mxu0 %v1848
    %2132 = vmatpush.bf16.msra.mxu0 %v1847
    %2133 = vmatpush.bf16.msra.mxu0 %v1846
    %2134 = vmatpush.bf16.msra.mxu0 %v1845
    %2135 = vmatpush.bf16.msra.mxu0 %v1844
    %2136 = vmatpush.bf16.msra.mxu0 %v1843
    %2137 = vmatpush.bf16.msra.mxu0 %v1842
    %2138 = vmatpush.bf16.msra.mxu0 %v1841
    %2139 = vmatmul.bf16.gmra.mxu0 %v1627
    %v2140 = vpop.f32.mrf.mxu0
    %v2141 = vadd.f32 %v1972, %v2140
    %v2142 = vpop.f32.mrf.mxu0
    %v2143 = vadd.f32 %v1974, %v2142
    %2144 = vmatmul.bf16.gmra.mxu0 %v1630
    %v2145 = vpop.f32.mrf.mxu0
    %v2146 = vadd.f32 %v1977, %v2145
    %v2147 = vpop.f32.mrf.mxu0
    %v2148 = vadd.f32 %v1979, %v2147
    %2149 = vmatmul.bf16.gmra.mxu0 %v1633
    %v2150 = vpop.f32.mrf.mxu0
    %v2151 = vadd.f32 %v1982, %v2150
    %v2152 = vpop.f32.mrf.mxu0
    %v2153 = vadd.f32 %v1984, %v2152
    %2154 = vmatmul.bf16.gmra.mxu0 %v1636
    %v2155 = vpop.f32.mrf.mxu0
    %v2156 = vadd.f32 %v1987, %v2155
    %v2157 = vpop.f32.mrf.mxu0
    %v2158 = vadd.f32 %v1989, %v2157
    %2159 = vmatmul.bf16.gmra.mxu0 %v1639
    %v2160 = vpop.f32.mrf.mxu0
    %v2161 = vadd.f32 %v1992, %v2160
    %v2162 = vpop.f32.mrf.mxu0
    %v2163 = vadd.f32 %v1994, %v2162
    %2164 = vmatmul.bf16.gmra.mxu0 %v1642
    %v2165 = vpop.f32.mrf.mxu0
    %v2166 = vadd.f32 %v1997, %v2165
    %v2167 = vpop.f32.mrf.mxu0
    %v2168 = vadd.f32 %v1999, %v2167
    %2169 = vmatmul.bf16.gmra.mxu0 %v1645
    %v2170 = vpop.f32.mrf.mxu0
    %v2171 = vadd.f32 %v2002, %v2170
    %v2172 = vpop.f32.mrf.mxu0
    %v2173 = vadd.f32 %v2004, %v2172
    %2174 = vmatmul.bf16.gmra.mxu0 %v1648
    %v2175 = vpop.f32.mrf.mxu0
    %v2176 = vadd.f32 %v2007, %v2175
    %v2177 = vpop.f32.mrf.mxu0
    %v2178 = vadd.f32 %v2009, %v2177
    %2179 = vmatmul.bf16.gmra.mxu0 %v1651
    %v2180 = vpop.f32.mrf.mxu0
    %v2181 = vadd.f32 %v2012, %v2180
    %v2182 = vpop.f32.mrf.mxu0
    %v2183 = vadd.f32 %v2014, %v2182
    %2184 = vmatmul.bf16.gmra.mxu0 %v1654
    %v2185 = vpop.f32.mrf.mxu0
    %v2186 = vadd.f32 %v2017, %v2185
    %v2187 = vpop.f32.mrf.mxu0
    %v2188 = vadd.f32 %v2019, %v2187
    %2189 = vmatmul.bf16.gmra.mxu0 %v1657
    %v2190 = vpop.f32.mrf.mxu0
    %v2191 = vadd.f32 %v2022, %v2190
    %v2192 = vpop.f32.mrf.mxu0
    %v2193 = vadd.f32 %v2024, %v2192
    %2194 = vmatmul.bf16.gmra.mxu0 %v1660
    %v2195 = vpop.f32.mrf.mxu0
    %v2196 = vadd.f32 %v2027, %v2195
    %v2197 = vpop.f32.mrf.mxu0
    %v2198 = vadd.f32 %v2029, %v2197
    %2199 = vmatmul.bf16.gmra.mxu0 %v1663
    %v2200 = vpop.f32.mrf.mxu0
    %v2201 = vadd.f32 %v2032, %v2200
    %v2202 = vpop.f32.mrf.mxu0
    %v2203 = vadd.f32 %v2034, %v2202
    %2204 = vmatmul.bf16.gmra.mxu0 %v1666
    %v2205 = vpop.f32.mrf.mxu0
    %v2206 = vadd.f32 %v2037, %v2205
    %v2207 = vpop.f32.mrf.mxu0
    %v2208 = vadd.f32 %v2039, %v2207
    %2209 = vmatmul.bf16.gmra.mxu0 %v1669
    %v2210 = vpop.f32.mrf.mxu0
    %v2211 = vadd.f32 %v2042, %v2210
    %v2212 = vpop.f32.mrf.mxu0
    %v2213 = vadd.f32 %v2044, %v2212
    %2214 = vmatmul.bf16.gmra.mxu0 %v1672
    %v2215 = vpop.f32.mrf.mxu0
    %v2216 = vadd.f32 %v2047, %v2215
    %v2217 = vpop.f32.mrf.mxu0
    %v2218 = vadd.f32 %v2049, %v2217
    %2219 = vmatmul.bf16.gmra.mxu0 %v1675
    %v2220 = vpop.f32.mrf.mxu0
    %v2221 = vadd.f32 %v2052, %v2220
    %v2222 = vpop.f32.mrf.mxu0
    %v2223 = vadd.f32 %v2054, %v2222
    %2224 = vmatmul.bf16.gmra.mxu0 %v1678
    %v2225 = vpop.f32.mrf.mxu0
    %v2226 = vadd.f32 %v2057, %v2225
    %v2227 = vpop.f32.mrf.mxu0
    %v2228 = vadd.f32 %v2059, %v2227
    %2229 = vmatmul.bf16.gmra.mxu0 %v1681
    %v2230 = vpop.f32.mrf.mxu0
    %v2231 = vadd.f32 %v2062, %v2230
    %v2232 = vpop.f32.mrf.mxu0
    %v2233 = vadd.f32 %v2064, %v2232
    %2234 = vmatmul.bf16.gmra.mxu0 %v1684
    %v2235 = vpop.f32.mrf.mxu0
    %v2236 = vadd.f32 %v2067, %v2235
    %v2237 = vpop.f32.mrf.mxu0
    %v2238 = vadd.f32 %v2069, %v2237
    %2239 = vmatmul.bf16.gmra.mxu0 %v1687
    %v2240 = vpop.f32.mrf.mxu0
    %v2241 = vadd.f32 %v2072, %v2240
    %v2242 = vpop.f32.mrf.mxu0
    %v2243 = vadd.f32 %v2074, %v2242
    %2244 = vmatmul.bf16.gmra.mxu0 %v1690
    %v2245 = vpop.f32.mrf.mxu0
    %v2246 = vadd.f32 %v2077, %v2245
    %v2247 = vpop.f32.mrf.mxu0
    %v2248 = vadd.f32 %v2079, %v2247
    %2249 = vmatmul.bf16.gmra.mxu0 %v1693
    %v2250 = vpop.f32.mrf.mxu0
    %v2251 = vadd.f32 %v2082, %v2250
    %v2252 = vpop.f32.mrf.mxu0
    %v2253 = vadd.f32 %v2084, %v2252
    %2254 = vmatmul.bf16.gmra.mxu0 %v1696
    %v2255 = vpop.f32.mrf.mxu0
    %v2256 = vadd.f32 %v2087, %v2255
    %v2257 = vpop.f32.mrf.mxu0
    %v2258 = vadd.f32 %v2089, %v2257
    %2259 = vmatmul.bf16.gmra.mxu0 %v1699
    %v2260 = vpop.f32.mrf.mxu0
    %v2261 = vadd.f32 %v2092, %v2260
    %v2262 = vpop.f32.mrf.mxu0
    %v2263 = vadd.f32 %v2094, %v2262
    %2264 = vmatmul.bf16.gmra.mxu0 %v1702
    %v2265 = vpop.f32.mrf.mxu0
    %v2266 = vadd.f32 %v2097, %v2265
    %v2267 = vpop.f32.mrf.mxu0
    %v2268 = vadd.f32 %v2099, %v2267
    %2269 = vmatmul.bf16.gmra.mxu0 %v1705
    %v2270 = vpop.f32.mrf.mxu0
    %v2271 = vadd.f32 %v2102, %v2270
    %v2272 = vpop.f32.mrf.mxu0
    %v2273 = vadd.f32 %v2104, %v2272
    %2274 = vmatmul.bf16.gmra.mxu0 %v1708
    %v2275 = vpop.f32.mrf.mxu0
    %v2276 = vadd.f32 %v2107, %v2275
    %v2277 = vpop.f32.mrf.mxu0
    %v2278 = vadd.f32 %v2109, %v2277
    %2279 = vmatmul.bf16.gmra.mxu0 %v1711
    %v2280 = vpop.f32.mrf.mxu0
    %v2281 = vadd.f32 %v2112, %v2280
    %v2282 = vpop.f32.mrf.mxu0
    %v2283 = vadd.f32 %v2114, %v2282
    %2284 = vmatmul.bf16.gmra.mxu0 %v1714
    %v2285 = vpop.f32.mrf.mxu0
    %v2286 = vadd.f32 %v2117, %v2285
    %v2287 = vpop.f32.mrf.mxu0
    %v2288 = vadd.f32 %v2119, %v2287
    %2289 = vmatmul.bf16.gmra.mxu0 %v1717
    %v2290 = vpop.f32.mrf.mxu0
    %v2291 = vadd.f32 %v2122, %v2290
    %v2292 = vpop.f32.mrf.mxu0
    %v2293 = vadd.f32 %v2124, %v2292
    %2294 = vmatmul.bf16.gmra.mxu0 %v1719
    %v2295 = vpop.f32.mrf.mxu0
    %v2296 = vadd.f32 %v2127, %v2295
    %v2297 = vpop.f32.mrf.mxu0
    %v2298 = vadd.f32 %v2129, %v2297
    %2299 = vdwg.mxu0
    %2300 = vmatpush.bf16.msra.mxu0 0
    %2301 = vmatpush.bf16.msra.mxu0 0
    %2302 = vmatpush.bf16.msra.mxu0 0
    %2303 = vmatpush.bf16.msra.mxu0 0
    %2304 = vmatpush.bf16.msra.mxu0 0
    %2305 = vmatpush.bf16.msra.mxu0 0
    %2306 = vmatpush.bf16.msra.mxu0 %v1850
    %2307 = vmatpush.bf16.msra.mxu0 %v1849
    %2308 = vmatmul.bf16.gmra.mxu0 %v1870
    %v2309 = vpop.f32.mrf.mxu0
    %v2310 = vadd.f32 %v2141, %v2309
    %v2311 = vpop.f32.mrf.mxu0
    %v2312 = vadd.f32 %v2143, %v2311
    %2313 = vmatmul.bf16.gmra.mxu0 %v1873
    %v2314 = vpop.f32.mrf.mxu0
    %v2315 = vadd.f32 %v2146, %v2314
    %v2316 = vpop.f32.mrf.mxu0
    %v2317 = vadd.f32 %v2148, %v2316
    %2318 = vmatmul.bf16.gmra.mxu0 %v1876
    %v2319 = vpop.f32.mrf.mxu0
    %v2320 = vadd.f32 %v2151, %v2319
    %v2321 = vpop.f32.mrf.mxu0
    %v2322 = vadd.f32 %v2153, %v2321
    %2323 = vmatmul.bf16.gmra.mxu0 %v1879
    %v2324 = vpop.f32.mrf.mxu0
    %v2325 = vadd.f32 %v2156, %v2324
    %v2326 = vpop.f32.mrf.mxu0
    %v2327 = vadd.f32 %v2158, %v2326
    %2328 = vmatmul.bf16.gmra.mxu0 %v1882
    %v2329 = vpop.f32.mrf.mxu0
    %v2330 = vadd.f32 %v2161, %v2329
    %v2331 = vpop.f32.mrf.mxu0
    %v2332 = vadd.f32 %v2163, %v2331
    %2333 = vmatmul.bf16.gmra.mxu0 %v1885
    %v2334 = vpop.f32.mrf.mxu0
    %v2335 = vadd.f32 %v2166, %v2334
    %v2336 = vpop.f32.mrf.mxu0
    %v2337 = vadd.f32 %v2168, %v2336
    %2338 = vmatmul.bf16.gmra.mxu0 %v1888
    %v2339 = vpop.f32.mrf.mxu0
    %v2340 = vadd.f32 %v2171, %v2339
    %v2341 = vpop.f32.mrf.mxu0
    %v2342 = vadd.f32 %v2173, %v2341
    %2343 = vmatmul.bf16.gmra.mxu0 %v1891
    %v2344 = vpop.f32.mrf.mxu0
    %v2345 = vadd.f32 %v2176, %v2344
    %v2346 = vpop.f32.mrf.mxu0
    %v2347 = vadd.f32 %v2178, %v2346
    %2348 = vmatmul.bf16.gmra.mxu0 %v1894
    %v2349 = vpop.f32.mrf.mxu0
    %v2350 = vadd.f32 %v2181, %v2349
    %v2351 = vpop.f32.mrf.mxu0
    %v2352 = vadd.f32 %v2183, %v2351
    %2353 = vmatmul.bf16.gmra.mxu0 %v1897
    %v2354 = vpop.f32.mrf.mxu0
    %v2355 = vadd.f32 %v2186, %v2354
    %v2356 = vpop.f32.mrf.mxu0
    %v2357 = vadd.f32 %v2188, %v2356
    %2358 = vmatmul.bf16.gmra.mxu0 %v1900
    %v2359 = vpop.f32.mrf.mxu0
    %v2360 = vadd.f32 %v2191, %v2359
    %v2361 = vpop.f32.mrf.mxu0
    %v2362 = vadd.f32 %v2193, %v2361
    %2363 = vmatmul.bf16.gmra.mxu0 %v1903
    %v2364 = vpop.f32.mrf.mxu0
    %v2365 = vadd.f32 %v2196, %v2364
    %v2366 = vpop.f32.mrf.mxu0
    %v2367 = vadd.f32 %v2198, %v2366
    %2368 = vmatmul.bf16.gmra.mxu0 %v1906
    %v2369 = vpop.f32.mrf.mxu0
    %v2370 = vadd.f32 %v2201, %v2369
    %v2371 = vpop.f32.mrf.mxu0
    %v2372 = vadd.f32 %v2203, %v2371
    %2373 = vmatmul.bf16.gmra.mxu0 %v1909
    %v2374 = vpop.f32.mrf.mxu0
    %v2375 = vadd.f32 %v2206, %v2374
    %v2376 = vpop.f32.mrf.mxu0
    %v2377 = vadd.f32 %v2208, %v2376
    %2378 = vmatmul.bf16.gmra.mxu0 %v1912
    %v2379 = vpop.f32.mrf.mxu0
    %v2380 = vadd.f32 %v2211, %v2379
    %v2381 = vpop.f32.mrf.mxu0
    %v2382 = vadd.f32 %v2213, %v2381
    %2383 = vmatmul.bf16.gmra.mxu0 %v1915
    %v2384 = vpop.f32.mrf.mxu0
    %v2385 = vadd.f32 %v2216, %v2384
    %v2386 = vpop.f32.mrf.mxu0
    %v2387 = vadd.f32 %v2218, %v2386
    %2388 = vmatmul.bf16.gmra.mxu0 %v1918
    %v2389 = vpop.f32.mrf.mxu0
    %v2390 = vadd.f32 %v2221, %v2389
    %v2391 = vpop.f32.mrf.mxu0
    %v2392 = vadd.f32 %v2223, %v2391
    %2393 = vmatmul.bf16.gmra.mxu0 %v1921
    %v2394 = vpop.f32.mrf.mxu0
    %v2395 = vadd.f32 %v2226, %v2394
    %v2396 = vpop.f32.mrf.mxu0
    %v2397 = vadd.f32 %v2228, %v2396
    %2398 = vmatmul.bf16.gmra.mxu0 %v1924
    %v2399 = vpop.f32.mrf.mxu0
    %v2400 = vadd.f32 %v2231, %v2399
    %v2401 = vpop.f32.mrf.mxu0
    %v2402 = vadd.f32 %v2233, %v2401
    %2403 = vmatmul.bf16.gmra.mxu0 %v1927
    %v2404 = vpop.f32.mrf.mxu0
    %v2405 = vadd.f32 %v2236, %v2404
    %v2406 = vpop.f32.mrf.mxu0
    %v2407 = vadd.f32 %v2238, %v2406
    %2408 = vmatmul.bf16.gmra.mxu0 %v1930
    %v2409 = vpop.f32.mrf.mxu0
    %v2410 = vadd.f32 %v2241, %v2409
    %v2411 = vpop.f32.mrf.mxu0
    %v2412 = vadd.f32 %v2243, %v2411
    %2413 = vmatmul.bf16.gmra.mxu0 %v1933
    %v2414 = vpop.f32.mrf.mxu0
    %v2415 = vadd.f32 %v2246, %v2414
    %v2416 = vpop.f32.mrf.mxu0
    %v2417 = vadd.f32 %v2248, %v2416
    %2418 = vmatmul.bf16.gmra.mxu0 %v1936
    %v2419 = vpop.f32.mrf.mxu0
    %v2420 = vadd.f32 %v2251, %v2419
    %v2421 = vpop.f32.mrf.mxu0
    %v2422 = vadd.f32 %v2253, %v2421
    %2423 = vmatmul.bf16.gmra.mxu0 %v1939
    %v2424 = vpop.f32.mrf.mxu0
    %v2425 = vadd.f32 %v2256, %v2424
    %v2426 = vpop.f32.mrf.mxu0
    %v2427 = vadd.f32 %v2258, %v2426
    %2428 = vmatmul.bf16.gmra.mxu0 %v1942
    %v2429 = vpop.f32.mrf.mxu0
    %v2430 = vadd.f32 %v2261, %v2429
    %v2431 = vpop.f32.mrf.mxu0
    %v2432 = vadd.f32 %v2263, %v2431
    %2433 = vmatmul.bf16.gmra.mxu0 %v1945
    %v2434 = vpop.f32.mrf.mxu0
    %v2435 = vadd.f32 %v2266, %v2434
    %v2436 = vpop.f32.mrf.mxu0
    %v2437 = vadd.f32 %v2268, %v2436
    %2438 = vmatmul.bf16.gmra.mxu0 %v1948
    %v2439 = vpop.f32.mrf.mxu0
    %v2440 = vadd.f32 %v2271, %v2439
    %v2441 = vpop.f32.mrf.mxu0
    %v2442 = vadd.f32 %v2273, %v2441
    %2443 = vmatmul.bf16.gmra.mxu0 %v1951
    %v2444 = vpop.f32.mrf.mxu0
    %v2445 = vadd.f32 %v2276, %v2444
    %v2446 = vpop.f32.mrf.mxu0
    %v2447 = vadd.f32 %v2278, %v2446
    %2448 = vmatmul.bf16.gmra.mxu0 %v1954
    %v2449 = vpop.f32.mrf.mxu0
    %v2450 = vadd.f32 %v2281, %v2449
    %v2451 = vpop.f32.mrf.mxu0
    %v2452 = vadd.f32 %v2283, %v2451
    %2453 = vmatmul.bf16.gmra.mxu0 %v1957
    %v2454 = vpop.f32.mrf.mxu0
    %v2455 = vadd.f32 %v2286, %v2454
    %v2456 = vpop.f32.mrf.mxu0
    %v2457 = vadd.f32 %v2288, %v2456
    %2458 = vmatmul.bf16.gmra.mxu0 %v1960
    %v2459 = vpop.f32.mrf.mxu0
    %v2460 = vadd.f32 %v2291, %v2459
    %v2461 = vpop.f32.mrf.mxu0
    %v2462 = vadd.f32 %v2293, %v2461
    %2463 = vmatmul.bf16.gmra.mxu0 %v1915
    %v2464 = vpop.f32.mrf.mxu0
    %v2465 = vadd.f32 %v2296, %v2464
    %v2466 = vpop.f32.mrf.mxu0
    %v2467 = vadd.f32 %v2298, %v2466
    %2468 = vdwg.mxu0
    %v2469 = vmax.f32 %v2310, 0.0
    %v2470 = vmax.f32 %v2312, 0.0
    %v2471 = vmax.f32 %v2315, 0.0
    %v2472 = vmax.f32 %v2317, 0.0
    %v2473 = vmax.f32 %v2320, 0.0
    %v2474 = vmax.f32 %v2322, 0.0
    %v2475 = vmax.f32 %v2325, 0.0
    %v2476 = vmax.f32 %v2327, 0.0
    %v2477 = vmax.f32 %v2330, 0.0
    %v2478 = vmax.f32 %v2332, 0.0
    %v2479 = vmax.f32 %v2335, 0.0
    %v2480 = vmax.f32 %v2337, 0.0
    %v2481 = vmax.f32 %v2340, 0.0
    %v2482 = vmax.f32 %v2342, 0.0
    %v2483 = vmax.f32 %v2345, 0.0
    %v2484 = vmax.f32 %v2347, 0.0
    %v2485 = vmax.f32 %v2350, 0.0
    %v2486 = vmax.f32 %v2352, 0.0
    %v2487 = vmax.f32 %v2355, 0.0
    %v2488 = vmax.f32 %v2357, 0.0
    %v2489 = vmax.f32 %v2360, 0.0
    %v2490 = vmax.f32 %v2362, 0.0
    %v2491 = vmax.f32 %v2365, 0.0
    %v2492 = vmax.f32 %v2367, 0.0
    %v2493 = vmax.f32 %v2370, 0.0
    %v2494 = vmax.f32 %v2372, 0.0
    %v2495 = vmax.f32 %v2375, 0.0
    %v2496 = vmax.f32 %v2377, 0.0
    %v2497 = vmax.f32 %v2380, 0.0
    %v2498 = vmax.f32 %v2382, 0.0
    %v2499 = vmax.f32 %v2385, 0.0
    %v2500 = vmax.f32 %v2387, 0.0
    %v2501 = vmax.f32 %v2390, 0.0
    %v2502 = vmax.f32 %v2392, 0.0
    %v2503 = vmax.f32 %v2395, 0.0
    %v2504 = vmax.f32 %v2397, 0.0
    %v2505 = vmax.f32 %v2400, 0.0
    %v2506 = vmax.f32 %v2402, 0.0
    %v2507 = vmax.f32 %v2405, 0.0
    %v2508 = vmax.f32 %v2407, 0.0
    %v2509 = vmax.f32 %v2410, 0.0
    %v2510 = vmax.f32 %v2412, 0.0
    %v2511 = vmax.f32 %v2415, 0.0
    %v2512 = vmax.f32 %v2417, 0.0
    %v2513 = vmax.f32 %v2420, 0.0
    %v2514 = vmax.f32 %v2422, 0.0
    %v2515 = vmax.f32 %v2425, 0.0
    %v2516 = vmax.f32 %v2427, 0.0
    %v2517 = vmax.f32 %v2430, 0.0
    %v2518 = vmax.f32 %v2432, 0.0
    %v2519 = vmax.f32 %v2435, 0.0
    %v2520 = vmax.f32 %v2437, 0.0
    %v2521 = vmax.f32 %v2440, 0.0
    %v2522 = vmax.f32 %v2442, 0.0
    %v2523 = vmax.f32 %v2445, 0.0
    %v2524 = vmax.f32 %v2447, 0.0
    %v2525 = vmax.f32 %v2450, 0.0
    %v2526 = vmax.f32 %v2452, 0.0
    %v2527 = vmax.f32 %v2455, 0.0
    %v2528 = vmax.f32 %v2457, 0.0
    %v2529 = vmax.f32 %v2460, 0.0
    %v2530 = vmax.f32 %v2462, 0.0
    %v2531 = vmax.f32 %v2465, 0.0
    %v2532 = vmax.f32 %v2467, 0.0
    %v2533 = vpack.c.bf16 %v2469, %v2469
    %v2534 = vpack.c.bf16 %v2470, %v2470
    %v2535 = vpack.c.bf16 %v2471, %v2471
    %v2536 = vpack.c.bf16 %v2472, %v2472
    %v2537 = vpack.c.bf16 %v2473, %v2473
    %v2538 = vpack.c.bf16 %v2474, %v2474
    %v2539 = vpack.c.bf16 %v2475, %v2475
    %v2540 = vpack.c.bf16 %v2476, %v2476
    %v2541 = vpack.c.bf16 %v2477, %v2477
    %v2542 = vpack.c.bf16 %v2478, %v2478
    %v2543 = vpack.c.bf16 %v2479, %v2479
    %v2544 = vpack.c.bf16 %v2480, %v2480
    %v2545 = vpack.c.bf16 %v2481, %v2481
    %v2546 = vpack.c.bf16 %v2482, %v2482
    %v2547 = vpack.c.bf16 %v2483, %v2483
    %v2548 = vpack.c.bf16 %v2484, %v2484
    %v2549 = vpack.c.bf16 %v2485, %v2485
    %v2550 = vpack.c.bf16 %v2486, %v2486
    %v2551 = vpack.c.bf16 %v2487, %v2487
    %v2552 = vpack.c.bf16 %v2488, %v2488
    %v2553 = vpack.c.bf16 %v2489, %v2489
    %v2554 = vpack.c.bf16 %v2490, %v2490
    %v2555 = vpack.c.bf16 %v2491, %v2491
    %v2556 = vpack.c.bf16 %v2492, %v2492
    %v2557 = vpack.c.bf16 %v2493, %v2493
    %v2558 = vpack.c.bf16 %v2494, %v2494
    %v2559 = vpack.c.bf16 %v2495, %v2495
    %v2560 = vpack.c.bf16 %v2496, %v2496
    %v2561 = vpack.c.bf16 %v2497, %v2497
    %v2562 = vpack.c.bf16 %v2498, %v2498
    %v2563 = vpack.c.bf16 %v2499, %v2499
    %v2564 = vpack.c.bf16 %v2500, %v2500
    %v2565 = vpack.c.bf16 %v2501, %v2501
    %v2566 = vpack.c.bf16 %v2502, %v2502
    %v2567 = vpack.c.bf16 %v2503, %v2503
    %v2568 = vpack.c.bf16 %v2504, %v2504
    %v2569 = vpack.c.bf16 %v2505, %v2505
    %v2570 = vpack.c.bf16 %v2506, %v2506
    %v2571 = vpack.c.bf16 %v2507, %v2507
    %v2572 = vpack.c.bf16 %v2508, %v2508
    %v2573 = vpack.c.bf16 %v2509, %v2509
    %v2574 = vpack.c.bf16 %v2510, %v2510
    %v2575 = vpack.c.bf16 %v2511, %v2511
    %v2576 = vpack.c.bf16 %v2512, %v2512
    %v2577 = vpack.c.bf16 %v2513, %v2513
    %v2578 = vpack.c.bf16 %v2514, %v2514
    %v2579 = vpack.c.bf16 %v2515, %v2515
    %v2580 = vpack.c.bf16 %v2516, %v2516
    %v2581 = vpack.c.bf16 %v2517, %v2517
    %v2582 = vpack.c.bf16 %v2518, %v2518
    %v2583 = vpack.c.bf16 %v2519, %v2519
    %v2584 = vpack.c.bf16 %v2520, %v2520
    %v2585 = vpack.c.bf16 %v2521, %v2521
    %v2586 = vpack.c.bf16 %v2522, %v2522
    %v2587 = vpack.c.bf16 %v2523, %v2523
    %v2588 = vpack.c.bf16 %v2524, %v2524
    %v2589 = vpack.c.bf16 %v2525, %v2525
    %v2590 = vpack.c.bf16 %v2526, %v2526
    %v2591 = vpack.c.bf16 %v2527, %v2527
    %v2592 = vpack.c.bf16 %v2528, %v2528
    %v2593 = vpack.c.bf16 %v2529, %v2529
    %v2594 = vpack.c.bf16 %v2530, %v2530
    %v2595 = vpack.c.bf16 %v2531, %v2531
    %v2596 = vpack.c.bf16 %v2532, %v2532
    %v2657 = vunpack.c.l.b16 %v2533
    %v2658 = vunpack.c.l.b16 %v2534
    %v2659 = vunpack.c.l.b16 %v2535
    %v2660 = vunpack.c.l.b16 %v2536
    %v2661 = vunpack.c.l.b16 %v2537
    %v2662 = vunpack.c.l.b16 %v2538
    %v2663 = vunpack.c.l.b16 %v2539
    %v2664 = vunpack.c.l.b16 %v2540
    %v2665 = vunpack.c.l.b16 %v2541
    %v2666 = vunpack.c.l.b16 %v2542
    %v2667 = vunpack.c.l.b16 %v2543
    %v2668 = vunpack.c.l.b16 %v2544
    %v2669 = vunpack.c.l.b16 %v2545
    %v2670 = vunpack.c.l.b16 %v2546
    %v2671 = vunpack.c.l.b16 %v2547
    %v2672 = vunpack.c.l.b16 %v2548
    %v2673 = vunpack.c.l.b16 %v2549
    %v2674 = vunpack.c.l.b16 %v2550
    %v2675 = vunpack.c.l.b16 %v2551
    %v2676 = vunpack.c.l.b16 %v2552
    %v2677 = vunpack.c.l.b16 %v2553
    %v2678 = vunpack.c.l.b16 %v2554
    %v2679 = vunpack.c.l.b16 %v2555
    %v2680 = vunpack.c.l.b16 %v2556
    %v2681 = vunpack.c.l.b16 %v2557
    %v2682 = vunpack.c.l.b16 %v2558
    %v2683 = vunpack.c.l.b16 %v2559
    %v2684 = vunpack.c.l.b16 %v2560
    %v2685 = vunpack.c.l.b16 %v2561
    %v2686 = vunpack.c.l.b16 %v2562
    %v2687 = vunpack.c.l.b16 %v2565
    %v2688 = vunpack.c.l.b16 %v2566
    %v2689 = vunpack.c.l.b16 %v2567
    %v2690 = vunpack.c.l.b16 %v2568
    %v2691 = vunpack.c.l.b16 %v2569
    %v2692 = vunpack.c.l.b16 %v2570
    %v2693 = vunpack.c.l.b16 %v2571
    %v2694 = vunpack.c.l.b16 %v2572
    %v2695 = vunpack.c.l.b16 %v2573
    %v2696 = vunpack.c.l.b16 %v2574
    %v2697 = vunpack.c.l.b16 %v2575
    %v2698 = vunpack.c.l.b16 %v2576
    %v2699 = vunpack.c.l.b16 %v2577
    %v2700 = vunpack.c.l.b16 %v2578
    %v2701 = vunpack.c.l.b16 %v2579
    %v2702 = vunpack.c.l.b16 %v2580
    %v2703 = vunpack.c.l.b16 %v2581
    %v2704 = vunpack.c.l.b16 %v2582
    %v2705 = vunpack.c.l.b16 %v2583
    %v2706 = vunpack.c.l.b16 %v2584
    %v2707 = vunpack.c.l.b16 %v2585
    %v2708 = vunpack.c.l.b16 %v2586
    %v2709 = vunpack.c.l.b16 %v2587
    %v2710 = vunpack.c.l.b16 %v2588
    %v2711 = vunpack.c.l.b16 %v2589
    %v2712 = vunpack.c.l.b16 %v2590
    %v2713 = vunpack.c.l.b16 %v2591
    %v2714 = vunpack.c.l.b16 %v2592
    %v2715 = vunpack.c.l.b16 %v2593
    %v2716 = vunpack.c.l.b16 %v2594
    %v2717 = vpack.c.b16 %v2658, %v2657
    %v2718 = vpack.c.b16 %v2660, %v2659
    %v2719 = vpack.c.b16 %v2662, %v2661
    %v2720 = vpack.c.b16 %v2664, %v2663
    %v2721 = vpack.c.b16 %v2666, %v2665
    %v2722 = vpack.c.b16 %v2668, %v2667
    %v2723 = vpack.c.b16 %v2670, %v2669
    %v2724 = vpack.c.b16 %v2672, %v2671
    %v2725 = vpack.c.b16 %v2674, %v2673
    %v2726 = vpack.c.b16 %v2676, %v2675
    %v2727 = vpack.c.b16 %v2678, %v2677
    %v2728 = vpack.c.b16 %v2680, %v2679
    %v2729 = vpack.c.b16 %v2682, %v2681
    %v2730 = vpack.c.b16 %v2684, %v2683
    %v2731 = vpack.c.b16 %v2686, %v2685
    %v2732 = vpack.c.b16 %v2688, %v2687
    %v2733 = vpack.c.b16 %v2690, %v2689
    %v2734 = vpack.c.b16 %v2692, %v2691
    %v2735 = vpack.c.b16 %v2694, %v2693
    %v2736 = vpack.c.b16 %v2696, %v2695
    %v2737 = vpack.c.b16 %v2698, %v2697
    %v2738 = vpack.c.b16 %v2700, %v2699
    %v2739 = vpack.c.b16 %v2702, %v2701
    %v2740 = vpack.c.b16 %v2704, %v2703
    %v2741 = vpack.c.b16 %v2706, %v2705
    %v2742 = vpack.c.b16 %v2708, %v2707
    %v2743 = vpack.c.b16 %v2710, %v2709
    %v2744 = vpack.c.b16 %v2712, %v2711
    %v2745 = vpack.c.b16 %v2714, %v2713
    %v2746 = vpack.c.b16 %v2716, %v2715
    %v2748 = vshrl.u32 %v2717, 16
    %v2750 = vrot.slane %v2748, 7
    %v2751 = vshll.u32 %v2717, 16
    %v2753 = vor.u32 %v2750, %v2751
    %v2755 = vshrl.u32 %v2718, 16
    %v2757 = vrot.slane %v2755, 7
    %v2758 = vshll.u32 %v2718, 16
    %v2760 = vor.u32 %v2757, %v2758
    %v2762 = vshrl.u32 %v2719, 16
    %v2764 = vrot.slane %v2762, 7
    %v2765 = vshll.u32 %v2719, 16
    %v2767 = vor.u32 %v2764, %v2765
    %v2769 = vshrl.u32 %v2720, 16
    %v2771 = vrot.slane %v2769, 7
    %v2772 = vshll.u32 %v2720, 16
    %v2774 = vor.u32 %v2771, %v2772
    %v2776 = vshrl.u32 %v2721, 16
    %v2778 = vrot.slane %v2776, 7
    %v2779 = vshll.u32 %v2721, 16
    %v2781 = vor.u32 %v2778, %v2779
    %v2783 = vshrl.u32 %v2722, 16
    %v2785 = vrot.slane %v2783, 7
    %v2786 = vshll.u32 %v2722, 16
    %v2788 = vor.u32 %v2785, %v2786
    %v2790 = vshrl.u32 %v2723, 16
    %v2792 = vrot.slane %v2790, 7
    %v2793 = vshll.u32 %v2723, 16
    %v2795 = vor.u32 %v2792, %v2793
    %v2797 = vshrl.u32 %v2724, 16
    %v2799 = vrot.slane %v2797, 7
    %v2800 = vshll.u32 %v2724, 16
    %v2802 = vor.u32 %v2799, %v2800
    %v2804 = vshrl.u32 %v2725, 16
    %v2806 = vrot.slane %v2804, 7
    %v2807 = vshll.u32 %v2725, 16
    %v2809 = vor.u32 %v2806, %v2807
    %v2811 = vshrl.u32 %v2726, 16
    %v2813 = vrot.slane %v2811, 7
    %v2814 = vshll.u32 %v2726, 16
    %v2816 = vor.u32 %v2813, %v2814
    %v2818 = vshrl.u32 %v2727, 16
    %v2820 = vrot.slane %v2818, 7
    %v2821 = vshll.u32 %v2727, 16
    %v2823 = vor.u32 %v2820, %v2821
    %v2825 = vshrl.u32 %v2728, 16
    %v2827 = vrot.slane %v2825, 7
    %v2828 = vshll.u32 %v2728, 16
    %v2830 = vor.u32 %v2827, %v2828
    %v2832 = vshrl.u32 %v2729, 16
    %v2834 = vrot.slane %v2832, 7
    %v2835 = vshll.u32 %v2729, 16
    %v2837 = vor.u32 %v2834, %v2835
    %v2839 = vshrl.u32 %v2730, 16
    %v2841 = vrot.slane %v2839, 7
    %v2842 = vshll.u32 %v2730, 16
    %v2844 = vor.u32 %v2841, %v2842
    %v2846 = vshrl.u32 %v2731, 16
    %v2848 = vrot.slane %v2846, 7
    %v2849 = vshll.u32 %v2731, 16
    %v2851 = vor.u32 %v2848, %v2849
    %v2853 = vshrl.u32 %v2732, 16
    %v2855 = vrot.slane %v2853, 7
    %v2856 = vshll.u32 %v2732, 16
    %v2858 = vor.u32 %v2855, %v2856
    %v2860 = vshrl.u32 %v2733, 16
    %v2862 = vrot.slane %v2860, 7
    %v2863 = vshll.u32 %v2733, 16
    %v2865 = vor.u32 %v2862, %v2863
    %v2867 = vshrl.u32 %v2734, 16
    %v2869 = vrot.slane %v2867, 7
    %v2870 = vshll.u32 %v2734, 16
    %v2872 = vor.u32 %v2869, %v2870
    %v2874 = vshrl.u32 %v2735, 16
    %v2876 = vrot.slane %v2874, 7
    %v2877 = vshll.u32 %v2735, 16
    %v2879 = vor.u32 %v2876, %v2877
    %v2881 = vshrl.u32 %v2736, 16
    %v2883 = vrot.slane %v2881, 7
    %v2884 = vshll.u32 %v2736, 16
    %v2886 = vor.u32 %v2883, %v2884
    %v2888 = vshrl.u32 %v2737, 16
    %v2890 = vrot.slane %v2888, 7
    %v2891 = vshll.u32 %v2737, 16
    %v2893 = vor.u32 %v2890, %v2891
    %v2895 = vshrl.u32 %v2738, 16
    %v2897 = vrot.slane %v2895, 7
    %v2898 = vshll.u32 %v2738, 16
    %v2900 = vor.u32 %v2897, %v2898
    %v2902 = vshrl.u32 %v2739, 16
    %v2904 = vrot.slane %v2902, 7
    %v2905 = vshll.u32 %v2739, 16
    %v2907 = vor.u32 %v2904, %v2905
    %v2909 = vshrl.u32 %v2740, 16
    %v2911 = vrot.slane %v2909, 7
    %v2912 = vshll.u32 %v2740, 16
    %v2914 = vor.u32 %v2911, %v2912
    %v2916 = vshrl.u32 %v2741, 16
    %v2918 = vrot.slane %v2916, 7
    %v2919 = vshll.u32 %v2741, 16
    %v2921 = vor.u32 %v2918, %v2919
    %v2923 = vshrl.u32 %v2742, 16
    %v2925 = vrot.slane %v2923, 7
    %v2926 = vshll.u32 %v2742, 16
    %v2928 = vor.u32 %v2925, %v2926
    %v2930 = vshrl.u32 %v2743, 16
    %v2932 = vrot.slane %v2930, 7
    %v2933 = vshll.u32 %v2743, 16
    %v2935 = vor.u32 %v2932, %v2933
    %v2937 = vshrl.u32 %v2744, 16
    %v2939 = vrot.slane %v2937, 7
    %v2940 = vshll.u32 %v2744, 16
    %v2942 = vor.u32 %v2939, %v2940
    %v2944 = vshrl.u32 %v2745, 16
    %v2946 = vrot.slane %v2944, 7
    %v2947 = vshll.u32 %v2745, 16
    %v2949 = vor.u32 %v2946, %v2947
    %v2951 = vshrl.u32 %v2746, 16
    %v2953 = vrot.slane %v2951, 7
    %v2954 = vshll.u32 %v2746, 16
    %v2956 = vor.u32 %v2953, %v2954
    %v2987 = vsel %vm592, 0, %v2753
    %v2988 = vsel %vm592, 0, %v2760
    %v2989 = vsel %vm592, 0, %v2767
    %v2990 = vsel %vm592, 0, %v2774
    %v2991 = vsel %vm592, 0, %v2781
    %v2992 = vsel %vm592, 0, %v2788
    %v2993 = vsel %vm592, 0, %v2795
    %v2994 = vsel %vm592, 0, %v2802
    %v2995 = vsel %vm592, 0, %v2809
    %v2996 = vsel %vm592, 0, %v2816
    %v2997 = vsel %vm592, 0, %v2823
    %v2998 = vsel %vm592, 0, %v2830
    %v2999 = vsel %vm592, 0, %v2837
    %v3000 = vsel %vm592, 0, %v2844
    %v3001 = vsel %vm592, 0, %v2851
    %v3002 = vsel %vm592, 0, %v2858
    %v3003 = vsel %vm592, 0, %v2865
    %v3004 = vsel %vm592, 0, %v2872
    %v3005 = vsel %vm592, 0, %v2879
    %v3006 = vsel %vm592, 0, %v2886
    %v3007 = vsel %vm592, 0, %v2893
    %v3008 = vsel %vm592, 0, %v2900
    %v3009 = vsel %vm592, 0, %v2907
    %v3010 = vsel %vm592, 0, %v2914
    %v3011 = vsel %vm592, 0, %v2921
    %v3012 = vsel %vm592, 0, %v2928
    %v3013 = vsel %vm592, 0, %v2935
    %v3014 = vsel %vm592, 0, %v2942
    %v3015 = vsel %vm592, 0, %v2949
    %v3016 = vsel %vm592, 0, %v2956
    %v3017 = vrot.slane %v2751, 1
    %v3018 = vor.u32 %v2748, %v3017
    %v3019 = vrot.slane %v2758, 1
    %v3020 = vor.u32 %v2755, %v3019
    %v3021 = vrot.slane %v2765, 1
    %v3022 = vor.u32 %v2762, %v3021
    %v3023 = vrot.slane %v2772, 1
    %v3024 = vor.u32 %v2769, %v3023
    %v3025 = vrot.slane %v2779, 1
    %v3026 = vor.u32 %v2776, %v3025
    %v3027 = vrot.slane %v2786, 1
    %v3028 = vor.u32 %v2783, %v3027
    %v3029 = vrot.slane %v2793, 1
    %v3030 = vor.u32 %v2790, %v3029
    %v3031 = vrot.slane %v2800, 1
    %v3032 = vor.u32 %v2797, %v3031
    %v3033 = vrot.slane %v2807, 1
    %v3034 = vor.u32 %v2804, %v3033
    %v3035 = vrot.slane %v2814, 1
    %v3036 = vor.u32 %v2811, %v3035
    %v3037 = vrot.slane %v2821, 1
    %v3038 = vor.u32 %v2818, %v3037
    %v3039 = vrot.slane %v2828, 1
    %v3040 = vor.u32 %v2825, %v3039
    %v3041 = vrot.slane %v2835, 1
    %v3042 = vor.u32 %v2832, %v3041
    %v3043 = vrot.slane %v2842, 1
    %v3044 = vor.u32 %v2839, %v3043
    %v3045 = vrot.slane %v2849, 1
    %v3046 = vor.u32 %v2846, %v3045
    %v3047 = vrot.slane %v2856, 1
    %v3048 = vor.u32 %v2853, %v3047
    %v3049 = vrot.slane %v2863, 1
    %v3050 = vor.u32 %v2860, %v3049
    %v3051 = vrot.slane %v2870, 1
    %v3052 = vor.u32 %v2867, %v3051
    %v3053 = vrot.slane %v2877, 1
    %v3054 = vor.u32 %v2874, %v3053
    %v3055 = vrot.slane %v2884, 1
    %v3056 = vor.u32 %v2881, %v3055
    %v3057 = vrot.slane %v2891, 1
    %v3058 = vor.u32 %v2888, %v3057
    %v3059 = vrot.slane %v2898, 1
    %v3060 = vor.u32 %v2895, %v3059
    %v3061 = vrot.slane %v2905, 1
    %v3062 = vor.u32 %v2902, %v3061
    %v3063 = vrot.slane %v2912, 1
    %v3064 = vor.u32 %v2909, %v3063
    %v3065 = vrot.slane %v2919, 1
    %v3066 = vor.u32 %v2916, %v3065
    %v3067 = vrot.slane %v2926, 1
    %v3068 = vor.u32 %v2923, %v3067
    %v3069 = vrot.slane %v2933, 1
    %v3070 = vor.u32 %v2930, %v3069
    %v3071 = vrot.slane %v2940, 1
    %v3072 = vor.u32 %v2937, %v3071
    %v3073 = vrot.slane %v2947, 1
    %v3074 = vor.u32 %v2944, %v3073
    %v3075 = vrot.slane %v2954, 1
    %v3076 = vor.u32 %v2951, %v3075
    %v3107 = vsel %vm719, %v3018, 0
    %v3108 = vsel %vm719, %v3020, 0
    %v3109 = vsel %vm719, %v3022, 0
    %v3110 = vsel %vm719, %v3024, 0
    %v3111 = vsel %vm719, %v3026, 0
    %v3112 = vsel %vm719, %v3028, 0
    %v3113 = vsel %vm719, %v3030, 0
    %v3114 = vsel %vm719, %v3032, 0
    %v3115 = vsel %vm719, %v3034, 0
    %v3116 = vsel %vm719, %v3036, 0
    %v3117 = vsel %vm719, %v3038, 0
    %v3118 = vsel %vm719, %v3040, 0
    %v3119 = vsel %vm719, %v3042, 0
    %v3120 = vsel %vm719, %v3044, 0
    %v3121 = vsel %vm719, %v3046, 0
    %v3122 = vsel %vm719, %v3048, 0
    %v3123 = vsel %vm719, %v3050, 0
    %v3124 = vsel %vm719, %v3052, 0
    %v3125 = vsel %vm719, %v3054, 0
    %v3126 = vsel %vm719, %v3056, 0
    %v3127 = vsel %vm719, %v3058, 0
    %v3128 = vsel %vm719, %v3060, 0
    %v3129 = vsel %vm719, %v3062, 0
    %v3130 = vsel %vm719, %v3064, 0
    %v3131 = vsel %vm719, %v3066, 0
    %v3132 = vsel %vm719, %v3068, 0
    %v3133 = vsel %vm719, %v3070, 0
    %v3134 = vsel %vm719, %v3072, 0
    %v3135 = vsel %vm719, %v3074, 0
    %v3136 = vsel %vm719, %v3076, 0
    %v3141 = vunpack.c.l.b16 %v2563
    %v3142 = vunpack.c.l.b16 %v2564
    %v3143 = vunpack.c.l.b16 %v2595
    %v3144 = vunpack.c.l.b16 %v2596
    %v3145 = vpack.c.b16 %v3142, %v3141
    %v3146 = vpack.c.b16 %v3144, %v3143
    %v3148 = vshrl.u32 %v3145, 16
    %v3150 = vrot.slane %v3148, 7
    %v3151 = vshll.u32 %v3145, 16
    %v3153 = vor.u32 %v3150, %v3151
    %v3155 = vshrl.u32 %v3146, 16
    %v3157 = vrot.slane %v3155, 7
    %v3158 = vshll.u32 %v3146, 16
    %v3160 = vor.u32 %v3157, %v3158
    %v3163 = vsel %vm592, 0, %v3153
    %v3164 = vsel %vm592, 0, %v3160
    %v3165 = vrot.slane %v3151, 1
    %v3166 = vor.u32 %v3148, %v3165
    %v3167 = vrot.slane %v3158, 1
    %v3168 = vor.u32 %v3155, %v3167
    %v3171 = vsel %vm719, %v3166, 0
    %v3172 = vsel %vm719, %v3168, 0
    %3173 = vrot.lane.b32.xlu0 %v2717, 32
    %v3174 = vpop.permute.xlu0 %3173
    %3175 = vrot.lane.b32.xlu0 %v2718, 32
    %v3176 = vpop.permute.xlu0 %3175
    %3177 = vrot.lane.b32.xlu0 %v2719, 32
    %v3178 = vpop.permute.xlu0 %3177
    %3179 = vrot.lane.b32.xlu0 %v2720, 32
    %v3180 = vpop.permute.xlu0 %3179
    %3181 = vrot.lane.b32.xlu0 %v2721, 32
    %v3182 = vpop.permute.xlu0 %3181
    %3183 = vrot.lane.b32.xlu0 %v2722, 32
    %v3184 = vpop.permute.xlu0 %3183
    %3185 = vrot.lane.b32.xlu0 %v2723, 32
    %v3186 = vpop.permute.xlu0 %3185
    %3187 = vrot.lane.b32.xlu0 %v2724, 32
    %v3188 = vpop.permute.xlu0 %3187
    %3189 = vrot.lane.b32.xlu0 %v2725, 32
    %v3190 = vpop.permute.xlu0 %3189
    %3191 = vrot.lane.b32.xlu0 %v2726, 32
    %v3192 = vpop.permute.xlu0 %3191
    %3193 = vrot.lane.b32.xlu0 %v2727, 32
    %v3194 = vpop.permute.xlu0 %3193
    %3195 = vrot.lane.b32.xlu0 %v2728, 32
    %v3196 = vpop.permute.xlu0 %3195
    %3197 = vrot.lane.b32.xlu0 %v2729, 32
    %v3198 = vpop.permute.xlu0 %3197
    %3199 = vrot.lane.b32.xlu0 %v2730, 32
    %v3200 = vpop.permute.xlu0 %3199
    %3201 = vrot.lane.b32.xlu0 %v2731, 32
    %v3202 = vpop.permute.xlu0 %3201
    %3203 = vrot.lane.b32.xlu0 %v2732, 32
    %v3204 = vpop.permute.xlu0 %3203
    %3205 = vrot.lane.b32.xlu0 %v2733, 32
    %v3206 = vpop.permute.xlu0 %3205
    %3207 = vrot.lane.b32.xlu0 %v2734, 32
    %v3208 = vpop.permute.xlu0 %3207
    %3209 = vrot.lane.b32.xlu0 %v2735, 32
    %v3210 = vpop.permute.xlu0 %3209
    %3211 = vrot.lane.b32.xlu0 %v2736, 32
    %v3212 = vpop.permute.xlu0 %3211
    %3213 = vrot.lane.b32.xlu0 %v2737, 32
    %v3214 = vpop.permute.xlu0 %3213
    %3215 = vrot.lane.b32.xlu0 %v2738, 32
    %v3216 = vpop.permute.xlu0 %3215
    %3217 = vrot.lane.b32.xlu0 %v2739, 32
    %v3218 = vpop.permute.xlu0 %3217
    %3219 = vrot.lane.b32.xlu0 %v2740, 32
    %v3220 = vpop.permute.xlu0 %3219
    %3221 = vrot.lane.b32.xlu0 %v2741, 32
    %v3222 = vpop.permute.xlu0 %3221
    %3223 = vrot.lane.b32.xlu0 %v2742, 32
    %v3224 = vpop.permute.xlu0 %3223
    %3225 = vrot.lane.b32.xlu0 %v2743, 32
    %v3226 = vpop.permute.xlu0 %3225
    %3227 = vrot.lane.b32.xlu0 %v2744, 32
    %v3228 = vpop.permute.xlu0 %3227
    %3229 = vrot.lane.b32.xlu0 %v2745, 32
    %v3230 = vpop.permute.xlu0 %3229
    %3231 = vrot.lane.b32.xlu0 %v2746, 32
    %v3232 = vpop.permute.xlu0 %3231
    %3263 = vrot.lane.b32.xlu0 %v3107, 64
    %v3264 = vpop.permute.xlu0 %3263
    %3265 = vrot.lane.b32.xlu0 %v3108, 64
    %v3266 = vpop.permute.xlu0 %3265
    %3267 = vrot.lane.b32.xlu0 %v3109, 64
    %v3268 = vpop.permute.xlu0 %3267
    %3269 = vrot.lane.b32.xlu0 %v3110, 64
    %v3270 = vpop.permute.xlu0 %3269
    %3271 = vrot.lane.b32.xlu0 %v3111, 64
    %v3272 = vpop.permute.xlu0 %3271
    %3273 = vrot.lane.b32.xlu0 %v3112, 64
    %v3274 = vpop.permute.xlu0 %3273
    %3275 = vrot.lane.b32.xlu0 %v3113, 64
    %v3276 = vpop.permute.xlu0 %3275
    %3277 = vrot.lane.b32.xlu0 %v3114, 64
    %v3278 = vpop.permute.xlu0 %3277
    %3279 = vrot.lane.b32.xlu0 %v3115, 64
    %v3280 = vpop.permute.xlu0 %3279
    %3281 = vrot.lane.b32.xlu0 %v3116, 64
    %v3282 = vpop.permute.xlu0 %3281
    %3283 = vrot.lane.b32.xlu0 %v3117, 64
    %v3284 = vpop.permute.xlu0 %3283
    %3285 = vrot.lane.b32.xlu0 %v3118, 64
    %v3286 = vpop.permute.xlu0 %3285
    %3287 = vrot.lane.b32.xlu0 %v3119, 64
    %v3288 = vpop.permute.xlu0 %3287
    %3289 = vrot.lane.b32.xlu0 %v3120, 64
    %v3290 = vpop.permute.xlu0 %3289
    %3291 = vrot.lane.b32.xlu0 %v3121, 64
    %v3292 = vpop.permute.xlu0 %3291
    %3293 = vrot.lane.b32.xlu0 %v3122, 64
    %v3294 = vpop.permute.xlu0 %3293
    %3295 = vrot.lane.b32.xlu0 %v3123, 64
    %v3296 = vpop.permute.xlu0 %3295
    %3297 = vrot.lane.b32.xlu0 %v3124, 64
    %v3298 = vpop.permute.xlu0 %3297
    %3299 = vrot.lane.b32.xlu0 %v3125, 64
    %v3300 = vpop.permute.xlu0 %3299
    %3301 = vrot.lane.b32.xlu0 %v3126, 64
    %v3302 = vpop.permute.xlu0 %3301
    %3303 = vrot.lane.b32.xlu0 %v3127, 64
    %v3304 = vpop.permute.xlu0 %3303
    %3305 = vrot.lane.b32.xlu0 %v3128, 64
    %v3306 = vpop.permute.xlu0 %3305
    %3307 = vrot.lane.b32.xlu0 %v3129, 64
    %v3308 = vpop.permute.xlu0 %3307
    %3309 = vrot.lane.b32.xlu0 %v3130, 64
    %v3310 = vpop.permute.xlu0 %3309
    %3311 = vrot.lane.b32.xlu0 %v3131, 64
    %v3312 = vpop.permute.xlu0 %3311
    %3313 = vrot.lane.b32.xlu0 %v3132, 64
    %v3314 = vpop.permute.xlu0 %3313
    %3315 = vrot.lane.b32.xlu0 %v3133, 64
    %v3316 = vpop.permute.xlu0 %3315
    %3317 = vrot.lane.b32.xlu0 %v3134, 64
    %v3318 = vpop.permute.xlu0 %3317
    %3319 = vrot.lane.b32.xlu0 %v3135, 64
    %v3320 = vpop.permute.xlu0 %3319
    %3321 = vrot.lane.b32.xlu0 %v3136, 64
    %v3322 = vpop.permute.xlu0 %3321
    %3355 = vrot.lane.b32.xlu0 %v2987, 96
    %v3356 = vpop.permute.xlu0 %3355
    %3357 = vrot.lane.b32.xlu0 %v2988, 96
    %v3358 = vpop.permute.xlu0 %3357
    %3359 = vrot.lane.b32.xlu0 %v2989, 96
    %v3360 = vpop.permute.xlu0 %3359
    %3361 = vrot.lane.b32.xlu0 %v2990, 96
    %v3362 = vpop.permute.xlu0 %3361
    %3363 = vrot.lane.b32.xlu0 %v2991, 96
    %v3364 = vpop.permute.xlu0 %3363
    %3365 = vrot.lane.b32.xlu0 %v2992, 96
    %v3366 = vpop.permute.xlu0 %3365
    %3367 = vrot.lane.b32.xlu0 %v2993, 96
    %v3368 = vpop.permute.xlu0 %3367
    %3369 = vrot.lane.b32.xlu0 %v2994, 96
    %v3370 = vpop.permute.xlu0 %3369
    %3371 = vrot.lane.b32.xlu0 %v2995, 96
    %v3372 = vpop.permute.xlu0 %3371
    %3373 = vrot.lane.b32.xlu0 %v2996, 96
    %v3374 = vpop.permute.xlu0 %3373
    %3375 = vrot.lane.b32.xlu0 %v2997, 96
    %v3376 = vpop.permute.xlu0 %3375
    %3377 = vrot.lane.b32.xlu0 %v2998, 96
    %v3378 = vpop.permute.xlu0 %3377
    %3379 = vrot.lane.b32.xlu0 %v2999, 96
    %v3380 = vpop.permute.xlu0 %3379
    %3381 = vrot.lane.b32.xlu0 %v3000, 96
    %v3382 = vpop.permute.xlu0 %3381
    %3383 = vrot.lane.b32.xlu0 %v3001, 96
    %v3384 = vpop.permute.xlu0 %3383
    %3385 = vrot.lane.b32.xlu0 %v3163, 96
    %v3386 = vpop.permute.xlu0 %3385
    %3387 = vrot.lane.b32.xlu0 %v3002, 96
    %v3388 = vpop.permute.xlu0 %3387
    %3389 = vrot.lane.b32.xlu0 %v3003, 96
    %v3390 = vpop.permute.xlu0 %3389
    %3391 = vrot.lane.b32.xlu0 %v3004, 96
    %v3392 = vpop.permute.xlu0 %3391
    %3393 = vrot.lane.b32.xlu0 %v3005, 96
    %v3394 = vpop.permute.xlu0 %3393
    %3395 = vrot.lane.b32.xlu0 %v3006, 96
    %v3396 = vpop.permute.xlu0 %3395
    %3397 = vrot.lane.b32.xlu0 %v3007, 96
    %v3398 = vpop.permute.xlu0 %3397
    %3399 = vrot.lane.b32.xlu0 %v3008, 96
    %v3400 = vpop.permute.xlu0 %3399
    %3401 = vrot.lane.b32.xlu0 %v3009, 96
    %v3402 = vpop.permute.xlu0 %3401
    %3403 = vrot.lane.b32.xlu0 %v3010, 96
    %v3404 = vpop.permute.xlu0 %3403
    %3405 = vrot.lane.b32.xlu0 %v3011, 96
    %v3406 = vpop.permute.xlu0 %3405
    %3407 = vrot.lane.b32.xlu0 %v3012, 96
    %v3408 = vpop.permute.xlu0 %3407
    %3409 = vrot.lane.b32.xlu0 %v3013, 96
    %v3410 = vpop.permute.xlu0 %3409
    %3411 = vrot.lane.b32.xlu0 %v3014, 96
    %v3412 = vpop.permute.xlu0 %3411
    %3413 = vrot.lane.b32.xlu0 %v3015, 96
    %v3414 = vpop.permute.xlu0 %3413
    %3415 = vrot.lane.b32.xlu0 %v3016, 96
    %v3416 = vpop.permute.xlu0 %3415
    %3417 = vrot.lane.b32.xlu0 %v3164, 96
    %v3418 = vpop.permute.xlu0 %3417
    %3421 = vrot.lane.b32.xlu0 %v3107, 32
    %v3422 = vpop.permute.xlu0 %3421
    %3423 = vrot.lane.b32.xlu0 %v3108, 32
    %v3424 = vpop.permute.xlu0 %3423
    %3425 = vrot.lane.b32.xlu0 %v3109, 32
    %v3426 = vpop.permute.xlu0 %3425
    %3427 = vrot.lane.b32.xlu0 %v3110, 32
    %v3428 = vpop.permute.xlu0 %3427
    %3429 = vrot.lane.b32.xlu0 %v3111, 32
    %v3430 = vpop.permute.xlu0 %3429
    %3431 = vrot.lane.b32.xlu0 %v3112, 32
    %v3432 = vpop.permute.xlu0 %3431
    %3433 = vrot.lane.b32.xlu0 %v3113, 32
    %v3434 = vpop.permute.xlu0 %3433
    %3435 = vrot.lane.b32.xlu0 %v3114, 32
    %v3436 = vpop.permute.xlu0 %3435
    %3437 = vrot.lane.b32.xlu0 %v3115, 32
    %v3438 = vpop.permute.xlu0 %3437
    %3439 = vrot.lane.b32.xlu0 %v3116, 32
    %v3440 = vpop.permute.xlu0 %3439
    %3441 = vrot.lane.b32.xlu0 %v3117, 32
    %v3442 = vpop.permute.xlu0 %3441
    %3443 = vrot.lane.b32.xlu0 %v3118, 32
    %v3444 = vpop.permute.xlu0 %3443
    %3445 = vrot.lane.b32.xlu0 %v3119, 32
    %v3446 = vpop.permute.xlu0 %3445
    %3447 = vrot.lane.b32.xlu0 %v3120, 32
    %v3448 = vpop.permute.xlu0 %3447
    %3449 = vrot.lane.b32.xlu0 %v3121, 32
    %v3450 = vpop.permute.xlu0 %3449
    %3451 = vrot.lane.b32.xlu0 %v3171, 32
    %v3452 = vpop.permute.xlu0 %3451
    %3453 = vrot.lane.b32.xlu0 %v3122, 32
    %v3454 = vpop.permute.xlu0 %3453
    %3455 = vrot.lane.b32.xlu0 %v3123, 32
    %v3456 = vpop.permute.xlu0 %3455
    %3457 = vrot.lane.b32.xlu0 %v3124, 32
    %v3458 = vpop.permute.xlu0 %3457
    %3459 = vrot.lane.b32.xlu0 %v3125, 32
    %v3460 = vpop.permute.xlu0 %3459
    %3461 = vrot.lane.b32.xlu0 %v3126, 32
    %v3462 = vpop.permute.xlu0 %3461
    %3463 = vrot.lane.b32.xlu0 %v3127, 32
    %v3464 = vpop.permute.xlu0 %3463
    %3465 = vrot.lane.b32.xlu0 %v3128, 32
    %v3466 = vpop.permute.xlu0 %3465
    %3467 = vrot.lane.b32.xlu0 %v3129, 32
    %v3468 = vpop.permute.xlu0 %3467
    %3469 = vrot.lane.b32.xlu0 %v3130, 32
    %v3470 = vpop.permute.xlu0 %3469
    %3471 = vrot.lane.b32.xlu0 %v3131, 32
    %v3472 = vpop.permute.xlu0 %3471
    %3473 = vrot.lane.b32.xlu0 %v3132, 32
    %v3474 = vpop.permute.xlu0 %3473
    %3475 = vrot.lane.b32.xlu0 %v3133, 32
    %v3476 = vpop.permute.xlu0 %3475
    %3477 = vrot.lane.b32.xlu0 %v3134, 32
    %v3478 = vpop.permute.xlu0 %3477
    %3479 = vrot.lane.b32.xlu0 %v3135, 32
    %v3480 = vpop.permute.xlu0 %3479
    %3481 = vrot.lane.b32.xlu0 %v3136, 32
    %v3482 = vpop.permute.xlu0 %3481
    %3483 = vrot.lane.b32.xlu0 %v3172, 32
    %v3484 = vpop.permute.xlu0 %3483
    %3485 = vrot.lane.b32.xlu0 %v2988, 64
    %v3486 = vpop.permute.xlu0 %3485
    %3487 = vrot.lane.b32.xlu0 %v2989, 64
    %v3488 = vpop.permute.xlu0 %3487
    %3489 = vrot.lane.b32.xlu0 %v2990, 64
    %v3490 = vpop.permute.xlu0 %3489
    %3491 = vrot.lane.b32.xlu0 %v2991, 64
    %v3492 = vpop.permute.xlu0 %3491
    %3493 = vrot.lane.b32.xlu0 %v2992, 64
    %v3494 = vpop.permute.xlu0 %3493
    %3495 = vrot.lane.b32.xlu0 %v2993, 64
    %v3496 = vpop.permute.xlu0 %3495
    %3497 = vrot.lane.b32.xlu0 %v2994, 64
    %v3498 = vpop.permute.xlu0 %3497
    %3499 = vrot.lane.b32.xlu0 %v2995, 64
    %v3500 = vpop.permute.xlu0 %3499
    %3501 = vrot.lane.b32.xlu0 %v2996, 64
    %v3502 = vpop.permute.xlu0 %3501
    %3503 = vrot.lane.b32.xlu0 %v2997, 64
    %v3504 = vpop.permute.xlu0 %3503
    %3505 = vrot.lane.b32.xlu0 %v2998, 64
    %v3506 = vpop.permute.xlu0 %3505
    %3507 = vrot.lane.b32.xlu0 %v2999, 64
    %v3508 = vpop.permute.xlu0 %3507
    %3509 = vrot.lane.b32.xlu0 %v3000, 64
    %v3510 = vpop.permute.xlu0 %3509
    %3511 = vrot.lane.b32.xlu0 %v3001, 64
    %v3512 = vpop.permute.xlu0 %3511
    %3513 = vrot.lane.b32.xlu0 %v3163, 64
    %v3514 = vpop.permute.xlu0 %3513
    %3515 = vrot.lane.b32.xlu0 %v3003, 64
    %v3516 = vpop.permute.xlu0 %3515
    %3517 = vrot.lane.b32.xlu0 %v3004, 64
    %v3518 = vpop.permute.xlu0 %3517
    %3519 = vrot.lane.b32.xlu0 %v3005, 64
    %v3520 = vpop.permute.xlu0 %3519
    %3521 = vrot.lane.b32.xlu0 %v3006, 64
    %v3522 = vpop.permute.xlu0 %3521
    %3523 = vrot.lane.b32.xlu0 %v3007, 64
    %v3524 = vpop.permute.xlu0 %3523
    %3525 = vrot.lane.b32.xlu0 %v3008, 64
    %v3526 = vpop.permute.xlu0 %3525
    %3527 = vrot.lane.b32.xlu0 %v3009, 64
    %v3528 = vpop.permute.xlu0 %3527
    %3529 = vrot.lane.b32.xlu0 %v3010, 64
    %v3530 = vpop.permute.xlu0 %3529
    %3531 = vrot.lane.b32.xlu0 %v3011, 64
    %v3532 = vpop.permute.xlu0 %3531
    %3533 = vrot.lane.b32.xlu0 %v3012, 64
    %v3534 = vpop.permute.xlu0 %3533
    %3535 = vrot.lane.b32.xlu0 %v3013, 64
    %v3536 = vpop.permute.xlu0 %3535
    %3537 = vrot.lane.b32.xlu0 %v3014, 64
    %v3538 = vpop.permute.xlu0 %3537
    %3539 = vrot.lane.b32.xlu0 %v3015, 64
    %v3540 = vpop.permute.xlu0 %3539
    %3541 = vrot.lane.b32.xlu0 %v3016, 64
    %v3542 = vpop.permute.xlu0 %3541
    %3543 = vrot.lane.b32.xlu0 %v3164, 64
    %v3544 = vpop.permute.xlu0 %3543
    %3545 = vrot.lane.b32.xlu0 %v2718, 96
    %v3546 = vpop.permute.xlu0 %3545
    %3547 = vrot.lane.b32.xlu0 %v2719, 96
    %v3548 = vpop.permute.xlu0 %3547
    %3549 = vrot.lane.b32.xlu0 %v2720, 96
    %v3550 = vpop.permute.xlu0 %3549
    %3551 = vrot.lane.b32.xlu0 %v2721, 96
    %v3552 = vpop.permute.xlu0 %3551
    %3553 = vrot.lane.b32.xlu0 %v2722, 96
    %v3554 = vpop.permute.xlu0 %3553
    %3555 = vrot.lane.b32.xlu0 %v2723, 96
    %v3556 = vpop.permute.xlu0 %3555
    %3557 = vrot.lane.b32.xlu0 %v2724, 96
    %v3558 = vpop.permute.xlu0 %3557
    %3559 = vrot.lane.b32.xlu0 %v2725, 96
    %v3560 = vpop.permute.xlu0 %3559
    %3561 = vrot.lane.b32.xlu0 %v2726, 96
    %v3562 = vpop.permute.xlu0 %3561
    %3563 = vrot.lane.b32.xlu0 %v2727, 96
    %v3564 = vpop.permute.xlu0 %3563
    %3565 = vrot.lane.b32.xlu0 %v2728, 96
    %v3566 = vpop.permute.xlu0 %3565
    %3567 = vrot.lane.b32.xlu0 %v2729, 96
    %v3568 = vpop.permute.xlu0 %3567
    %3569 = vrot.lane.b32.xlu0 %v2730, 96
    %v3570 = vpop.permute.xlu0 %3569
    %3571 = vrot.lane.b32.xlu0 %v2731, 96
    %v3572 = vpop.permute.xlu0 %3571
    %3573 = vrot.lane.b32.xlu0 %v3145, 96
    %v3574 = vpop.permute.xlu0 %3573
    %3575 = vrot.lane.b32.xlu0 %v2733, 96
    %v3576 = vpop.permute.xlu0 %3575
    %3577 = vrot.lane.b32.xlu0 %v2734, 96
    %v3578 = vpop.permute.xlu0 %3577
    %3579 = vrot.lane.b32.xlu0 %v2735, 96
    %v3580 = vpop.permute.xlu0 %3579
    %3581 = vrot.lane.b32.xlu0 %v2736, 96
    %v3582 = vpop.permute.xlu0 %3581
    %3583 = vrot.lane.b32.xlu0 %v2737, 96
    %v3584 = vpop.permute.xlu0 %3583
    %3585 = vrot.lane.b32.xlu0 %v2738, 96
    %v3586 = vpop.permute.xlu0 %3585
    %3587 = vrot.lane.b32.xlu0 %v2739, 96
    %v3588 = vpop.permute.xlu0 %3587
    %3589 = vrot.lane.b32.xlu0 %v2740, 96
    %v3590 = vpop.permute.xlu0 %3589
    %3591 = vrot.lane.b32.xlu0 %v2741, 96
    %v3592 = vpop.permute.xlu0 %3591
    %3593 = vrot.lane.b32.xlu0 %v2742, 96
    %v3594 = vpop.permute.xlu0 %3593
    %3595 = vrot.lane.b32.xlu0 %v2743, 96
    %v3596 = vpop.permute.xlu0 %3595
    %3597 = vrot.lane.b32.xlu0 %v2744, 96
    %v3598 = vpop.permute.xlu0 %3597
    %3599 = vrot.lane.b32.xlu0 %v2745, 96
    %v3600 = vpop.permute.xlu0 %3599
    %3601 = vrot.lane.b32.xlu0 %v2746, 96
    %v3602 = vpop.permute.xlu0 %3601
    %3603 = vrot.lane.b32.xlu0 %v3146, 96
    %v3604 = vpop.permute.xlu0 %3603
    %v3607 = vsel %vm1245, %v2987, %v3174
    %v3610 = vsel %vm1245, %v2988, %v3176
    %v3613 = vsel %vm1245, %v2989, %v3178
    %v3616 = vsel %vm1245, %v2990, %v3180
    %v3619 = vsel %vm1245, %v2991, %v3182
    %v3622 = vsel %vm1245, %v2992, %v3184
    %v3625 = vsel %vm1245, %v2993, %v3186
    %v3628 = vsel %vm1245, %v2994, %v3188
    %v3631 = vsel %vm1245, %v2995, %v3190
    %v3634 = vsel %vm1245, %v2996, %v3192
    %v3637 = vsel %vm1245, %v2997, %v3194
    %v3640 = vsel %vm1245, %v2998, %v3196
    %v3643 = vsel %vm1245, %v2999, %v3198
    %v3646 = vsel %vm1245, %v3000, %v3200
    %v3649 = vsel %vm1245, %v3001, %v3202
    %v3652 = vsel %vm1245, %v3002, %v3204
    %v3655 = vsel %vm1245, %v3003, %v3206
    %v3658 = vsel %vm1245, %v3004, %v3208
    %v3661 = vsel %vm1245, %v3005, %v3210
    %v3664 = vsel %vm1245, %v3006, %v3212
    %v3667 = vsel %vm1245, %v3007, %v3214
    %v3670 = vsel %vm1245, %v3008, %v3216
    %v3673 = vsel %vm1245, %v3009, %v3218
    %v3676 = vsel %vm1245, %v3010, %v3220
    %v3679 = vsel %vm1245, %v3011, %v3222
    %v3682 = vsel %vm1245, %v3012, %v3224
    %v3685 = vsel %vm1245, %v3013, %v3226
    %v3688 = vsel %vm1245, %v3014, %v3228
    %v3691 = vsel %vm1245, %v3015, %v3230
    %v3694 = vsel %vm1245, %v3016, %v3232
    %v3696 = vsel %vm1339, %v3607, %v3264
    %v3698 = vsel %vm1339, %v3610, %v3266
    %v3700 = vsel %vm1339, %v3613, %v3268
    %v3702 = vsel %vm1339, %v3616, %v3270
    %v3704 = vsel %vm1339, %v3619, %v3272
    %v3706 = vsel %vm1339, %v3622, %v3274
    %v3708 = vsel %vm1339, %v3625, %v3276
    %v3710 = vsel %vm1339, %v3628, %v3278
    %v3712 = vsel %vm1339, %v3631, %v3280
    %v3714 = vsel %vm1339, %v3634, %v3282
    %v3716 = vsel %vm1339, %v3637, %v3284
    %v3718 = vsel %vm1339, %v3640, %v3286
    %v3720 = vsel %vm1339, %v3643, %v3288
    %v3722 = vsel %vm1339, %v3646, %v3290
    %v3724 = vsel %vm1339, %v3649, %v3292
    %v3726 = vsel %vm1339, %v3652, %v3294
    %v3728 = vsel %vm1339, %v3655, %v3296
    %v3730 = vsel %vm1339, %v3658, %v3298
    %v3732 = vsel %vm1339, %v3661, %v3300
    %v3734 = vsel %vm1339, %v3664, %v3302
    %v3736 = vsel %vm1339, %v3667, %v3304
    %v3738 = vsel %vm1339, %v3670, %v3306
    %v3740 = vsel %vm1339, %v3673, %v3308
    %v3742 = vsel %vm1339, %v3676, %v3310
    %v3744 = vsel %vm1339, %v3679, %v3312
    %v3746 = vsel %vm1339, %v3682, %v3314
    %v3748 = vsel %vm1339, %v3685, %v3316
    %v3750 = vsel %vm1339, %v3688, %v3318
    %v3752 = vsel %vm1339, %v3691, %v3320
    %v3754 = vsel %vm1339, %v3694, %v3322
    %v3756 = vsel %vm1402, %v1341, %v3356
    %v3759 = vsel %vm1402, %v3696, %v3358
    %v3762 = vsel %vm1402, %v3698, %v3360
    %v3765 = vsel %vm1402, %v3700, %v3362
    %v3768 = vsel %vm1402, %v3702, %v3364
    %v3771 = vsel %vm1402, %v3704, %v3366
    %v3774 = vsel %vm1402, %v3706, %v3368
    %v3777 = vsel %vm1402, %v3708, %v3370
    %v3780 = vsel %vm1402, %v3710, %v3372
    %v3783 = vsel %vm1402, %v3712, %v3374
    %v3786 = vsel %vm1402, %v3714, %v3376
    %v3789 = vsel %vm1402, %v3716, %v3378
    %v3792 = vsel %vm1402, %v3718, %v3380
    %v3795 = vsel %vm1402, %v3720, %v3382
    %v3798 = vsel %vm1402, %v3722, %v3384
    %v3801 = vsel %vm1402, %v3724, %v3386
    %v3804 = vsel %vm1402, %v1341, %v3388
    %v3807 = vsel %vm1402, %v3726, %v3390
    %v3810 = vsel %vm1402, %v3728, %v3392
    %v3813 = vsel %vm1402, %v3730, %v3394
    %v3816 = vsel %vm1402, %v3732, %v3396
    %v3819 = vsel %vm1402, %v3734, %v3398
    %v3822 = vsel %vm1402, %v3736, %v3400
    %v3825 = vsel %vm1402, %v3738, %v3402
    %v3828 = vsel %vm1402, %v3740, %v3404
    %v3831 = vsel %vm1402, %v3742, %v3406
    %v3834 = vsel %vm1402, %v3744, %v3408
    %v3837 = vsel %vm1402, %v3746, %v3410
    %v3840 = vsel %vm1402, %v3748, %v3412
    %v3843 = vsel %vm1402, %v3750, %v3414
    %v3846 = vsel %vm1402, %v3752, %v3416
    %v3849 = vsel %vm1402, %v3754, %v3418
    %v3852 = vsel %vm1245, %v2717, %v3422
    %v3854 = vsel %vm1245, %v2718, %v3424
    %v3856 = vsel %vm1245, %v2719, %v3426
    %v3858 = vsel %vm1245, %v2720, %v3428
    %v3860 = vsel %vm1245, %v2721, %v3430
    %v3862 = vsel %vm1245, %v2722, %v3432
    %v3864 = vsel %vm1245, %v2723, %v3434
    %v3866 = vsel %vm1245, %v2724, %v3436
    %v3868 = vsel %vm1245, %v2725, %v3438
    %v3870 = vsel %vm1245, %v2726, %v3440
    %v3872 = vsel %vm1245, %v2727, %v3442
    %v3874 = vsel %vm1245, %v2728, %v3444
    %v3876 = vsel %vm1245, %v2729, %v3446
    %v3878 = vsel %vm1245, %v2730, %v3448
    %v3880 = vsel %vm1245, %v2731, %v3450
    %v3882 = vsel %vm1245, %v3145, %v3452
    %v3884 = vsel %vm1245, %v2732, %v3454
    %v3886 = vsel %vm1245, %v2733, %v3456
    %v3888 = vsel %vm1245, %v2734, %v3458
    %v3890 = vsel %vm1245, %v2735, %v3460
    %v3892 = vsel %vm1245, %v2736, %v3462
    %v3894 = vsel %vm1245, %v2737, %v3464
    %v3896 = vsel %vm1245, %v2738, %v3466
    %v3898 = vsel %vm1245, %v2739, %v3468
    %v3900 = vsel %vm1245, %v2740, %v3470
    %v3902 = vsel %vm1245, %v2741, %v3472
    %v3904 = vsel %vm1245, %v2742, %v3474
    %v3906 = vsel %vm1245, %v2743, %v3476
    %v3908 = vsel %vm1245, %v2744, %v3478
    %v3910 = vsel %vm1245, %v2745, %v3480
    %v3912 = vsel %vm1245, %v2746, %v3482
    %v3914 = vsel %vm1245, %v3146, %v3484
    %v3916 = vsel %vm1339, %v3852, %v3486
    %v3918 = vsel %vm1339, %v3854, %v3488
    %v3920 = vsel %vm1339, %v3856, %v3490
    %v3922 = vsel %vm1339, %v3858, %v3492
    %v3924 = vsel %vm1339, %v3860, %v3494
    %v3926 = vsel %vm1339, %v3862, %v3496
    %v3928 = vsel %vm1339, %v3864, %v3498
    %v3930 = vsel %vm1339, %v3866, %v3500
    %v3932 = vsel %vm1339, %v3868, %v3502
    %v3934 = vsel %vm1339, %v3870, %v3504
    %v3936 = vsel %vm1339, %v3872, %v3506
    %v3938 = vsel %vm1339, %v3874, %v3508
    %v3940 = vsel %vm1339, %v3876, %v3510
    %v3942 = vsel %vm1339, %v3878, %v3512
    %v3944 = vsel %vm1339, %v3880, %v3514
    %v3945 = vsel %vm1339, %v3882, %v1152
    %v3947 = vsel %vm1339, %v3884, %v3516
    %v3949 = vsel %vm1339, %v3886, %v3518
    %v3951 = vsel %vm1339, %v3888, %v3520
    %v3953 = vsel %vm1339, %v3890, %v3522
    %v3955 = vsel %vm1339, %v3892, %v3524
    %v3957 = vsel %vm1339, %v3894, %v3526
    %v3959 = vsel %vm1339, %v3896, %v3528
    %v3961 = vsel %vm1339, %v3898, %v3530
    %v3963 = vsel %vm1339, %v3900, %v3532
    %v3965 = vsel %vm1339, %v3902, %v3534
    %v3967 = vsel %vm1339, %v3904, %v3536
    %v3969 = vsel %vm1339, %v3906, %v3538
    %v3971 = vsel %vm1339, %v3908, %v3540
    %v3973 = vsel %vm1339, %v3910, %v3542
    %v3975 = vsel %vm1339, %v3912, %v3544
    %v3976 = vsel %vm1339, %v3914, %v1152
    %v3978 = vsel %vm1402, %v3916, %v3546
    %v3981 = vsel %vm1402, %v3918, %v3548
    %v3984 = vsel %vm1402, %v3920, %v3550
    %v3987 = vsel %vm1402, %v3922, %v3552
    %v3990 = vsel %vm1402, %v3924, %v3554
    %v3993 = vsel %vm1402, %v3926, %v3556
    %v3996 = vsel %vm1402, %v3928, %v3558
    %v3999 = vsel %vm1402, %v3930, %v3560
    %v4002 = vsel %vm1402, %v3932, %v3562
    %v4005 = vsel %vm1402, %v3934, %v3564
    %v4008 = vsel %vm1402, %v3936, %v3566
    %v4011 = vsel %vm1402, %v3938, %v3568
    %v4014 = vsel %vm1402, %v3940, %v3570
    %v4017 = vsel %vm1402, %v3942, %v3572
    %v4020 = vsel %vm1402, %v3944, %v3574
    %v4022 = vsel %vm1402, %v3945, %v1214
    %v4025 = vsel %vm1402, %v3947, %v3576
    %v4028 = vsel %vm1402, %v3949, %v3578
    %v4031 = vsel %vm1402, %v3951, %v3580
    %v4034 = vsel %vm1402, %v3953, %v3582
    %v4037 = vsel %vm1402, %v3955, %v3584
    %v4040 = vsel %vm1402, %v3957, %v3586
    %v4043 = vsel %vm1402, %v3959, %v3588
    %v4046 = vsel %vm1402, %v3961, %v3590
    %v4049 = vsel %vm1402, %v3963, %v3592
    %v4052 = vsel %vm1402, %v3965, %v3594
    %v4055 = vsel %vm1402, %v3967, %v3596
    %v4058 = vsel %vm1402, %v3969, %v3598
    %v4061 = vsel %vm1402, %v3971, %v3600
    %v4064 = vsel %vm1402, %v3973, %v3602
    %v4067 = vsel %vm1402, %v3975, %v3604
    %v4069 = vsel %vm1402, %v3976, %v1214
    %v4071 = vld [vmem:[%s3] sm:$0xf]
    %v4072 = vld [vmem:[%s3 + $0x4] sm:$0xf]
    %v4073 = vld [vmem:[%s3 + $0x8] sm:$0xf]
    %v4074 = vld [vmem:[%s3 + $0xc] sm:$0xf]
    %v4075 = vld [vmem:[%s3 + $0x10] sm:$0xf]
    %v4076 = vld [vmem:[%s3 + $0x14] sm:$0xf]
    %v4077 = vld [vmem:[%s3 + $0x18] sm:$0xf]
    %v4078 = vld [vmem:[%s3 + $0x1c] sm:$0xf]
    %v4079 = vld [vmem:[%s3 + $0x20] sm:$0xf]
    %v4080 = vld [vmem:[%s3 + $0x24] sm:$0xf]
    %v4081 = vld [vmem:[%s3 + $0x28] sm:$0xf]
    %v4082 = vld [vmem:[%s3 + $0x2c] sm:$0xf]
    %v4083 = vld [vmem:[%s3 + $0x30] sm:$0xf]
    %v4084 = vld [vmem:[%s3 + $0x34] sm:$0xf]
    %v4085 = vld [vmem:[%s3 + $0x38] sm:$0xf]
    %v4086 = vld [vmem:[%s3 + $0x3c] sm:$0xf]
    %v4087 = vld [vmem:[%s3 + $0x40] sm:$0xf]
    %v4088 = vld [vmem:[%s3 + $0x44] sm:$0xf]
    %v4089 = vld [vmem:[%s3 + $0x48] sm:$0xf]
    %v4090 = vld [vmem:[%s3 + $0x4c] sm:$0xf]
    %v4091 = vld [vmem:[%s3 + $0x50] sm:$0xf]
    %v4092 = vld [vmem:[%s3 + $0x54] sm:$0xf]
    %v4093 = vld [vmem:[%s3 + $0x58] sm:$0xf]
    %v4094 = vld [vmem:[%s3 + $0x5c] sm:$0xf]
    %v4095 = vld [vmem:[%s3 + $0x60] sm:$0xf]
    %v4096 = vld [vmem:[%s3 + $0x64] sm:$0xf]
    %v4097 = vld [vmem:[%s3 + $0x68] sm:$0xf]
    %v4098 = vld [vmem:[%s3 + $0x6c] sm:$0xf]
    %v4099 = vld [vmem:[%s3 + $0x70] sm:$0xf]
    %v4100 = vld [vmem:[%s3 + $0x74] sm:$0xf]
    %v4101 = vld [vmem:[%s3 + $0x78] sm:$0xf]
    %v4102 = vld [vmem:[%s3 + $0x7c] sm:$0xf]
    %v4103 = vld [vmem:[%s3 + $0x80] sm:$0xf]
    %v4104 = vld [vmem:[%s3 + $0x84] sm:$0xf]
    %v4105 = vld [vmem:[%s3 + $0x88] sm:$0xf]
    %v4106 = vld [vmem:[%s3 + $0x8c] sm:$0xf]
    %v4107 = vld [vmem:[%s4] sm:$0x1]
    %v4109 = vperm.slane %v4107, 0
    %v4147 = vunpack.c.l.b16 %v4071
    %v4148 = vunpack.c.l.b16 %v4072
    %v4149 = vunpack.c.l.b16 %v4073
    %v4150 = vunpack.c.l.b16 %v4074
    %v4151 = vunpack.c.l.b16 %v4075
    %v4152 = vunpack.c.l.b16 %v4076
    %v4153 = vunpack.c.l.b16 %v4077
    %v4154 = vunpack.c.l.b16 %v4078
    %v4155 = vunpack.c.l.b16 %v4079
    %v4156 = vunpack.c.l.b16 %v4080
    %v4157 = vunpack.c.l.b16 %v4081
    %v4158 = vunpack.c.l.b16 %v4082
    %v4159 = vunpack.c.l.b16 %v4083
    %v4160 = vunpack.c.l.b16 %v4084
    %v4161 = vunpack.c.l.b16 %v4085
    %v4162 = vunpack.c.l.b16 %v4086
    %v4163 = vunpack.c.l.b16 %v4087
    %v4164 = vunpack.c.l.b16 %v4088
    %v4165 = vunpack.c.l.b16 %v4089
    %v4166 = vunpack.c.l.b16 %v4090
    %v4167 = vunpack.c.l.b16 %v4091
    %v4168 = vunpack.c.l.b16 %v4092
    %v4169 = vunpack.c.l.b16 %v4093
    %v4170 = vunpack.c.l.b16 %v4094
    %v4171 = vunpack.c.l.b16 %v4095
    %v4172 = vunpack.c.l.b16 %v4096
    %v4173 = vunpack.c.l.b16 %v4097
    %v4174 = vunpack.c.l.b16 %v4098
    %v4175 = vunpack.c.l.b16 %v4099
    %v4176 = vunpack.c.l.b16 %v4100
    %v4177 = vunpack.c.l.b16 %v4101
    %v4178 = vunpack.c.l.b16 %v4102
    %v4179 = vunpack.c.l.b16 %v4103
    %v4180 = vunpack.c.l.b16 %v4104
    %v4181 = vunpack.c.l.b16 %v4105
    %v4182 = vunpack.c.l.b16 %v4106
    %v4183 = vpack.c.b16 %v4148, %v4147
    %v4184 = vpack.c.b16 %v4150, %v4149
    %v4185 = vpack.c.b16 %v4152, %v4151
    %v4186 = vpack.c.b16 %v4154, %v4153
    %v4187 = vpack.c.b16 %v4156, %v4155
    %v4188 = vpack.c.b16 %v4158, %v4157
    %v4189 = vpack.c.b16 %v4160, %v4159
    %v4190 = vpack.c.b16 %v4162, %v4161
    %v4191 = vpack.c.b16 %v4164, %v4163
    %v4192 = vpack.c.b16 %v4166, %v4165
    %v4193 = vpack.c.b16 %v4168, %v4167
    %v4194 = vpack.c.b16 %v4170, %v4169
    %v4195 = vpack.c.b16 %v4172, %v4171
    %v4196 = vpack.c.b16 %v4174, %v4173
    %v4197 = vpack.c.b16 %v4176, %v4175
    %v4198 = vpack.c.b16 %v4178, %v4177
    %v4199 = vpack.c.b16 %v4180, %v4179
    %v4200 = vpack.c.b16 %v4182, %v4181
    %v4220 = vsel %vm1245, %v3108, 0
    %v4223 = vsel %vm1245, %v3109, 0
    %v4226 = vsel %vm1245, %v3110, 0
    %v4229 = vsel %vm1245, %v3111, 0
    %v4232 = vsel %vm1245, %v3112, 0
    %v4235 = vsel %vm1245, %v3113, 0
    %v4238 = vsel %vm1245, %v3114, 0
    %v4241 = vsel %vm1245, %v3115, 0
    %v4244 = vsel %vm1245, %v3116, 0
    %v4247 = vsel %vm1245, %v3117, 0
    %v4250 = vsel %vm1245, %v3118, 0
    %v4253 = vsel %vm1245, %v3119, 0
    %v4256 = vsel %vm1245, %v3120, 0
    %v4259 = vsel %vm1245, %v3121, 0
    %v4262 = vsel %vm1245, %v3171, 0
    %v4265 = vsel %vm1245, %v3123, 0
    %v4268 = vsel %vm1245, %v3124, 0
    %v4271 = vsel %vm1245, %v3125, 0
    %v4274 = vsel %vm1245, %v3126, 0
    %v4277 = vsel %vm1245, %v3127, 0
    %v4280 = vsel %vm1245, %v3128, 0
    %v4283 = vsel %vm1245, %v3129, 0
    %v4286 = vsel %vm1245, %v3130, 0
    %v4289 = vsel %vm1245, %v3131, 0
    %v4292 = vsel %vm1245, %v3132, 0
    %v4295 = vsel %vm1245, %v3133, 0
    %v4298 = vsel %vm1245, %v3134, 0
    %v4301 = vsel %vm1245, %v3135, 0
    %v4304 = vsel %vm1245, %v3136, 0
    %v4307 = vsel %vm1245, %v3172, 0
    %4309 = vmatpush.bf16.msra.mxu0 %v4190
    %4310 = vmatpush.bf16.msra.mxu0 %v4189
    %4311 = vmatpush.bf16.msra.mxu0 %v4188
    %4312 = vmatpush.bf16.msra.mxu0 %v4187
    %4313 = vmatpush.bf16.msra.mxu0 %v4186
    %4314 = vmatpush.bf16.msra.mxu0 %v4185
    %4315 = vmatpush.bf16.msra.mxu0 %v4184
    %4316 = vmatpush.bf16.msra.mxu0 %v4183
    %4317 = vmatmul.bf16.gmra.mxu0 %v3756
    %v4318 = vpop.f32.mrf.mxu0
    %v4319 = vadd.f32 %v4109, %v4318
    %v4320 = vpop.f32.mrf.mxu0
    %v4321 = vadd.f32 %v4109, %v4320
    %4322 = vmatmul.bf16.gmra.mxu0 %v3759
    %v4323 = vpop.f32.mrf.mxu0
    %v4324 = vadd.f32 %v4109, %v4323
    %v4325 = vpop.f32.mrf.mxu0
    %v4326 = vadd.f32 %v4109, %v4325
    %4327 = vmatmul.bf16.gmra.mxu0 %v3762
    %v4328 = vpop.f32.mrf.mxu0
    %v4329 = vadd.f32 %v4109, %v4328
    %v4330 = vpop.f32.mrf.mxu0
    %v4331 = vadd.f32 %v4109, %v4330
    %4332 = vmatmul.bf16.gmra.mxu0 %v3765
    %v4333 = vpop.f32.mrf.mxu0
    %v4334 = vadd.f32 %v4109, %v4333
    %v4335 = vpop.f32.mrf.mxu0
    %v4336 = vadd.f32 %v4109, %v4335
    %4337 = vmatmul.bf16.gmra.mxu0 %v3768
    %v4338 = vpop.f32.mrf.mxu0
    %v4339 = vadd.f32 %v4109, %v4338
    %v4340 = vpop.f32.mrf.mxu0
    %v4341 = vadd.f32 %v4109, %v4340
    %4342 = vmatmul.bf16.gmra.mxu0 %v3771
    %v4343 = vpop.f32.mrf.mxu0
    %v4344 = vadd.f32 %v4109, %v4343
    %v4345 = vpop.f32.mrf.mxu0
    %v4346 = vadd.f32 %v4109, %v4345
    %4347 = vmatmul.bf16.gmra.mxu0 %v3774
    %v4348 = vpop.f32.mrf.mxu0
    %v4349 = vadd.f32 %v4109, %v4348
    %v4350 = vpop.f32.mrf.mxu0
    %v4351 = vadd.f32 %v4109, %v4350
    %4352 = vmatmul.bf16.gmra.mxu0 %v3777
    %v4353 = vpop.f32.mrf.mxu0
    %v4354 = vadd.f32 %v4109, %v4353
    %v4355 = vpop.f32.mrf.mxu0
    %v4356 = vadd.f32 %v4109, %v4355
    %4357 = vmatmul.bf16.gmra.mxu0 %v3780
    %v4358 = vpop.f32.mrf.mxu0
    %v4359 = vadd.f32 %v4109, %v4358
    %v4360 = vpop.f32.mrf.mxu0
    %v4361 = vadd.f32 %v4109, %v4360
    %4362 = vmatmul.bf16.gmra.mxu0 %v3783
    %v4363 = vpop.f32.mrf.mxu0
    %v4364 = vadd.f32 %v4109, %v4363
    %v4365 = vpop.f32.mrf.mxu0
    %v4366 = vadd.f32 %v4109, %v4365
    %4367 = vmatmul.bf16.gmra.mxu0 %v3786
    %v4368 = vpop.f32.mrf.mxu0
    %v4369 = vadd.f32 %v4109, %v4368
    %v4370 = vpop.f32.mrf.mxu0
    %v4371 = vadd.f32 %v4109, %v4370
    %4372 = vmatmul.bf16.gmra.mxu0 %v3789
    %v4373 = vpop.f32.mrf.mxu0
    %v4374 = vadd.f32 %v4109, %v4373
    %v4375 = vpop.f32.mrf.mxu0
    %v4376 = vadd.f32 %v4109, %v4375
    %4377 = vmatmul.bf16.gmra.mxu0 %v3792
    %v4378 = vpop.f32.mrf.mxu0
    %v4379 = vadd.f32 %v4109, %v4378
    %v4380 = vpop.f32.mrf.mxu0
    %v4381 = vadd.f32 %v4109, %v4380
    %4382 = vmatmul.bf16.gmra.mxu0 %v3795
    %v4383 = vpop.f32.mrf.mxu0
    %v4384 = vadd.f32 %v4109, %v4383
    %v4385 = vpop.f32.mrf.mxu0
    %v4386 = vadd.f32 %v4109, %v4385
    %4387 = vmatmul.bf16.gmra.mxu0 %v3798
    %v4388 = vpop.f32.mrf.mxu0
    %v4389 = vadd.f32 %v4109, %v4388
    %v4390 = vpop.f32.mrf.mxu0
    %v4391 = vadd.f32 %v4109, %v4390
    %4392 = vmatmul.bf16.gmra.mxu0 %v3801
    %v4393 = vpop.f32.mrf.mxu0
    %v4394 = vadd.f32 %v4109, %v4393
    %v4395 = vpop.f32.mrf.mxu0
    %v4396 = vadd.f32 %v4109, %v4395
    %4397 = vmatmul.bf16.gmra.mxu0 %v3804
    %v4398 = vpop.f32.mrf.mxu0
    %v4399 = vadd.f32 %v4109, %v4398
    %v4400 = vpop.f32.mrf.mxu0
    %v4401 = vadd.f32 %v4109, %v4400
    %4402 = vmatmul.bf16.gmra.mxu0 %v3807
    %v4403 = vpop.f32.mrf.mxu0
    %v4404 = vadd.f32 %v4109, %v4403
    %v4405 = vpop.f32.mrf.mxu0
    %v4406 = vadd.f32 %v4109, %v4405
    %4407 = vmatmul.bf16.gmra.mxu0 %v3810
    %v4408 = vpop.f32.mrf.mxu0
    %v4409 = vadd.f32 %v4109, %v4408
    %v4410 = vpop.f32.mrf.mxu0
    %v4411 = vadd.f32 %v4109, %v4410
    %4412 = vmatmul.bf16.gmra.mxu0 %v3813
    %v4413 = vpop.f32.mrf.mxu0
    %v4414 = vadd.f32 %v4109, %v4413
    %v4415 = vpop.f32.mrf.mxu0
    %v4416 = vadd.f32 %v4109, %v4415
    %4417 = vmatmul.bf16.gmra.mxu0 %v3816
    %v4418 = vpop.f32.mrf.mxu0
    %v4419 = vadd.f32 %v4109, %v4418
    %v4420 = vpop.f32.mrf.mxu0
    %v4421 = vadd.f32 %v4109, %v4420
    %4422 = vmatmul.bf16.gmra.mxu0 %v3819
    %v4423 = vpop.f32.mrf.mxu0
    %v4424 = vadd.f32 %v4109, %v4423
    %v4425 = vpop.f32.mrf.mxu0
    %v4426 = vadd.f32 %v4109, %v4425
    %4427 = vmatmul.bf16.gmra.mxu0 %v3822
    %v4428 = vpop.f32.mrf.mxu0
    %v4429 = vadd.f32 %v4109, %v4428
    %v4430 = vpop.f32.mrf.mxu0
    %v4431 = vadd.f32 %v4109, %v4430
    %4432 = vmatmul.bf16.gmra.mxu0 %v3825
    %v4433 = vpop.f32.mrf.mxu0
    %v4434 = vadd.f32 %v4109, %v4433
    %v4435 = vpop.f32.mrf.mxu0
    %v4436 = vadd.f32 %v4109, %v4435
    %4437 = vmatmul.bf16.gmra.mxu0 %v3828
    %v4438 = vpop.f32.mrf.mxu0
    %v4439 = vadd.f32 %v4109, %v4438
    %v4440 = vpop.f32.mrf.mxu0
    %v4441 = vadd.f32 %v4109, %v4440
    %4442 = vmatmul.bf16.gmra.mxu0 %v3831
    %v4443 = vpop.f32.mrf.mxu0
    %v4444 = vadd.f32 %v4109, %v4443
    %v4445 = vpop.f32.mrf.mxu0
    %v4446 = vadd.f32 %v4109, %v4445
    %4447 = vmatmul.bf16.gmra.mxu0 %v3834
    %v4448 = vpop.f32.mrf.mxu0
    %v4449 = vadd.f32 %v4109, %v4448
    %v4450 = vpop.f32.mrf.mxu0
    %v4451 = vadd.f32 %v4109, %v4450
    %4452 = vmatmul.bf16.gmra.mxu0 %v3837
    %v4453 = vpop.f32.mrf.mxu0
    %v4454 = vadd.f32 %v4109, %v4453
    %v4455 = vpop.f32.mrf.mxu0
    %v4456 = vadd.f32 %v4109, %v4455
    %4457 = vmatmul.bf16.gmra.mxu0 %v3840
    %v4458 = vpop.f32.mrf.mxu0
    %v4459 = vadd.f32 %v4109, %v4458
    %v4460 = vpop.f32.mrf.mxu0
    %v4461 = vadd.f32 %v4109, %v4460
    %4462 = vmatmul.bf16.gmra.mxu0 %v3843
    %v4463 = vpop.f32.mrf.mxu0
    %v4464 = vadd.f32 %v4109, %v4463
    %v4465 = vpop.f32.mrf.mxu0
    %v4466 = vadd.f32 %v4109, %v4465
    %4467 = vmatmul.bf16.gmra.mxu0 %v3846
    %v4468 = vpop.f32.mrf.mxu0
    %v4469 = vadd.f32 %v4109, %v4468
    %v4470 = vpop.f32.mrf.mxu0
    %v4471 = vadd.f32 %v4109, %v4470
    %4472 = vmatmul.bf16.gmra.mxu0 %v3849
    %v4473 = vpop.f32.mrf.mxu0
    %v4474 = vadd.f32 %v4109, %v4473
    %v4475 = vpop.f32.mrf.mxu0
    %v4476 = vadd.f32 %v4109, %v4475
    %4477 = vdwg.mxu0
    %4478 = vmatpush.bf16.msra.mxu0 %v4198
    %4479 = vmatpush.bf16.msra.mxu0 %v4197
    %4480 = vmatpush.bf16.msra.mxu0 %v4196
    %4481 = vmatpush.bf16.msra.mxu0 %v4195
    %4482 = vmatpush.bf16.msra.mxu0 %v4194
    %4483 = vmatpush.bf16.msra.mxu0 %v4193
    %4484 = vmatpush.bf16.msra.mxu0 %v4192
    %4485 = vmatpush.bf16.msra.mxu0 %v4191
    %4486 = vmatmul.bf16.gmra.mxu0 %v3978
    %v4487 = vpop.f32.mrf.mxu0
    %v4488 = vadd.f32 %v4319, %v4487
    %v4489 = vpop.f32.mrf.mxu0
    %v4490 = vadd.f32 %v4321, %v4489
    %4491 = vmatmul.bf16.gmra.mxu0 %v3981
    %v4492 = vpop.f32.mrf.mxu0
    %v4493 = vadd.f32 %v4324, %v4492
    %v4494 = vpop.f32.mrf.mxu0
    %v4495 = vadd.f32 %v4326, %v4494
    %4496 = vmatmul.bf16.gmra.mxu0 %v3984
    %v4497 = vpop.f32.mrf.mxu0
    %v4498 = vadd.f32 %v4329, %v4497
    %v4499 = vpop.f32.mrf.mxu0
    %v4500 = vadd.f32 %v4331, %v4499
    %4501 = vmatmul.bf16.gmra.mxu0 %v3987
    %v4502 = vpop.f32.mrf.mxu0
    %v4503 = vadd.f32 %v4334, %v4502
    %v4504 = vpop.f32.mrf.mxu0
    %v4505 = vadd.f32 %v4336, %v4504
    %4506 = vmatmul.bf16.gmra.mxu0 %v3990
    %v4507 = vpop.f32.mrf.mxu0
    %v4508 = vadd.f32 %v4339, %v4507
    %v4509 = vpop.f32.mrf.mxu0
    %v4510 = vadd.f32 %v4341, %v4509
    %4511 = vmatmul.bf16.gmra.mxu0 %v3993
    %v4512 = vpop.f32.mrf.mxu0
    %v4513 = vadd.f32 %v4344, %v4512
    %v4514 = vpop.f32.mrf.mxu0
    %v4515 = vadd.f32 %v4346, %v4514
    %4516 = vmatmul.bf16.gmra.mxu0 %v3996
    %v4517 = vpop.f32.mrf.mxu0
    %v4518 = vadd.f32 %v4349, %v4517
    %v4519 = vpop.f32.mrf.mxu0
    %v4520 = vadd.f32 %v4351, %v4519
    %4521 = vmatmul.bf16.gmra.mxu0 %v3999
    %v4522 = vpop.f32.mrf.mxu0
    %v4523 = vadd.f32 %v4354, %v4522
    %v4524 = vpop.f32.mrf.mxu0
    %v4525 = vadd.f32 %v4356, %v4524
    %4526 = vmatmul.bf16.gmra.mxu0 %v4002
    %v4527 = vpop.f32.mrf.mxu0
    %v4528 = vadd.f32 %v4359, %v4527
    %v4529 = vpop.f32.mrf.mxu0
    %v4530 = vadd.f32 %v4361, %v4529
    %4531 = vmatmul.bf16.gmra.mxu0 %v4005
    %v4532 = vpop.f32.mrf.mxu0
    %v4533 = vadd.f32 %v4364, %v4532
    %v4534 = vpop.f32.mrf.mxu0
    %v4535 = vadd.f32 %v4366, %v4534
    %4536 = vmatmul.bf16.gmra.mxu0 %v4008
    %v4537 = vpop.f32.mrf.mxu0
    %v4538 = vadd.f32 %v4369, %v4537
    %v4539 = vpop.f32.mrf.mxu0
    %v4540 = vadd.f32 %v4371, %v4539
    %4541 = vmatmul.bf16.gmra.mxu0 %v4011
    %v4542 = vpop.f32.mrf.mxu0
    %v4543 = vadd.f32 %v4374, %v4542
    %v4544 = vpop.f32.mrf.mxu0
    %v4545 = vadd.f32 %v4376, %v4544
    %4546 = vmatmul.bf16.gmra.mxu0 %v4014
    %v4547 = vpop.f32.mrf.mxu0
    %v4548 = vadd.f32 %v4379, %v4547
    %v4549 = vpop.f32.mrf.mxu0
    %v4550 = vadd.f32 %v4381, %v4549
    %4551 = vmatmul.bf16.gmra.mxu0 %v4017
    %v4552 = vpop.f32.mrf.mxu0
    %v4553 = vadd.f32 %v4384, %v4552
    %v4554 = vpop.f32.mrf.mxu0
    %v4555 = vadd.f32 %v4386, %v4554
    %4556 = vmatmul.bf16.gmra.mxu0 %v4020
    %v4557 = vpop.f32.mrf.mxu0
    %v4558 = vadd.f32 %v4389, %v4557
    %v4559 = vpop.f32.mrf.mxu0
    %v4560 = vadd.f32 %v4391, %v4559
    %4561 = vmatmul.bf16.gmra.mxu0 %v4022
    %v4562 = vpop.f32.mrf.mxu0
    %v4563 = vadd.f32 %v4394, %v4562
    %v4564 = vpop.f32.mrf.mxu0
    %v4565 = vadd.f32 %v4396, %v4564
    %4566 = vmatmul.bf16.gmra.mxu0 %v4025
    %v4567 = vpop.f32.mrf.mxu0
    %v4568 = vadd.f32 %v4399, %v4567
    %v4569 = vpop.f32.mrf.mxu0
    %v4570 = vadd.f32 %v4401, %v4569
    %4571 = vmatmul.bf16.gmra.mxu0 %v4028
    %v4572 = vpop.f32.mrf.mxu0
    %v4573 = vadd.f32 %v4404, %v4572
    %v4574 = vpop.f32.mrf.mxu0
    %v4575 = vadd.f32 %v4406, %v4574
    %4576 = vmatmul.bf16.gmra.mxu0 %v4031
    %v4577 = vpop.f32.mrf.mxu0
    %v4578 = vadd.f32 %v4409, %v4577
    %v4579 = vpop.f32.mrf.mxu0
    %v4580 = vadd.f32 %v4411, %v4579
    %4581 = vmatmul.bf16.gmra.mxu0 %v4034
    %v4582 = vpop.f32.mrf.mxu0
    %v4583 = vadd.f32 %v4414, %v4582
    %v4584 = vpop.f32.mrf.mxu0
    %v4585 = vadd.f32 %v4416, %v4584
    %4586 = vmatmul.bf16.gmra.mxu0 %v4037
    %v4587 = vpop.f32.mrf.mxu0
    %v4588 = vadd.f32 %v4419, %v4587
    %v4589 = vpop.f32.mrf.mxu0
    %v4590 = vadd.f32 %v4421, %v4589
    %4591 = vmatmul.bf16.gmra.mxu0 %v4040
    %v4592 = vpop.f32.mrf.mxu0
    %v4593 = vadd.f32 %v4424, %v4592
    %v4594 = vpop.f32.mrf.mxu0
    %v4595 = vadd.f32 %v4426, %v4594
    %4596 = vmatmul.bf16.gmra.mxu0 %v4043
    %v4597 = vpop.f32.mrf.mxu0
    %v4598 = vadd.f32 %v4429, %v4597
    %v4599 = vpop.f32.mrf.mxu0
    %v4600 = vadd.f32 %v4431, %v4599
    %4601 = vmatmul.bf16.gmra.mxu0 %v4046
    %v4602 = vpop.f32.mrf.mxu0
    %v4603 = vadd.f32 %v4434, %v4602
    %v4604 = vpop.f32.mrf.mxu0
    %v4605 = vadd.f32 %v4436, %v4604
    %4606 = vmatmul.bf16.gmra.mxu0 %v4049
    %v4607 = vpop.f32.mrf.mxu0
    %v4608 = vadd.f32 %v4439, %v4607
    %v4609 = vpop.f32.mrf.mxu0
    %v4610 = vadd.f32 %v4441, %v4609
    %4611 = vmatmul.bf16.gmra.mxu0 %v4052
    %v4612 = vpop.f32.mrf.mxu0
    %v4613 = vadd.f32 %v4444, %v4612
    %v4614 = vpop.f32.mrf.mxu0
    %v4615 = vadd.f32 %v4446, %v4614
    %4616 = vmatmul.bf16.gmra.mxu0 %v4055
    %v4617 = vpop.f32.mrf.mxu0
    %v4618 = vadd.f32 %v4449, %v4617
    %v4619 = vpop.f32.mrf.mxu0
    %v4620 = vadd.f32 %v4451, %v4619
    %4621 = vmatmul.bf16.gmra.mxu0 %v4058
    %v4622 = vpop.f32.mrf.mxu0
    %v4623 = vadd.f32 %v4454, %v4622
    %v4624 = vpop.f32.mrf.mxu0
    %v4625 = vadd.f32 %v4456, %v4624
    %4626 = vmatmul.bf16.gmra.mxu0 %v4061
    %v4627 = vpop.f32.mrf.mxu0
    %v4628 = vadd.f32 %v4459, %v4627
    %v4629 = vpop.f32.mrf.mxu0
    %v4630 = vadd.f32 %v4461, %v4629
    %4631 = vmatmul.bf16.gmra.mxu0 %v4064
    %v4632 = vpop.f32.mrf.mxu0
    %v4633 = vadd.f32 %v4464, %v4632
    %v4634 = vpop.f32.mrf.mxu0
    %v4635 = vadd.f32 %v4466, %v4634
    %4636 = vmatmul.bf16.gmra.mxu0 %v4067
    %v4637 = vpop.f32.mrf.mxu0
    %v4638 = vadd.f32 %v4469, %v4637
    %v4639 = vpop.f32.mrf.mxu0
    %v4640 = vadd.f32 %v4471, %v4639
    %4641 = vmatmul.bf16.gmra.mxu0 %v4069
    %v4642 = vpop.f32.mrf.mxu0
    %v4643 = vadd.f32 %v4474, %v4642
    %v4644 = vpop.f32.mrf.mxu0
    %v4645 = vadd.f32 %v4476, %v4644
    %4646 = vdwg.mxu0
    %4647 = vmatpush.bf16.msra.mxu0 0
    %4648 = vmatpush.bf16.msra.mxu0 0
    %4649 = vmatpush.bf16.msra.mxu0 0
    %4650 = vmatpush.bf16.msra.mxu0 0
    %4651 = vmatpush.bf16.msra.mxu0 0
    %4652 = vmatpush.bf16.msra.mxu0 0
    %4653 = vmatpush.bf16.msra.mxu0 %v4200
    %4654 = vmatpush.bf16.msra.mxu0 %v4199
    %4655 = vmatmul.bf16.gmra.mxu0 %v4220
    %v4656 = vpop.f32.mrf.mxu0
    %v4657 = vadd.f32 %v4488, %v4656
    %v4658 = vpop.f32.mrf.mxu0
    %v4659 = vadd.f32 %v4490, %v4658
    %4660 = vmatmul.bf16.gmra.mxu0 %v4223
    %v4661 = vpop.f32.mrf.mxu0
    %v4662 = vadd.f32 %v4493, %v4661
    %v4663 = vpop.f32.mrf.mxu0
    %v4664 = vadd.f32 %v4495, %v4663
    %4665 = vmatmul.bf16.gmra.mxu0 %v4226
    %v4666 = vpop.f32.mrf.mxu0
    %v4667 = vadd.f32 %v4498, %v4666
    %v4668 = vpop.f32.mrf.mxu0
    %v4669 = vadd.f32 %v4500, %v4668
    %4670 = vmatmul.bf16.gmra.mxu0 %v4229
    %v4671 = vpop.f32.mrf.mxu0
    %v4672 = vadd.f32 %v4503, %v4671
    %v4673 = vpop.f32.mrf.mxu0
    %v4674 = vadd.f32 %v4505, %v4673
    %4675 = vmatmul.bf16.gmra.mxu0 %v4232
    %v4676 = vpop.f32.mrf.mxu0
    %v4677 = vadd.f32 %v4508, %v4676
    %v4678 = vpop.f32.mrf.mxu0
    %v4679 = vadd.f32 %v4510, %v4678
    %4680 = vmatmul.bf16.gmra.mxu0 %v4235
    %v4681 = vpop.f32.mrf.mxu0
    %v4682 = vadd.f32 %v4513, %v4681
    %v4683 = vpop.f32.mrf.mxu0
    %v4684 = vadd.f32 %v4515, %v4683
    %4685 = vmatmul.bf16.gmra.mxu0 %v4238
    %v4686 = vpop.f32.mrf.mxu0
    %v4687 = vadd.f32 %v4518, %v4686
    %v4688 = vpop.f32.mrf.mxu0
    %v4689 = vadd.f32 %v4520, %v4688
    %4690 = vmatmul.bf16.gmra.mxu0 %v4241
    %v4691 = vpop.f32.mrf.mxu0
    %v4692 = vadd.f32 %v4523, %v4691
    %v4693 = vpop.f32.mrf.mxu0
    %v4694 = vadd.f32 %v4525, %v4693
    %4695 = vmatmul.bf16.gmra.mxu0 %v4244
    %v4696 = vpop.f32.mrf.mxu0
    %v4697 = vadd.f32 %v4528, %v4696
    %v4698 = vpop.f32.mrf.mxu0
    %v4699 = vadd.f32 %v4530, %v4698
    %4700 = vmatmul.bf16.gmra.mxu0 %v4247
    %v4701 = vpop.f32.mrf.mxu0
    %v4702 = vadd.f32 %v4533, %v4701
    %v4703 = vpop.f32.mrf.mxu0
    %v4704 = vadd.f32 %v4535, %v4703
    %4705 = vmatmul.bf16.gmra.mxu0 %v4250
    %v4706 = vpop.f32.mrf.mxu0
    %v4707 = vadd.f32 %v4538, %v4706
    %v4708 = vpop.f32.mrf.mxu0
    %v4709 = vadd.f32 %v4540, %v4708
    %4710 = vmatmul.bf16.gmra.mxu0 %v4253
    %v4711 = vpop.f32.mrf.mxu0
    %v4712 = vadd.f32 %v4543, %v4711
    %v4713 = vpop.f32.mrf.mxu0
    %v4714 = vadd.f32 %v4545, %v4713
    %4715 = vmatmul.bf16.gmra.mxu0 %v4256
    %v4716 = vpop.f32.mrf.mxu0
    %v4717 = vadd.f32 %v4548, %v4716
    %v4718 = vpop.f32.mrf.mxu0
    %v4719 = vadd.f32 %v4550, %v4718
    %4720 = vmatmul.bf16.gmra.mxu0 %v4259
    %v4721 = vpop.f32.mrf.mxu0
    %v4722 = vadd.f32 %v4553, %v4721
    %v4723 = vpop.f32.mrf.mxu0
    %v4724 = vadd.f32 %v4555, %v4723
    %4725 = vmatmul.bf16.gmra.mxu0 %v4262
    %v4726 = vpop.f32.mrf.mxu0
    %v4727 = vadd.f32 %v4558, %v4726
    %v4728 = vpop.f32.mrf.mxu0
    %v4729 = vadd.f32 %v4560, %v4728
    %4730 = vmatmul.bf16.gmra.mxu0 %v1915
    %v4731 = vpop.f32.mrf.mxu0
    %v4732 = vadd.f32 %v4563, %v4731
    %v4733 = vpop.f32.mrf.mxu0
    %v4734 = vadd.f32 %v4565, %v4733
    %4735 = vmatmul.bf16.gmra.mxu0 %v4265
    %v4736 = vpop.f32.mrf.mxu0
    %v4737 = vadd.f32 %v4568, %v4736
    %v4738 = vpop.f32.mrf.mxu0
    %v4739 = vadd.f32 %v4570, %v4738
    %4740 = vmatmul.bf16.gmra.mxu0 %v4268
    %v4741 = vpop.f32.mrf.mxu0
    %v4742 = vadd.f32 %v4573, %v4741
    %v4743 = vpop.f32.mrf.mxu0
    %v4744 = vadd.f32 %v4575, %v4743
    %4745 = vmatmul.bf16.gmra.mxu0 %v4271
    %v4746 = vpop.f32.mrf.mxu0
    %v4747 = vadd.f32 %v4578, %v4746
    %v4748 = vpop.f32.mrf.mxu0
    %v4749 = vadd.f32 %v4580, %v4748
    %4750 = vmatmul.bf16.gmra.mxu0 %v4274
    %v4751 = vpop.f32.mrf.mxu0
    %v4752 = vadd.f32 %v4583, %v4751
    %v4753 = vpop.f32.mrf.mxu0
    %v4754 = vadd.f32 %v4585, %v4753
    %4755 = vmatmul.bf16.gmra.mxu0 %v4277
    %v4756 = vpop.f32.mrf.mxu0
    %v4757 = vadd.f32 %v4588, %v4756
    %v4758 = vpop.f32.mrf.mxu0
    %v4759 = vadd.f32 %v4590, %v4758
    %4760 = vmatmul.bf16.gmra.mxu0 %v4280
    %v4761 = vpop.f32.mrf.mxu0
    %v4762 = vadd.f32 %v4593, %v4761
    %v4763 = vpop.f32.mrf.mxu0
    %v4764 = vadd.f32 %v4595, %v4763
    %4765 = vmatmul.bf16.gmra.mxu0 %v4283
    %v4766 = vpop.f32.mrf.mxu0
    %v4767 = vadd.f32 %v4598, %v4766
    %v4768 = vpop.f32.mrf.mxu0
    %v4769 = vadd.f32 %v4600, %v4768
    %4770 = vmatmul.bf16.gmra.mxu0 %v4286
    %v4771 = vpop.f32.mrf.mxu0
    %v4772 = vadd.f32 %v4603, %v4771
    %v4773 = vpop.f32.mrf.mxu0
    %v4774 = vadd.f32 %v4605, %v4773
    %4775 = vmatmul.bf16.gmra.mxu0 %v4289
    %v4776 = vpop.f32.mrf.mxu0
    %v4777 = vadd.f32 %v4608, %v4776
    %v4778 = vpop.f32.mrf.mxu0
    %v4779 = vadd.f32 %v4610, %v4778
    %4780 = vmatmul.bf16.gmra.mxu0 %v4292
    %v4781 = vpop.f32.mrf.mxu0
    %v4782 = vadd.f32 %v4613, %v4781
    %v4783 = vpop.f32.mrf.mxu0
    %v4784 = vadd.f32 %v4615, %v4783
    %4785 = vmatmul.bf16.gmra.mxu0 %v4295
    %v4786 = vpop.f32.mrf.mxu0
    %v4787 = vadd.f32 %v4618, %v4786
    %v4788 = vpop.f32.mrf.mxu0
    %v4789 = vadd.f32 %v4620, %v4788
    %4790 = vmatmul.bf16.gmra.mxu0 %v4298
    %v4791 = vpop.f32.mrf.mxu0
    %v4792 = vadd.f32 %v4623, %v4791
    %v4793 = vpop.f32.mrf.mxu0
    %v4794 = vadd.f32 %v4625, %v4793
    %4795 = vmatmul.bf16.gmra.mxu0 %v4301
    %v4796 = vpop.f32.mrf.mxu0
    %v4797 = vadd.f32 %v4628, %v4796
    %v4798 = vpop.f32.mrf.mxu0
    %v4799 = vadd.f32 %v4630, %v4798
    %4800 = vmatmul.bf16.gmra.mxu0 %v4304
    %v4801 = vpop.f32.mrf.mxu0
    %v4802 = vadd.f32 %v4633, %v4801
    %v4803 = vpop.f32.mrf.mxu0
    %v4804 = vadd.f32 %v4635, %v4803
    %4805 = vmatmul.bf16.gmra.mxu0 %v4307
    %v4806 = vpop.f32.mrf.mxu0
    %v4807 = vadd.f32 %v4638, %v4806
    %v4808 = vpop.f32.mrf.mxu0
    %v4809 = vadd.f32 %v4640, %v4808
    %4810 = vmatmul.bf16.gmra.mxu0 %v1915
    %v4811 = vpop.f32.mrf.mxu0
    %v4812 = vadd.f32 %v4643, %v4811
    %v4813 = vpop.f32.mrf.mxu0
    %v4814 = vadd.f32 %v4645, %v4813
    %4815 = vdwg.mxu0
    %v4816 = vsel %vm1245, %v4657, 0.0
    %v4817 = vsel %vm1245, %v4659, 0.0
    %v4818 = vadd.f32 %v4816, %v4817
    %v4819 = vsel %vm1245, %v4662, 0.0
    %v4820 = vadd.f32 %v4818, %v4819
    %v4821 = vsel %vm1245, %v4664, 0.0
    %v4822 = vadd.f32 %v4820, %v4821
    %v4823 = vsel %vm1245, %v4667, 0.0
    %v4824 = vadd.f32 %v4822, %v4823
    %v4825 = vsel %vm1245, %v4669, 0.0
    %v4826 = vadd.f32 %v4824, %v4825
    %v4827 = vsel %vm1245, %v4672, 0.0
    %v4828 = vadd.f32 %v4826, %v4827
    %v4829 = vsel %vm1245, %v4674, 0.0
    %v4830 = vadd.f32 %v4828, %v4829
    %v4831 = vsel %vm1245, %v4677, 0.0
    %v4832 = vadd.f32 %v4830, %v4831
    %v4833 = vsel %vm1245, %v4679, 0.0
    %v4834 = vadd.f32 %v4832, %v4833
    %v4835 = vsel %vm1245, %v4682, 0.0
    %v4836 = vadd.f32 %v4834, %v4835
    %v4837 = vsel %vm1245, %v4684, 0.0
    %v4838 = vadd.f32 %v4836, %v4837
    %v4839 = vsel %vm1245, %v4687, 0.0
    %v4840 = vadd.f32 %v4838, %v4839
    %v4841 = vsel %vm1245, %v4689, 0.0
    %v4842 = vadd.f32 %v4840, %v4841
    %v4843 = vsel %vm1245, %v4692, 0.0
    %v4844 = vadd.f32 %v4842, %v4843
    %v4845 = vsel %vm1245, %v4694, 0.0
    %v4846 = vadd.f32 %v4844, %v4845
    %v4847 = vsel %vm1245, %v4697, 0.0
    %v4848 = vadd.f32 %v4846, %v4847
    %v4849 = vsel %vm1245, %v4699, 0.0
    %v4850 = vadd.f32 %v4848, %v4849
    %v4851 = vsel %vm1245, %v4702, 0.0
    %v4852 = vadd.f32 %v4850, %v4851
    %v4853 = vsel %vm1245, %v4704, 0.0
    %v4854 = vadd.f32 %v4852, %v4853
    %v4855 = vsel %vm1245, %v4707, 0.0
    %v4856 = vadd.f32 %v4854, %v4855
    %v4857 = vsel %vm1245, %v4709, 0.0
    %v4858 = vadd.f32 %v4856, %v4857
    %v4859 = vsel %vm1245, %v4712, 0.0
    %v4860 = vadd.f32 %v4858, %v4859
    %v4861 = vsel %vm1245, %v4714, 0.0
    %v4862 = vadd.f32 %v4860, %v4861
    %v4863 = vsel %vm1245, %v4717, 0.0
    %v4864 = vadd.f32 %v4862, %v4863
    %v4865 = vsel %vm1245, %v4719, 0.0
    %v4866 = vadd.f32 %v4864, %v4865
    %v4867 = vsel %vm1245, %v4722, 0.0
    %v4868 = vadd.f32 %v4866, %v4867
    %v4869 = vsel %vm1245, %v4724, 0.0
    %v4870 = vadd.f32 %v4868, %v4869
    %v4871 = vsel %vm1245, %v4727, 0.0
    %v4872 = vadd.f32 %v4870, %v4871
    %v4873 = vsel %vm1245, %v4729, 0.0
    %v4874 = vadd.f32 %v4872, %v4873
    %v4875 = vsel %vm1245, %v4732, 0.0
    %v4876 = vadd.f32 %v4874, %v4875
    %v4877 = vsel %vm1245, %v4734, 0.0
    %v4878 = vadd.f32 %v4876, %v4877
    %v4879 = vrot.slane %v4878, 4
    %v4880 = vadd.f32 %v4878, %v4879
    %v4881 = vrot.slane %v4880, 2
    %v4882 = vadd.f32 %v4880, %v4881
    %v4883 = vrot.slane %v4882, 1
    %v4884 = vadd.f32 %v4882, %v4883
    %v4885 = vsel %vm1245, %v4737, 0.0
    %v4886 = vsel %vm1245, %v4739, 0.0
    %v4887 = vadd.f32 %v4885, %v4886
    %v4888 = vsel %vm1245, %v4742, 0.0
    %v4889 = vadd.f32 %v4887, %v4888
    %v4890 = vsel %vm1245, %v4744, 0.0
    %v4891 = vadd.f32 %v4889, %v4890
    %v4892 = vsel %vm1245, %v4747, 0.0
    %v4893 = vadd.f32 %v4891, %v4892
    %v4894 = vsel %vm1245, %v4749, 0.0
    %v4895 = vadd.f32 %v4893, %v4894
    %v4896 = vsel %vm1245, %v4752, 0.0
    %v4897 = vadd.f32 %v4895, %v4896
    %v4898 = vsel %vm1245, %v4754, 0.0
    %v4899 = vadd.f32 %v4897, %v4898
    %v4900 = vsel %vm1245, %v4757, 0.0
    %v4901 = vadd.f32 %v4899, %v4900
    %v4902 = vsel %vm1245, %v4759, 0.0
    %v4903 = vadd.f32 %v4901, %v4902
    %v4904 = vsel %vm1245, %v4762, 0.0
    %v4905 = vadd.f32 %v4903, %v4904
    %v4906 = vsel %vm1245, %v4764, 0.0
    %v4907 = vadd.f32 %v4905, %v4906
    %v4908 = vsel %vm1245, %v4767, 0.0
    %v4909 = vadd.f32 %v4907, %v4908
    %v4910 = vsel %vm1245, %v4769, 0.0
    %v4911 = vadd.f32 %v4909, %v4910
    %v4912 = vsel %vm1245, %v4772, 0.0
    %v4913 = vadd.f32 %v4911, %v4912
    %v4914 = vsel %vm1245, %v4774, 0.0
    %v4915 = vadd.f32 %v4913, %v4914
    %v4916 = vsel %vm1245, %v4777, 0.0
    %v4917 = vadd.f32 %v4915, %v4916
    %v4918 = vsel %vm1245, %v4779, 0.0
    %v4919 = vadd.f32 %v4917, %v4918
    %v4920 = vsel %vm1245, %v4782, 0.0
    %v4921 = vadd.f32 %v4919, %v4920
    %v4922 = vsel %vm1245, %v4784, 0.0
    %v4923 = vadd.f32 %v4921, %v4922
    %v4924 = vsel %vm1245, %v4787, 0.0
    %v4925 = vadd.f32 %v4923, %v4924
    %v4926 = vsel %vm1245, %v4789, 0.0
    %v4927 = vadd.f32 %v4925, %v4926
    %v4928 = vsel %vm1245, %v4792, 0.0
    %v4929 = vadd.f32 %v4927, %v4928
    %v4930 = vsel %vm1245, %v4794, 0.0
    %v4931 = vadd.f32 %v4929, %v4930
    %v4932 = vsel %vm1245, %v4797, 0.0
    %v4933 = vadd.f32 %v4931, %v4932
    %v4934 = vsel %vm1245, %v4799, 0.0
    %v4935 = vadd.f32 %v4933, %v4934
    %v4936 = vsel %vm1245, %v4802, 0.0
    %v4937 = vadd.f32 %v4935, %v4936
    %v4938 = vsel %vm1245, %v4804, 0.0
    %v4939 = vadd.f32 %v4937, %v4938
    %v4940 = vsel %vm1245, %v4807, 0.0
    %v4941 = vadd.f32 %v4939, %v4940
    %v4942 = vsel %vm1245, %v4809, 0.0
    %v4943 = vadd.f32 %v4941, %v4942
    %v4944 = vsel %vm1245, %v4812, 0.0
    %v4945 = vadd.f32 %v4943, %v4944
    %v4946 = vsel %vm1245, %v4814, 0.0
    %v4947 = vadd.f32 %v4945, %v4946
    %v4948 = vrot.slane %v4947, 4
    %v4949 = vadd.f32 %v4947, %v4948
    %v4950 = vrot.slane %v4949, 2
    %v4951 = vadd.f32 %v4949, %v4950
    %v4952 = vrot.slane %v4951, 1
    %v4953 = vadd.f32 %v4951, %v4952
    %v4954 = vrcp.pop 256.0
    %v4955 = vmul.f32 256.0, %v4954
    %v4956 = vsub.f32 1.0, %v4955
    %v4957 = vmul.f32 %v4954, %v4956
    %v4958 = vadd.f32 %v4954, %v4957
    %vm4959 = vweird.f32 %v4954
    %v4960 = vsel %vm4959, %v4954, %v4958
    %v4961 = vmul.f32 %v4884, %v4960
    %v4962 = vmul.f32 %v4953, %v4960
    %v4963 = vsel %vm1245, %v4657, -inf
    %v4964 = vsel %vm1245, %v4659, -inf
    %v4965 = vsel %vm1245, %v4662, -inf
    %v4966 = vmax.f32 %v4963, %v4965
    %v4967 = vsel %vm1245, %v4664, -inf
    %v4968 = vmax.f32 %v4964, %v4967
    %v4969 = vsel %vm1245, %v4667, -inf
    %v4970 = vmax.f32 %v4966, %v4969
    %v4971 = vsel %vm1245, %v4669, -inf
    %v4972 = vmax.f32 %v4968, %v4971
    %v4973 = vsel %vm1245, %v4672, -inf
    %v4974 = vmax.f32 %v4970, %v4973
    %v4975 = vsel %vm1245, %v4674, -inf
    %v4976 = vmax.f32 %v4972, %v4975
    %v4977 = vsel %vm1245, %v4677, -inf
    %v4978 = vmax.f32 %v4974, %v4977
    %v4979 = vsel %vm1245, %v4679, -inf
    %v4980 = vmax.f32 %v4976, %v4979
    %v4981 = vsel %vm1245, %v4682, -inf
    %v4982 = vmax.f32 %v4978, %v4981
    %v4983 = vsel %vm1245, %v4684, -inf
    %v4984 = vmax.f32 %v4980, %v4983
    %v4985 = vsel %vm1245, %v4687, -inf
    %v4986 = vmax.f32 %v4982, %v4985
    %v4987 = vsel %vm1245, %v4689, -inf
    %v4988 = vmax.f32 %v4984, %v4987
    %v4989 = vsel %vm1245, %v4692, -inf
    %v4990 = vmax.f32 %v4986, %v4989
    %v4991 = vsel %vm1245, %v4694, -inf
    %v4992 = vmax.f32 %v4988, %v4991
    %v4993 = vsel %vm1245, %v4697, -inf
    %v4994 = vmax.f32 %v4990, %v4993
    %v4995 = vsel %vm1245, %v4699, -inf
    %v4996 = vmax.f32 %v4992, %v4995
    %v4997 = vsel %vm1245, %v4702, -inf
    %v4998 = vmax.f32 %v4994, %v4997
    %v4999 = vsel %vm1245, %v4704, -inf
    %v5000 = vmax.f32 %v4996, %v4999
    %v5001 = vsel %vm1245, %v4707, -inf
    %v5002 = vmax.f32 %v4998, %v5001
    %v5003 = vsel %vm1245, %v4709, -inf
    %v5004 = vmax.f32 %v5000, %v5003
    %v5005 = vsel %vm1245, %v4712, -inf
    %v5006 = vmax.f32 %v5002, %v5005
    %v5007 = vsel %vm1245, %v4714, -inf
    %v5008 = vmax.f32 %v5004, %v5007
    %v5009 = vsel %vm1245, %v4717, -inf
    %v5010 = vmax.f32 %v5006, %v5009
    %v5011 = vsel %vm1245, %v4719, -inf
    %v5012 = vmax.f32 %v5008, %v5011
    %v5013 = vsel %vm1245, %v4722, -inf
    %v5014 = vmax.f32 %v5010, %v5013
    %v5015 = vsel %vm1245, %v4724, -inf
    %v5016 = vmax.f32 %v5012, %v5015
    %v5017 = vsel %vm1245, %v4727, -inf
    %v5018 = vmax.f32 %v5014, %v5017
    %v5019 = vsel %vm1245, %v4729, -inf
    %v5020 = vmax.f32 %v5016, %v5019
    %v5021 = vsel %vm1245, %v4732, -inf
    %v5022 = vmax.f32 %v5018, %v5021
    %v5023 = vsel %vm1245, %v4734, -inf
    %v5024 = vmax.f32 %v5020, %v5023
    %v5025 = vmax.f32 %v5022, %v5024
    %v5026 = vrot.slane %v5025, 4
    %v5027 = vmax.f32 %v5025, %v5026
    %v5028 = vrot.slane %v5027, 2
    %v5029 = vmax.f32 %v5027, %v5028
    %v5030 = vrot.slane %v5029, 1
    %v5031 = vmax.f32 %v5029, %v5030
    %v5032 = vsel %vm1245, %v4737, -inf
    %v5033 = vsel %vm1245, %v4739, -inf
    %v5034 = vsel %vm1245, %v4742, -inf
    %v5035 = vmax.f32 %v5032, %v5034
    %v5036 = vsel %vm1245, %v4744, -inf
    %v5037 = vmax.f32 %v5033, %v5036
    %v5038 = vsel %vm1245, %v4747, -inf
    %v5039 = vmax.f32 %v5035, %v5038
    %v5040 = vsel %vm1245, %v4749, -inf
    %v5041 = vmax.f32 %v5037, %v5040
    %v5042 = vsel %vm1245, %v4752, -inf
    %v5043 = vmax.f32 %v5039, %v5042
    %v5044 = vsel %vm1245, %v4754, -inf
    %v5045 = vmax.f32 %v5041, %v5044
    %v5046 = vsel %vm1245, %v4757, -inf
    %v5047 = vmax.f32 %v5043, %v5046
    %v5048 = vsel %vm1245, %v4759, -inf
    %v5049 = vmax.f32 %v5045, %v5048
    %v5050 = vsel %vm1245, %v4762, -inf
    %v5051 = vmax.f32 %v5047, %v5050
    %v5052 = vsel %vm1245, %v4764, -inf
    %v5053 = vmax.f32 %v5049, %v5052
    %v5054 = vsel %vm1245, %v4767, -inf
    %v5055 = vmax.f32 %v5051, %v5054
    %v5056 = vsel %vm1245, %v4769, -inf
    %v5057 = vmax.f32 %v5053, %v5056
    %v5058 = vsel %vm1245, %v4772, -inf
    %v5059 = vmax.f32 %v5055, %v5058
    %v5060 = vsel %vm1245, %v4774, -inf
    %v5061 = vmax.f32 %v5057, %v5060
    %v5062 = vsel %vm1245, %v4777, -inf
    %v5063 = vmax.f32 %v5059, %v5062
    %v5064 = vsel %vm1245, %v4779, -inf
    %v5065 = vmax.f32 %v5061, %v5064
    %v5066 = vsel %vm1245, %v4782, -inf
    %v5067 = vmax.f32 %v5063, %v5066
    %v5068 = vsel %vm1245, %v4784, -inf
    %v5069 = vmax.f32 %v5065, %v5068
    %v5070 = vsel %vm1245, %v4787, -inf
    %v5071 = vmax.f32 %v5067, %v5070
    %v5072 = vsel %vm1245, %v4789, -inf
    %v5073 = vmax.f32 %v5069, %v5072
    %v5074 = vsel %vm1245, %v4792, -inf
    %v5075 = vmax.f32 %v5071, %v5074
    %v5076 = vsel %vm1245, %v4794, -inf
    %v5077 = vmax.f32 %v5073, %v5076
    %v5078 = vsel %vm1245, %v4797, -inf
    %v5079 = vmax.f32 %v5075, %v5078
    %v5080 = vsel %vm1245, %v4799, -inf
    %v5081 = vmax.f32 %v5077, %v5080
    %v5082 = vsel %vm1245, %v4802, -inf
    %v5083 = vmax.f32 %v5079, %v5082
    %v5084 = vsel %vm1245, %v4804, -inf
    %v5085 = vmax.f32 %v5081, %v5084
    %v5086 = vsel %vm1245, %v4807, -inf
    %v5087 = vmax.f32 %v5083, %v5086
    %v5088 = vsel %vm1245, %v4809, -inf
    %v5089 = vmax.f32 %v5085, %v5088
    %v5090 = vsel %vm1245, %v4812, -inf
    %v5091 = vmax.f32 %v5087, %v5090
    %v5092 = vsel %vm1245, %v4814, -inf
    %v5093 = vmax.f32 %v5089, %v5092
    %v5094 = vmax.f32 %v5091, %v5093
    %v5095 = vrot.slane %v5094, 4
    %v5096 = vmax.f32 %v5094, %v5095
    %v5097 = vrot.slane %v5096, 2
    %v5098 = vmax.f32 %v5096, %v5097
    %v5099 = vrot.slane %v5098, 1
    %v5100 = vmax.f32 %v5098, %v5099
    %vm5103 = vcmask 1041409
    %v5104 = vsel %vm5103, %v4962, %v4961
    %vm5108 = vcmask 1043459
    %v5109 = vsel %vm5108, %v5100, %v5031
    %vm5111 = vcmask 1041408
    %v5112 = vsel %vm5111, %v5104, %v5109
    %v5113 = vpack.c.bf16 %v5112, %v5112
    %v5114 = vld [vmem:[%s5] sm:$0xf]
    %v5115 = vld [vmem:[%s5 + $0x4] sm:$0xf]
    %v5116 = vld [vmem:[%s5 + $0x8] sm:$0xf]
    %v5117 = vld [vmem:[%s5 + $0xc] sm:$0xf]
    %v5122 = vunpack.c.l.b16 %v5114
    %v5123 = vunpack.c.l.b16 %v5115
    %v5124 = vunpack.c.l.b16 %v5116
    %v5125 = vunpack.c.l.b16 %v5117
    %v5126 = vpack.c.b16 %v5123, %v5122
    %v5127 = vpack.c.b16 %v5125, %v5124
    %v5131 = vsel %vm1245, %v5113, 0
    %5133 = vmatpush.bf16.msra.mxu0 0
    %5134 = vmatpush.bf16.msra.mxu0 0
    %5135 = vmatpush.bf16.msra.mxu0 0
    %5136 = vmatpush.bf16.msra.mxu0 0
    %5137 = vmatpush.bf16.msra.mxu0 0
    %5138 = vmatpush.bf16.msra.mxu0 0
    %5139 = vmatpush.bf16.msra.mxu0 %v5127
    %5140 = vmatpush.bf16.msra.mxu0 %v5126
    %5141 = vmatmul.bf16.gmra.mxu0 %v5131
    %v5142 = vpop.f32.mrf.mxu0
    %v5143 = vadd.f32 0.0, %v5142
    %v5144 = vpop.f32.mrf.mxu0
    %5145 = vdwg.mxu0
    %v5146 = vmax.f32 %v5143, 0.0
    %v5147 = vpack.c.bf16 %v5146, %v5146
    %v5148 = vld [vmem:[%s6] sm:$0x1]
    %vm5149 = vcmask 15360
    %v5151 = vsel %vm5149, %v5147, 0
    %vm5153 = vcmask 1040384
    %v5155 = vsel %vm5153, %v5148, 0
    %5157 = vmatpush.bf16.msra.mxu0 0
    %5158 = vmatpush.bf16.msra.mxu0 0
    %5159 = vmatpush.bf16.msra.mxu0 0
    %5160 = vmatpush.bf16.msra.mxu0 0
    %5161 = vmatpush.bf16.msra.mxu0 0
    %5162 = vmatpush.bf16.msra.mxu0 0
    %5163 = vmatpush.bf16.msra.mxu0 0
    %5164 = vmatpush.bf16.msra.mxu0 %v5155
    %5165 = vmatmul.bf16.gmra.mxu0 %v5151
    %v5166 = vpop.f32.mrf.mxu0
    %v5167 = vadd.f32 0.0, %v5166
    %v5168 = vpop.f32.mrf.mxu0
    %5169 = vdwg.mxu0
    %v5171 = vrot.slane %v5167, 2
    %v5173 = vadd.f32 %v5167, %v5171
    %v5174 = vxor.u32 %v5173, 2147483648
    %v5175 = vmul.f32 %v5174, 1.442695
    %v5176 = vpow.pop %v5175
    %v5177 = vadd.f32 %v5176, 1.0
    %v5178 = vrcp.pop %v5177
    %v5179 = vmul.f32 %v5177, %v5178
    %v5180 = vsub.f32 1.0, %v5179
    %v5181 = vmul.f32 %v5178, %v5180
    %v5182 = vadd.f32 %v5178, %v5181
    %vm5183 = vweird.f32 %v5177
    %vm5184 = vweird.f32 %v5178
    %vm5185 = vmor %vm5183, %vm5184
    %v5186 = vsel %vm5185, %v5178, %v5182
    %v5187 = vand.u32 2147483647, %v5177
    %vm5188 = vcmp.eq.f32.partialorder %v5187, 8.507059e+37
    %v5189 = vand.u32 %v5177, 2147483648
    %v5190 = vor.u32 1.1754944e-38, %v5189
    %v5191 = vsel %vm5188, %v5190, %v5186
    %v5192 = vmul.f32 1.0, %v5191
    %v5194 = vrot.slane %v5192, 1
    %v5195 = vperm.slane %v5192, 0
    %v5196 = vperm.slane %v5194, 0
    %v5199 = vmul.f32 %v4657, %v5195
    %v5200 = vmul.f32 %v4659, %v5195
    %v5201 = vmul.f32 %v4662, %v5195
    %v5202 = vmul.f32 %v4664, %v5195
    %v5203 = vmul.f32 %v4667, %v5195
    %v5204 = vmul.f32 %v4669, %v5195
    %v5205 = vmul.f32 %v4672, %v5195
    %v5206 = vmul.f32 %v4674, %v5195
    %v5207 = vmul.f32 %v4677, %v5195
    %v5208 = vmul.f32 %v4679, %v5195
    %v5209 = vmul.f32 %v4682, %v5195
    %v5210 = vmul.f32 %v4684, %v5195
    %v5211 = vmul.f32 %v4687, %v5195
    %v5212 = vmul.f32 %v4689, %v5195
    %v5213 = vmul.f32 %v4692, %v5195
    %v5214 = vmul.f32 %v4694, %v5195
    %v5215 = vmul.f32 %v4697, %v5195
    %v5216 = vmul.f32 %v4699, %v5195
    %v5217 = vmul.f32 %v4702, %v5195
    %v5218 = vmul.f32 %v4704, %v5195
    %v5219 = vmul.f32 %v4707, %v5195
    %v5220 = vmul.f32 %v4709, %v5195
    %v5221 = vmul.f32 %v4712, %v5195
    %v5222 = vmul.f32 %v4714, %v5195
    %v5223 = vmul.f32 %v4717, %v5195
    %v5224 = vmul.f32 %v4719, %v5195
    %v5225 = vmul.f32 %v4722, %v5195
    %v5226 = vmul.f32 %v4724, %v5195
    %v5227 = vmul.f32 %v4727, %v5195
    %v5228 = vmul.f32 %v4729, %v5195
    %v5229 = vmul.f32 %v4732, %v5195
    %v5230 = vmul.f32 %v4734, %v5195
    %v5231 = vmul.f32 %v4737, %v5196
    %v5232 = vmul.f32 %v4739, %v5196
    %v5233 = vmul.f32 %v4742, %v5196
    %v5234 = vmul.f32 %v4744, %v5196
    %v5235 = vmul.f32 %v4747, %v5196
    %v5236 = vmul.f32 %v4749, %v5196
    %v5237 = vmul.f32 %v4752, %v5196
    %v5238 = vmul.f32 %v4754, %v5196
    %v5239 = vmul.f32 %v4757, %v5196
    %v5240 = vmul.f32 %v4759, %v5196
    %v5241 = vmul.f32 %v4762, %v5196
    %v5242 = vmul.f32 %v4764, %v5196
    %v5243 = vmul.f32 %v4767, %v5196
    %v5244 = vmul.f32 %v4769, %v5196
    %v5245 = vmul.f32 %v4772, %v5196
    %v5246 = vmul.f32 %v4774, %v5196
    %v5247 = vmul.f32 %v4777, %v5196
    %v5248 = vmul.f32 %v4779, %v5196
    %v5249 = vmul.f32 %v4782, %v5196
    %v5250 = vmul.f32 %v4784, %v5196
    %v5251 = vmul.f32 %v4787, %v5196
    %v5252 = vmul.f32 %v4789, %v5196
    %v5253 = vmul.f32 %v4792, %v5196
    %v5254 = vmul.f32 %v4794, %v5196
    %v5255 = vmul.f32 %v4797, %v5196
    %v5256 = vmul.f32 %v4799, %v5196
    %v5257 = vmul.f32 %v4802, %v5196
    %v5258 = vmul.f32 %v4804, %v5196
    %v5259 = vmul.f32 %v4807, %v5196
    %v5260 = vmul.f32 %v4809, %v5196
    %v5261 = vmul.f32 %v4812, %v5196
    %v5262 = vmul.f32 %v4814, %v5196
    %v5263 = vsel %vm1245, %v5199, 0.0
    %5264 = vadd.xlane.f32.xlu0 %v5263
    %v5265 = vpop.xlane.xlu0 %5264
    %v5266 = vsel %vm1245, %v5200, 0.0
    %5267 = vadd.xlane.f32.xlu0 %v5266
    %v5268 = vpop.xlane.xlu0 %5267
    %v5269 = vsel %vm1245, %v5201, 0.0
    %5270 = vadd.xlane.f32.xlu0 %v5269
    %v5271 = vpop.xlane.xlu0 %5270
    %v5272 = vsel %vm1245, %v5202, 0.0
    %5273 = vadd.xlane.f32.xlu0 %v5272
    %v5274 = vpop.xlane.xlu0 %5273
    %v5275 = vsel %vm1245, %v5203, 0.0
    %5276 = vadd.xlane.f32.xlu0 %v5275
    %v5277 = vpop.xlane.xlu0 %5276
    %v5278 = vsel %vm1245, %v5204, 0.0
    %5279 = vadd.xlane.f32.xlu0 %v5278
    %v5280 = vpop.xlane.xlu0 %5279
    %v5281 = vsel %vm1245, %v5205, 0.0
    %5282 = vadd.xlane.f32.xlu0 %v5281
    %v5283 = vpop.xlane.xlu0 %5282
    %v5284 = vsel %vm1245, %v5206, 0.0
    %5285 = vadd.xlane.f32.xlu0 %v5284
    %v5286 = vpop.xlane.xlu0 %5285
    %v5287 = vsel %vm1245, %v5207, 0.0
    %5288 = vadd.xlane.f32.xlu0 %v5287
    %v5289 = vpop.xlane.xlu0 %5288
    %v5290 = vsel %vm1245, %v5208, 0.0
    %5291 = vadd.xlane.f32.xlu0 %v5290
    %v5292 = vpop.xlane.xlu0 %5291
    %v5293 = vsel %vm1245, %v5209, 0.0
    %5294 = vadd.xlane.f32.xlu0 %v5293
    %v5295 = vpop.xlane.xlu0 %5294
    %v5296 = vsel %vm1245, %v5210, 0.0
    %5297 = vadd.xlane.f32.xlu0 %v5296
    %v5298 = vpop.xlane.xlu0 %5297
    %v5299 = vsel %vm1245, %v5211, 0.0
    %5300 = vadd.xlane.f32.xlu0 %v5299
    %v5301 = vpop.xlane.xlu0 %5300
    %v5302 = vsel %vm1245, %v5212, 0.0
    %5303 = vadd.xlane.f32.xlu0 %v5302
    %v5304 = vpop.xlane.xlu0 %5303
    %v5305 = vsel %vm1245, %v5213, 0.0
    %5306 = vadd.xlane.f32.xlu0 %v5305
    %v5307 = vpop.xlane.xlu0 %5306
    %v5308 = vsel %vm1245, %v5214, 0.0
    %5309 = vadd.xlane.f32.xlu0 %v5308
    %v5310 = vpop.xlane.xlu0 %5309
    %v5311 = vsel %vm1245, %v5215, 0.0
    %5312 = vadd.xlane.f32.xlu0 %v5311
    %v5313 = vpop.xlane.xlu0 %5312
    %v5314 = vsel %vm1245, %v5216, 0.0
    %5315 = vadd.xlane.f32.xlu0 %v5314
    %v5316 = vpop.xlane.xlu0 %5315
    %v5317 = vsel %vm1245, %v5217, 0.0
    %5318 = vadd.xlane.f32.xlu0 %v5317
    %v5319 = vpop.xlane.xlu0 %5318
    %v5320 = vsel %vm1245, %v5218, 0.0
    %5321 = vadd.xlane.f32.xlu0 %v5320
    %v5322 = vpop.xlane.xlu0 %5321
    %v5323 = vsel %vm1245, %v5219, 0.0
    %5324 = vadd.xlane.f32.xlu0 %v5323
    %v5325 = vpop.xlane.xlu0 %5324
    %v5326 = vsel %vm1245, %v5220, 0.0
    %5327 = vadd.xlane.f32.xlu0 %v5326
    %v5328 = vpop.xlane.xlu0 %5327
    %v5329 = vsel %vm1245, %v5221, 0.0
    %5330 = vadd.xlane.f32.xlu0 %v5329
    %v5331 = vpop.xlane.xlu0 %5330
    %v5332 = vsel %vm1245, %v5222, 0.0
    %5333 = vadd.xlane.f32.xlu0 %v5332
    %v5334 = vpop.xlane.xlu0 %5333
    %v5335 = vsel %vm1245, %v5223, 0.0
    %5336 = vadd.xlane.f32.xlu0 %v5335
    %v5337 = vpop.xlane.xlu0 %5336
    %v5338 = vsel %vm1245, %v5224, 0.0
    %5339 = vadd.xlane.f32.xlu0 %v5338
    %v5340 = vpop.xlane.xlu0 %5339
    %v5341 = vsel %vm1245, %v5225, 0.0
    %5342 = vadd.xlane.f32.xlu0 %v5341
    %v5343 = vpop.xlane.xlu0 %5342
    %v5344 = vsel %vm1245, %v5226, 0.0
    %5345 = vadd.xlane.f32.xlu0 %v5344
    %v5346 = vpop.xlane.xlu0 %5345
    %v5347 = vsel %vm1245, %v5227, 0.0
    %5348 = vadd.xlane.f32.xlu0 %v5347
    %v5349 = vpop.xlane.xlu0 %5348
    %v5350 = vsel %vm1245, %v5228, 0.0
    %5351 = vadd.xlane.f32.xlu0 %v5350
    %v5352 = vpop.xlane.xlu0 %5351
    %v5353 = vsel %vm1245, %v5229, 0.0
    %5354 = vadd.xlane.f32.xlu0 %v5353
    %v5355 = vpop.xlane.xlu0 %5354
    %v5356 = vsel %vm1245, %v5230, 0.0
    %5357 = vadd.xlane.f32.xlu0 %v5356
    %v5358 = vpop.xlane.xlu0 %5357
    %v5359 = vsel %vm1245, %v5231, 0.0
    %5360 = vadd.xlane.f32.xlu0 %v5359
    %v5361 = vpop.xlane.xlu0 %5360
    %v5362 = vsel %vm1245, %v5232, 0.0
    %5363 = vadd.xlane.f32.xlu0 %v5362
    %v5364 = vpop.xlane.xlu0 %5363
    %v5365 = vsel %vm1245, %v5233, 0.0
    %5366 = vadd.xlane.f32.xlu0 %v5365
    %v5367 = vpop.xlane.xlu0 %5366
    %v5368 = vsel %vm1245, %v5234, 0.0
    %5369 = vadd.xlane.f32.xlu0 %v5368
    %v5370 = vpop.xlane.xlu0 %5369
    %v5371 = vsel %vm1245, %v5235, 0.0
    %5372 = vadd.xlane.f32.xlu0 %v5371
    %v5373 = vpop.xlane.xlu0 %5372
    %v5374 = vsel %vm1245, %v5236, 0.0
    %5375 = vadd.xlane.f32.xlu0 %v5374
    %v5376 = vpop.xlane.xlu0 %5375
    %v5377 = vsel %vm1245, %v5237, 0.0
    %5378 = vadd.xlane.f32.xlu0 %v5377
    %v5379 = vpop.xlane.xlu0 %5378
    %v5380 = vsel %vm1245, %v5238, 0.0
    %5381 = vadd.xlane.f32.xlu0 %v5380
    %v5382 = vpop.xlane.xlu0 %5381
    %v5383 = vsel %vm1245, %v5239, 0.0
    %5384 = vadd.xlane.f32.xlu0 %v5383
    %v5385 = vpop.xlane.xlu0 %5384
    %v5386 = vsel %vm1245, %v5240, 0.0
    %5387 = vadd.xlane.f32.xlu0 %v5386
    %v5388 = vpop.xlane.xlu0 %5387
    %v5389 = vsel %vm1245, %v5241, 0.0
    %5390 = vadd.xlane.f32.xlu0 %v5389
    %v5391 = vpop.xlane.xlu0 %5390
    %v5392 = vsel %vm1245, %v5242, 0.0
    %5393 = vadd.xlane.f32.xlu0 %v5392
    %v5394 = vpop.xlane.xlu0 %5393
    %v5395 = vsel %vm1245, %v5243, 0.0
    %5396 = vadd.xlane.f32.xlu0 %v5395
    %v5397 = vpop.xlane.xlu0 %5396
    %v5398 = vsel %vm1245, %v5244, 0.0
    %5399 = vadd.xlane.f32.xlu0 %v5398
    %v5400 = vpop.xlane.xlu0 %5399
    %v5401 = vsel %vm1245, %v5245, 0.0
    %5402 = vadd.xlane.f32.xlu0 %v5401
    %v5403 = vpop.xlane.xlu0 %5402
    %v5404 = vsel %vm1245, %v5246, 0.0
    %5405 = vadd.xlane.f32.xlu0 %v5404
    %v5406 = vpop.xlane.xlu0 %5405
    %v5407 = vsel %vm1245, %v5247, 0.0
    %5408 = vadd.xlane.f32.xlu0 %v5407
    %v5409 = vpop.xlane.xlu0 %5408
    %v5410 = vsel %vm1245, %v5248, 0.0
    %5411 = vadd.xlane.f32.xlu0 %v5410
    %v5412 = vpop.xlane.xlu0 %5411
    %v5413 = vsel %vm1245, %v5249, 0.0
    %5414 = vadd.xlane.f32.xlu0 %v5413
    %v5415 = vpop.xlane.xlu0 %5414
    %v5416 = vsel %vm1245, %v5250, 0.0
    %5417 = vadd.xlane.f32.xlu0 %v5416
    %v5418 = vpop.xlane.xlu0 %5417
    %v5419 = vsel %vm1245, %v5251, 0.0
    %5420 = vadd.xlane.f32.xlu0 %v5419
    %v5421 = vpop.xlane.xlu0 %5420
    %v5422 = vsel %vm1245, %v5252, 0.0
    %5423 = vadd.xlane.f32.xlu0 %v5422
    %v5424 = vpop.xlane.xlu0 %5423
    %v5425 = vsel %vm1245, %v5253, 0.0
    %5426 = vadd.xlane.f32.xlu0 %v5425
    %v5427 = vpop.xlane.xlu0 %5426
    %v5428 = vsel %vm1245, %v5254, 0.0
    %5429 = vadd.xlane.f32.xlu0 %v5428
    %v5430 = vpop.xlane.xlu0 %5429
    %v5431 = vsel %vm1245, %v5255, 0.0
    %5432 = vadd.xlane.f32.xlu0 %v5431
    %v5433 = vpop.xlane.xlu0 %5432
    %v5434 = vsel %vm1245, %v5256, 0.0
    %5435 = vadd.xlane.f32.xlu0 %v5434
    %v5436 = vpop.xlane.xlu0 %5435
    %v5437 = vsel %vm1245, %v5257, 0.0
    %5438 = vadd.xlane.f32.xlu0 %v5437
    %v5439 = vpop.xlane.xlu0 %5438
    %v5440 = vsel %vm1245, %v5258, 0.0
    %5441 = vadd.xlane.f32.xlu0 %v5440
    %v5442 = vpop.xlane.xlu0 %5441
    %v5443 = vsel %vm1245, %v5259, 0.0
    %5444 = vadd.xlane.f32.xlu0 %v5443
    %v5445 = vpop.xlane.xlu0 %5444
    %v5446 = vsel %vm1245, %v5260, 0.0
    %5447 = vadd.xlane.f32.xlu0 %v5446
    %v5448 = vpop.xlane.xlu0 %5447
    %v5449 = vsel %vm1245, %v5261, 0.0
    %5450 = vadd.xlane.f32.xlu0 %v5449
    %v5451 = vpop.xlane.xlu0 %5450
    %v5452 = vsel %vm1245, %v5262, 0.0
    %5453 = vadd.xlane.f32.xlu0 %v5452
    %v5454 = vpop.xlane.xlu0 %5453
    %v5455 = vrcp.pop 32.0
    %v5456 = vmul.f32 32.0, %v5455
    %v5457 = vsub.f32 1.0, %v5456
    %v5458 = vmul.f32 %v5455, %v5457
    %v5459 = vadd.f32 %v5455, %v5458
    %vm5460 = vweird.f32 %v5455
    %v5461 = vsel %vm5460, %v5455, %v5459
    %v5462 = vmul.f32 %v5265, %v5461
    %v5463 = vmul.f32 %v5268, %v5461
    %v5464 = vmul.f32 %v5271, %v5461
    %v5465 = vmul.f32 %v5274, %v5461
    %v5466 = vmul.f32 %v5277, %v5461
    %v5467 = vmul.f32 %v5280, %v5461
    %v5468 = vmul.f32 %v5283, %v5461
    %v5469 = vmul.f32 %v5286, %v5461
    %v5470 = vmul.f32 %v5289, %v5461
    %v5471 = vmul.f32 %v5292, %v5461
    %v5472 = vmul.f32 %v5295, %v5461
    %v5473 = vmul.f32 %v5298, %v5461
    %v5474 = vmul.f32 %v5301, %v5461
    %v5475 = vmul.f32 %v5304, %v5461
    %v5476 = vmul.f32 %v5307, %v5461
    %v5477 = vmul.f32 %v5310, %v5461
    %v5478 = vmul.f32 %v5313, %v5461
    %v5479 = vmul.f32 %v5316, %v5461
    %v5480 = vmul.f32 %v5319, %v5461
    %v5481 = vmul.f32 %v5322, %v5461
    %v5482 = vmul.f32 %v5325, %v5461
    %v5483 = vmul.f32 %v5328, %v5461
    %v5484 = vmul.f32 %v5331, %v5461
    %v5485 = vmul.f32 %v5334, %v5461
    %v5486 = vmul.f32 %v5337, %v5461
    %v5487 = vmul.f32 %v5340, %v5461
    %v5488 = vmul.f32 %v5343, %v5461
    %v5489 = vmul.f32 %v5346, %v5461
    %v5490 = vmul.f32 %v5349, %v5461
    %v5491 = vmul.f32 %v5352, %v5461
    %v5492 = vmul.f32 %v5355, %v5461
    %v5493 = vmul.f32 %v5358, %v5461
    %v5494 = vmul.f32 %v5361, %v5461
    %v5495 = vmul.f32 %v5364, %v5461
    %v5496 = vmul.f32 %v5367, %v5461
    %v5497 = vmul.f32 %v5370, %v5461
    %v5498 = vmul.f32 %v5373, %v5461
    %v5499 = vmul.f32 %v5376, %v5461
    %v5500 = vmul.f32 %v5379, %v5461
    %v5501 = vmul.f32 %v5382, %v5461
    %v5502 = vmul.f32 %v5385, %v5461
    %v5503 = vmul.f32 %v5388, %v5461
    %v5504 = vmul.f32 %v5391, %v5461
    %v5505 = vmul.f32 %v5394, %v5461
    %v5506 = vmul.f32 %v5397, %v5461
    %v5507 = vmul.f32 %v5400, %v5461
    %v5508 = vmul.f32 %v5403, %v5461
    %v5509 = vmul.f32 %v5406, %v5461
    %v5510 = vmul.f32 %v5409, %v5461
    %v5511 = vmul.f32 %v5412, %v5461
    %v5512 = vmul.f32 %v5415, %v5461
    %v5513 = vmul.f32 %v5418, %v5461
    %v5514 = vmul.f32 %v5421, %v5461
    %v5515 = vmul.f32 %v5424, %v5461
    %v5516 = vmul.f32 %v5427, %v5461
    %v5517 = vmul.f32 %v5430, %v5461
    %v5518 = vmul.f32 %v5433, %v5461
    %v5519 = vmul.f32 %v5436, %v5461
    %v5520 = vmul.f32 %v5439, %v5461
    %v5521 = vmul.f32 %v5442, %v5461
    %v5522 = vmul.f32 %v5445, %v5461
    %v5523 = vmul.f32 %v5448, %v5461
    %v5524 = vmul.f32 %v5451, %v5461
    %v5525 = vmul.f32 %v5454, %v5461
    %v5526 = vsel %vm1245, %v5199, -inf
    %5527 = vmax.xlane.f32.xlu0 %v5526
    %v5528 = vpop.xlane.xlu0 %5527
    %v5529 = vsel %vm1245, %v5200, -inf
    %5530 = vmax.xlane.f32.xlu0 %v5529
    %v5531 = vpop.xlane.xlu0 %5530
    %v5532 = vsel %vm1245, %v5201, -inf
    %5533 = vmax.xlane.f32.xlu0 %v5532
    %v5534 = vpop.xlane.xlu0 %5533
    %v5535 = vsel %vm1245, %v5202, -inf
    %5536 = vmax.xlane.f32.xlu0 %v5535
    %v5537 = vpop.xlane.xlu0 %5536
    %v5538 = vsel %vm1245, %v5203, -inf
    %5539 = vmax.xlane.f32.xlu0 %v5538
    %v5540 = vpop.xlane.xlu0 %5539
    %v5541 = vsel %vm1245, %v5204, -inf
    %5542 = vmax.xlane.f32.xlu0 %v5541
    %v5543 = vpop.xlane.xlu0 %5542
    %v5544 = vsel %vm1245, %v5205, -inf
    %5545 = vmax.xlane.f32.xlu0 %v5544
    %v5546 = vpop.xlane.xlu0 %5545
    %v5547 = vsel %vm1245, %v5206, -inf
    %5548 = vmax.xlane.f32.xlu0 %v5547
    %v5549 = vpop.xlane.xlu0 %5548
    %v5550 = vsel %vm1245, %v5207, -inf
    %5551 = vmax.xlane.f32.xlu0 %v5550
    %v5552 = vpop.xlane.xlu0 %5551
    %v5553 = vsel %vm1245, %v5208, -inf
    %5554 = vmax.xlane.f32.xlu0 %v5553
    %v5555 = vpop.xlane.xlu0 %5554
    %v5556 = vsel %vm1245, %v5209, -inf
    %5557 = vmax.xlane.f32.xlu0 %v5556
    %v5558 = vpop.xlane.xlu0 %5557
    %v5559 = vsel %vm1245, %v5210, -inf
    %5560 = vmax.xlane.f32.xlu0 %v5559
    %v5561 = vpop.xlane.xlu0 %5560
    %v5562 = vsel %vm1245, %v5211, -inf
    %5563 = vmax.xlane.f32.xlu0 %v5562
    %v5564 = vpop.xlane.xlu0 %5563
    %v5565 = vsel %vm1245, %v5212, -inf
    %5566 = vmax.xlane.f32.xlu0 %v5565
    %v5567 = vpop.xlane.xlu0 %5566
    %v5568 = vsel %vm1245, %v5213, -inf
    %5569 = vmax.xlane.f32.xlu0 %v5568
    %v5570 = vpop.xlane.xlu0 %5569
    %v5571 = vsel %vm1245, %v5214, -inf
    %5572 = vmax.xlane.f32.xlu0 %v5571
    %v5573 = vpop.xlane.xlu0 %5572
    %v5574 = vsel %vm1245, %v5215, -inf
    %5575 = vmax.xlane.f32.xlu0 %v5574
    %v5576 = vpop.xlane.xlu0 %5575
    %v5577 = vsel %vm1245, %v5216, -inf
    %5578 = vmax.xlane.f32.xlu0 %v5577
    %v5579 = vpop.xlane.xlu0 %5578
    %v5580 = vsel %vm1245, %v5217, -inf
    %5581 = vmax.xlane.f32.xlu0 %v5580
    %v5582 = vpop.xlane.xlu0 %5581
    %v5583 = vsel %vm1245, %v5218, -inf
    %5584 = vmax.xlane.f32.xlu0 %v5583
    %v5585 = vpop.xlane.xlu0 %5584
    %v5586 = vsel %vm1245, %v5219, -inf
    %5587 = vmax.xlane.f32.xlu0 %v5586
    %v5588 = vpop.xlane.xlu0 %5587
    %v5589 = vsel %vm1245, %v5220, -inf
    %5590 = vmax.xlane.f32.xlu0 %v5589
    %v5591 = vpop.xlane.xlu0 %5590
    %v5592 = vsel %vm1245, %v5221, -inf
    %5593 = vmax.xlane.f32.xlu0 %v5592
    %v5594 = vpop.xlane.xlu0 %5593
    %v5595 = vsel %vm1245, %v5222, -inf
    %5596 = vmax.xlane.f32.xlu0 %v5595
    %v5597 = vpop.xlane.xlu0 %5596
    %v5598 = vsel %vm1245, %v5223, -inf
    %5599 = vmax.xlane.f32.xlu0 %v5598
    %v5600 = vpop.xlane.xlu0 %5599
    %v5601 = vsel %vm1245, %v5224, -inf
    %5602 = vmax.xlane.f32.xlu0 %v5601
    %v5603 = vpop.xlane.xlu0 %5602
    %v5604 = vsel %vm1245, %v5225, -inf
    %5605 = vmax.xlane.f32.xlu0 %v5604
    %v5606 = vpop.xlane.xlu0 %5605
    %v5607 = vsel %vm1245, %v5226, -inf
    %5608 = vmax.xlane.f32.xlu0 %v5607
    %v5609 = vpop.xlane.xlu0 %5608
    %v5610 = vsel %vm1245, %v5227, -inf
    %5611 = vmax.xlane.f32.xlu0 %v5610
    %v5612 = vpop.xlane.xlu0 %5611
    %v5613 = vsel %vm1245, %v5228, -inf
    %5614 = vmax.xlane.f32.xlu0 %v5613
    %v5615 = vpop.xlane.xlu0 %5614
    %v5616 = vsel %vm1245, %v5229, -inf
    %5617 = vmax.xlane.f32.xlu0 %v5616
    %v5618 = vpop.xlane.xlu0 %5617
    %v5619 = vsel %vm1245, %v5230, -inf
    %5620 = vmax.xlane.f32.xlu0 %v5619
    %v5621 = vpop.xlane.xlu0 %5620
    %v5622 = vsel %vm1245, %v5231, -inf
    %5623 = vmax.xlane.f32.xlu0 %v5622
    %v5624 = vpop.xlane.xlu0 %5623
    %v5625 = vsel %vm1245, %v5232, -inf
    %5626 = vmax.xlane.f32.xlu0 %v5625
    %v5627 = vpop.xlane.xlu0 %5626
    %v5628 = vsel %vm1245, %v5233, -inf
    %5629 = vmax.xlane.f32.xlu0 %v5628
    %v5630 = vpop.xlane.xlu0 %5629
    %v5631 = vsel %vm1245, %v5234, -inf
    %5632 = vmax.xlane.f32.xlu0 %v5631
    %v5633 = vpop.xlane.xlu0 %5632
    %v5634 = vsel %vm1245, %v5235, -inf
    %5635 = vmax.xlane.f32.xlu0 %v5634
    %v5636 = vpop.xlane.xlu0 %5635
    %v5637 = vsel %vm1245, %v5236, -inf
    %5638 = vmax.xlane.f32.xlu0 %v5637
    %v5639 = vpop.xlane.xlu0 %5638
    %v5640 = vsel %vm1245, %v5237, -inf
    %5641 = vmax.xlane.f32.xlu0 %v5640
    %v5642 = vpop.xlane.xlu0 %5641
    %v5643 = vsel %vm1245, %v5238, -inf
    %5644 = vmax.xlane.f32.xlu0 %v5643
    %v5645 = vpop.xlane.xlu0 %5644
    %v5646 = vsel %vm1245, %v5239, -inf
    %5647 = vmax.xlane.f32.xlu0 %v5646
    %v5648 = vpop.xlane.xlu0 %5647
    %v5649 = vsel %vm1245, %v5240, -inf
    %5650 = vmax.xlane.f32.xlu0 %v5649
    %v5651 = vpop.xlane.xlu0 %5650
    %v5652 = vsel %vm1245, %v5241, -inf
    %5653 = vmax.xlane.f32.xlu0 %v5652
    %v5654 = vpop.xlane.xlu0 %5653
    %v5655 = vsel %vm1245, %v5242, -inf
    %5656 = vmax.xlane.f32.xlu0 %v5655
    %v5657 = vpop.xlane.xlu0 %5656
    %v5658 = vsel %vm1245, %v5243, -inf
    %5659 = vmax.xlane.f32.xlu0 %v5658
    %v5660 = vpop.xlane.xlu0 %5659
    %v5661 = vsel %vm1245, %v5244, -inf
    %5662 = vmax.xlane.f32.xlu0 %v5661
    %v5663 = vpop.xlane.xlu0 %5662
    %v5664 = vsel %vm1245, %v5245, -inf
    %5665 = vmax.xlane.f32.xlu0 %v5664
    %v5666 = vpop.xlane.xlu0 %5665
    %v5667 = vsel %vm1245, %v5246, -inf
    %5668 = vmax.xlane.f32.xlu0 %v5667
    %v5669 = vpop.xlane.xlu0 %5668
    %v5670 = vsel %vm1245, %v5247, -inf
    %5671 = vmax.xlane.f32.xlu0 %v5670
    %v5672 = vpop.xlane.xlu0 %5671
    %v5673 = vsel %vm1245, %v5248, -inf
    %5674 = vmax.xlane.f32.xlu0 %v5673
    %v5675 = vpop.xlane.xlu0 %5674
    %v5676 = vsel %vm1245, %v5249, -inf
    %5677 = vmax.xlane.f32.xlu0 %v5676
    %v5678 = vpop.xlane.xlu0 %5677
    %v5679 = vsel %vm1245, %v5250, -inf
    %5680 = vmax.xlane.f32.xlu0 %v5679
    %v5681 = vpop.xlane.xlu0 %5680
    %v5682 = vsel %vm1245, %v5251, -inf
    %5683 = vmax.xlane.f32.xlu0 %v5682
    %v5684 = vpop.xlane.xlu0 %5683
    %v5685 = vsel %vm1245, %v5252, -inf
    %5686 = vmax.xlane.f32.xlu0 %v5685
    %v5687 = vpop.xlane.xlu0 %5686
    %v5688 = vsel %vm1245, %v5253, -inf
    %5689 = vmax.xlane.f32.xlu0 %v5688
    %v5690 = vpop.xlane.xlu0 %5689
    %v5691 = vsel %vm1245, %v5254, -inf
    %5692 = vmax.xlane.f32.xlu0 %v5691
    %v5693 = vpop.xlane.xlu0 %5692
    %v5694 = vsel %vm1245, %v5255, -inf
    %5695 = vmax.xlane.f32.xlu0 %v5694
    %v5696 = vpop.xlane.xlu0 %5695
    %v5697 = vsel %vm1245, %v5256, -inf
    %5698 = vmax.xlane.f32.xlu0 %v5697
    %v5699 = vpop.xlane.xlu0 %5698
    %v5700 = vsel %vm1245, %v5257, -inf
    %5701 = vmax.xlane.f32.xlu0 %v5700
    %v5702 = vpop.xlane.xlu0 %5701
    %v5703 = vsel %vm1245, %v5258, -inf
    %5704 = vmax.xlane.f32.xlu0 %v5703
    %v5705 = vpop.xlane.xlu0 %5704
    %v5706 = vsel %vm1245, %v5259, -inf
    %5707 = vmax.xlane.f32.xlu0 %v5706
    %v5708 = vpop.xlane.xlu0 %5707
    %v5709 = vsel %vm1245, %v5260, -inf
    %5710 = vmax.xlane.f32.xlu0 %v5709
    %v5711 = vpop.xlane.xlu0 %5710
    %v5712 = vsel %vm1245, %v5261, -inf
    %5713 = vmax.xlane.f32.xlu0 %v5712
    %v5714 = vpop.xlane.xlu0 %5713
    %v5715 = vsel %vm1245, %v5262, -inf
    %5716 = vmax.xlane.f32.xlu0 %v5715
    %v5717 = vpop.xlane.xlu0 %5716
    %v5778 = vlaneseq
    %v5779 = vand.u32 %v5778, 127
    %v5780 = vperm.slane %v5462, %v5779
    %v5781 = vadd.s32 %v5779, 4294967288
    %v5782 = vperm.slane %v5463, %v5781
    %vm5783 = vcmask 130112
    %v5784 = vsel %vm5783, %v5782, %v5780
    %v5785 = vperm.slane %v5464, %v5779
    %v5786 = vperm.slane %v5465, %v5781
    %v5787 = vsel %vm5783, %v5786, %v5785
    %v5788 = vperm.slane %v5466, %v5779
    %v5789 = vperm.slane %v5467, %v5781
    %v5790 = vsel %vm5783, %v5789, %v5788
    %v5791 = vperm.slane %v5468, %v5779
    %v5792 = vperm.slane %v5469, %v5781
    %v5793 = vsel %vm5783, %v5792, %v5791
    %v5794 = vperm.slane %v5470, %v5779
    %v5795 = vperm.slane %v5471, %v5781
    %v5796 = vsel %vm5783, %v5795, %v5794
    %v5797 = vperm.slane %v5472, %v5779
    %v5798 = vperm.slane %v5473, %v5781
    %v5799 = vsel %vm5783, %v5798, %v5797
    %v5800 = vperm.slane %v5474, %v5779
    %v5801 = vperm.slane %v5475, %v5781
    %v5802 = vsel %vm5783, %v5801, %v5800
    %v5803 = vperm.slane %v5476, %v5779
    %v5804 = vperm.slane %v5477, %v5781
    %v5805 = vsel %vm5783, %v5804, %v5803
    %v5806 = vperm.slane %v5478, %v5779
    %v5807 = vperm.slane %v5479, %v5781
    %v5808 = vsel %vm5783, %v5807, %v5806
    %v5809 = vperm.slane %v5480, %v5779
    %v5810 = vperm.slane %v5481, %v5781
    %v5811 = vsel %vm5783, %v5810, %v5809
    %v5812 = vperm.slane %v5482, %v5779
    %v5813 = vperm.slane %v5483, %v5781
    %v5814 = vsel %vm5783, %v5813, %v5812
    %v5815 = vperm.slane %v5484, %v5779
    %v5816 = vperm.slane %v5485, %v5781
    %v5817 = vsel %vm5783, %v5816, %v5815
    %v5818 = vperm.slane %v5486, %v5779
    %v5819 = vperm.slane %v5487, %v5781
    %v5820 = vsel %vm5783, %v5819, %v5818
    %v5821 = vperm.slane %v5488, %v5779
    %v5822 = vperm.slane %v5489, %v5781
    %v5823 = vsel %vm5783, %v5822, %v5821
    %v5824 = vperm.slane %v5490, %v5779
    %v5825 = vperm.slane %v5491, %v5781
    %v5826 = vsel %vm5783, %v5825, %v5824
    %v5827 = vperm.slane %v5494, %v5779
    %v5828 = vperm.slane %v5495, %v5781
    %v5829 = vsel %vm5783, %v5828, %v5827
    %v5830 = vperm.slane %v5496, %v5779
    %v5831 = vperm.slane %v5497, %v5781
    %v5832 = vsel %vm5783, %v5831, %v5830
    %v5833 = vperm.slane %v5498, %v5779
    %v5834 = vperm.slane %v5499, %v5781
    %v5835 = vsel %vm5783, %v5834, %v5833
    %v5836 = vperm.slane %v5500, %v5779
    %v5837 = vperm.slane %v5501, %v5781
    %v5838 = vsel %vm5783, %v5837, %v5836
    %v5839 = vperm.slane %v5502, %v5779
    %v5840 = vperm.slane %v5503, %v5781
    %v5841 = vsel %vm5783, %v5840, %v5839
    %v5842 = vperm.slane %v5504, %v5779
    %v5843 = vperm.slane %v5505, %v5781
    %v5844 = vsel %vm5783, %v5843, %v5842
    %v5845 = vperm.slane %v5506, %v5779
    %v5846 = vperm.slane %v5507, %v5781
    %v5847 = vsel %vm5783, %v5846, %v5845
    %v5848 = vperm.slane %v5508, %v5779
    %v5849 = vperm.slane %v5509, %v5781
    %v5850 = vsel %vm5783, %v5849, %v5848
    %v5851 = vperm.slane %v5510, %v5779
    %v5852 = vperm.slane %v5511, %v5781
    %v5853 = vsel %vm5783, %v5852, %v5851
    %v5854 = vperm.slane %v5512, %v5779
    %v5855 = vperm.slane %v5513, %v5781
    %v5856 = vsel %vm5783, %v5855, %v5854
    %v5857 = vperm.slane %v5514, %v5779
    %v5858 = vperm.slane %v5515, %v5781
    %v5859 = vsel %vm5783, %v5858, %v5857
    %v5860 = vperm.slane %v5516, %v5779
    %v5861 = vperm.slane %v5517, %v5781
    %v5862 = vsel %vm5783, %v5861, %v5860
    %v5863 = vperm.slane %v5518, %v5779
    %v5864 = vperm.slane %v5519, %v5781
    %v5865 = vsel %vm5783, %v5864, %v5863
    %v5866 = vperm.slane %v5520, %v5779
    %v5867 = vperm.slane %v5521, %v5781
    %v5868 = vsel %vm5783, %v5867, %v5866
    %v5869 = vperm.slane %v5522, %v5779
    %v5870 = vperm.slane %v5523, %v5781
    %v5871 = vsel %vm5783, %v5870, %v5869
    %vm5872 = vcmask 1042434
    %v5873 = vsel %vm5872, %v5787, %v5784
    %v5874 = vsel %vm5108, %v5790, %v5873
    %vm5875 = vcmask 1044484
    %v5876 = vsel %vm5875, %v5793, %v5874
    %vm5877 = vcmask 1045509
    %v5878 = vsel %vm5877, %v5796, %v5876
    %vm5879 = vcmask 1046534
    %v5880 = vsel %vm5879, %v5799, %v5878
    %vm5881 = vcmask 1047559
    %v5882 = vsel %vm5881, %v5802, %v5880
    %v5883 = vsel %vm5103, %v5808, %v5805
    %v5884 = vsel %vm5872, %v5811, %v5883
    %v5885 = vsel %vm5108, %v5814, %v5884
    %v5886 = vsel %vm5875, %v5817, %v5885
    %v5887 = vsel %vm5877, %v5820, %v5886
    %v5888 = vsel %vm5879, %v5823, %v5887
    %v5889 = vsel %vm5881, %v5826, %v5888
    %v5890 = vsel %vm5872, %v5832, %v5829
    %v5891 = vsel %vm5108, %v5835, %v5890
    %v5892 = vsel %vm5875, %v5838, %v5891
    %v5893 = vsel %vm5877, %v5841, %v5892
    %v5894 = vsel %vm5879, %v5844, %v5893
    %v5895 = vsel %vm5881, %v5847, %v5894
    %v5896 = vsel %vm5103, %v5853, %v5850
    %v5897 = vsel %vm5872, %v5856, %v5896
    %v5898 = vsel %vm5108, %v5859, %v5897
    %v5899 = vsel %vm5875, %v5862, %v5898
    %v5900 = vsel %vm5877, %v5865, %v5899
    %v5901 = vsel %vm5879, %v5868, %v5900
    %v5902 = vsel %vm5881, %v5871, %v5901
    %v5907 = vsel %vm5153, 0.0, %v5882
    %v5908 = vsel %vm5153, 0.0, %v5895
    %v5969 = vperm.slane %v5528, %v5779
    %v5970 = vperm.slane %v5531, %v5781
    %v5971 = vsel %vm5783, %v5970, %v5969
    %v5972 = vperm.slane %v5534, %v5779
    %v5973 = vperm.slane %v5537, %v5781
    %v5974 = vsel %vm5783, %v5973, %v5972
    %v5975 = vperm.slane %v5540, %v5779
    %v5976 = vperm.slane %v5543, %v5781
    %v5977 = vsel %vm5783, %v5976, %v5975
    %v5978 = vperm.slane %v5546, %v5779
    %v5979 = vperm.slane %v5549, %v5781
    %v5980 = vsel %vm5783, %v5979, %v5978
    %v5981 = vperm.slane %v5552, %v5779
    %v5982 = vperm.slane %v5555, %v5781
    %v5983 = vsel %vm5783, %v5982, %v5981
    %v5984 = vperm.slane %v5558, %v5779
    %v5985 = vperm.slane %v5561, %v5781
    %v5986 = vsel %vm5783, %v5985, %v5984
    %v5987 = vperm.slane %v5564, %v5779
    %v5988 = vperm.slane %v5567, %v5781
    %v5989 = vsel %vm5783, %v5988, %v5987
    %v5990 = vperm.slane %v5570, %v5779
    %v5991 = vperm.slane %v5573, %v5781
    %v5992 = vsel %vm5783, %v5991, %v5990
    %v5993 = vperm.slane %v5576, %v5779
    %v5994 = vperm.slane %v5579, %v5781
    %v5995 = vsel %vm5783, %v5994, %v5993
    %v5996 = vperm.slane %v5582, %v5779
    %v5997 = vperm.slane %v5585, %v5781
    %v5998 = vsel %vm5783, %v5997, %v5996
    %v5999 = vperm.slane %v5588, %v5779
    %v6000 = vperm.slane %v5591, %v5781
    %v6001 = vsel %vm5783, %v6000, %v5999
    %v6002 = vperm.slane %v5594, %v5779
    %v6003 = vperm.slane %v5597, %v5781
    %v6004 = vsel %vm5783, %v6003, %v6002
    %v6005 = vperm.slane %v5600, %v5779
    %v6006 = vperm.slane %v5603, %v5781
    %v6007 = vsel %vm5783, %v6006, %v6005
    %v6008 = vperm.slane %v5606, %v5779
    %v6009 = vperm.slane %v5609, %v5781
    %v6010 = vsel %vm5783, %v6009, %v6008
    %v6011 = vperm.slane %v5612, %v5779
    %v6012 = vperm.slane %v5615, %v5781
    %v6013 = vsel %vm5783, %v6012, %v6011
    %v6014 = vperm.slane %v5624, %v5779
    %v6015 = vperm.slane %v5627, %v5781
    %v6016 = vsel %vm5783, %v6015, %v6014
    %v6017 = vperm.slane %v5630, %v5779
    %v6018 = vperm.slane %v5633, %v5781
    %v6019 = vsel %vm5783, %v6018, %v6017
    %v6020 = vperm.slane %v5636, %v5779
    %v6021 = vperm.slane %v5639, %v5781
    %v6022 = vsel %vm5783, %v6021, %v6020
    %v6023 = vperm.slane %v5642, %v5779
    %v6024 = vperm.slane %v5645, %v5781
    %v6025 = vsel %vm5783, %v6024, %v6023
    %v6026 = vperm.slane %v5648, %v5779
    %v6027 = vperm.slane %v5651, %v5781
    %v6028 = vsel %vm5783, %v6027, %v6026
    %v6029 = vperm.slane %v5654, %v5779
    %v6030 = vperm.slane %v5657, %v5781
    %v6031 = vsel %vm5783, %v6030, %v6029
    %v6032 = vperm.slane %v5660, %v5779
    %v6033 = vperm.slane %v5663, %v5781
    %v6034 = vsel %vm5783, %v6033, %v6032
    %v6035 = vperm.slane %v5666, %v5779
    %v6036 = vperm.slane %v5669, %v5781
    %v6037 = vsel %vm5783, %v6036, %v6035
    %v6038 = vperm.slane %v5672, %v5779
    %v6039 = vperm.slane %v5675, %v5781
    %v6040 = vsel %vm5783, %v6039, %v6038
    %v6041 = vperm.slane %v5678, %v5779
    %v6042 = vperm.slane %v5681, %v5781
    %v6043 = vsel %vm5783, %v6042, %v6041
    %v6044 = vperm.slane %v5684, %v5779
    %v6045 = vperm.slane %v5687, %v5781
    %v6046 = vsel %vm5783, %v6045, %v6044
    %v6047 = vperm.slane %v5690, %v5779
    %v6048 = vperm.slane %v5693, %v5781
    %v6049 = vsel %vm5783, %v6048, %v6047
    %v6050 = vperm.slane %v5696, %v5779
    %v6051 = vperm.slane %v5699, %v5781
    %v6052 = vsel %vm5783, %v6051, %v6050
    %v6053 = vperm.slane %v5702, %v5779
    %v6054 = vperm.slane %v5705, %v5781
    %v6055 = vsel %vm5783, %v6054, %v6053
    %v6056 = vperm.slane %v5708, %v5779
    %v6057 = vperm.slane %v5711, %v5781
    %v6058 = vsel %vm5783, %v6057, %v6056
    %v6059 = vsel %vm5872, %v5974, %v5971
    %v6060 = vsel %vm5108, %v5977, %v6059
    %v6061 = vsel %vm5875, %v5980, %v6060
    %v6062 = vsel %vm5877, %v5983, %v6061
    %v6063 = vsel %vm5879, %v5986, %v6062
    %v6064 = vsel %vm5881, %v5989, %v6063
    %v6065 = vsel %vm5103, %v5995, %v5992
    %v6066 = vsel %vm5872, %v5998, %v6065
    %v6067 = vsel %vm5108, %v6001, %v6066
    %v6068 = vsel %vm5875, %v6004, %v6067
    %v6069 = vsel %vm5877, %v6007, %v6068
    %v6070 = vsel %vm5879, %v6010, %v6069
    %v6071 = vsel %vm5881, %v6013, %v6070
    %v6072 = vsel %vm5872, %v6019, %v6016
    %v6073 = vsel %vm5108, %v6022, %v6072
    %v6074 = vsel %vm5875, %v6025, %v6073
    %v6075 = vsel %vm5877, %v6028, %v6074
    %v6076 = vsel %vm5879, %v6031, %v6075
    %v6077 = vsel %vm5881, %v6034, %v6076
    %v6078 = vsel %vm5103, %v6040, %v6037
    %v6079 = vsel %vm5872, %v6043, %v6078
    %v6080 = vsel %vm5108, %v6046, %v6079
    %v6081 = vsel %vm5875, %v6049, %v6080
    %v6082 = vsel %vm5877, %v6052, %v6081
    %v6083 = vsel %vm5879, %v6055, %v6082
    %v6084 = vsel %vm5881, %v6058, %v6083
    %v6089 = vsel %vm5153, 0.0, %v6064
    %v6090 = vsel %vm5153, 0.0, %v6077
    %6093 = vrot.lane.b32.xlu0 %v5907, 1
    %v6094 = vpop.permute.xlu0 %6093
    %6095 = vrot.lane.b32.xlu0 %v5889, 1
    %v6096 = vpop.permute.xlu0 %6095
    %6097 = vrot.lane.b32.xlu0 %v5908, 1
    %v6098 = vpop.permute.xlu0 %6097
    %6099 = vrot.lane.b32.xlu0 %v5902, 1
    %v6100 = vpop.permute.xlu0 %6099
    %vm6105 = vcmask 7168
    %v6106 = vsel %vm6105, 0.0, %v6094
    %v6107 = vsel %vm6105, 0.0, %v6096
    %v6108 = vsel %vm6105, 0.0, %v6098
    %v6109 = vsel %vm6105, 0.0, %v6100
    %s6110 = sld [smem:[#allocation7]]
    %v6111 = vstv %s6110
    %v6112 = vmul.f32 %v6106, %v6111
    %v6113 = vmul.f32 %v6107, %v6111
    %v6114 = vmul.f32 %v6108, %v6111
    %v6115 = vmul.f32 %v6109, %v6111
    %v6116 = vadd.f32 %v6112, 0.0
    %v6117 = vadd.f32 %v6113, 0.0
    %v6118 = vadd.f32 %v6114, 0.0
    %v6119 = vadd.f32 %v6115, 0.0
    %6122 = vrot.lane.b32.xlu0 %v6089, 1
    %v6123 = vpop.permute.xlu0 %6122
    %6124 = vrot.lane.b32.xlu0 %v6071, 1
    %v6125 = vpop.permute.xlu0 %6124
    %6126 = vrot.lane.b32.xlu0 %v6090, 1
    %v6127 = vpop.permute.xlu0 %6126
    %6128 = vrot.lane.b32.xlu0 %v6084, 1
    %v6129 = vpop.permute.xlu0 %6128
    %v6134 = vsel %vm6105, 0.0, %v6123
    %v6135 = vsel %vm6105, 0.0, %v6125
    %v6136 = vsel %vm6105, 0.0, %v6127
    %v6137 = vsel %vm6105, 0.0, %v6129
    %s6138 = sld [smem:[#allocation7 + $0x1]]
    %v6139 = vstv %s6138
    %v6140 = vmul.f32 %v6134, %v6139
    %v6141 = vmul.f32 %v6135, %v6139
    %v6142 = vmul.f32 %v6136, %v6139
    %v6143 = vmul.f32 %v6137, %v6139
    %v6144 = vadd.f32 %v6116, %v6140
    %v6145 = vadd.f32 %v6117, %v6141
    %v6146 = vadd.f32 %v6118, %v6142
    %v6147 = vadd.f32 %v6119, %v6143
    %s6148 = sld [smem:[#allocation7 + $0x2]]
    %v6149 = vstv %s6148
    %v6150 = vmul.f32 %v5907, %v6149
    %v6151 = vmul.f32 %v5889, %v6149
    %v6152 = vmul.f32 %v5908, %v6149
    %v6153 = vmul.f32 %v5902, %v6149
    %v6154 = vadd.f32 %v6144, %v6150
    %v6155 = vadd.f32 %v6145, %v6151
    %v6156 = vadd.f32 %v6146, %v6152
    %v6157 = vadd.f32 %v6147, %v6153
    %s6158 = sld [smem:[#allocation7 + $0x3]]
    %v6159 = vstv %s6158
    %v6160 = vmul.f32 %v6089, %v6159
    %v6161 = vmul.f32 %v6071, %v6159
    %v6162 = vmul.f32 %v6090, %v6159
    %v6163 = vmul.f32 %v6084, %v6159
    %v6164 = vadd.f32 %v6154, %v6160
    %v6165 = vadd.f32 %v6155, %v6161
    %v6166 = vadd.f32 %v6156, %v6162
    %v6167 = vadd.f32 %v6157, %v6163
    %6168 = vrot.lane.b32.xlu0 %v5907, 127
    %v6169 = vpop.permute.xlu0 %6168
    %6170 = vrot.lane.b32.xlu0 %v5889, 127
    %v6171 = vpop.permute.xlu0 %6170
    %6172 = vrot.lane.b32.xlu0 %v5908, 127
    %v6173 = vpop.permute.xlu0 %6172
    %6174 = vrot.lane.b32.xlu0 %v5902, 127
    %v6175 = vpop.permute.xlu0 %6174
    %vm6180 = vcmask 121856
    %v6181 = vsel %vm6180, %v6169, 0.0
    %v6182 = vsel %vm6180, %v6171, 0.0
    %v6183 = vsel %vm6180, %v6173, 0.0
    %v6184 = vsel %vm6180, %v6175, 0.0
    %s6185 = sld [smem:[#allocation7 + $0x4]]
    %v6186 = vstv %s6185
    %v6187 = vmul.f32 %v6181, %v6186
    %v6188 = vmul.f32 %v6182, %v6186
    %v6189 = vmul.f32 %v6183, %v6186
    %v6190 = vmul.f32 %v6184, %v6186
    %v6191 = vadd.f32 %v6164, %v6187
    %v6192 = vadd.f32 %v6165, %v6188
    %v6193 = vadd.f32 %v6166, %v6189
    %v6194 = vadd.f32 %v6167, %v6190
    %6195 = vrot.lane.b32.xlu0 %v6089, 127
    %v6196 = vpop.permute.xlu0 %6195
    %6197 = vrot.lane.b32.xlu0 %v6071, 127
    %v6198 = vpop.permute.xlu0 %6197
    %6199 = vrot.lane.b32.xlu0 %v6090, 127
    %v6200 = vpop.permute.xlu0 %6199
    %6201 = vrot.lane.b32.xlu0 %v6084, 127
    %v6202 = vpop.permute.xlu0 %6201
    %v6207 = vsel %vm6180, %v6196, 0.0
    %v6208 = vsel %vm6180, %v6198, 0.0
    %v6209 = vsel %vm6180, %v6200, 0.0
    %v6210 = vsel %vm6180, %v6202, 0.0
    %s6211 = sld [smem:[#allocation7 + $0x5]]
    %v6212 = vstv %s6211
    %v6213 = vmul.f32 %v6207, %v6212
    %v6214 = vmul.f32 %v6208, %v6212
    %v6215 = vmul.f32 %v6209, %v6212
    %v6216 = vmul.f32 %v6210, %v6212
    %v6217 = vadd.f32 %v6191, %v6213
    %v6218 = vadd.f32 %v6192, %v6214
    %v6219 = vadd.f32 %v6193, %v6215
    %v6220 = vadd.f32 %v6194, %v6216
    %v6225 = vadd.s32 %v5779, 4294967295
    %v6226 = vperm.slane %v5462, %v6225
    %v6227 = vadd.s32 %v5779, 4294967287
    %v6228 = vperm.slane %v5463, %v6227
    %vm6229 = vcmask 138312
    %v6230 = vsel %vm6229, %v6228, %v6226
    %v6231 = vperm.slane %v5464, %v6225
    %v6232 = vperm.slane %v5465, %v6227
    %v6233 = vsel %vm6229, %v6232, %v6231
    %v6234 = vperm.slane %v5466, %v6225
    %v6235 = vperm.slane %v5467, %v6227
    %v6236 = vsel %vm6229, %v6235, %v6234
    %v6237 = vperm.slane %v5468, %v6225
    %v6238 = vperm.slane %v5469, %v6227
    %v6239 = vsel %vm6229, %v6238, %v6237
    %v6240 = vperm.slane %v5470, %v6225
    %v6241 = vperm.slane %v5471, %v6227
    %v6242 = vsel %vm6229, %v6241, %v6240
    %v6243 = vperm.slane %v5472, %v6225
    %v6244 = vperm.slane %v5473, %v6227
    %v6245 = vsel %vm6229, %v6244, %v6243
    %v6246 = vperm.slane %v5474, %v6225
    %v6247 = vperm.slane %v5475, %v6227
    %v6248 = vsel %vm6229, %v6247, %v6246
    %v6249 = vperm.slane %v5476, %v6225
    %v6250 = vperm.slane %v5477, %v6227
    %v6251 = vsel %vm6229, %v6250, %v6249
    %v6252 = vperm.slane %v5478, %v6225
    %v6253 = vperm.slane %v5479, %v6227
    %v6254 = vsel %vm6229, %v6253, %v6252
    %v6255 = vperm.slane %v5480, %v6225
    %v6256 = vperm.slane %v5481, %v6227
    %v6257 = vsel %vm6229, %v6256, %v6255
    %v6258 = vperm.slane %v5482, %v6225
    %v6259 = vperm.slane %v5483, %v6227
    %v6260 = vsel %vm6229, %v6259, %v6258
    %v6261 = vperm.slane %v5484, %v6225
    %v6262 = vperm.slane %v5485, %v6227
    %v6263 = vsel %vm6229, %v6262, %v6261
    %v6264 = vperm.slane %v5486, %v6225
    %v6265 = vperm.slane %v5487, %v6227
    %v6266 = vsel %vm6229, %v6265, %v6264
    %v6267 = vperm.slane %v5488, %v6225
    %v6268 = vperm.slane %v5489, %v6227
    %v6269 = vsel %vm6229, %v6268, %v6267
    %v6270 = vperm.slane %v5490, %v6225
    %v6271 = vperm.slane %v5491, %v6227
    %v6272 = vsel %vm6229, %v6271, %v6270
    %v6273 = vperm.slane %v5492, %v6225
    %v6274 = vperm.slane %v5493, %v6227
    %v6275 = vsel %vm6229, %v6274, %v6273
    %v6276 = vperm.slane %v5494, %v6225
    %v6277 = vperm.slane %v5495, %v6227
    %v6278 = vsel %vm6229, %v6277, %v6276
    %v6279 = vperm.slane %v5496, %v6225
    %v6280 = vperm.slane %v5497, %v6227
    %v6281 = vsel %vm6229, %v6280, %v6279
    %v6282 = vperm.slane %v5498, %v6225
    %v6283 = vperm.slane %v5499, %v6227
    %v6284 = vsel %vm6229, %v6283, %v6282
    %v6285 = vperm.slane %v5500, %v6225
    %v6286 = vperm.slane %v5501, %v6227
    %v6287 = vsel %vm6229, %v6286, %v6285
    %v6288 = vperm.slane %v5502, %v6225
    %v6289 = vperm.slane %v5503, %v6227
    %v6290 = vsel %vm6229, %v6289, %v6288
    %v6291 = vperm.slane %v5504, %v6225
    %v6292 = vperm.slane %v5505, %v6227
    %v6293 = vsel %vm6229, %v6292, %v6291
    %v6294 = vperm.slane %v5506, %v6225
    %v6295 = vperm.slane %v5507, %v6227
    %v6296 = vsel %vm6229, %v6295, %v6294
    %v6297 = vperm.slane %v5508, %v6225
    %v6298 = vperm.slane %v5509, %v6227
    %v6299 = vsel %vm6229, %v6298, %v6297
    %v6300 = vperm.slane %v5510, %v6225
    %v6301 = vperm.slane %v5511, %v6227
    %v6302 = vsel %vm6229, %v6301, %v6300
    %v6303 = vperm.slane %v5512, %v6225
    %v6304 = vperm.slane %v5513, %v6227
    %v6305 = vsel %vm6229, %v6304, %v6303
    %v6306 = vperm.slane %v5514, %v6225
    %v6307 = vperm.slane %v5515, %v6227
    %v6308 = vsel %vm6229, %v6307, %v6306
    %v6309 = vperm.slane %v5516, %v6225
    %v6310 = vperm.slane %v5517, %v6227
    %v6311 = vsel %vm6229, %v6310, %v6309
    %v6312 = vperm.slane %v5518, %v6225
    %v6313 = vperm.slane %v5519, %v6227
    %v6314 = vsel %vm6229, %v6313, %v6312
    %v6315 = vperm.slane %v5520, %v6225
    %v6316 = vperm.slane %v5521, %v6227
    %v6317 = vsel %vm6229, %v6316, %v6315
    %v6318 = vperm.slane %v5522, %v6225
    %v6319 = vperm.slane %v5523, %v6227
    %v6320 = vsel %vm6229, %v6319, %v6318
    %v6321 = vperm.slane %v5524, %v6225
    %v6322 = vperm.slane %v5525, %v6227
    %v6323 = vsel %vm6229, %v6322, %v6321
    %v6324 = vsel %vm5103, %v6233, %v6230
    %v6325 = vsel %vm5872, %v6236, %v6324
    %v6326 = vsel %vm5108, %v6239, %v6325
    %v6327 = vsel %vm5875, %v6242, %v6326
    %v6328 = vsel %vm5877, %v6245, %v6327
    %v6329 = vsel %vm5879, %v6248, %v6328
    %v6330 = vsel %vm5881, %v6251, %v6329
    %v6331 = vsel %vm5103, %v6257, %v6254
    %v6332 = vsel %vm5872, %v6260, %v6331
    %v6333 = vsel %vm5108, %v6263, %v6332
    %v6334 = vsel %vm5875, %v6266, %v6333
    %v6335 = vsel %vm5877, %v6269, %v6334
    %v6336 = vsel %vm5879, %v6272, %v6335
    %v6337 = vsel %vm5881, %v6275, %v6336
    %v6338 = vsel %vm5103, %v6281, %v6278
    %v6339 = vsel %vm5872, %v6284, %v6338
    %v6340 = vsel %vm5108, %v6287, %v6339
    %v6341 = vsel %vm5875, %v6290, %v6340
    %v6342 = vsel %vm5877, %v6293, %v6341
    %v6343 = vsel %vm5879, %v6296, %v6342
    %v6344 = vsel %vm5881, %v6299, %v6343
    %v6345 = vsel %vm5103, %v6305, %v6302
    %v6346 = vsel %vm5872, %v6308, %v6345
    %v6347 = vsel %vm5108, %v6311, %v6346
    %v6348 = vsel %vm5875, %v6314, %v6347
    %v6349 = vsel %vm5877, %v6317, %v6348
    %v6350 = vsel %vm5879, %v6320, %v6349
    %v6351 = vsel %vm5881, %v6323, %v6350
    %v6356 = vsel %vm6105, 0.0, %v6330
    %v6357 = vsel %vm6105, 0.0, %v6337
    %v6358 = vsel %vm6105, 0.0, %v6344
    %v6359 = vsel %vm6105, 0.0, %v6351
    %s6360 = sld [smem:[#allocation7 + $0x6]]
    %v6361 = vstv %s6360
    %v6362 = vmul.f32 %v6356, %v6361
    %v6363 = vmul.f32 %v6357, %v6361
    %v6364 = vmul.f32 %v6358, %v6361
    %v6365 = vmul.f32 %v6359, %v6361
    %v6366 = vadd.f32 %v6217, %v6362
    %v6367 = vadd.f32 %v6218, %v6363
    %v6368 = vadd.f32 %v6219, %v6364
    %v6369 = vadd.f32 %v6220, %v6365
    %v6374 = vperm.slane %v5528, %v6225
    %v6375 = vperm.slane %v5531, %v6227
    %v6376 = vsel %vm6229, %v6375, %v6374
    %v6377 = vperm.slane %v5534, %v6225
    %v6378 = vperm.slane %v5537, %v6227
    %v6379 = vsel %vm6229, %v6378, %v6377
    %v6380 = vperm.slane %v5540, %v6225
    %v6381 = vperm.slane %v5543, %v6227
    %v6382 = vsel %vm6229, %v6381, %v6380
    %v6383 = vperm.slane %v5546, %v6225
    %v6384 = vperm.slane %v5549, %v6227
    %v6385 = vsel %vm6229, %v6384, %v6383
    %v6386 = vperm.slane %v5552, %v6225
    %v6387 = vperm.slane %v5555, %v6227
    %v6388 = vsel %vm6229, %v6387, %v6386
    %v6389 = vperm.slane %v5558, %v6225
    %v6390 = vperm.slane %v5561, %v6227
    %v6391 = vsel %vm6229, %v6390, %v6389
    %v6392 = vperm.slane %v5564, %v6225
    %v6393 = vperm.slane %v5567, %v6227
    %v6394 = vsel %vm6229, %v6393, %v6392
    %v6395 = vperm.slane %v5570, %v6225
    %v6396 = vperm.slane %v5573, %v6227
    %v6397 = vsel %vm6229, %v6396, %v6395
    %v6398 = vperm.slane %v5576, %v6225
    %v6399 = vperm.slane %v5579, %v6227
    %v6400 = vsel %vm6229, %v6399, %v6398
    %v6401 = vperm.slane %v5582, %v6225
    %v6402 = vperm.slane %v5585, %v6227
    %v6403 = vsel %vm6229, %v6402, %v6401
    %v6404 = vperm.slane %v5588, %v6225
    %v6405 = vperm.slane %v5591, %v6227
    %v6406 = vsel %vm6229, %v6405, %v6404
    %v6407 = vperm.slane %v5594, %v6225
    %v6408 = vperm.slane %v5597, %v6227
    %v6409 = vsel %vm6229, %v6408, %v6407
    %v6410 = vperm.slane %v5600, %v6225
    %v6411 = vperm.slane %v5603, %v6227
    %v6412 = vsel %vm6229, %v6411, %v6410
    %v6413 = vperm.slane %v5606, %v6225
    %v6414 = vperm.slane %v5609, %v6227
    %v6415 = vsel %vm6229, %v6414, %v6413
    %v6416 = vperm.slane %v5612, %v6225
    %v6417 = vperm.slane %v5615, %v6227
    %v6418 = vsel %vm6229, %v6417, %v6416
    %v6419 = vperm.slane %v5618, %v6225
    %v6420 = vperm.slane %v5621, %v6227
    %v6421 = vsel %vm6229, %v6420, %v6419
    %v6422 = vperm.slane %v5624, %v6225
    %v6423 = vperm.slane %v5627, %v6227
    %v6424 = vsel %vm6229, %v6423, %v6422
    %v6425 = vperm.slane %v5630, %v6225
    %v6426 = vperm.slane %v5633, %v6227
    %v6427 = vsel %vm6229, %v6426, %v6425
    %v6428 = vperm.slane %v5636, %v6225
    %v6429 = vperm.slane %v5639, %v6227
    %v6430 = vsel %vm6229, %v6429, %v6428
    %v6431 = vperm.slane %v5642, %v6225
    %v6432 = vperm.slane %v5645, %v6227
    %v6433 = vsel %vm6229, %v6432, %v6431
    %v6434 = vperm.slane %v5648, %v6225
    %v6435 = vperm.slane %v5651, %v6227
    %v6436 = vsel %vm6229, %v6435, %v6434
    %v6437 = vperm.slane %v5654, %v6225
    %v6438 = vperm.slane %v5657, %v6227
    %v6439 = vsel %vm6229, %v6438, %v6437
    %v6440 = vperm.slane %v5660, %v6225
    %v6441 = vperm.slane %v5663, %v6227
    %v6442 = vsel %vm6229, %v6441, %v6440
    %v6443 = vperm.slane %v5666, %v6225
    %v6444 = vperm.slane %v5669, %v6227
    %v6445 = vsel %vm6229, %v6444, %v6443
    %v6446 = vperm.slane %v5672, %v6225
    %v6447 = vperm.slane %v5675, %v6227
    %v6448 = vsel %vm6229, %v6447, %v6446
    %v6449 = vperm.slane %v5678, %v6225
    %v6450 = vperm.slane %v5681, %v6227
    %v6451 = vsel %vm6229, %v6450, %v6449
    %v6452 = vperm.slane %v5684, %v6225
    %v6453 = vperm.slane %v5687, %v6227
    %v6454 = vsel %vm6229, %v6453, %v6452
    %v6455 = vperm.slane %v5690, %v6225
    %v6456 = vperm.slane %v5693, %v6227
    %v6457 = vsel %vm6229, %v6456, %v6455
    %v6458 = vperm.slane %v5696, %v6225
    %v6459 = vperm.slane %v5699, %v6227
    %v6460 = vsel %vm6229, %v6459, %v6458
    %v6461 = vperm.slane %v5702, %v6225
    %v6462 = vperm.slane %v5705, %v6227
    %v6463 = vsel %vm6229, %v6462, %v6461
    %v6464 = vperm.slane %v5708, %v6225
    %v6465 = vperm.slane %v5711, %v6227
    %v6466 = vsel %vm6229, %v6465, %v6464
    %v6467 = vperm.slane %v5714, %v6225
    %v6468 = vperm.slane %v5717, %v6227
    %v6469 = vsel %vm6229, %v6468, %v6467
    %v6470 = vsel %vm5103, %v6379, %v6376
    %v6471 = vsel %vm5872, %v6382, %v6470
    %v6472 = vsel %vm5108, %v6385, %v6471
    %v6473 = vsel %vm5875, %v6388, %v6472
    %v6474 = vsel %vm5877, %v6391, %v6473
    %v6475 = vsel %vm5879, %v6394, %v6474
    %v6476 = vsel %vm5881, %v6397, %v6475
    %v6477 = vsel %vm5103, %v6403, %v6400
    %v6478 = vsel %vm5872, %v6406, %v6477
    %v6479 = vsel %vm5108, %v6409, %v6478
    %v6480 = vsel %vm5875, %v6412, %v6479
    %v6481 = vsel %vm5877, %v6415, %v6480
    %v6482 = vsel %vm5879, %v6418, %v6481
    %v6483 = vsel %vm5881, %v6421, %v6482
    %v6484 = vsel %vm5103, %v6427, %v6424
    %v6485 = vsel %vm5872, %v6430, %v6484
    %v6486 = vsel %vm5108, %v6433, %v6485
    %v6487 = vsel %vm5875, %v6436, %v6486
    %v6488 = vsel %vm5877, %v6439, %v6487
    %v6489 = vsel %vm5879, %v6442, %v6488
    %v6490 = vsel %vm5881, %v6445, %v6489
    %v6491 = vsel %vm5103, %v6451, %v6448
    %v6492 = vsel %vm5872, %v6454, %v6491
    %v6493 = vsel %vm5108, %v6457, %v6492
    %v6494 = vsel %vm5875, %v6460, %v6493
    %v6495 = vsel %vm5877, %v6463, %v6494
    %v6496 = vsel %vm5879, %v6466, %v6495
    %v6497 = vsel %vm5881, %v6469, %v6496
    %v6502 = vsel %vm6105, 0.0, %v6476
    %v6503 = vsel %vm6105, 0.0, %v6483
    %v6504 = vsel %vm6105, 0.0, %v6490
    %v6505 = vsel %vm6105, 0.0, %v6497
    %s6506 = sld [smem:[#allocation7 + $0x7]]
    %v6507 = vstv %s6506
    %v6508 = vmul.f32 %v6502, %v6507
    %v6509 = vmul.f32 %v6503, %v6507
    %v6510 = vmul.f32 %v6504, %v6507
    %v6511 = vmul.f32 %v6505, %v6507
    %v6512 = vadd.f32 %v6366, %v6508
    %v6513 = vadd.f32 %v6367, %v6509
    %v6514 = vadd.f32 %v6368, %v6510
    %v6515 = vadd.f32 %v6369, %v6511
    %s6516 = sld [smem:[#allocation7 + $0x8]]
    %v6517 = vstv %s6516
    %v6518 = vmul.f32 %v5462, %v6517
    %v6519 = vmul.f32 %v5463, %v6517
    %v6520 = vmul.f32 %v5464, %v6517
    %v6521 = vmul.f32 %v5465, %v6517
    %v6522 = vmul.f32 %v5466, %v6517
    %v6523 = vmul.f32 %v5467, %v6517
    %v6524 = vmul.f32 %v5468, %v6517
    %v6525 = vmul.f32 %v5469, %v6517
    %v6526 = vmul.f32 %v5470, %v6517
    %v6527 = vmul.f32 %v5471, %v6517
    %v6528 = vmul.f32 %v5472, %v6517
    %v6529 = vmul.f32 %v5473, %v6517
    %v6530 = vmul.f32 %v5474, %v6517
    %v6531 = vmul.f32 %v5475, %v6517
    %v6532 = vmul.f32 %v5476, %v6517
    %v6533 = vmul.f32 %v5477, %v6517
    %v6534 = vmul.f32 %v5478, %v6517
    %v6535 = vmul.f32 %v5479, %v6517
    %v6536 = vmul.f32 %v5480, %v6517
    %v6537 = vmul.f32 %v5481, %v6517
    %v6538 = vmul.f32 %v5482, %v6517
    %v6539 = vmul.f32 %v5483, %v6517
    %v6540 = vmul.f32 %v5484, %v6517
    %v6541 = vmul.f32 %v5485, %v6517
    %v6542 = vmul.f32 %v5486, %v6517
    %v6543 = vmul.f32 %v5487, %v6517
    %v6544 = vmul.f32 %v5488, %v6517
    %v6545 = vmul.f32 %v5489, %v6517
    %v6546 = vmul.f32 %v5490, %v6517
    %v6547 = vmul.f32 %v5491, %v6517
    %v6548 = vmul.f32 %v5492, %v6517
    %v6549 = vmul.f32 %v5493, %v6517
    %v6550 = vmul.f32 %v5494, %v6517
    %v6551 = vmul.f32 %v5495, %v6517
    %v6552 = vmul.f32 %v5496, %v6517
    %v6553 = vmul.f32 %v5497, %v6517
    %v6554 = vmul.f32 %v5498, %v6517
    %v6555 = vmul.f32 %v5499, %v6517
    %v6556 = vmul.f32 %v5500, %v6517
    %v6557 = vmul.f32 %v5501, %v6517
    %v6558 = vmul.f32 %v5502, %v6517
    %v6559 = vmul.f32 %v5503, %v6517
    %v6560 = vmul.f32 %v5504, %v6517
    %v6561 = vmul.f32 %v5505, %v6517
    %v6562 = vmul.f32 %v5506, %v6517
    %v6563 = vmul.f32 %v5507, %v6517
    %v6564 = vmul.f32 %v5508, %v6517
    %v6565 = vmul.f32 %v5509, %v6517
    %v6566 = vmul.f32 %v5510, %v6517
    %v6567 = vmul.f32 %v5511, %v6517
    %v6568 = vmul.f32 %v5512, %v6517
    %v6569 = vmul.f32 %v5513, %v6517
    %v6570 = vmul.f32 %v5514, %v6517
    %v6571 = vmul.f32 %v5515, %v6517
    %v6572 = vmul.f32 %v5516, %v6517
    %v6573 = vmul.f32 %v5517, %v6517
    %v6574 = vmul.f32 %v5518, %v6517
    %v6575 = vmul.f32 %v5519, %v6517
    %v6576 = vmul.f32 %v5520, %v6517
    %v6577 = vmul.f32 %v5521, %v6517
    %v6578 = vmul.f32 %v5522, %v6517
    %v6579 = vmul.f32 %v5523, %v6517
    %v6580 = vmul.f32 %v5524, %v6517
    %v6581 = vmul.f32 %v5525, %v6517
    %v6646 = vperm.slane %v6518, %v5779
    %v6647 = vperm.slane %v6519, %v5781
    %v6648 = vsel %vm5783, %v6647, %v6646
    %v6649 = vperm.slane %v6520, %v5779
    %v6650 = vperm.slane %v6521, %v5781
    %v6651 = vsel %vm5783, %v6650, %v6649
    %v6652 = vperm.slane %v6522, %v5779
    %v6653 = vperm.slane %v6523, %v5781
    %v6654 = vsel %vm5783, %v6653, %v6652
    %v6655 = vperm.slane %v6524, %v5779
    %v6656 = vperm.slane %v6525, %v5781
    %v6657 = vsel %vm5783, %v6656, %v6655
    %v6658 = vperm.slane %v6526, %v5779
    %v6659 = vperm.slane %v6527, %v5781
    %v6660 = vsel %vm5783, %v6659, %v6658
    %v6661 = vperm.slane %v6528, %v5779
    %v6662 = vperm.slane %v6529, %v5781
    %v6663 = vsel %vm5783, %v6662, %v6661
    %v6664 = vperm.slane %v6530, %v5779
    %v6665 = vperm.slane %v6531, %v5781
    %v6666 = vsel %vm5783, %v6665, %v6664
    %v6667 = vperm.slane %v6532, %v5779
    %v6668 = vperm.slane %v6533, %v5781
    %v6669 = vsel %vm5783, %v6668, %v6667
    %v6670 = vperm.slane %v6534, %v5779
    %v6671 = vperm.slane %v6535, %v5781
    %v6672 = vsel %vm5783, %v6671, %v6670
    %v6673 = vperm.slane %v6536, %v5779
    %v6674 = vperm.slane %v6537, %v5781
    %v6675 = vsel %vm5783, %v6674, %v6673
    %v6676 = vperm.slane %v6538, %v5779
    %v6677 = vperm.slane %v6539, %v5781
    %v6678 = vsel %vm5783, %v6677, %v6676
    %v6679 = vperm.slane %v6540, %v5779
    %v6680 = vperm.slane %v6541, %v5781
    %v6681 = vsel %vm5783, %v6680, %v6679
    %v6682 = vperm.slane %v6542, %v5779
    %v6683 = vperm.slane %v6543, %v5781
    %v6684 = vsel %vm5783, %v6683, %v6682
    %v6685 = vperm.slane %v6544, %v5779
    %v6686 = vperm.slane %v6545, %v5781
    %v6687 = vsel %vm5783, %v6686, %v6685
    %v6688 = vperm.slane %v6546, %v5779
    %v6689 = vperm.slane %v6547, %v5781
    %v6690 = vsel %vm5783, %v6689, %v6688
    %v6691 = vperm.slane %v6548, %v5779
    %v6692 = vperm.slane %v6549, %v5781
    %v6693 = vsel %vm5783, %v6692, %v6691
    %v6694 = vperm.slane %v6550, %v5779
    %v6695 = vperm.slane %v6551, %v5781
    %v6696 = vsel %vm5783, %v6695, %v6694
    %v6697 = vperm.slane %v6552, %v5779
    %v6698 = vperm.slane %v6553, %v5781
    %v6699 = vsel %vm5783, %v6698, %v6697
    %v6700 = vperm.slane %v6554, %v5779
    %v6701 = vperm.slane %v6555, %v5781
    %v6702 = vsel %vm5783, %v6701, %v6700
    %v6703 = vperm.slane %v6556, %v5779
    %v6704 = vperm.slane %v6557, %v5781
    %v6705 = vsel %vm5783, %v6704, %v6703
    %v6706 = vperm.slane %v6558, %v5779
    %v6707 = vperm.slane %v6559, %v5781
    %v6708 = vsel %vm5783, %v6707, %v6706
    %v6709 = vperm.slane %v6560, %v5779
    %v6710 = vperm.slane %v6561, %v5781
    %v6711 = vsel %vm5783, %v6710, %v6709
    %v6712 = vperm.slane %v6562, %v5779
    %v6713 = vperm.slane %v6563, %v5781
    %v6714 = vsel %vm5783, %v6713, %v6712
    %v6715 = vperm.slane %v6564, %v5779
    %v6716 = vperm.slane %v6565, %v5781
    %v6717 = vsel %vm5783, %v6716, %v6715
    %v6718 = vperm.slane %v6566, %v5779
    %v6719 = vperm.slane %v6567, %v5781
    %v6720 = vsel %vm5783, %v6719, %v6718
    %v6721 = vperm.slane %v6568, %v5779
    %v6722 = vperm.slane %v6569, %v5781
    %v6723 = vsel %vm5783, %v6722, %v6721
    %v6724 = vperm.slane %v6570, %v5779
    %v6725 = vperm.slane %v6571, %v5781
    %v6726 = vsel %vm5783, %v6725, %v6724
    %v6727 = vperm.slane %v6572, %v5779
    %v6728 = vperm.slane %v6573, %v5781
    %v6729 = vsel %vm5783, %v6728, %v6727
    %v6730 = vperm.slane %v6574, %v5779
    %v6731 = vperm.slane %v6575, %v5781
    %v6732 = vsel %vm5783, %v6731, %v6730
    %v6733 = vperm.slane %v6576, %v5779
    %v6734 = vperm.slane %v6577, %v5781
    %v6735 = vsel %vm5783, %v6734, %v6733
    %v6736 = vperm.slane %v6578, %v5779
    %v6737 = vperm.slane %v6579, %v5781
    %v6738 = vsel %vm5783, %v6737, %v6736
    %v6739 = vperm.slane %v6580, %v5779
    %v6740 = vperm.slane %v6581, %v5781
    %v6741 = vsel %vm5783, %v6740, %v6739
    %v6742 = vsel %vm5103, %v6651, %v6648
    %v6743 = vsel %vm5872, %v6654, %v6742
    %v6744 = vsel %vm5108, %v6657, %v6743
    %v6745 = vsel %vm5875, %v6660, %v6744
    %v6746 = vsel %vm5877, %v6663, %v6745
    %v6747 = vsel %vm5879, %v6666, %v6746
    %v6748 = vsel %vm5881, %v6669, %v6747
    %v6749 = vsel %vm5103, %v6675, %v6672
    %v6750 = vsel %vm5872, %v6678, %v6749
    %v6751 = vsel %vm5108, %v6681, %v6750
    %v6752 = vsel %vm5875, %v6684, %v6751
    %v6753 = vsel %vm5877, %v6687, %v6752
    %v6754 = vsel %vm5879, %v6690, %v6753
    %v6755 = vsel %vm5881, %v6693, %v6754
    %v6756 = vsel %vm5103, %v6699, %v6696
    %v6757 = vsel %vm5872, %v6702, %v6756
    %v6758 = vsel %vm5108, %v6705, %v6757
    %v6759 = vsel %vm5875, %v6708, %v6758
    %v6760 = vsel %vm5877, %v6711, %v6759
    %v6761 = vsel %vm5879, %v6714, %v6760
    %v6762 = vsel %vm5881, %v6717, %v6761
    %v6763 = vsel %vm5103, %v6723, %v6720
    %v6764 = vsel %vm5872, %v6726, %v6763
    %v6765 = vsel %vm5108, %v6729, %v6764
    %v6766 = vsel %vm5875, %v6732, %v6765
    %v6767 = vsel %vm5877, %v6735, %v6766
    %v6768 = vsel %vm5879, %v6738, %v6767
    %v6769 = vsel %vm5881, %v6741, %v6768
    %v6774 = vadd.f32 %v6512, %v6748
    %v6775 = vadd.f32 %v6513, %v6755
    %v6776 = vadd.f32 %v6514, %v6762
    %v6777 = vadd.f32 %v6515, %v6769
    %s6778 = sld [smem:[#allocation7 + $0x9]]
    %v6779 = vstv %s6778
    %v6780 = vmul.f32 %v5528, %v6779
    %v6781 = vmul.f32 %v5531, %v6779
    %v6782 = vmul.f32 %v5534, %v6779
    %v6783 = vmul.f32 %v5537, %v6779
    %v6784 = vmul.f32 %v5540, %v6779
    %v6785 = vmul.f32 %v5543, %v6779
    %v6786 = vmul.f32 %v5546, %v6779
    %v6787 = vmul.f32 %v5549, %v6779
    %v6788 = vmul.f32 %v5552, %v6779
    %v6789 = vmul.f32 %v5555, %v6779
    %v6790 = vmul.f32 %v5558, %v6779
    %v6791 = vmul.f32 %v5561, %v6779
    %v6792 = vmul.f32 %v5564, %v6779
    %v6793 = vmul.f32 %v5567, %v6779
    %v6794 = vmul.f32 %v5570, %v6779
    %v6795 = vmul.f32 %v5573, %v6779
    %v6796 = vmul.f32 %v5576, %v6779
    %v6797 = vmul.f32 %v5579, %v6779
    %v6798 = vmul.f32 %v5582, %v6779
    %v6799 = vmul.f32 %v5585, %v6779
    %v6800 = vmul.f32 %v5588, %v6779
    %v6801 = vmul.f32 %v5591, %v6779
    %v6802 = vmul.f32 %v5594, %v6779
    %v6803 = vmul.f32 %v5597, %v6779
    %v6804 = vmul.f32 %v5600, %v6779
    %v6805 = vmul.f32 %v5603, %v6779
    %v6806 = vmul.f32 %v5606, %v6779
    %v6807 = vmul.f32 %v5609, %v6779
    %v6808 = vmul.f32 %v5612, %v6779
    %v6809 = vmul.f32 %v5615, %v6779
    %v6810 = vmul.f32 %v5618, %v6779
    %v6811 = vmul.f32 %v5621, %v6779
    %v6812 = vmul.f32 %v5624, %v6779
    %v6813 = vmul.f32 %v5627, %v6779
    %v6814 = vmul.f32 %v5630, %v6779
    %v6815 = vmul.f32 %v5633, %v6779
    %v6816 = vmul.f32 %v5636, %v6779
    %v6817 = vmul.f32 %v5639, %v6779
    %v6818 = vmul.f32 %v5642, %v6779
    %v6819 = vmul.f32 %v5645, %v6779
    %v6820 = vmul.f32 %v5648, %v6779
    %v6821 = vmul.f32 %v5651, %v6779
    %v6822 = vmul.f32 %v5654, %v6779
    %v6823 = vmul.f32 %v5657, %v6779
    %v6824 = vmul.f32 %v5660, %v6779
    %v6825 = vmul.f32 %v5663, %v6779
    %v6826 = vmul.f32 %v5666, %v6779
    %v6827 = vmul.f32 %v5669, %v6779
    %v6828 = vmul.f32 %v5672, %v6779
    %v6829 = vmul.f32 %v5675, %v6779
    %v6830 = vmul.f32 %v5678, %v6779
    %v6831 = vmul.f32 %v5681, %v6779
    %v6832 = vmul.f32 %v5684, %v6779
    %v6833 = vmul.f32 %v5687, %v6779
    %v6834 = vmul.f32 %v5690, %v6779
    %v6835 = vmul.f32 %v5693, %v6779
    %v6836 = vmul.f32 %v5696, %v6779
    %v6837 = vmul.f32 %v5699, %v6779
    %v6838 = vmul.f32 %v5702, %v6779
    %v6839 = vmul.f32 %v5705, %v6779
    %v6840 = vmul.f32 %v5708, %v6779
    %v6841 = vmul.f32 %v5711, %v6779
    %v6842 = vmul.f32 %v5714, %v6779
    %v6843 = vmul.f32 %v5717, %v6779
    %v6908 = vperm.slane %v6780, %v5779
    %v6909 = vperm.slane %v6781, %v5781
    %v6910 = vsel %vm5783, %v6909, %v6908
    %v6911 = vperm.slane %v6782, %v5779
    %v6912 = vperm.slane %v6783, %v5781
    %v6913 = vsel %vm5783, %v6912, %v6911
    %v6914 = vperm.slane %v6784, %v5779
    %v6915 = vperm.slane %v6785, %v5781
    %v6916 = vsel %vm5783, %v6915, %v6914
    %v6917 = vperm.slane %v6786, %v5779
    %v6918 = vperm.slane %v6787, %v5781
    %v6919 = vsel %vm5783, %v6918, %v6917
    %v6920 = vperm.slane %v6788, %v5779
    %v6921 = vperm.slane %v6789, %v5781
    %v6922 = vsel %vm5783, %v6921, %v6920
    %v6923 = vperm.slane %v6790, %v5779
    %v6924 = vperm.slane %v6791, %v5781
    %v6925 = vsel %vm5783, %v6924, %v6923
    %v6926 = vperm.slane %v6792, %v5779
    %v6927 = vperm.slane %v6793, %v5781
    %v6928 = vsel %vm5783, %v6927, %v6926
    %v6929 = vperm.slane %v6794, %v5779
    %v6930 = vperm.slane %v6795, %v5781
    %v6931 = vsel %vm5783, %v6930, %v6929
    %v6932 = vperm.slane %v6796, %v5779
    %v6933 = vperm.slane %v6797, %v5781
    %v6934 = vsel %vm5783, %v6933, %v6932
    %v6935 = vperm.slane %v6798, %v5779
    %v6936 = vperm.slane %v6799, %v5781
    %v6937 = vsel %vm5783, %v6936, %v6935
    %v6938 = vperm.slane %v6800, %v5779
    %v6939 = vperm.slane %v6801, %v5781
    %v6940 = vsel %vm5783, %v6939, %v6938
    %v6941 = vperm.slane %v6802, %v5779
    %v6942 = vperm.slane %v6803, %v5781
    %v6943 = vsel %vm5783, %v6942, %v6941
    %v6944 = vperm.slane %v6804, %v5779
    %v6945 = vperm.slane %v6805, %v5781
    %v6946 = vsel %vm5783, %v6945, %v6944
    %v6947 = vperm.slane %v6806, %v5779
    %v6948 = vperm.slane %v6807, %v5781
    %v6949 = vsel %vm5783, %v6948, %v6947
    %v6950 = vperm.slane %v6808, %v5779
    %v6951 = vperm.slane %v6809, %v5781
    %v6952 = vsel %vm5783, %v6951, %v6950
    %v6953 = vperm.slane %v6810, %v5779
    %v6954 = vperm.slane %v6811, %v5781
    %v6955 = vsel %vm5783, %v6954, %v6953
    %v6956 = vperm.slane %v6812, %v5779
    %v6957 = vperm.slane %v6813, %v5781
    %v6958 = vsel %vm5783, %v6957, %v6956
    %v6959 = vperm.slane %v6814, %v5779
    %v6960 = vperm.slane %v6815, %v5781
    %v6961 = vsel %vm5783, %v6960, %v6959
    %v6962 = vperm.slane %v6816, %v5779
    %v6963 = vperm.slane %v6817, %v5781
    %v6964 = vsel %vm5783, %v6963, %v6962
    %v6965 = vperm.slane %v6818, %v5779
    %v6966 = vperm.slane %v6819, %v5781
    %v6967 = vsel %vm5783, %v6966, %v6965
    %v6968 = vperm.slane %v6820, %v5779
    %v6969 = vperm.slane %v6821, %v5781
    %v6970 = vsel %vm5783, %v6969, %v6968
    %v6971 = vperm.slane %v6822, %v5779
    %v6972 = vperm.slane %v6823, %v5781
    %v6973 = vsel %vm5783, %v6972, %v6971
    %v6974 = vperm.slane %v6824, %v5779
    %v6975 = vperm.slane %v6825, %v5781
    %v6976 = vsel %vm5783, %v6975, %v6974
    %v6977 = vperm.slane %v6826, %v5779
    %v6978 = vperm.slane %v6827, %v5781
    %v6979 = vsel %vm5783, %v6978, %v6977
    %v6980 = vperm.slane %v6828, %v5779
    %v6981 = vperm.slane %v6829, %v5781
    %v6982 = vsel %vm5783, %v6981, %v6980
    %v6983 = vperm.slane %v6830, %v5779
    %v6984 = vperm.slane %v6831, %v5781
    %v6985 = vsel %vm5783, %v6984, %v6983
    %v6986 = vperm.slane %v6832, %v5779
    %v6987 = vperm.slane %v6833, %v5781
    %v6988 = vsel %vm5783, %v6987, %v6986
    %v6989 = vperm.slane %v6834, %v5779
    %v6990 = vperm.slane %v6835, %v5781
    %v6991 = vsel %vm5783, %v6990, %v6989
    %v6992 = vperm.slane %v6836, %v5779
    %v6993 = vperm.slane %v6837, %v5781
    %v6994 = vsel %vm5783, %v6993, %v6992
    %v6995 = vperm.slane %v6838, %v5779
    %v6996 = vperm.slane %v6839, %v5781
    %v6997 = vsel %vm5783, %v6996, %v6995
    %v6998 = vperm.slane %v6840, %v5779
    %v6999 = vperm.slane %v6841, %v5781
    %v7000 = vsel %vm5783, %v6999, %v6998
    %v7001 = vperm.slane %v6842, %v5779
    %v7002 = vperm.slane %v6843, %v5781
    %v7003 = vsel %vm5783, %v7002, %v7001
    %v7004 = vsel %vm5103, %v6913, %v6910
    %v7005 = vsel %vm5872, %v6916, %v7004
    %v7006 = vsel %vm5108, %v6919, %v7005
    %v7007 = vsel %vm5875, %v6922, %v7006
    %v7008 = vsel %vm5877, %v6925, %v7007
    %v7009 = vsel %vm5879, %v6928, %v7008
    %v7010 = vsel %vm5881, %v6931, %v7009
    %v7011 = vsel %vm5103, %v6937, %v6934
    %v7012 = vsel %vm5872, %v6940, %v7011
    %v7013 = vsel %vm5108, %v6943, %v7012
    %v7014 = vsel %vm5875, %v6946, %v7013
    %v7015 = vsel %vm5877, %v6949, %v7014
    %v7016 = vsel %vm5879, %v6952, %v7015
    %v7017 = vsel %vm5881, %v6955, %v7016
    %v7018 = vsel %vm5103, %v6961, %v6958
    %v7019 = vsel %vm5872, %v6964, %v7018
    %v7020 = vsel %vm5108, %v6967, %v7019
    %v7021 = vsel %vm5875, %v6970, %v7020
    %v7022 = vsel %vm5877, %v6973, %v7021
    %v7023 = vsel %vm5879, %v6976, %v7022
    %v7024 = vsel %vm5881, %v6979, %v7023
    %v7025 = vsel %vm5103, %v6985, %v6982
    %v7026 = vsel %vm5872, %v6988, %v7025
    %v7027 = vsel %vm5108, %v6991, %v7026
    %v7028 = vsel %vm5875, %v6994, %v7027
    %v7029 = vsel %vm5877, %v6997, %v7028
    %v7030 = vsel %vm5879, %v7000, %v7029
    %v7031 = vsel %vm5881, %v7003, %v7030
    %v7036 = vadd.f32 %v6774, %v7010
    %v7037 = vadd.f32 %v6775, %v7017
    %v7038 = vadd.f32 %v6776, %v7024
    %v7039 = vadd.f32 %v6777, %v7031
    %v7040 = vadd.s32 %v5779, 1
    %v7041 = vperm.slane %v5462, %v7040
    %v7042 = vadd.s32 %v5779, 4294967289
    %v7043 = vperm.slane %v5463, %v7042
    %vm7044 = vcmask 121912
    %v7045 = vsel %vm7044, %v7043, %v7041
    %v7046 = vperm.slane %v5464, %v7040
    %v7047 = vperm.slane %v5465, %v7042
    %v7048 = vsel %vm7044, %v7047, %v7046
    %v7049 = vperm.slane %v5466, %v7040
    %v7050 = vperm.slane %v5467, %v7042
    %v7051 = vsel %vm7044, %v7050, %v7049
    %v7052 = vperm.slane %v5468, %v7040
    %v7053 = vperm.slane %v5469, %v7042
    %v7054 = vsel %vm7044, %v7053, %v7052
    %v7055 = vperm.slane %v5470, %v7040
    %v7056 = vperm.slane %v5471, %v7042
    %v7057 = vsel %vm7044, %v7056, %v7055
    %v7058 = vperm.slane %v5472, %v7040
    %v7059 = vperm.slane %v5473, %v7042
    %v7060 = vsel %vm7044, %v7059, %v7058
    %v7061 = vperm.slane %v5474, %v7040
    %v7062 = vperm.slane %v5475, %v7042
    %v7063 = vsel %vm7044, %v7062, %v7061
    %v7064 = vperm.slane %v5476, %v7040
    %v7065 = vperm.slane %v5477, %v7042
    %v7066 = vsel %vm7044, %v7065, %v7064
    %v7067 = vperm.slane %v5478, %v7040
    %v7068 = vperm.slane %v5479, %v7042
    %v7069 = vsel %vm7044, %v7068, %v7067
    %v7070 = vperm.slane %v5480, %v7040
    %v7071 = vperm.slane %v5481, %v7042
    %v7072 = vsel %vm7044, %v7071, %v7070
    %v7073 = vperm.slane %v5482, %v7040
    %v7074 = vperm.slane %v5483, %v7042
    %v7075 = vsel %vm7044, %v7074, %v7073
    %v7076 = vperm.slane %v5484, %v7040
    %v7077 = vperm.slane %v5485, %v7042
    %v7078 = vsel %vm7044, %v7077, %v7076
    %v7079 = vperm.slane %v5486, %v7040
    %v7080 = vperm.slane %v5487, %v7042
    %v7081 = vsel %vm7044, %v7080, %v7079
    %v7082 = vperm.slane %v5488, %v7040
    %v7083 = vperm.slane %v5489, %v7042
    %v7084 = vsel %vm7044, %v7083, %v7082
    %v7085 = vperm.slane %v5490, %v7040
    %v7086 = vperm.slane %v5491, %v7042
    %v7087 = vsel %vm7044, %v7086, %v7085
    %v7088 = vperm.slane %v5492, %v7040
    %v7089 = vperm.slane %v5493, %v7042
    %v7090 = vsel %vm7044, %v7089, %v7088
    %v7091 = vperm.slane %v5494, %v7040
    %v7092 = vperm.slane %v5495, %v7042
    %v7093 = vsel %vm7044, %v7092, %v7091
    %v7094 = vperm.slane %v5496, %v7040
    %v7095 = vperm.slane %v5497, %v7042
    %v7096 = vsel %vm7044, %v7095, %v7094
    %v7097 = vperm.slane %v5498, %v7040
    %v7098 = vperm.slane %v5499, %v7042
    %v7099 = vsel %vm7044, %v7098, %v7097
    %v7100 = vperm.slane %v5500, %v7040
    %v7101 = vperm.slane %v5501, %v7042
    %v7102 = vsel %vm7044, %v7101, %v7100
    %v7103 = vperm.slane %v5502, %v7040
    %v7104 = vperm.slane %v5503, %v7042
    %v7105 = vsel %vm7044, %v7104, %v7103
    %v7106 = vperm.slane %v5504, %v7040
    %v7107 = vperm.slane %v5505, %v7042
    %v7108 = vsel %vm7044, %v7107, %v7106
    %v7109 = vperm.slane %v5506, %v7040
    %v7110 = vperm.slane %v5507, %v7042
    %v7111 = vsel %vm7044, %v7110, %v7109
    %v7112 = vperm.slane %v5508, %v7040
    %v7113 = vperm.slane %v5509, %v7042
    %v7114 = vsel %vm7044, %v7113, %v7112
    %v7115 = vperm.slane %v5510, %v7040
    %v7116 = vperm.slane %v5511, %v7042
    %v7117 = vsel %vm7044, %v7116, %v7115
    %v7118 = vperm.slane %v5512, %v7040
    %v7119 = vperm.slane %v5513, %v7042
    %v7120 = vsel %vm7044, %v7119, %v7118
    %v7121 = vperm.slane %v5514, %v7040
    %v7122 = vperm.slane %v5515, %v7042
    %v7123 = vsel %vm7044, %v7122, %v7121
    %v7124 = vperm.slane %v5516, %v7040
    %v7125 = vperm.slane %v5517, %v7042
    %v7126 = vsel %vm7044, %v7125, %v7124
    %v7127 = vperm.slane %v5518, %v7040
    %v7128 = vperm.slane %v5519, %v7042
    %v7129 = vsel %vm7044, %v7128, %v7127
    %v7130 = vperm.slane %v5520, %v7040
    %v7131 = vperm.slane %v5521, %v7042
    %v7132 = vsel %vm7044, %v7131, %v7130
    %v7133 = vperm.slane %v5522, %v7040
    %v7134 = vperm.slane %v5523, %v7042
    %v7135 = vsel %vm7044, %v7134, %v7133
    %v7136 = vperm.slane %v5524, %v7040
    %v7137 = vperm.slane %v5525, %v7042
    %v7138 = vsel %vm7044, %v7137, %v7136
    %v7139 = vsel %vm5872, %v7048, %v7045
    %v7140 = vsel %vm5108, %v7051, %v7139
    %v7141 = vsel %vm5875, %v7054, %v7140
    %v7142 = vsel %vm5877, %v7057, %v7141
    %v7143 = vsel %vm5879, %v7060, %v7142
    %v7144 = vsel %vm5881, %v7063, %v7143
    %v7145 = vsel %vm5103, %v7069, %v7066
    %v7146 = vsel %vm5872, %v7072, %v7145
    %v7147 = vsel %vm5108, %v7075, %v7146
    %v7148 = vsel %vm5875, %v7078, %v7147
    %v7149 = vsel %vm5877, %v7081, %v7148
    %v7150 = vsel %vm5879, %v7084, %v7149
    %v7151 = vsel %vm5881, %v7087, %v7150
    %v7152 = vsel %vm5872, %v7096, %v7093
    %v7153 = vsel %vm5108, %v7099, %v7152
    %v7154 = vsel %vm5875, %v7102, %v7153
    %v7155 = vsel %vm5877, %v7105, %v7154
    %v7156 = vsel %vm5879, %v7108, %v7155
    %v7157 = vsel %vm5881, %v7111, %v7156
    %v7158 = vsel %vm5103, %v7117, %v7114
    %v7159 = vsel %vm5872, %v7120, %v7158
    %v7160 = vsel %vm5108, %v7123, %v7159
    %v7161 = vsel %vm5875, %v7126, %v7160
    %v7162 = vsel %vm5877, %v7129, %v7161
    %v7163 = vsel %vm5879, %v7132, %v7162
    %v7164 = vsel %vm5881, %v7135, %v7163
    %v7171 = vsel %vm6180, %v7144, 0.0
    %v7172 = vsel %vm6180, %v7151, 0.0
    %v7173 = vsel %vm6180, %v7090, 0.0
    %v7174 = vsel %vm6180, %v7157, 0.0
    %v7175 = vsel %vm6180, %v7164, 0.0
    %v7176 = vsel %vm6180, %v7138, 0.0
    %s7177 = sld [smem:[#allocation7 + $0xa]]
    %v7178 = vstv %s7177
    %v7179 = vmul.f32 %v7171, %v7178
    %v7180 = vmul.f32 %v7172, %v7178
    %v7181 = vmul.f32 %v7173, %v7178
    %v7182 = vmul.f32 %v7174, %v7178
    %v7183 = vmul.f32 %v7175, %v7178
    %v7184 = vmul.f32 %v7176, %v7178
    %vm7191 = vcmask 1046528
    %v7192 = vrot.slane %v7179, 1
    %v7193 = vrot.slane %v7180, 1
    %v7194 = vsel %vm7191, %v7192, %v7193
    %v7195 = vrot.slane %v7181, 1
    %v7196 = vsel %vm7191, %v7193, %v7195
    %v7197 = vrot.slane %v7182, 1
    %v7198 = vrot.slane %v7183, 1
    %v7199 = vsel %vm7191, %v7197, %v7198
    %v7200 = vrot.slane %v7184, 1
    %v7201 = vsel %vm7191, %v7198, %v7200
    %v7206 = vadd.f32 %v7036, %v7194
    %v7207 = vadd.f32 %v7037, %v7196
    %v7208 = vadd.f32 %v7038, %v7199
    %v7209 = vadd.f32 %v7039, %v7201
    %v7210 = vperm.slane %v5528, %v7040
    %v7211 = vperm.slane %v5531, %v7042
    %v7212 = vsel %vm7044, %v7211, %v7210
    %v7213 = vperm.slane %v5534, %v7040
    %v7214 = vperm.slane %v5537, %v7042
    %v7215 = vsel %vm7044, %v7214, %v7213
    %v7216 = vperm.slane %v5540, %v7040
    %v7217 = vperm.slane %v5543, %v7042
    %v7218 = vsel %vm7044, %v7217, %v7216
    %v7219 = vperm.slane %v5546, %v7040
    %v7220 = vperm.slane %v5549, %v7042
    %v7221 = vsel %vm7044, %v7220, %v7219
    %v7222 = vperm.slane %v5552, %v7040
    %v7223 = vperm.slane %v5555, %v7042
    %v7224 = vsel %vm7044, %v7223, %v7222
    %v7225 = vperm.slane %v5558, %v7040
    %v7226 = vperm.slane %v5561, %v7042
    %v7227 = vsel %vm7044, %v7226, %v7225
    %v7228 = vperm.slane %v5564, %v7040
    %v7229 = vperm.slane %v5567, %v7042
    %v7230 = vsel %vm7044, %v7229, %v7228
    %v7231 = vperm.slane %v5570, %v7040
    %v7232 = vperm.slane %v5573, %v7042
    %v7233 = vsel %vm7044, %v7232, %v7231
    %v7234 = vperm.slane %v5576, %v7040
    %v7235 = vperm.slane %v5579, %v7042
    %v7236 = vsel %vm7044, %v7235, %v7234
    %v7237 = vperm.slane %v5582, %v7040
    %v7238 = vperm.slane %v5585, %v7042
    %v7239 = vsel %vm7044, %v7238, %v7237
    %v7240 = vperm.slane %v5588, %v7040
    %v7241 = vperm.slane %v5591, %v7042
    %v7242 = vsel %vm7044, %v7241, %v7240
    %v7243 = vperm.slane %v5594, %v7040
    %v7244 = vperm.slane %v5597, %v7042
    %v7245 = vsel %vm7044, %v7244, %v7243
    %v7246 = vperm.slane %v5600, %v7040
    %v7247 = vperm.slane %v5603, %v7042
    %v7248 = vsel %vm7044, %v7247, %v7246
    %v7249 = vperm.slane %v5606, %v7040
    %v7250 = vperm.slane %v5609, %v7042
    %v7251 = vsel %vm7044, %v7250, %v7249
    %v7252 = vperm.slane %v5612, %v7040
    %v7253 = vperm.slane %v5615, %v7042
    %v7254 = vsel %vm7044, %v7253, %v7252
    %v7255 = vperm.slane %v5618, %v7040
    %v7256 = vperm.slane %v5621, %v7042
    %v7257 = vsel %vm7044, %v7256, %v7255
    %v7258 = vperm.slane %v5624, %v7040
    %v7259 = vperm.slane %v5627, %v7042
    %v7260 = vsel %vm7044, %v7259, %v7258
    %v7261 = vperm.slane %v5630, %v7040
    %v7262 = vperm.slane %v5633, %v7042
    %v7263 = vsel %vm7044, %v7262, %v7261
    %v7264 = vperm.slane %v5636, %v7040
    %v7265 = vperm.slane %v5639, %v7042
    %v7266 = vsel %vm7044, %v7265, %v7264
    %v7267 = vperm.slane %v5642, %v7040
    %v7268 = vperm.slane %v5645, %v7042
    %v7269 = vsel %vm7044, %v7268, %v7267
    %v7270 = vperm.slane %v5648, %v7040
    %v7271 = vperm.slane %v5651, %v7042
    %v7272 = vsel %vm7044, %v7271, %v7270
    %v7273 = vperm.slane %v5654, %v7040
    %v7274 = vperm.slane %v5657, %v7042
    %v7275 = vsel %vm7044, %v7274, %v7273
    %v7276 = vperm.slane %v5660, %v7040
    %v7277 = vperm.slane %v5663, %v7042
    %v7278 = vsel %vm7044, %v7277, %v7276
    %v7279 = vperm.slane %v5666, %v7040
    %v7280 = vperm.slane %v5669, %v7042
    %v7281 = vsel %vm7044, %v7280, %v7279
    %v7282 = vperm.slane %v5672, %v7040
    %v7283 = vperm.slane %v5675, %v7042
    %v7284 = vsel %vm7044, %v7283, %v7282
    %v7285 = vperm.slane %v5678, %v7040
    %v7286 = vperm.slane %v5681, %v7042
    %v7287 = vsel %vm7044, %v7286, %v7285
    %v7288 = vperm.slane %v5684, %v7040
    %v7289 = vperm.slane %v5687, %v7042
    %v7290 = vsel %vm7044, %v7289, %v7288
    %v7291 = vperm.slane %v5690, %v7040
    %v7292 = vperm.slane %v5693, %v7042
    %v7293 = vsel %vm7044, %v7292, %v7291
    %v7294 = vperm.slane %v5696, %v7040
    %v7295 = vperm.slane %v5699, %v7042
    %v7296 = vsel %vm7044, %v7295, %v7294
    %v7297 = vperm.slane %v5702, %v7040
    %v7298 = vperm.slane %v5705, %v7042
    %v7299 = vsel %vm7044, %v7298, %v7297
    %v7300 = vperm.slane %v5708, %v7040
    %v7301 = vperm.slane %v5711, %v7042
    %v7302 = vsel %vm7044, %v7301, %v7300
    %v7303 = vperm.slane %v5714, %v7040
    %v7304 = vperm.slane %v5717, %v7042
    %v7305 = vsel %vm7044, %v7304, %v7303
    %v7306 = vsel %vm5872, %v7215, %v7212
    %v7307 = vsel %vm5108, %v7218, %v7306
    %v7308 = vsel %vm5875, %v7221, %v7307
    %v7309 = vsel %vm5877, %v7224, %v7308
    %v7310 = vsel %vm5879, %v7227, %v7309
    %v7311 = vsel %vm5881, %v7230, %v7310
    %v7312 = vsel %vm5103, %v7236, %v7233
    %v7313 = vsel %vm5872, %v7239, %v7312
    %v7314 = vsel %vm5108, %v7242, %v7313
    %v7315 = vsel %vm5875, %v7245, %v7314
    %v7316 = vsel %vm5877, %v7248, %v7315
    %v7317 = vsel %vm5879, %v7251, %v7316
    %v7318 = vsel %vm5881, %v7254, %v7317
    %v7319 = vsel %vm5872, %v7263, %v7260
    %v7320 = vsel %vm5108, %v7266, %v7319
    %v7321 = vsel %vm5875, %v7269, %v7320
    %v7322 = vsel %vm5877, %v7272, %v7321
    %v7323 = vsel %vm5879, %v7275, %v7322
    %v7324 = vsel %vm5881, %v7278, %v7323
    %v7325 = vsel %vm5103, %v7284, %v7281
    %v7326 = vsel %vm5872, %v7287, %v7325
    %v7327 = vsel %vm5108, %v7290, %v7326
    %v7328 = vsel %vm5875, %v7293, %v7327
    %v7329 = vsel %vm5877, %v7296, %v7328
    %v7330 = vsel %vm5879, %v7299, %v7329
    %v7331 = vsel %vm5881, %v7302, %v7330
    %v7338 = vsel %vm6180, %v7311, 0.0
    %v7339 = vsel %vm6180, %v7318, 0.0
    %v7340 = vsel %vm6180, %v7257, 0.0
    %v7341 = vsel %vm6180, %v7324, 0.0
    %v7342 = vsel %vm6180, %v7331, 0.0
    %v7343 = vsel %vm6180, %v7305, 0.0
    %s7344 = sld [smem:[#allocation7 + $0xb]]
    %v7345 = vstv %s7344
    %v7346 = vmul.f32 %v7338, %v7345
    %v7347 = vmul.f32 %v7339, %v7345
    %v7348 = vmul.f32 %v7340, %v7345
    %v7349 = vmul.f32 %v7341, %v7345
    %v7350 = vmul.f32 %v7342, %v7345
    %v7351 = vmul.f32 %v7343, %v7345
    %v7358 = vrot.slane %v7346, 1
    %v7359 = vrot.slane %v7347, 1
    %v7360 = vsel %vm7191, %v7358, %v7359
    %v7361 = vrot.slane %v7348, 1
    %v7362 = vsel %vm7191, %v7359, %v7361
    %v7363 = vrot.slane %v7349, 1
    %v7364 = vrot.slane %v7350, 1
    %v7365 = vsel %vm7191, %v7363, %v7364
    %v7366 = vrot.slane %v7351, 1
    %v7367 = vsel %vm7191, %v7364, %v7366
    %v7372 = vadd.f32 %v7206, %v7360
    %v7373 = vadd.f32 %v7207, %v7362
    %v7374 = vadd.f32 %v7208, %v7365
    %v7375 = vadd.f32 %v7209, %v7367
    %v7376 = vperm.slane %v5492, %v5779
    %v7377 = vperm.slane %v5493, %v5781
    %v7378 = vsel %vm5783, %v7377, %v7376
    %v7379 = vperm.slane %v5524, %v5779
    %v7380 = vperm.slane %v5525, %v5781
    %v7381 = vsel %vm5783, %v7380, %v7379
    %v7382 = vsel %vm5103, %v5790, %v5787
    %v7383 = vsel %vm5872, %v5793, %v7382
    %v7384 = vsel %vm5108, %v5796, %v7383
    %v7385 = vsel %vm5875, %v5799, %v7384
    %v7386 = vsel %vm5877, %v5802, %v7385
    %v7387 = vsel %vm5879, %v5805, %v7386
    %v7388 = vsel %vm5881, %v5808, %v7387
    %v7389 = vsel %vm5103, %v5814, %v5811
    %v7390 = vsel %vm5872, %v5817, %v7389
    %v7391 = vsel %vm5108, %v5820, %v7390
    %v7392 = vsel %vm5875, %v5823, %v7391
    %v7393 = vsel %vm5877, %v5826, %v7392
    %v7394 = vsel %vm5879, %v7378, %v7393
    %v7395 = vsel %vm5103, %v5835, %v5832
    %v7396 = vsel %vm5872, %v5838, %v7395
    %v7397 = vsel %vm5108, %v5841, %v7396
    %v7398 = vsel %vm5875, %v5844, %v7397
    %v7399 = vsel %vm5877, %v5847, %v7398
    %v7400 = vsel %vm5879, %v5850, %v7399
    %v7401 = vsel %vm5881, %v5853, %v7400
    %v7402 = vsel %vm5103, %v5859, %v5856
    %v7403 = vsel %vm5872, %v5862, %v7402
    %v7404 = vsel %vm5108, %v5865, %v7403
    %v7405 = vsel %vm5875, %v5868, %v7404
    %v7406 = vsel %vm5877, %v5871, %v7405
    %v7407 = vsel %vm5879, %v7381, %v7406
    %v7412 = vsel %vm7191, %v7394, 0.0
    %v7413 = vsel %vm7191, %v7407, 0.0
    %v7414 = vperm.slane %v5618, %v5779
    %v7415 = vperm.slane %v5621, %v5781
    %v7416 = vsel %vm5783, %v7415, %v7414
    %v7417 = vperm.slane %v5714, %v5779
    %v7418 = vperm.slane %v5717, %v5781
    %v7419 = vsel %vm5783, %v7418, %v7417
    %v7420 = vsel %vm5103, %v5977, %v5974
    %v7421 = vsel %vm5872, %v5980, %v7420
    %v7422 = vsel %vm5108, %v5983, %v7421
    %v7423 = vsel %vm5875, %v5986, %v7422
    %v7424 = vsel %vm5877, %v5989, %v7423
    %v7425 = vsel %vm5879, %v5992, %v7424
    %v7426 = vsel %vm5881, %v5995, %v7425
    %v7427 = vsel %vm5103, %v6001, %v5998
    %v7428 = vsel %vm5872, %v6004, %v7427
    %v7429 = vsel %vm5108, %v6007, %v7428
    %v7430 = vsel %vm5875, %v6010, %v7429
    %v7431 = vsel %vm5877, %v6013, %v7430
    %v7432 = vsel %vm5879, %v7416, %v7431
    %v7433 = vsel %vm5103, %v6022, %v6019
    %v7434 = vsel %vm5872, %v6025, %v7433
    %v7435 = vsel %vm5108, %v6028, %v7434
    %v7436 = vsel %vm5875, %v6031, %v7435
    %v7437 = vsel %vm5877, %v6034, %v7436
    %v7438 = vsel %vm5879, %v6037, %v7437
    %v7439 = vsel %vm5881, %v6040, %v7438
    %v7440 = vsel %vm5103, %v6046, %v6043
    %v7441 = vsel %vm5872, %v6049, %v7440
    %v7442 = vsel %vm5108, %v6052, %v7441
    %v7443 = vsel %vm5875, %v6055, %v7442
    %v7444 = vsel %vm5877, %v6058, %v7443
    %v7445 = vsel %vm5879, %v7419, %v7444
    %v7450 = vsel %vm7191, %v7432, 0.0
    %v7451 = vsel %vm7191, %v7445, 0.0
    %7454 = vrot.lane.b32.xlu0 %v7388, 1
    %v7455 = vpop.permute.xlu0 %7454
    %7456 = vrot.lane.b32.xlu0 %v7412, 1
    %v7457 = vpop.permute.xlu0 %7456
    %7458 = vrot.lane.b32.xlu0 %v7401, 1
    %v7459 = vpop.permute.xlu0 %7458
    %7460 = vrot.lane.b32.xlu0 %v7413, 1
    %v7461 = vpop.permute.xlu0 %7460
    %v7466 = vsel %vm6105, 0.0, %v7455
    %v7467 = vsel %vm6105, 0.0, %v7457
    %v7468 = vsel %vm6105, 0.0, %v7459
    %v7469 = vsel %vm6105, 0.0, %v7461
    %s7470 = sld [smem:[#allocation7 + $0xc]]
    %v7471 = vstv %s7470
    %v7472 = vmul.f32 %v7466, %v7471
    %v7473 = vmul.f32 %v7467, %v7471
    %v7474 = vmul.f32 %v7468, %v7471
    %v7475 = vmul.f32 %v7469, %v7471
    %v7476 = vadd.f32 %v7372, %v7472
    %v7477 = vadd.f32 %v7373, %v7473
    %v7478 = vadd.f32 %v7374, %v7474
    %v7479 = vadd.f32 %v7375, %v7475
    %7482 = vrot.lane.b32.xlu0 %v7426, 1
    %v7483 = vpop.permute.xlu0 %7482
    %7484 = vrot.lane.b32.xlu0 %v7450, 1
    %v7485 = vpop.permute.xlu0 %7484
    %7486 = vrot.lane.b32.xlu0 %v7439, 1
    %v7487 = vpop.permute.xlu0 %7486
    %7488 = vrot.lane.b32.xlu0 %v7451, 1
    %v7489 = vpop.permute.xlu0 %7488
    %v7494 = vsel %vm6105, 0.0, %v7483
    %v7495 = vsel %vm6105, 0.0, %v7485
    %v7496 = vsel %vm6105, 0.0, %v7487
    %v7497 = vsel %vm6105, 0.0, %v7489
    %s7498 = sld [smem:[#allocation7 + $0xd]]
    %v7499 = vstv %s7498
    %v7500 = vmul.f32 %v7494, %v7499
    %v7501 = vmul.f32 %v7495, %v7499
    %v7502 = vmul.f32 %v7496, %v7499
    %v7503 = vmul.f32 %v7497, %v7499
    %v7504 = vadd.f32 %v7476, %v7500
    %v7505 = vadd.f32 %v7477, %v7501
    %v7506 = vadd.f32 %v7478, %v7502
    %v7507 = vadd.f32 %v7479, %v7503
    %s7508 = sld [smem:[#allocation7 + $0xe]]
    %v7509 = vstv %s7508
    %v7510 = vmul.f32 %v7388, %v7509
    %v7511 = vmul.f32 %v7412, %v7509
    %v7512 = vmul.f32 %v7401, %v7509
    %v7513 = vmul.f32 %v7413, %v7509
    %v7514 = vadd.f32 %v7504, %v7510
    %v7515 = vadd.f32 %v7505, %v7511
    %v7516 = vadd.f32 %v7506, %v7512
    %v7517 = vadd.f32 %v7507, %v7513
    %s7518 = sld [smem:[#allocation7 + $0xf]]
    %v7519 = vstv %s7518
    %v7520 = vmul.f32 %v7426, %v7519
    %v7521 = vmul.f32 %v7450, %v7519
    %v7522 = vmul.f32 %v7439, %v7519
    %v7523 = vmul.f32 %v7451, %v7519
    %v7524 = vadd.f32 %v7514, %v7520
    %v7525 = vadd.f32 %v7515, %v7521
    %v7526 = vadd.f32 %v7516, %v7522
    %v7527 = vadd.f32 %v7517, %v7523
    %7528 = vrot.lane.b32.xlu0 %v7388, 127
    %v7529 = vpop.permute.xlu0 %7528
    %7530 = vrot.lane.b32.xlu0 %v7412, 127
    %v7531 = vpop.permute.xlu0 %7530
    %7532 = vrot.lane.b32.xlu0 %v7401, 127
    %v7533 = vpop.permute.xlu0 %7532
    %7534 = vrot.lane.b32.xlu0 %v7413, 127
    %v7535 = vpop.permute.xlu0 %7534
    %v7540 = vsel %vm6180, %v7529, 0.0
    %v7541 = vsel %vm6180, %v7531, 0.0
    %v7542 = vsel %vm6180, %v7533, 0.0
    %v7543 = vsel %vm6180, %v7535, 0.0
    %s7544 = sld [smem:[#allocation7 + $0x10]]
    %v7545 = vstv %s7544
    %v7546 = vmul.f32 %v7540, %v7545
    %v7547 = vmul.f32 %v7541, %v7545
    %v7548 = vmul.f32 %v7542, %v7545
    %v7549 = vmul.f32 %v7543, %v7545
    %v7550 = vadd.f32 %v7524, %v7546
    %v7551 = vadd.f32 %v7525, %v7547
    %v7552 = vadd.f32 %v7526, %v7548
    %v7553 = vadd.f32 %v7527, %v7549
    %7554 = vrot.lane.b32.xlu0 %v7426, 127
    %v7555 = vpop.permute.xlu0 %7554
    %7556 = vrot.lane.b32.xlu0 %v7450, 127
    %v7557 = vpop.permute.xlu0 %7556
    %7558 = vrot.lane.b32.xlu0 %v7439, 127
    %v7559 = vpop.permute.xlu0 %7558
    %7560 = vrot.lane.b32.xlu0 %v7451, 127
    %v7561 = vpop.permute.xlu0 %7560
    %v7566 = vsel %vm6180, %v7555, 0.0
    %v7567 = vsel %vm6180, %v7557, 0.0
    %v7568 = vsel %vm6180, %v7559, 0.0
    %v7569 = vsel %vm6180, %v7561, 0.0
    %s7570 = sld [smem:[#allocation7 + $0x11]]
    %v7571 = vstv %s7570
    %v7572 = vmul.f32 %v7566, %v7571
    %v7573 = vmul.f32 %v7567, %v7571
    %v7574 = vmul.f32 %v7568, %v7571
    %v7575 = vmul.f32 %v7569, %v7571
    %v7576 = vadd.f32 %v7550, %v7572
    %v7577 = vadd.f32 %v7551, %v7573
    %v7578 = vadd.f32 %v7552, %v7574
    %v7579 = vadd.f32 %v7553, %v7575
    %s7580 = sld [smem:[#allocation2]]
    %v7581 = vstv %s7580
    %v7582 = vadd.f32 %v7576, %v7581
    %v7583 = vadd.f32 %v7577, %v7581
    %v7584 = vadd.f32 %v7578, %v7581
    %v7585 = vadd.f32 %v7579, %v7581
    %v7586 = vxor.u32 %v7582, 2147483648
    %v7587 = vxor.u32 %v7583, 2147483648
    %v7588 = vxor.u32 %v7584, 2147483648
    %v7589 = vxor.u32 %v7585, 2147483648
    %v7590 = vmul.f32 %v7586, 1.442695
    %v7591 = vpow.pop %v7590
    %v7592 = vmul.f32 %v7587, 1.442695
    %v7593 = vpow.pop %v7592
    %v7594 = vmul.f32 %v7588, 1.442695
    %v7595 = vpow.pop %v7594
    %v7596 = vmul.f32 %v7589, 1.442695
    %v7597 = vpow.pop %v7596
    %v7598 = vadd.f32 %v7591, 1.0
    %v7599 = vadd.f32 %v7593, 1.0
    %v7600 = vadd.f32 %v7595, 1.0
    %v7601 = vadd.f32 %v7597, 1.0
    %v7602 = vrcp.pop %v7598
    %v7603 = vmul.f32 %v7598, %v7602
    %v7604 = vsub.f32 1.0, %v7603
    %v7605 = vmul.f32 %v7602, %v7604
    %v7606 = vadd.f32 %v7602, %v7605
    %vm7607 = vweird.f32 %v7598
    %vm7608 = vweird.f32 %v7602
    %vm7609 = vmor %vm7607, %vm7608
    %v7610 = vsel %vm7609, %v7602, %v7606
    %v7611 = vand.u32 2147483647, %v7598
    %vm7612 = vcmp.eq.f32.partialorder %v7611, 8.507059e+37
    %v7613 = vand.u32 %v7598, 2147483648
    %v7614 = vor.u32 1.1754944e-38, %v7613
    %v7615 = vsel %vm7612, %v7614, %v7610
    %v7616 = vmul.f32 1.0, %v7615
    %v7617 = vrcp.pop %v7599
    %v7618 = vmul.f32 %v7599, %v7617
    %v7619 = vsub.f32 1.0, %v7618
    %v7620 = vmul.f32 %v7617, %v7619
    %v7621 = vadd.f32 %v7617, %v7620
    %vm7622 = vweird.f32 %v7599
    %vm7623 = vweird.f32 %v7617
    %vm7624 = vmor %vm7622, %vm7623
    %v7625 = vsel %vm7624, %v7617, %v7621
    %v7626 = vand.u32 2147483647, %v7599
    %vm7627 = vcmp.eq.f32.partialorder %v7626, 8.507059e+37
    %v7628 = vand.u32 %v7599, 2147483648
    %v7629 = vor.u32 1.1754944e-38, %v7628
    %v7630 = vsel %vm7627, %v7629, %v7625
    %v7631 = vmul.f32 1.0, %v7630
    %v7632 = vrcp.pop %v7600
    %v7633 = vmul.f32 %v7600, %v7632
    %v7634 = vsub.f32 1.0, %v7633
    %v7635 = vmul.f32 %v7632, %v7634
    %v7636 = vadd.f32 %v7632, %v7635
    %vm7637 = vweird.f32 %v7600
    %vm7638 = vweird.f32 %v7632
    %vm7639 = vmor %vm7637, %vm7638
    %v7640 = vsel %vm7639, %v7632, %v7636
    %v7641 = vand.u32 2147483647, %v7600
    %vm7642 = vcmp.eq.f32.partialorder %v7641, 8.507059e+37
    %v7643 = vand.u32 %v7600, 2147483648
    %v7644 = vor.u32 1.1754944e-38, %v7643
    %v7645 = vsel %vm7642, %v7644, %v7640
    %v7646 = vmul.f32 1.0, %v7645
    %v7647 = vrcp.pop %v7601
    %v7648 = vmul.f32 %v7601, %v7647
    %v7649 = vsub.f32 1.0, %v7648
    %v7650 = vmul.f32 %v7647, %v7649
    %v7651 = vadd.f32 %v7647, %v7650
    %vm7652 = vweird.f32 %v7601
    %vm7653 = vweird.f32 %v7647
    %vm7654 = vmor %vm7652, %vm7653
    %v7655 = vsel %vm7654, %v7647, %v7651
    %v7656 = vand.u32 2147483647, %v7601
    %vm7657 = vcmp.eq.f32.partialorder %v7656, 8.507059e+37
    %v7658 = vand.u32 %v7601, 2147483648
    %v7659 = vor.u32 1.1754944e-38, %v7658
    %v7660 = vsel %vm7657, %v7659, %v7655
    %v7661 = vmul.f32 1.0, %v7660
    %v7662 = vperm.slane %v7616, 0
    %v7663 = vlaneseq
    %v7664 = vshrl.u32 %v7663, 7
    %7666 = vset.pattern.permute.xlu0 %v7664
    %7667 = vperm.xlu0 %7666, %v7662
    %v7668 = vpop.permute.xlu0 %7667
    %v7669 = vlaneseq
    %v7670 = vshrl.u32 %v7669, 7
    %v7671 = vadd.s32 %v7670, 8
    %7672 = vset.pattern.permute.xlu0 %v7671
    %7673 = vperm.xlu0 %7672, %v7662
    %v7674 = vpop.permute.xlu0 %7673
    %v7675 = vperm.slane %v7616, 1
    %v7676 = vlaneseq
    %v7677 = vshrl.u32 %v7676, 7
    %7679 = vset.pattern.permute.xlu0 %v7677
    %7680 = vperm.xlu0 %7679, %v7675
    %v7681 = vpop.permute.xlu0 %7680
    %v7682 = vlaneseq
    %v7683 = vshrl.u32 %v7682, 7
    %v7684 = vadd.s32 %v7683, 8
    %7685 = vset.pattern.permute.xlu0 %v7684
    %7686 = vperm.xlu0 %7685, %v7675
    %v7687 = vpop.permute.xlu0 %7686
    %v7688 = vperm.slane %v7616, 2
    %v7689 = vlaneseq
    %v7690 = vshrl.u32 %v7689, 7
    %7692 = vset.pattern.permute.xlu0 %v7690
    %7693 = vperm.xlu0 %7692, %v7688
    %v7694 = vpop.permute.xlu0 %7693
    %v7695 = vlaneseq
    %v7696 = vshrl.u32 %v7695, 7
    %v7697 = vadd.s32 %v7696, 8
    %7698 = vset.pattern.permute.xlu0 %v7697
    %7699 = vperm.xlu0 %7698, %v7688
    %v7700 = vpop.permute.xlu0 %7699
    %v7701 = vperm.slane %v7616, 3
    %v7702 = vlaneseq
    %v7703 = vshrl.u32 %v7702, 7
    %7705 = vset.pattern.permute.xlu0 %v7703
    %7706 = vperm.xlu0 %7705, %v7701
    %v7707 = vpop.permute.xlu0 %7706
    %v7708 = vlaneseq
    %v7709 = vshrl.u32 %v7708, 7
    %v7710 = vadd.s32 %v7709, 8
    %7711 = vset.pattern.permute.xlu0 %v7710
    %7712 = vperm.xlu0 %7711, %v7701
    %v7713 = vpop.permute.xlu0 %7712
    %v7714 = vperm.slane %v7616, 4
    %v7715 = vlaneseq
    %v7716 = vshrl.u32 %v7715, 7
    %7718 = vset.pattern.permute.xlu0 %v7716
    %7719 = vperm.xlu0 %7718, %v7714
    %v7720 = vpop.permute.xlu0 %7719
    %v7721 = vlaneseq
    %v7722 = vshrl.u32 %v7721, 7
    %v7723 = vadd.s32 %v7722, 8
    %7724 = vset.pattern.permute.xlu0 %v7723
    %7725 = vperm.xlu0 %7724, %v7714
    %v7726 = vpop.permute.xlu0 %7725
    %v7727 = vperm.slane %v7616, 5
    %v7728 = vlaneseq
    %v7729 = vshrl.u32 %v7728, 7
    %7731 = vset.pattern.permute.xlu0 %v7729
    %7732 = vperm.xlu0 %7731, %v7727
    %v7733 = vpop.permute.xlu0 %7732
    %v7734 = vlaneseq
    %v7735 = vshrl.u32 %v7734, 7
    %v7736 = vadd.s32 %v7735, 8
    %7737 = vset.pattern.permute.xlu0 %v7736
    %7738 = vperm.xlu0 %7737, %v7727
    %v7739 = vpop.permute.xlu0 %7738
    %v7740 = vperm.slane %v7616, 6
    %v7741 = vlaneseq
    %v7742 = vshrl.u32 %v7741, 7
    %7744 = vset.pattern.permute.xlu0 %v7742
    %7745 = vperm.xlu0 %7744, %v7740
    %v7746 = vpop.permute.xlu0 %7745
    %v7747 = vlaneseq
    %v7748 = vshrl.u32 %v7747, 7
    %v7749 = vadd.s32 %v7748, 8
    %7750 = vset.pattern.permute.xlu0 %v7749
    %7751 = vperm.xlu0 %7750, %v7740
    %v7752 = vpop.permute.xlu0 %7751
    %v7753 = vperm.slane %v7616, 7
    %v7754 = vlaneseq
    %v7755 = vshrl.u32 %v7754, 7
    %7757 = vset.pattern.permute.xlu0 %v7755
    %7758 = vperm.xlu0 %7757, %v7753
    %v7759 = vpop.permute.xlu0 %7758
    %v7760 = vlaneseq
    %v7761 = vshrl.u32 %v7760, 7
    %v7762 = vadd.s32 %v7761, 8
    %7763 = vset.pattern.permute.xlu0 %v7762
    %7764 = vperm.xlu0 %7763, %v7753
    %v7765 = vpop.permute.xlu0 %7764
    %v7766 = vperm.slane %v7631, 0
    %v7767 = vlaneseq
    %v7768 = vshrl.u32 %v7767, 7
    %7770 = vset.pattern.permute.xlu0 %v7768
    %7771 = vperm.xlu0 %7770, %v7766
    %v7772 = vpop.permute.xlu0 %7771
    %v7773 = vlaneseq
    %v7774 = vshrl.u32 %v7773, 7
    %v7775 = vadd.s32 %v7774, 8
    %7776 = vset.pattern.permute.xlu0 %v7775
    %7777 = vperm.xlu0 %7776, %v7766
    %v7778 = vpop.permute.xlu0 %7777
    %v7779 = vperm.slane %v7631, 1
    %v7780 = vlaneseq
    %v7781 = vshrl.u32 %v7780, 7
    %7783 = vset.pattern.permute.xlu0 %v7781
    %7784 = vperm.xlu0 %7783, %v7779
    %v7785 = vpop.permute.xlu0 %7784
    %v7786 = vlaneseq
    %v7787 = vshrl.u32 %v7786, 7
    %v7788 = vadd.s32 %v7787, 8
    %7789 = vset.pattern.permute.xlu0 %v7788
    %7790 = vperm.xlu0 %7789, %v7779
    %v7791 = vpop.permute.xlu0 %7790
    %v7792 = vperm.slane %v7631, 2
    %v7793 = vlaneseq
    %v7794 = vshrl.u32 %v7793, 7
    %7796 = vset.pattern.permute.xlu0 %v7794
    %7797 = vperm.xlu0 %7796, %v7792
    %v7798 = vpop.permute.xlu0 %7797
    %v7799 = vlaneseq
    %v7800 = vshrl.u32 %v7799, 7
    %v7801 = vadd.s32 %v7800, 8
    %7802 = vset.pattern.permute.xlu0 %v7801
    %7803 = vperm.xlu0 %7802, %v7792
    %v7804 = vpop.permute.xlu0 %7803
    %v7805 = vperm.slane %v7631, 3
    %v7806 = vlaneseq
    %v7807 = vshrl.u32 %v7806, 7
    %7809 = vset.pattern.permute.xlu0 %v7807
    %7810 = vperm.xlu0 %7809, %v7805
    %v7811 = vpop.permute.xlu0 %7810
    %v7812 = vlaneseq
    %v7813 = vshrl.u32 %v7812, 7
    %v7814 = vadd.s32 %v7813, 8
    %7815 = vset.pattern.permute.xlu0 %v7814
    %7816 = vperm.xlu0 %7815, %v7805
    %v7817 = vpop.permute.xlu0 %7816
    %v7818 = vperm.slane %v7631, 4
    %v7819 = vlaneseq
    %v7820 = vshrl.u32 %v7819, 7
    %7822 = vset.pattern.permute.xlu0 %v7820
    %7823 = vperm.xlu0 %7822, %v7818
    %v7824 = vpop.permute.xlu0 %7823
    %v7825 = vlaneseq
    %v7826 = vshrl.u32 %v7825, 7
    %v7827 = vadd.s32 %v7826, 8
    %7828 = vset.pattern.permute.xlu0 %v7827
    %7829 = vperm.xlu0 %7828, %v7818
    %v7830 = vpop.permute.xlu0 %7829
    %v7831 = vperm.slane %v7631, 5
    %v7832 = vlaneseq
    %v7833 = vshrl.u32 %v7832, 7
    %7835 = vset.pattern.permute.xlu0 %v7833
    %7836 = vperm.xlu0 %7835, %v7831
    %v7837 = vpop.permute.xlu0 %7836
    %v7838 = vlaneseq
    %v7839 = vshrl.u32 %v7838, 7
    %v7840 = vadd.s32 %v7839, 8
    %7841 = vset.pattern.permute.xlu0 %v7840
    %7842 = vperm.xlu0 %7841, %v7831
    %v7843 = vpop.permute.xlu0 %7842
    %v7844 = vperm.slane %v7631, 6
    %v7845 = vlaneseq
    %v7846 = vshrl.u32 %v7845, 7
    %7848 = vset.pattern.permute.xlu0 %v7846
    %7849 = vperm.xlu0 %7848, %v7844
    %v7850 = vpop.permute.xlu0 %7849
    %v7851 = vlaneseq
    %v7852 = vshrl.u32 %v7851, 7
    %v7853 = vadd.s32 %v7852, 8
    %7854 = vset.pattern.permute.xlu0 %v7853
    %7855 = vperm.xlu0 %7854, %v7844
    %v7856 = vpop.permute.xlu0 %7855
    %v7857 = vperm.slane %v7631, 7
    %v7858 = vlaneseq
    %v7859 = vshrl.u32 %v7858, 7
    %7861 = vset.pattern.permute.xlu0 %v7859
    %7862 = vperm.xlu0 %7861, %v7857
    %v7863 = vpop.permute.xlu0 %7862
    %v7864 = vlaneseq
    %v7865 = vshrl.u32 %v7864, 7
    %v7866 = vadd.s32 %v7865, 8
    %7867 = vset.pattern.permute.xlu0 %v7866
    %7868 = vperm.xlu0 %7867, %v7857
    %v7869 = vpop.permute.xlu0 %7868
    %v7870 = vperm.slane %v7646, 0
    %v7871 = vlaneseq
    %v7872 = vshrl.u32 %v7871, 7
    %7874 = vset.pattern.permute.xlu0 %v7872
    %7875 = vperm.xlu0 %7874, %v7870
    %v7876 = vpop.permute.xlu0 %7875
    %v7877 = vlaneseq
    %v7878 = vshrl.u32 %v7877, 7
    %v7879 = vadd.s32 %v7878, 8
    %7880 = vset.pattern.permute.xlu0 %v7879
    %7881 = vperm.xlu0 %7880, %v7870
    %v7882 = vpop.permute.xlu0 %7881
    %v7883 = vperm.slane %v7646, 1
    %v7884 = vlaneseq
    %v7885 = vshrl.u32 %v7884, 7
    %7887 = vset.pattern.permute.xlu0 %v7885
    %7888 = vperm.xlu0 %7887, %v7883
    %v7889 = vpop.permute.xlu0 %7888
    %v7890 = vlaneseq
    %v7891 = vshrl.u32 %v7890, 7
    %v7892 = vadd.s32 %v7891, 8
    %7893 = vset.pattern.permute.xlu0 %v7892
    %7894 = vperm.xlu0 %7893, %v7883
    %v7895 = vpop.permute.xlu0 %7894
    %v7896 = vperm.slane %v7646, 2
    %v7897 = vlaneseq
    %v7898 = vshrl.u32 %v7897, 7
    %7900 = vset.pattern.permute.xlu0 %v7898
    %7901 = vperm.xlu0 %7900, %v7896
    %v7902 = vpop.permute.xlu0 %7901
    %v7903 = vlaneseq
    %v7904 = vshrl.u32 %v7903, 7
    %v7905 = vadd.s32 %v7904, 8
    %7906 = vset.pattern.permute.xlu0 %v7905
    %7907 = vperm.xlu0 %7906, %v7896
    %v7908 = vpop.permute.xlu0 %7907
    %v7909 = vperm.slane %v7646, 3
    %v7910 = vlaneseq
    %v7911 = vshrl.u32 %v7910, 7
    %7913 = vset.pattern.permute.xlu0 %v7911
    %7914 = vperm.xlu0 %7913, %v7909
    %v7915 = vpop.permute.xlu0 %7914
    %v7916 = vlaneseq
    %v7917 = vshrl.u32 %v7916, 7
    %v7918 = vadd.s32 %v7917, 8
    %7919 = vset.pattern.permute.xlu0 %v7918
    %7920 = vperm.xlu0 %7919, %v7909
    %v7921 = vpop.permute.xlu0 %7920
    %v7922 = vperm.slane %v7646, 4
    %v7923 = vlaneseq
    %v7924 = vshrl.u32 %v7923, 7
    %7926 = vset.pattern.permute.xlu0 %v7924
    %7927 = vperm.xlu0 %7926, %v7922
    %v7928 = vpop.permute.xlu0 %7927
    %v7929 = vlaneseq
    %v7930 = vshrl.u32 %v7929, 7
    %v7931 = vadd.s32 %v7930, 8
    %7932 = vset.pattern.permute.xlu0 %v7931
    %7933 = vperm.xlu0 %7932, %v7922
    %v7934 = vpop.permute.xlu0 %7933
    %v7935 = vperm.slane %v7646, 5
    %v7936 = vlaneseq
    %v7937 = vshrl.u32 %v7936, 7
    %7939 = vset.pattern.permute.xlu0 %v7937
    %7940 = vperm.xlu0 %7939, %v7935
    %v7941 = vpop.permute.xlu0 %7940
    %v7942 = vlaneseq
    %v7943 = vshrl.u32 %v7942, 7
    %v7944 = vadd.s32 %v7943, 8
    %7945 = vset.pattern.permute.xlu0 %v7944
    %7946 = vperm.xlu0 %7945, %v7935
    %v7947 = vpop.permute.xlu0 %7946
    %v7948 = vperm.slane %v7646, 6
    %v7949 = vlaneseq
    %v7950 = vshrl.u32 %v7949, 7
    %7952 = vset.pattern.permute.xlu0 %v7950
    %7953 = vperm.xlu0 %7952, %v7948
    %v7954 = vpop.permute.xlu0 %7953
    %v7955 = vlaneseq
    %v7956 = vshrl.u32 %v7955, 7
    %v7957 = vadd.s32 %v7956, 8
    %7958 = vset.pattern.permute.xlu0 %v7957
    %7959 = vperm.xlu0 %7958, %v7948
    %v7960 = vpop.permute.xlu0 %7959
    %v7961 = vperm.slane %v7646, 7
    %v7962 = vlaneseq
    %v7963 = vshrl.u32 %v7962, 7
    %7965 = vset.pattern.permute.xlu0 %v7963
    %7966 = vperm.xlu0 %7965, %v7961
    %v7967 = vpop.permute.xlu0 %7966
    %v7968 = vlaneseq
    %v7969 = vshrl.u32 %v7968, 7
    %v7970 = vadd.s32 %v7969, 8
    %7971 = vset.pattern.permute.xlu0 %v7970
    %7972 = vperm.xlu0 %7971, %v7961
    %v7973 = vpop.permute.xlu0 %7972
    %v7974 = vperm.slane %v7661, 0
    %v7975 = vlaneseq
    %v7976 = vshrl.u32 %v7975, 7
    %7978 = vset.pattern.permute.xlu0 %v7976
    %7979 = vperm.xlu0 %7978, %v7974
    %v7980 = vpop.permute.xlu0 %7979
    %v7981 = vlaneseq
    %v7982 = vshrl.u32 %v7981, 7
    %v7983 = vadd.s32 %v7982, 8
    %7984 = vset.pattern.permute.xlu0 %v7983
    %7985 = vperm.xlu0 %7984, %v7974
    %v7986 = vpop.permute.xlu0 %7985
    %v7987 = vperm.slane %v7661, 1
    %v7988 = vlaneseq
    %v7989 = vshrl.u32 %v7988, 7
    %7991 = vset.pattern.permute.xlu0 %v7989
    %7992 = vperm.xlu0 %7991, %v7987
    %v7993 = vpop.permute.xlu0 %7992
    %v7994 = vlaneseq
    %v7995 = vshrl.u32 %v7994, 7
    %v7996 = vadd.s32 %v7995, 8
    %7997 = vset.pattern.permute.xlu0 %v7996
    %7998 = vperm.xlu0 %7997, %v7987
    %v7999 = vpop.permute.xlu0 %7998
    %v8000 = vperm.slane %v7661, 2
    %v8001 = vlaneseq
    %v8002 = vshrl.u32 %v8001, 7
    %8004 = vset.pattern.permute.xlu0 %v8002
    %8005 = vperm.xlu0 %8004, %v8000
    %v8006 = vpop.permute.xlu0 %8005
    %v8007 = vlaneseq
    %v8008 = vshrl.u32 %v8007, 7
    %v8009 = vadd.s32 %v8008, 8
    %8010 = vset.pattern.permute.xlu0 %v8009
    %8011 = vperm.xlu0 %8010, %v8000
    %v8012 = vpop.permute.xlu0 %8011
    %v8013 = vperm.slane %v7661, 3
    %v8014 = vlaneseq
    %v8015 = vshrl.u32 %v8014, 7
    %8017 = vset.pattern.permute.xlu0 %v8015
    %8018 = vperm.xlu0 %8017, %v8013
    %v8019 = vpop.permute.xlu0 %8018
    %v8020 = vlaneseq
    %v8021 = vshrl.u32 %v8020, 7
    %v8022 = vadd.s32 %v8021, 8
    %8023 = vset.pattern.permute.xlu0 %v8022
    %8024 = vperm.xlu0 %8023, %v8013
    %v8025 = vpop.permute.xlu0 %8024
    %v8026 = vperm.slane %v7661, 4
    %v8027 = vlaneseq
    %v8028 = vshrl.u32 %v8027, 7
    %8030 = vset.pattern.permute.xlu0 %v8028
    %8031 = vperm.xlu0 %8030, %v8026
    %v8032 = vpop.permute.xlu0 %8031
    %v8033 = vlaneseq
    %v8034 = vshrl.u32 %v8033, 7
    %v8035 = vadd.s32 %v8034, 8
    %8036 = vset.pattern.permute.xlu0 %v8035
    %8037 = vperm.xlu0 %8036, %v8026
    %v8038 = vpop.permute.xlu0 %8037
    %v8039 = vperm.slane %v7661, 5
    %v8040 = vlaneseq
    %v8041 = vshrl.u32 %v8040, 7
    %8043 = vset.pattern.permute.xlu0 %v8041
    %8044 = vperm.xlu0 %8043, %v8039
    %v8045 = vpop.permute.xlu0 %8044
    %v8046 = vlaneseq
    %v8047 = vshrl.u32 %v8046, 7
    %v8048 = vadd.s32 %v8047, 8
    %8049 = vset.pattern.permute.xlu0 %v8048
    %8050 = vperm.xlu0 %8049, %v8039
    %v8051 = vpop.permute.xlu0 %8050
    %v8052 = vperm.slane %v7661, 6
    %v8053 = vlaneseq
    %v8054 = vshrl.u32 %v8053, 7
    %8056 = vset.pattern.permute.xlu0 %v8054
    %8057 = vperm.xlu0 %8056, %v8052
    %v8058 = vpop.permute.xlu0 %8057
    %v8059 = vlaneseq
    %v8060 = vshrl.u32 %v8059, 7
    %v8061 = vadd.s32 %v8060, 8
    %8062 = vset.pattern.permute.xlu0 %v8061
    %8063 = vperm.xlu0 %8062, %v8052
    %v8064 = vpop.permute.xlu0 %8063
    %v8065 = vperm.slane %v7661, 7
    %v8066 = vlaneseq
    %v8067 = vshrl.u32 %v8066, 7
    %8069 = vset.pattern.permute.xlu0 %v8067
    %8070 = vperm.xlu0 %8069, %v8065
    %v8071 = vpop.permute.xlu0 %8070
    %v8072 = vlaneseq
    %v8073 = vshrl.u32 %v8072, 7
    %v8074 = vadd.s32 %v8073, 8
    %8075 = vset.pattern.permute.xlu0 %v8074
    %8076 = vperm.xlu0 %8075, %v8065
    %v8077 = vpop.permute.xlu0 %8076
    %v8078 = vmul.f32 %v5199, %v7668
    %v8079 = vmul.f32 %v5200, %v7674
    %v8080 = vmul.f32 %v5201, %v7681
    %v8081 = vmul.f32 %v5202, %v7687
    %v8082 = vmul.f32 %v5203, %v7694
    %v8083 = vmul.f32 %v5204, %v7700
    %v8084 = vmul.f32 %v5205, %v7707
    %v8085 = vmul.f32 %v5206, %v7713
    %v8086 = vmul.f32 %v5207, %v7720
    %v8087 = vmul.f32 %v5208, %v7726
    %v8088 = vmul.f32 %v5209, %v7733
    %v8089 = vmul.f32 %v5210, %v7739
    %v8090 = vmul.f32 %v5211, %v7746
    %v8091 = vmul.f32 %v5212, %v7752
    %v8092 = vmul.f32 %v5213, %v7759
    %v8093 = vmul.f32 %v5214, %v7765
    %v8094 = vmul.f32 %v5215, %v7772
    %v8095 = vmul.f32 %v5216, %v7778
    %v8096 = vmul.f32 %v5217, %v7785
    %v8097 = vmul.f32 %v5218, %v7791
    %v8098 = vmul.f32 %v5219, %v7798
    %v8099 = vmul.f32 %v5220, %v7804
    %v8100 = vmul.f32 %v5221, %v7811
    %v8101 = vmul.f32 %v5222, %v7817
    %v8102 = vmul.f32 %v5223, %v7824
    %v8103 = vmul.f32 %v5224, %v7830
    %v8104 = vmul.f32 %v5225, %v7837
    %v8105 = vmul.f32 %v5226, %v7843
    %v8106 = vmul.f32 %v5227, %v7850
    %v8107 = vmul.f32 %v5228, %v7856
    %v8108 = vmul.f32 %v5229, %v7863
    %v8109 = vmul.f32 %v5230, %v7869
    %v8110 = vmul.f32 %v5231, %v7876
    %v8111 = vmul.f32 %v5232, %v7882
    %v8112 = vmul.f32 %v5233, %v7889
    %v8113 = vmul.f32 %v5234, %v7895
    %v8114 = vmul.f32 %v5235, %v7902
    %v8115 = vmul.f32 %v5236, %v7908
    %v8116 = vmul.f32 %v5237, %v7915
    %v8117 = vmul.f32 %v5238, %v7921
    %v8118 = vmul.f32 %v5239, %v7928
    %v8119 = vmul.f32 %v5240, %v7934
    %v8120 = vmul.f32 %v5241, %v7941
    %v8121 = vmul.f32 %v5242, %v7947
    %v8122 = vmul.f32 %v5243, %v7954
    %v8123 = vmul.f32 %v5244, %v7960
    %v8124 = vmul.f32 %v5245, %v7967
    %v8125 = vmul.f32 %v5246, %v7973
    %v8126 = vmul.f32 %v5247, %v7980
    %v8127 = vmul.f32 %v5248, %v7986
    %v8128 = vmul.f32 %v5249, %v7993
    %v8129 = vmul.f32 %v5250, %v7999
    %v8130 = vmul.f32 %v5251, %v8006
    %v8131 = vmul.f32 %v5252, %v8012
    %v8132 = vmul.f32 %v5253, %v8019
    %v8133 = vmul.f32 %v5254, %v8025
    %v8134 = vmul.f32 %v5255, %v8032
    %v8135 = vmul.f32 %v5256, %v8038
    %v8136 = vmul.f32 %v5257, %v8045
    %v8137 = vmul.f32 %v5258, %v8051
    %v8138 = vmul.f32 %v5259, %v8058
    %v8139 = vmul.f32 %v5260, %v8064
    %v8140 = vmul.f32 %v5261, %v8071
    %v8141 = vmul.f32 %v5262, %v8077
    %v8142 = vadd.f32 %v8078, %v64
    %v8143 = vadd.f32 %v8079, %v65
    %v8144 = vadd.f32 %v8080, %v66
    %v8145 = vadd.f32 %v8081, %v67
    %v8146 = vadd.f32 %v8082, %v68
    %v8147 = vadd.f32 %v8083, %v69
    %v8148 = vadd.f32 %v8084, %v70
    %v8149 = vadd.f32 %v8085, %v71
    %v8150 = vadd.f32 %v8086, %v72
    %v8151 = vadd.f32 %v8087, %v73
    %v8152 = vadd.f32 %v8088, %v74
    %v8153 = vadd.f32 %v8089, %v75
    %v8154 = vadd.f32 %v8090, %v76
    %v8155 = vadd.f32 %v8091, %v77
    %v8156 = vadd.f32 %v8092, %v78
    %v8157 = vadd.f32 %v8093, %v79
    %v8158 = vadd.f32 %v8094, %v80
    %v8159 = vadd.f32 %v8095, %v81
    %v8160 = vadd.f32 %v8096, %v82
    %v8161 = vadd.f32 %v8097, %v83
    %v8162 = vadd.f32 %v8098, %v84
    %v8163 = vadd.f32 %v8099, %v85
    %v8164 = vadd.f32 %v8100, %v86
    %v8165 = vadd.f32 %v8101, %v87
    %v8166 = vadd.f32 %v8102, %v88
    %v8167 = vadd.f32 %v8103, %v89
    %v8168 = vadd.f32 %v8104, %v90
    %v8169 = vadd.f32 %v8105, %v91
    %v8170 = vadd.f32 %v8106, %v92
    %v8171 = vadd.f32 %v8107, %v93
    %v8172 = vadd.f32 %v8108, %v94
    %v8173 = vadd.f32 %v8109, %v95
    %v8174 = vadd.f32 %v8110, %v96
    %v8175 = vadd.f32 %v8111, %v97
    %v8176 = vadd.f32 %v8112, %v98
    %v8177 = vadd.f32 %v8113, %v99
    %v8178 = vadd.f32 %v8114, %v100
    %v8179 = vadd.f32 %v8115, %v101
    %v8180 = vadd.f32 %v8116, %v102
    %v8181 = vadd.f32 %v8117, %v103
    %v8182 = vadd.f32 %v8118, %v104
    %v8183 = vadd.f32 %v8119, %v105
    %v8184 = vadd.f32 %v8120, %v106
    %v8185 = vadd.f32 %v8121, %v107
    %v8186 = vadd.f32 %v8122, %v108
    %v8187 = vadd.f32 %v8123, %v109
    %v8188 = vadd.f32 %v8124, %v110
    %v8189 = vadd.f32 %v8125, %v111
    %v8190 = vadd.f32 %v8126, %v112
    %v8191 = vadd.f32 %v8127, %v113
    %v8192 = vadd.f32 %v8128, %v114
    %v8193 = vadd.f32 %v8129, %v115
    %v8194 = vadd.f32 %v8130, %v116
    %v8195 = vadd.f32 %v8131, %v117
    %v8196 = vadd.f32 %v8132, %v118
    %v8197 = vadd.f32 %v8133, %v119
    %v8198 = vadd.f32 %v8134, %v120
    %v8199 = vadd.f32 %v8135, %v121
    %v8200 = vadd.f32 %v8136, %v122
    %v8201 = vadd.f32 %v8137, %v123
    %v8202 = vadd.f32 %v8138, %v124
    %v8203 = vadd.f32 %v8139, %v125
    %v8204 = vadd.f32 %v8140, %v126
    %v8205 = vadd.f32 %v8141, %v127
    %v8206 = vmax.f32 %v8142, 0.0
    %v8207 = vmax.f32 %v8143, 0.0
    %v8208 = vmax.f32 %v8144, 0.0
    %v8209 = vmax.f32 %v8145, 0.0
    %v8210 = vmax.f32 %v8146, 0.0
    %v8211 = vmax.f32 %v8147, 0.0
    %v8212 = vmax.f32 %v8148, 0.0
    %v8213 = vmax.f32 %v8149, 0.0
    %v8214 = vmax.f32 %v8150, 0.0
    %v8215 = vmax.f32 %v8151, 0.0
    %v8216 = vmax.f32 %v8152, 0.0
    %v8217 = vmax.f32 %v8153, 0.0
    %v8218 = vmax.f32 %v8154, 0.0
    %v8219 = vmax.f32 %v8155, 0.0
    %v8220 = vmax.f32 %v8156, 0.0
    %v8221 = vmax.f32 %v8157, 0.0
    %v8222 = vmax.f32 %v8158, 0.0
    %v8223 = vmax.f32 %v8159, 0.0
    %v8224 = vmax.f32 %v8160, 0.0
    %v8225 = vmax.f32 %v8161, 0.0
    %v8226 = vmax.f32 %v8162, 0.0
    %v8227 = vmax.f32 %v8163, 0.0
    %v8228 = vmax.f32 %v8164, 0.0
    %v8229 = vmax.f32 %v8165, 0.0
    %v8230 = vmax.f32 %v8166, 0.0
    %v8231 = vmax.f32 %v8167, 0.0
    %v8232 = vmax.f32 %v8168, 0.0
    %v8233 = vmax.f32 %v8169, 0.0
    %v8234 = vmax.f32 %v8170, 0.0
    %v8235 = vmax.f32 %v8171, 0.0
    %v8236 = vmax.f32 %v8172, 0.0
    %v8237 = vmax.f32 %v8173, 0.0
    %v8238 = vmax.f32 %v8174, 0.0
    %v8239 = vmax.f32 %v8175, 0.0
    %v8240 = vmax.f32 %v8176, 0.0
    %v8241 = vmax.f32 %v8177, 0.0
    %v8242 = vmax.f32 %v8178, 0.0
    %v8243 = vmax.f32 %v8179, 0.0
    %v8244 = vmax.f32 %v8180, 0.0
    %v8245 = vmax.f32 %v8181, 0.0
    %v8246 = vmax.f32 %v8182, 0.0
    %v8247 = vmax.f32 %v8183, 0.0
    %v8248 = vmax.f32 %v8184, 0.0
    %v8249 = vmax.f32 %v8185, 0.0
    %v8250 = vmax.f32 %v8186, 0.0
    %v8251 = vmax.f32 %v8187, 0.0
    %v8252 = vmax.f32 %v8188, 0.0
    %v8253 = vmax.f32 %v8189, 0.0
    %v8254 = vmax.f32 %v8190, 0.0
    %v8255 = vmax.f32 %v8191, 0.0
    %v8256 = vmax.f32 %v8192, 0.0
    %v8257 = vmax.f32 %v8193, 0.0
    %v8258 = vmax.f32 %v8194, 0.0
    %v8259 = vmax.f32 %v8195, 0.0
    %v8260 = vmax.f32 %v8196, 0.0
    %v8261 = vmax.f32 %v8197, 0.0
    %v8262 = vmax.f32 %v8198, 0.0
    %v8263 = vmax.f32 %v8199, 0.0
    %v8264 = vmax.f32 %v8200, 0.0
    %v8265 = vmax.f32 %v8201, 0.0
    %v8266 = vmax.f32 %v8202, 0.0
    %v8267 = vmax.f32 %v8203, 0.0
    %v8268 = vmax.f32 %v8204, 0.0
    %v8269 = vmax.f32 %v8205, 0.0
    %8270 = vst.msk [vmem:[#allocation8] sm:$0xff] %vm1245, %v8206
    %8271 = vst.msk [vmem:[#allocation8 + $0x8] sm:$0xff] %vm1245, %v8207
    %8272 = vst.msk [vmem:[#allocation8 + $0x10] sm:$0xff] %vm1245, %v8208
    %8273 = vst.msk [vmem:[#allocation8 + $0x18] sm:$0xff] %vm1245, %v8209
    %8274 = vst.msk [vmem:[#allocation8 + $0x20] sm:$0xff] %vm1245, %v8210
    %8275 = vst.msk [vmem:[#allocation8 + $0x28] sm:$0xff] %vm1245, %v8211
    %8276 = vst.msk [vmem:[#allocation8 + $0x30] sm:$0xff] %vm1245, %v8212
    %8277 = vst.msk [vmem:[#allocation8 + $0x38] sm:$0xff] %vm1245, %v8213
    %8278 = vst.msk [vmem:[#allocation8 + $0x40] sm:$0xff] %vm1245, %v8214
    %8279 = vst.msk [vmem:[#allocation8 + $0x48] sm:$0xff] %vm1245, %v8215
    %8280 = vst.msk [vmem:[#allocation8 + $0x50] sm:$0xff] %vm1245, %v8216
    %8281 = vst.msk [vmem:[#allocation8 + $0x58] sm:$0xff] %vm1245, %v8217
    %8282 = vst.msk [vmem:[#allocation8 + $0x60] sm:$0xff] %vm1245, %v8218
    %8283 = vst.msk [vmem:[#allocation8 + $0x68] sm:$0xff] %vm1245, %v8219
    %8284 = vst.msk [vmem:[#allocation8 + $0x70] sm:$0xff] %vm1245, %v8220
    %8285 = vst.msk [vmem:[#allocation8 + $0x78] sm:$0xff] %vm1245, %v8221
    %8286 = vst.msk [vmem:[#allocation8 + $0x80] sm:$0xff] %vm1245, %v8222
    %8287 = vst.msk [vmem:[#allocation8 + $0x88] sm:$0xff] %vm1245, %v8223
    %8288 = vst.msk [vmem:[#allocation8 + $0x90] sm:$0xff] %vm1245, %v8224
    %8289 = vst.msk [vmem:[#allocation8 + $0x98] sm:$0xff] %vm1245, %v8225
    %8290 = vst.msk [vmem:[#allocation8 + $0xa0] sm:$0xff] %vm1245, %v8226
    %8291 = vst.msk [vmem:[#allocation8 + $0xa8] sm:$0xff] %vm1245, %v8227
    %8292 = vst.msk [vmem:[#allocation8 + $0xb0] sm:$0xff] %vm1245, %v8228
    %8293 = vst.msk [vmem:[#allocation8 + $0xb8] sm:$0xff] %vm1245, %v8229
    %8294 = vst.msk [vmem:[#allocation8 + $0xc0] sm:$0xff] %vm1245, %v8230
    %8295 = vst.msk [vmem:[#allocation8 + $0xc8] sm:$0xff] %vm1245, %v8231
    %8296 = vst.msk [vmem:[#allocation8 + $0xd0] sm:$0xff] %vm1245, %v8232
    %8297 = vst.msk [vmem:[#allocation8 + $0xd8] sm:$0xff] %vm1245, %v8233
    %8298 = vst.msk [vmem:[#allocation8 + $0xe0] sm:$0xff] %vm1245, %v8234
    %8299 = vst.msk [vmem:[#allocation8 + $0xe8] sm:$0xff] %vm1245, %v8235
    %8300 = vst.msk [vmem:[#allocation8 + $0xf0] sm:$0xff] %vm1245, %v8236
    %8301 = vst.msk [vmem:[#allocation8 + $0xf8] sm:$0xff] %vm1245, %v8237
    %8302 = vst.msk [vmem:[#allocation8 + $0x100] sm:$0xff] %vm1245, %v8238
    %8303 = vst.msk [vmem:[#allocation8 + $0x108] sm:$0xff] %vm1245, %v8239
    %8304 = vst.msk [vmem:[#allocation8 + $0x110] sm:$0xff] %vm1245, %v8240
    %8305 = vst.msk [vmem:[#allocation8 + $0x118] sm:$0xff] %vm1245, %v8241
    %8306 = vst.msk [vmem:[#allocation8 + $0x120] sm:$0xff] %vm1245, %v8242
    %8307 = vst.msk [vmem:[#allocation8 + $0x128] sm:$0xff] %vm1245, %v8243
    %8308 = vst.msk [vmem:[#allocation8 + $0x130] sm:$0xff] %vm1245, %v8244
    %8309 = vst.msk [vmem:[#allocation8 + $0x138] sm:$0xff] %vm1245, %v8245
    %8310 = vst.msk [vmem:[#allocation8 + $0x140] sm:$0xff] %vm1245, %v8246
    %8311 = vst.msk [vmem:[#allocation8 + $0x148] sm:$0xff] %vm1245, %v8247
    %8312 = vst.msk [vmem:[#allocation8 + $0x150] sm:$0xff] %vm1245, %v8248
    %8313 = vst.msk [vmem:[#allocation8 + $0x158] sm:$0xff] %vm1245, %v8249
    %8314 = vst.msk [vmem:[#allocation8 + $0x160] sm:$0xff] %vm1245, %v8250
    %8315 = vst.msk [vmem:[#allocation8 + $0x168] sm:$0xff] %vm1245, %v8251
    %8316 = vst.msk [vmem:[#allocation8 + $0x170] sm:$0xff] %vm1245, %v8252
    %8317 = vst.msk [vmem:[#allocation8 + $0x178] sm:$0xff] %vm1245, %v8253
    %8318 = vst.msk [vmem:[#allocation8 + $0x180] sm:$0xff] %vm1245, %v8254
    %8319 = vst.msk [vmem:[#allocation8 + $0x188] sm:$0xff] %vm1245, %v8255
    %8320 = vst.msk [vmem:[#allocation8 + $0x190] sm:$0xff] %vm1245, %v8256
    %8321 = vst.msk [vmem:[#allocation8 + $0x198] sm:$0xff] %vm1245, %v8257
    %8322 = vst.msk [vmem:[#allocation8 + $0x1a0] sm:$0xff] %vm1245, %v8258
    %8323 = vst.msk [vmem:[#allocation8 + $0x1a8] sm:$0xff] %vm1245, %v8259
    %8324 = vst.msk [vmem:[#allocation8 + $0x1b0] sm:$0xff] %vm1245, %v8260
    %8325 = vst.msk [vmem:[#allocation8 + $0x1b8] sm:$0xff] %vm1245, %v8261
    %8326 = vst.msk [vmem:[#allocation8 + $0x1c0] sm:$0xff] %vm1245, %v8262
    %8327 = vst.msk [vmem:[#allocation8 + $0x1c8] sm:$0xff] %vm1245, %v8263
    %8328 = vst.msk [vmem:[#allocation8 + $0x1d0] sm:$0xff] %vm1245, %v8264
    %8329 = vst.msk [vmem:[#allocation8 + $0x1d8] sm:$0xff] %vm1245, %v8265
    %8330 = vst.msk [vmem:[#allocation8 + $0x1e0] sm:$0xff] %vm1245, %v8266
    %8331 = vst.msk [vmem:[#allocation8 + $0x1e8] sm:$0xff] %vm1245, %v8267
    %8332 = vst.msk [vmem:[#allocation8 + $0x1f0] sm:$0xff] %vm1245, %v8268
    %8333 = vst.msk [vmem:[#allocation8 + $0x1f8] sm:$0xff] %vm1245, %v8269
    // Predicated region
    $region46: #{tpu_custom_call.1} parent=1 // pred_check
      _
    $region47: #{tpu_custom_call.1} parent=1 // pred_check_branch
      %8335 = sbr.rel (0) target = $region49
    $region48: #{tpu_custom_call.1} parent=1 // pred_region
      %8337 = vsyncadd [#allocation5], 0
      %s8338 = sshll.u32 [#allocation8], 4
      %s8339 = int_to_ptr.vmem [resolvable:$true] %s8338
      %s8340 = sshll.u32 %s9, 4
      %s8341 = int_to_ptr.hbm [resolvable:$true] %s8340
      %8346 = dma.vmem_to_hbm [thread:$0]  %s8339, 8192, %s8341, [#allocation5], 128, 128, 8
    $region49: #{tpu_custom_call.1} parent=1 // pred_fallthru
      _
    // Predicated region
    $region50: #{tpu_custom_call.1} parent=1 // pred_check
      _
    $region51: #{tpu_custom_call.1} parent=1 // pred_check_branch
      %8348 = sbr.rel (0) target = $region53
    $region52: #{tpu_custom_call.1} parent=1 // pred_region
      %8350 = dma.done [#allocation5], 8192
    $region53: #{tpu_custom_call.1} parent=1 // pred_fallthru
      _
    %8351 = vsyncpa [#allocation4], 1
    %8352 = vsyncpa [#allocation5], 1
    %8353 = vsyncpa [#allocation6], 1

</llo_original>
